<compile_context>
chip_gen: v5e
topology: v5e:2x2
jax: 0.10.0
libtpu: 0.0.40
codegen_flags: <defaults>
</compile_context>

<pallas_src>
import functools

import numpy as np

import jax
import jax.numpy as jnp
from jax.experimental import pallas as pl
from jax.experimental.pallas import tpu as pltpu

GROUPS = 32
EPS = 1e-5


def _bilinear_matrix_np(n_in, n_out):
    """Interpolation matrix R (n_out, n_in) for bilinear, align_corners=True."""
    i = np.arange(n_out)
    if n_out == 1 or n_in == 1:
        src = np.zeros((n_out,), np.float64)
    else:
        src = i * (n_in - 1) / (n_out - 1)
    i0 = np.clip(np.floor(src).astype(np.int64), 0, n_in - 1)
    i1 = np.minimum(i0 + 1, n_in - 1)
    w1 = (src - i0).astype(np.float32)
    w0 = 1.0 - w1
    R = np.zeros((n_out, n_in), np.float32)
    R[i, i0] += w0
    R[i, i1] += w1
    return R


def _conv_gn_relu_kernel(x_hbm, xb_ref, wpk_ref, gamma_ref, beta_ref, rh_ref,
                         rw_ref, o_ref, halo, sem, sum_ref, ssq_ref,
                         *, H, W, Cin, Cout, th, upsample):
    b = pl.program_id(0)
    p = pl.program_id(1)          # 0: accumulate GN stats, 1: normalize + emit
    r = pl.program_id(2)          # output-row tile index
    R = pl.num_programs(2)
    row0 = r * th                 # first image row owned by this tile
    nrow = th + 2                 # conv rows computed (tile + 1-row halo/side)

    # ------------------------------------------------------------------
    # Halo rows (2 above / 2 below the body tile): manual DMA from HBM.
    # The body tile itself is auto-pipelined via its BlockSpec.  Halo rows
    # outside the image are zeroed in VMEM (padding is done in-kernel).
    # ------------------------------------------------------------------
    cp_top = pltpu.make_async_copy(
        x_hbm.at[b, pl.ds(jnp.maximum(row0 - 2, 0), 2)],
        halo.at[pl.ds(0, 2)], sem.at[0])
    cp_bot = pltpu.make_async_copy(
        x_hbm.at[b, pl.ds(jnp.minimum(row0 + th, H - 2), 2)],
        halo.at[pl.ds(2, 2)], sem.at[1])

    @pl.when(r > 0)
    def _():
        cp_top.start()

    @pl.when(r < R - 1)
    def _():
        cp_bot.start()

    @pl.when(r == 0)
    def _():
        halo[0:2] = jnp.zeros((2, W, Cin), halo.dtype)

    @pl.when(r == R - 1)
    def _():
        halo[2:4] = jnp.zeros((2, W, Cin), halo.dtype)

    @pl.when(r > 0)
    def _():
        cp_top.wait()

    @pl.when(r < R - 1)
    def _():
        cp_bot.wait()

    # (th+4, W, Cin) slab of input rows [row0-2, row0+th+2)
    xm = jnp.concatenate([halo[0:2], xb_ref[0], halo[2:4]], axis=0)

    # ------------------------------------------------------------------
    # 3x3 conv on the MXU: taps packed along dy -> 3 matmuls with K = 3*Cin.
    # Only two shifted slabs are materialized (dx = 1 is the slab itself).
    # ------------------------------------------------------------------
    zc = jnp.zeros((th + 4, 1, Cin), xm.dtype)
    slabs = (
        jnp.concatenate([zc, xm[:, :W - 1, :]], axis=1),   # dx=0 -> col w-1
        xm,                                                # dx=1 -> col w
        jnp.concatenate([xm[:, 1:, :], zc], axis=1),       # dx=2 -> col w+1
    )
    acc = jnp.zeros((nrow * W, Cout), jnp.float32)
    for dx in range(3):
        s = slabs[dx]
        x3 = jnp.concatenate([s[0:nrow], s[1:nrow + 1], s[2:nrow + 2]],
                             axis=-1)                      # (nrow, W, 3*Cin)
        acc = acc + jnp.dot(x3.reshape(nrow * W, 3 * Cin), wpk_ref[dx],
                            preferred_element_type=jnp.float32)

    # ------------------ pass 0: per-channel GN statistics ------------------
    @pl.when((p == 0) & (r == 0))
    def _():
        sum_ref[...] = jnp.zeros_like(sum_ref)
        ssq_ref[...] = jnp.zeros_like(ssq_ref)

    @pl.when(p == 0)
    def _():
        v = acc[W:(th + 1) * W]                            # only the th valid rows
        sum_ref[...] += jnp.sum(v, axis=0, keepdims=True)
        ssq_ref[...] += jnp.sum(v * v, axis=0, keepdims=True)

    # --------- pass 1: normalize + ReLU (+ bilinear x2) and store ----------
    @pl.when(p == 1)
    def _():
        cpg = Cout // GROUPS
        n = float(H * W * cpg)
        s_c, ss_c = sum_ref[...], ssq_ref[...]
        # NOTE: E[x^2]-E[x]^2 in f32; adequate at GN activation scales.
        if cpg == 1:
            mean_c = s_c / n
            var_c = ss_c / n - mean_c * mean_c
        else:
            s_g = jnp.sum(s_c.reshape(GROUPS, cpg), axis=1, keepdims=True)
            ss_g = jnp.sum(ss_c.reshape(GROUPS, cpg), axis=1, keepdims=True)
            mean_g = s_g / n
            var_g = ss_g / n - mean_g * mean_g
            mean_c = jnp.broadcast_to(mean_g, (GROUPS, cpg)).reshape(1, Cout)
            var_c = jnp.broadcast_to(var_g, (GROUPS, cpg)).reshape(1, Cout)
        # fold the GN affine into one scale/shift pair (2 VPU ops on hot path)
        scale = gamma_ref[...] * jax.lax.rsqrt(var_c + EPS)
        shift = beta_ref[...] - mean_c * scale
        y = jnp.maximum(acc * scale + shift, 0.0).reshape(nrow, W, Cout)
        if upsample:
            # bilinear x2, align_corners=True, as two separable matmuls; the
            # H pass uses a per-tile slice of the interpolation matrix.
            # TODO(synk): align_corners=True weights are not the simple
            # roll+average pattern, so the W pass stays an einsum (transpose).
            yh = jnp.einsum('oh,hwc->owc', rh_ref[0], y,
                            preferred_element_type=jnp.float32)
            yo = jnp.einsum('pw,owc->opc', rw_ref[...], yh,
                            preferred_element_type=jnp.float32)
            o_ref[0] = yo.astype(o_ref.dtype)
        else:
            o_ref[0] = y[1:th + 1].astype(o_ref.dtype)


def _pick_tile_h(H, W, Cin, Cout, upsample, out_bytes, force=None):
    """Largest row tile (divisor of H) whose working set fits a VMEM budget."""
    if force is not None:
        assert H % force == 0 and (force == H or force >= 2)
        return force
    budget = 20 * 1024 * 1024
    up = 2 if upsample else 1

    def est(th):
        body = 2 * th * W * Cin * 2                    # double-buffered input
        slab = 3 * (th + 4) * W * Cin * 2              # xm + shifted slabs
        x3 = (th + 2) * W * 3 * Cin * 2
        acc = (th + 2) * W * Cout * 4
        ups = (2 * th * W * Cout * 4 + 4 * th * W * Cout * 4) if upsample else 0
        out = 2 * (up * th) * (up * W) * Cout * out_bytes
        wts = 2 * (9 * Cin * Cout * 2 + up * th * (th + 2) * 4 + up * W * W * 4)
        return int(1.25 * (body + slab + x3 + acc + ups + out + wts))

    cands = [d for d in range(2, H + 1) if H % d == 0] or [H]
    best = cands[0]
    for th in cands:
        if est(th) <= budget:
            best = th
    return best


def conv3x3_gn_relu(x_nhwc, w, gamma, beta, upsample, *,
                    out_dtype=jnp.bfloat16, tile_h=None):
    """Fused Conv3x3(pad=1, no bias) + GroupNorm(32) + ReLU (+ bilinear x2).

    x_nhwc: (N, H, W, Cin) bf16; w: (3, 3, Cin, Cout) HWIO; gamma/beta: (Cout,).
    """
    N, H, W, Cin = x_nhwc.shape
    Cout = w.shape[-1]
    th = _pick_tile_h(H, W, Cin, Cout, upsample,
                      jnp.dtype(out_dtype).itemsize, force=tile_h)
    R = H // th

    # taps packed along dy: wpk[dx] is (3*Cin, Cout) = [w[0,dx]; w[1,dx]; w[2,dx]]
    wpk = jnp.transpose(w, (1, 0, 2, 3)).reshape(3, 3 * Cin, Cout)
    wpk = wpk.astype(jnp.bfloat16)
    g2 = gamma.reshape(1, Cout).astype(jnp.float32)
    b2 = beta.reshape(1, Cout).astype(jnp.float32)

    if upsample:
        Ho, Wo, oth = 2 * H, 2 * W, 2 * th
        RH = _bilinear_matrix_np(H, Ho)                  # (2H, H)
        rh_t = np.zeros((R, oth, th + 2), np.float32)    # per-tile slice of RH
        for rr in range(R):
            cols = np.arange(th + 2) + rr * th - 1
            m = (cols >= 0) & (cols < H)
            rh_t[rr][:, m] = RH[rr * oth:(rr + 1) * oth, cols[m]]
        rh_t = jnp.asarray(rh_t)
        rw = jnp.asarray(_bilinear_matrix_np(W, Wo))     # (2W, W)
        rh_map = lambda bb, pp, rr: (rr, 0, 0)
    else:
        Ho, Wo, oth = H, W, th
        rh_t = jnp.zeros((1, 1, 1), jnp.float32)         # unused dummies
        rw = jnp.zeros((1, 1), jnp.float32)
        rh_map = lambda bb, pp, rr: (0, 0, 0)

    kernel = functools.partial(_conv_gn_relu_kernel, H=H, W=W, Cin=Cin,
                               Cout=Cout, th=th, upsample=upsample)

    return pl.pallas_call(
        kernel,
        out_shape=jax.ShapeDtypeStruct((N, Ho, Wo, Cout), out_dtype),
        grid_spec=pltpu.PrefetchScalarGridSpec(
            num_scalar_prefetch=0,
            grid=(N, 2, R),                              # batch, GN pass, row tile
            in_specs=[
                pl.BlockSpec(memory_space=pl.ANY),       # x in HBM (halo DMA src)
                pl.BlockSpec((1, th, W, Cin), lambda bb, pp, rr: (bb, rr, 0, 0)),
                pl.BlockSpec((3, 3 * Cin, Cout), lambda bb, pp, rr: (0, 0, 0)),
                pl.BlockSpec((1, Cout), lambda bb, pp, rr: (0, 0)),
                pl.BlockSpec((1, Cout), lambda bb, pp, rr: (0, 0)),
                pl.BlockSpec((1,) + tuple(rh_t.shape[1:]), rh_map),
                pl.BlockSpec(tuple(rw.shape), lambda bb, pp, rr: (0, 0)),
            ],
            # pp*rr pins the output block during pass 0 so nothing is written
            # back until pass 1 produced real data (lane-dense Cout is last).
            out_specs=pl.BlockSpec((1, oth, Wo, Cout),
                                   lambda bb, pp, rr: (bb, pp * rr, 0, 0)),
            scratch_shapes=[
                pltpu.VMEM((4, W, Cin), x_nhwc.dtype),   # halo rows
                pltpu.SemaphoreType.DMA((2,)),
                pltpu.VMEM((1, Cout), jnp.float32),      # GN sum
                pltpu.VMEM((1, Cout), jnp.float32),      # GN sum of squares
            ]),
        compiler_params=pltpu.CompilerParams(
            dimension_semantics=("parallel", "arbitrary", "arbitrary"),
            vmem_limit_bytes=48 * 1024 * 1024),
    )(x_nhwc, x_nhwc, wpk, g2, b2, rh_t, rw)


class SegmentationBlockPallas:
    """Mirrors SegmentationBlock(in_channels, out_channels, n_upsamples)."""

    def __init__(self, in_channels, out_channels, n_upsamples=0, *, key,
                 tile_h=None):
        assert out_channels % GROUPS == 0, "GroupNorm(32, C) needs C % 32 == 0"
        self.tile_h = tile_h
        self.params = []
        self.block_cfg = []
        cins = [in_channels] + [out_channels] * max(0, n_upsamples - 1)
        ups = [bool(n_upsamples)] + [True] * max(0, n_upsamples - 1)
        for cin, up in zip(cins, ups):
            key, wk = jax.random.split(key)
            w = jax.random.normal(wk, (3, 3, cin, out_channels),
                                  jnp.float32) * 0.05
            gamma = jnp.ones((out_channels,), jnp.float32)  # GN affine defaults
            beta = jnp.zeros((out_channels,), jnp.float32)
            self.params.append((w, gamma, beta))
            self.block_cfg.append(up)

    def __call__(self, x_nchw):
        # NCHW -> NHWC; inter-layer activations travel in bf16 (halved HBM
        # traffic); only the final layer emits f32.
        x = jnp.transpose(x_nchw, (0, 2, 3, 1)).astype(jnp.bfloat16)
        nb = len(self.params)
        for i, ((w, gamma, beta), up) in enumerate(zip(self.params,
                                                       self.block_cfg)):
            out_dtype = jnp.float32 if i == nb - 1 else jnp.bfloat16
            x = conv3x3_gn_relu(x, w, gamma, beta, up, out_dtype=out_dtype,
                                tile_h=self.tile_h)
        return jnp.transpose(x, (0, 3, 1, 2))              # NHWC -> NCHW


def _reference_forward(x_nchw, params, cfgs):
    """Pure-JAX f32 reference with the exact module semantics."""
    x = x_nchw.astype(jnp.float32)
    for (w, gamma, beta), up in zip(params, cfgs):
        y = jax.lax.conv_general_dilated(
            x, w, window_strides=(1, 1), padding=((1, 1), (1, 1)),
            dimension_numbers=('NCHW', 'HWIO', 'NCHW'))
        N, C, Hh, Ww = y.shape
        cpg = C // GROUPS
        yg = y.reshape(N, GROUPS, cpg, Hh, Ww)
        mean = jnp.mean(yg, axis=(2, 3, 4), keepdims=True)
        var = jnp.mean((yg - mean) ** 2, axis=(2, 3, 4), keepdims=True)
        y = ((yg - mean) / jnp.sqrt(var + EPS)).reshape(N, C, Hh, Ww)
        y = y * gamma.reshape(1, C, 1, 1) + beta.reshape(1, C, 1, 1)
        y = jnp.maximum(y, 0.0)
        if up:
            rh = jnp.asarray(_bilinear_matrix_np(Hh, 2 * Hh))
            rw = jnp.asarray(_bilinear_matrix_np(Ww, 2 * Ww))
            y = jnp.einsum('oh,nchw->ncow', rh, y)
            y = jnp.einsum('pw,ncow->ncop', rw, y)
        x = y
    return x


if __name__ == "__main__":
    key = jax.random.PRNGKey(0)
    key, xk = jax.random.split(key)

    # batch=2, in_channels=16, out_channels=32 (32 GN groups), spatial 16x16,
    # n_upsamples=2 -> two Conv3x3GNReLU blocks, output (2, 32, 64, 64).
    N, Cin, Cout, H, W = 2, 16, 32, 16, 16
    x = jax.random.normal(xk, (N, Cin, H, W), jnp.float32)

    # tile_h=8 forces multiple row tiles per image so the halo-DMA path and the
    # two-pass GroupNorm are exercised (layer 1: 2 tiles, layer 2: 4 tiles).
    model = SegmentationBlockPallas(Cin, Cout, n_upsamples=2, key=key, tile_h=8)
    out = jax.block_until_ready(model(x))

    assert out.shape == (N, Cout, 4 * H, 4 * W), out.shape
    assert bool(jnp.all(jnp.isfinite(out)))

    ref = jax.block_until_ready(
        _reference_forward(x, model.params, model.block_cfg))
    max_err = float(jnp.max(jnp.abs(out - ref)))
    assert max_err < 0.15, f"max abs err vs f32 reference: {max_err}"

    print("KERNEL_OK")
</pallas_src>

<mosaic_0001>
module attributes {stable_mosaic.version = 11 : i64} {
  func.func @_conv_gn_relu_kernel(%arg0: i32, %arg1: i32, %arg2: i32, %arg3: memref<2x16x16x16xbf16, #tpu.memory_space<any>>, %arg4: memref<1x8x16x16xbf16, #tpu.memory_space<vmem>>, %arg5: memref<3x48x32xbf16, #tpu.memory_space<vmem>>, %arg6: memref<1x32xf32, #tpu.memory_space<vmem>>, %arg7: memref<1x32xf32, #tpu.memory_space<vmem>>, %arg8: memref<1x16x10xf32, #tpu.memory_space<vmem>>, %arg9: memref<32x16xf32, #tpu.memory_space<vmem>>, %arg10: memref<1x16x32x32xbf16, #tpu.memory_space<vmem>>, %arg11: memref<4x16x16xbf16, #tpu.memory_space<vmem>>, %arg12: memref<2x!tpu.dma_semaphore, #tpu.memory_space<semaphore_mem>>, %arg13: memref<1x32xf32, #tpu.memory_space<vmem>>, %arg14: memref<1x32xf32, #tpu.memory_space<vmem>>) attributes {dimension_semantics = [#tpu.dimension_semantics<parallel>, #tpu.dimension_semantics<arbitrary>, #tpu.dimension_semantics<arbitrary>], iteration_bounds = array<i64: 2, 2, 2>, scalar_prefetch = 0 : i64, scratch_operands = 4 : i64, tpu.core_type = #tpu.core_type<tc>, window_params = [{}, {transform_indices = @transform_1, window_bounds = array<i64: 1, 8, 16, 16>}, {pipeline_mode = #tpu.pipeline_mode<synchronous>, transform_indices = @transform_2, window_bounds = array<i64: 3, 48, 32>}, {pipeline_mode = #tpu.pipeline_mode<synchronous>, transform_indices = @transform_3, window_bounds = array<i64: 1, 32>}, {pipeline_mode = #tpu.pipeline_mode<synchronous>, transform_indices = @transform_4, window_bounds = array<i64: 1, 32>}, {transform_indices = @transform_5, window_bounds = array<i64: 1, 16, 10>}, {pipeline_mode = #tpu.pipeline_mode<synchronous>, transform_indices = @transform_6, window_bounds = array<i64: 32, 16>}, {transform_indices = @transform_7, window_bounds = array<i64: 1, 16, 32, 32>}]} {
    %c8_i32 = arith.constant 8 : i32
    %0 = arith.muli %arg2, %c8_i32 : i32
    %c2_i32 = arith.constant 2 : i32
    %1 = arith.subi %0, %c2_i32 : i32
    %c0_i32 = arith.constant 0 : i32
    %2 = arith.maxsi %1, %c0_i32 : i32
    %c8_i32_0 = arith.constant 8 : i32
    %3 = arith.addi %0, %c8_i32_0 : i32
    %c14_i32 = arith.constant 14 : i32
    %4 = arith.minsi %3, %c14_i32 : i32
    %c0_i32_1 = arith.constant 0 : i32
    %5 = arith.cmpi sgt, %arg2, %c0_i32_1 : i32
    %6 = arith.extui %5 : i1 to i32
    %c0_i32_2 = arith.constant 0 : i32
    %c0_i32_3 = arith.constant 0 : i32
    %7 = arith.cmpi ne, %6, %c0_i32_3 : i32
    scf.if %7 {
      %c0_i32_43 = arith.constant 0 : i32
      %c0_i32_44 = arith.constant 0 : i32
      %72 = tpu.memref_slice %arg3[%arg0, %2, %c0_i32_43, %c0_i32_44] : memref<2x16x16x16xbf16, #tpu.memory_space<any>> -> memref<1x2x16x16xbf16, #tpu.memory_space<any>>
      %73 = tpu.memref_squeeze %72 : memref<1x2x16x16xbf16, #tpu.memory_space<any>> -> memref<2x16x16xbf16, #tpu.memory_space<any>>
      %c0_i32_45 = arith.constant 0 : i32
      %c0_i32_46 = arith.constant 0 : i32
      %c0_i32_47 = arith.constant 0 : i32
      %74 = tpu.memref_slice %arg11[%c0_i32_45, %c0_i32_46, %c0_i32_47] : memref<4x16x16xbf16, #tpu.memory_space<vmem>> -> memref<2x16x16xbf16, #tpu.memory_space<vmem>>
      %75 = tpu.memref_slice %arg12[%c0_i32_2] : memref<2x!tpu.dma_semaphore, #tpu.memory_space<semaphore_mem>> -> memref<1x!tpu.dma_semaphore, #tpu.memory_space<semaphore_mem>>
      %76 = tpu.memref_squeeze %75 : memref<1x!tpu.dma_semaphore, #tpu.memory_space<semaphore_mem>> -> memref<!tpu.dma_semaphore, #tpu.memory_space<semaphore_mem>>
      tpu.enqueue_dma source(%73 : memref<2x16x16xbf16, #tpu.memory_space<any>>) target(%74 : memref<2x16x16xbf16, #tpu.memory_space<vmem>>) target_semaphore(%76 : memref<!tpu.dma_semaphore, #tpu.memory_space<semaphore_mem>>)
    } else {
    }
    %c1_i32 = arith.constant 1 : i32
    %8 = arith.cmpi slt, %arg2, %c1_i32 : i32
    %9 = arith.extui %8 : i1 to i32
    %c1_i32_4 = arith.constant 1 : i32
    %c0_i32_5 = arith.constant 0 : i32
    %10 = arith.cmpi ne, %9, %c0_i32_5 : i32
    scf.if %10 {
      %c0_i32_43 = arith.constant 0 : i32
      %c0_i32_44 = arith.constant 0 : i32
      %72 = tpu.memref_slice %arg3[%arg0, %4, %c0_i32_43, %c0_i32_44] : memref<2x16x16x16xbf16, #tpu.memory_space<any>> -> memref<1x2x16x16xbf16, #tpu.memory_space<any>>
      %73 = tpu.memref_squeeze %72 : memref<1x2x16x16xbf16, #tpu.memory_space<any>> -> memref<2x16x16xbf16, #tpu.memory_space<any>>
      %c2_i32_45 = arith.constant 2 : i32
      %c0_i32_46 = arith.constant 0 : i32
      %c0_i32_47 = arith.constant 0 : i32
      %74 = tpu.memref_slice %arg11[%c2_i32_45, %c0_i32_46, %c0_i32_47] : memref<4x16x16xbf16, #tpu.memory_space<vmem>> -> memref<2x16x16xbf16, #tpu.memory_space<vmem>>
      %75 = tpu.memref_slice %arg12[%c1_i32_4] : memref<2x!tpu.dma_semaphore, #tpu.memory_space<semaphore_mem>> -> memref<1x!tpu.dma_semaphore, #tpu.memory_space<semaphore_mem>>
      %76 = tpu.memref_squeeze %75 : memref<1x!tpu.dma_semaphore, #tpu.memory_space<semaphore_mem>> -> memref<!tpu.dma_semaphore, #tpu.memory_space<semaphore_mem>>
      tpu.enqueue_dma source(%73 : memref<2x16x16xbf16, #tpu.memory_space<any>>) target(%74 : memref<2x16x16xbf16, #tpu.memory_space<vmem>>) target_semaphore(%76 : memref<!tpu.dma_semaphore, #tpu.memory_space<semaphore_mem>>)
    } else {
    }
    %c0_i32_6 = arith.constant 0 : i32
    %11 = arith.cmpi eq, %arg2, %c0_i32_6 : i32
    %12 = arith.extui %11 : i1 to i32
    %c0_i32_7 = arith.constant 0 : i32
    %13 = arith.cmpi ne, %12, %c0_i32_7 : i32
    scf.if %13 {
      %cst_43 = arith.constant 0.000000e+00 : bf16
      %72 = vector.broadcast %cst_43 : bf16 to vector<2x16x16xbf16>
      %c0_44 = arith.constant 0 : index
      %c0_45 = arith.constant 0 : index
      %c0_46 = arith.constant 0 : index
      %73 = vector.load %arg11[%c0_44, %c0_45, %c0_46] : memref<4x16x16xbf16, #tpu.memory_space<vmem>>, vector<2x16x16xbf16>
      tpu.vector_store %arg11[%c0_44, %c0_45, %c0_46], %72 {strides = array<i32>} : memref<4x16x16xbf16, #tpu.memory_space<vmem>>, vector<2x16x16xbf16>,
    } else {
    }
    %c1_i32_8 = arith.constant 1 : i32
    %14 = arith.cmpi eq, %arg2, %c1_i32_8 : i32
    %15 = arith.extui %14 : i1 to i32
    %c0_i32_9 = arith.constant 0 : i32
    %16 = arith.cmpi ne, %15, %c0_i32_9 : i32
    scf.if %16 {
      %cst_43 = arith.constant 0.000000e+00 : bf16
      %72 = vector.broadcast %cst_43 : bf16 to vector<2x16x16xbf16>
      %c2_44 = arith.constant 2 : index
      %c0_45 = arith.constant 0 : index
      %c0_46 = arith.constant 0 : index
      %73 = vector.load %arg11[%c2_44, %c0_45, %c0_46] : memref<4x16x16xbf16, #tpu.memory_space<vmem>>, vector<2x16x16xbf16>
      tpu.vector_store %arg11[%c2_44, %c0_45, %c0_46], %72 {strides = array<i32>} : memref<4x16x16xbf16, #tpu.memory_space<vmem>>, vector<2x16x16xbf16>,
    } else {
    }
    %c0_i32_10 = arith.constant 0 : i32
    %17 = arith.cmpi sgt, %arg2, %c0_i32_10 : i32
    %18 = arith.extui %17 : i1 to i32
    %c0_i32_11 = arith.constant 0 : i32
    %c0_i32_12 = arith.constant 0 : i32
    %19 = arith.cmpi ne, %18, %c0_i32_12 : i32
    scf.if %19 {
      %c0_i32_43 = arith.constant 0 : i32
      %c0_i32_44 = arith.constant 0 : i32
      %72 = tpu.memref_slice %arg3[%arg0, %2, %c0_i32_43, %c0_i32_44] : memref<2x16x16x16xbf16, #tpu.memory_space<any>> -> memref<1x2x16x16xbf16, #tpu.memory_space<any>>
      %73 = tpu.memref_squeeze %72 : memref<1x2x16x16xbf16, #tpu.memory_space<any>> -> memref<2x16x16xbf16, #tpu.memory_space<any>>
      %c0_i32_45 = arith.constant 0 : i32
      %c0_i32_46 = arith.constant 0 : i32
      %c0_i32_47 = arith.constant 0 : i32
      %74 = tpu.memref_slice %arg11[%c0_i32_45, %c0_i32_46, %c0_i32_47] : memref<4x16x16xbf16, #tpu.memory_space<vmem>> -> memref<2x16x16xbf16, #tpu.memory_space<vmem>>
      %75 = tpu.memref_slice %arg12[%c0_i32_11] : memref<2x!tpu.dma_semaphore, #tpu.memory_space<semaphore_mem>> -> memref<1x!tpu.dma_semaphore, #tpu.memory_space<semaphore_mem>>
      %76 = tpu.memref_squeeze %75 : memref<1x!tpu.dma_semaphore, #tpu.memory_space<semaphore_mem>> -> memref<!tpu.dma_semaphore, #tpu.memory_space<semaphore_mem>>
      tpu.wait_dma2 semaphore(%76 : memref<!tpu.dma_semaphore, #tpu.memory_space<semaphore_mem>>) src(%73 : memref<2x16x16xbf16, #tpu.memory_space<any>>) dst(%74 : memref<2x16x16xbf16, #tpu.memory_space<vmem>>)
    } else {
    }
    %c1_i32_13 = arith.constant 1 : i32
    %20 = arith.cmpi slt, %arg2, %c1_i32_13 : i32
    %21 = arith.extui %20 : i1 to i32
    %c1_i32_14 = arith.constant 1 : i32
    %c0_i32_15 = arith.constant 0 : i32
    %22 = arith.cmpi ne, %21, %c0_i32_15 : i32
    scf.if %22 {
      %c0_i32_43 = arith.constant 0 : i32
      %c0_i32_44 = arith.constant 0 : i32
      %72 = tpu.memref_slice %arg3[%arg0, %4, %c0_i32_43, %c0_i32_44] : memref<2x16x16x16xbf16, #tpu.memory_space<any>> -> memref<1x2x16x16xbf16, #tpu.memory_space<any>>
      %73 = tpu.memref_squeeze %72 : memref<1x2x16x16xbf16, #tpu.memory_space<any>> -> memref<2x16x16xbf16, #tpu.memory_space<any>>
      %c2_i32_45 = arith.constant 2 : i32
      %c0_i32_46 = arith.constant 0 : i32
      %c0_i32_47 = arith.constant 0 : i32
      %74 = tpu.memref_slice %arg11[%c2_i32_45, %c0_i32_46, %c0_i32_47] : memref<4x16x16xbf16, #tpu.memory_space<vmem>> -> memref<2x16x16xbf16, #tpu.memory_space<vmem>>
      %75 = tpu.memref_slice %arg12[%c1_i32_14] : memref<2x!tpu.dma_semaphore, #tpu.memory_space<semaphore_mem>> -> memref<1x!tpu.dma_semaphore, #tpu.memory_space<semaphore_mem>>
      %76 = tpu.memref_squeeze %75 : memref<1x!tpu.dma_semaphore, #tpu.memory_space<semaphore_mem>> -> memref<!tpu.dma_semaphore, #tpu.memory_space<semaphore_mem>>
      tpu.wait_dma2 semaphore(%76 : memref<!tpu.dma_semaphore, #tpu.memory_space<semaphore_mem>>) src(%73 : memref<2x16x16xbf16, #tpu.memory_space<any>>) dst(%74 : memref<2x16x16xbf16, #tpu.memory_space<vmem>>)
    } else {
    }
    %c0 = arith.constant 0 : index
    %c0_16 = arith.constant 0 : index
    %c0_17 = arith.constant 0 : index
    %23 = vector.load %arg11[%c0, %c0_16, %c0_17] : memref<4x16x16xbf16, #tpu.memory_space<vmem>>, vector<2x16x16xbf16>
    %c0_18 = arith.constant 0 : index
    %c0_19 = arith.constant 0 : index
    %c0_20 = arith.constant 0 : index
    %c0_21 = arith.constant 0 : index
    %24 = vector.load %arg4[%c0_18, %c0_19, %c0_20, %c0_21] : memref<1x8x16x16xbf16, #tpu.memory_space<vmem>>, vector<1x8x16x16xbf16>
    %25 = vector.shape_cast %24 : vector<1x8x16x16xbf16> to vector<8x16x16xbf16>
    %c2 = arith.constant 2 : index
    %c0_22 = arith.constant 0 : index
    %c0_23 = arith.constant 0 : index
    %26 = vector.load %arg11[%c2, %c0_22, %c0_23] : memref<4x16x16xbf16, #tpu.memory_space<vmem>>, vector<2x16x16xbf16>
    %27 = tpu.concatenate %23, %25, %26 in 0 : vector<2x16x16xbf16>, vector<8x16x16xbf16>, vector<2x16x16xbf16> -> vector<12x16x16xbf16>
    %cst = arith.constant 0.000000e+00 : bf16
    %28 = vector.broadcast %cst : bf16 to vector<12x1x16xbf16>
    %29 = vector.extract_strided_slice %27 {offsets = [0, 0, 0], sizes = [12, 15, 16], strides = [1, 1, 1]} : vector<12x16x16xbf16> to vector<12x15x16xbf16>
    %30 = tpu.concatenate %28, %29 in 1 : vector<12x1x16xbf16>, vector<12x15x16xbf16> -> vector<12x16x16xbf16>
    %31 = vector.extract_strided_slice %27 {offsets = [0, 1, 0], sizes = [12, 15, 16], strides = [1, 1, 1]} : vector<12x16x16xbf16> to vector<12x15x16xbf16>
    %32 = tpu.concatenate %31, %28 in 1 : vector<12x15x16xbf16>, vector<12x1x16xbf16> -> vector<12x16x16xbf16>
    %cst_24 = arith.constant 0.000000e+00 : f32
    %33 = vector.broadcast %cst_24 : f32 to vector<160x32xf32>
    %34 = vector.extract_strided_slice %30 {offsets = [0, 0, 0], sizes = [10, 16, 16], strides = [1, 1, 1]} : vector<12x16x16xbf16> to vector<10x16x16xbf16>
    %35 = vector.extract_strided_slice %30 {offsets = [1, 0, 0], sizes = [10, 16, 16], strides = [1, 1, 1]} : vector<12x16x16xbf16> to vector<10x16x16xbf16>
    %36 = vector.extract_strided_slice %30 {offsets = [2, 0, 0], sizes = [10, 16, 16], strides = [1, 1, 1]} : vector<12x16x16xbf16> to vector<10x16x16xbf16>
    %37 = tpu.concatenate %34, %35, %36 in 2 : vector<10x16x16xbf16>, vector<10x16x16xbf16>, vector<10x16x16xbf16> -> vector<10x16x48xbf16>
    %38 = vector.shape_cast %37 : vector<10x16x48xbf16> to vector<160x48xbf16>
    %c0_25 = arith.constant 0 : index
    %c0_26 = arith.constant 0 : index
    %c0_27 = arith.constant 0 : index
    %39 = vector.load %arg5[%c0_25, %c0_26, %c0_27] : memref<3x48x32xbf16, #tpu.memory_space<vmem>>, vector<1x48x32xbf16>
    %40 = vector.shape_cast %39 : vector<1x48x32xbf16> to vector<48x32xbf16>
    %cst_28 = arith.constant dense<0.000000e+00> : vector<160x32xf32>
    %41 = tpu.matmul %38, %40, %cst_28 {dimension_numbers = #tpu.dot_dimension_numbers<[1], [0], [0], [1], [0, 0, 1, 1], [], []>} : vector<160x48xbf16>, vector<48x32xbf16>, vector<160x32xf32> -> vector<160x32xf32>
    %42 = arith.addf %33, %41 : vector<160x32xf32>
    %43 = vector.extract_strided_slice %27 {offsets = [0, 0, 0], sizes = [10, 16, 16], strides = [1, 1, 1]} : vector<12x16x16xbf16> to vector<10x16x16xbf16>
    %44 = vector.extract_strided_slice %27 {offsets = [1, 0, 0], sizes = [10, 16, 16], strides = [1, 1, 1]} : vector<12x16x16xbf16> to vector<10x16x16xbf16>
    %45 = vector.extract_strided_slice %27 {offsets = [2, 0, 0], sizes = [10, 16, 16], strides = [1, 1, 1]} : vector<12x16x16xbf16> to vector<10x16x16xbf16>
    %46 = tpu.concatenate %43, %44, %45 in 2 : vector<10x16x16xbf16>, vector<10x16x16xbf16>, vector<10x16x16xbf16> -> vector<10x16x48xbf16>
    %47 = vector.shape_cast %46 : vector<10x16x48xbf16> to vector<160x48xbf16>
    %c1 = arith.constant 1 : index
    %c0_29 = arith.constant 0 : index
    %c0_30 = arith.constant 0 : index
    %48 = vector.load %arg5[%c1, %c0_29, %c0_30] : memref<3x48x32xbf16, #tpu.memory_space<vmem>>, vector<1x48x32xbf16>
    %49 = vector.shape_cast %48 : vector<1x48x32xbf16> to vector<48x32xbf16>
    %cst_31 = arith.constant dense<0.000000e+00> : vector<160x32xf32>
    %50 = tpu.matmul %47, %49, %cst_31 {dimension_numbers = #tpu.dot_dimension_numbers<[1], [0], [0], [1], [0, 0, 1, 1], [], []>} : vector<160x48xbf16>, vector<48x32xbf16>, vector<160x32xf32> -> vector<160x32xf32>
    %51 = arith.addf %42, %50 : vector<160x32xf32>
    %52 = vector.extract_strided_slice %32 {offsets = [0, 0, 0], sizes = [10, 16, 16], strides = [1, 1, 1]} : vector<12x16x16xbf16> to vector<10x16x16xbf16>
    %53 = vector.extract_strided_slice %32 {offsets = [1, 0, 0], sizes = [10, 16, 16], strides = [1, 1, 1]} : vector<12x16x16xbf16> to vector<10x16x16xbf16>
    %54 = vector.extract_strided_slice %32 {offsets = [2, 0, 0], sizes = [10, 16, 16], strides = [1, 1, 1]} : vector<12x16x16xbf16> to vector<10x16x16xbf16>
    %55 = tpu.concatenate %52, %53, %54 in 2 : vector<10x16x16xbf16>, vector<10x16x16xbf16>, vector<10x16x16xbf16> -> vector<10x16x48xbf16>
    %56 = vector.shape_cast %55 : vector<10x16x48xbf16> to vector<160x48xbf16>
    %c2_32 = arith.constant 2 : index
    %c0_33 = arith.constant 0 : index
    %c0_34 = arith.constant 0 : index
    %57 = vector.load %arg5[%c2_32, %c0_33, %c0_34] : memref<3x48x32xbf16, #tpu.memory_space<vmem>>, vector<1x48x32xbf16>
    %58 = vector.shape_cast %57 : vector<1x48x32xbf16> to vector<48x32xbf16>
    %cst_35 = arith.constant dense<0.000000e+00> : vector<160x32xf32>
    %59 = tpu.matmul %56, %58, %cst_35 {dimension_numbers = #tpu.dot_dimension_numbers<[1], [0], [0], [1], [0, 0, 1, 1], [], []>} : vector<160x48xbf16>, vector<48x32xbf16>, vector<160x32xf32> -> vector<160x32xf32>
    %60 = arith.addf %51, %59 : vector<160x32xf32>
    %c0_i32_36 = arith.constant 0 : i32
    %61 = arith.cmpi eq, %arg1, %c0_i32_36 : i32
    %c0_i32_37 = arith.constant 0 : i32
    %62 = arith.cmpi eq, %arg2, %c0_i32_37 : i32
    %63 = arith.andi %61, %62 : i1
    %64 = arith.extui %63 : i1 to i32
    %c0_i32_38 = arith.constant 0 : i32
    %65 = arith.cmpi ne, %64, %c0_i32_38 : i32
    scf.if %65 {
      %cst_43 = arith.constant 0.000000e+00 : f32
      %72 = vector.broadcast %cst_43 : f32 to vector<1x32xf32>
      %c0_44 = arith.constant 0 : index
      %c0_45 = arith.constant 0 : index
      %73 = vector.load %arg13[%c0_44, %c0_45] : memref<1x32xf32, #tpu.memory_space<vmem>>, vector<1x32xf32>
      tpu.vector_store %arg13[%c0_44, %c0_45], %72 {strides = array<i32>} : memref<1x32xf32, #tpu.memory_space<vmem>>, vector<1x32xf32>,
      %cst_46 = arith.constant 0.000000e+00 : f32
      %74 = vector.broadcast %cst_46 : f32 to vector<1x32xf32>
      %c0_47 = arith.constant 0 : index
      %c0_48 = arith.constant 0 : index
      %75 = vector.load %arg14[%c0_47, %c0_48] : memref<1x32xf32, #tpu.memory_space<vmem>>, vector<1x32xf32>
      tpu.vector_store %arg14[%c0_47, %c0_48], %74 {strides = array<i32>} : memref<1x32xf32, #tpu.memory_space<vmem>>, vector<1x32xf32>,
    } else {
    }
    %c0_i32_39 = arith.constant 0 : i32
    %66 = arith.cmpi eq, %arg1, %c0_i32_39 : i32
    %67 = arith.extui %66 : i1 to i32
    %c0_i32_40 = arith.constant 0 : i32
    %68 = arith.cmpi ne, %67, %c0_i32_40 : i32
    scf.if %68 {
      %72 = vector.extract_strided_slice %60 {offsets = [16, 0], sizes = [128, 32], strides = [1, 1]} : vector<160x32xf32> to vector<128x32xf32>
      %c0_43 = arith.constant 0 : index
      %c0_44 = arith.constant 0 : index
      %73 = vector.load %arg13[%c0_43, %c0_44] : memref<1x32xf32, #tpu.memory_space<vmem>>, vector<1x32xf32>
      %cst_45 = arith.constant dense<0.000000e+00> : vector<32xf32>
      %74 = vector.multi_reduction <add>, %72, %cst_45 [0] : vector<128x32xf32> to vector<32xf32>
      %75 = vector.shape_cast %74 : vector<32xf32> to vector<1x32xf32>
      %76 = arith.addf %73, %75 : vector<1x32xf32>
      %c0_46 = arith.constant 0 : index
      %c0_47 = arith.constant 0 : index
      %77 = vector.load %arg13[%c0_46, %c0_47] : memref<1x32xf32, #tpu.memory_space<vmem>>, vector<1x32xf32>
      tpu.vector_store %arg13[%c0_46, %c0_47], %76 {strides = array<i32>} : memref<1x32xf32, #tpu.memory_space<vmem>>, vector<1x32xf32>,
      %c0_48 = arith.constant 0 : index
      %c0_49 = arith.constant 0 : index
      %78 = vector.load %arg14[%c0_48, %c0_49] : memref<1x32xf32, #tpu.memory_space<vmem>>, vector<1x32xf32>
      %79 = arith.mulf %72, %72 : vector<128x32xf32>
      %cst_50 = arith.constant dense<0.000000e+00> : vector<32xf32>
      %80 = vector.multi_reduction <add>, %79, %cst_50 [0] : vector<128x32xf32> to vector<32xf32>
      %81 = vector.shape_cast %80 : vector<32xf32> to vector<1x32xf32>
      %82 = arith.addf %78, %81 : vector<1x32xf32>
      %c0_51 = arith.constant 0 : index
      %c0_52 = arith.constant 0 : index
      %83 = vector.load %arg14[%c0_51, %c0_52] : memref<1x32xf32, #tpu.memory_space<vmem>>, vector<1x32xf32>
      tpu.vector_store %arg14[%c0_51, %c0_52], %82 {strides = array<i32>} : memref<1x32xf32, #tpu.memory_space<vmem>>, vector<1x32xf32>,
    } else {
    }
    %c1_i32_41 = arith.constant 1 : i32
    %69 = arith.cmpi eq, %arg1, %c1_i32_41 : i32
    %70 = arith.extui %69 : i1 to i32
    %c0_i32_42 = arith.constant 0 : i32
    %71 = arith.cmpi ne, %70, %c0_i32_42 : i32
    scf.if %71 {
      %c0_43 = arith.constant 0 : index
      %c0_44 = arith.constant 0 : index
      %72 = vector.load %arg13[%c0_43, %c0_44] : memref<1x32xf32, #tpu.memory_space<vmem>>, vector<1x32xf32>
      %c0_45 = arith.constant 0 : index
      %c0_46 = arith.constant 0 : index
      %73 = vector.load %arg14[%c0_45, %c0_46] : memref<1x32xf32, #tpu.memory_space<vmem>>, vector<1x32xf32>
      %cst_47 = arith.constant 2.560000e+02 : f32
      %74 = vector.broadcast %cst_47 : f32 to vector<1x32xf32>
      %75 = arith.divf %72, %74 : vector<1x32xf32>
      %cst_48 = arith.constant 2.560000e+02 : f32
      %76 = vector.broadcast %cst_48 : f32 to vector<1x32xf32>
      %77 = arith.divf %73, %76 : vector<1x32xf32>
      %78 = arith.mulf %75, %75 : vector<1x32xf32>
      %79 = arith.subf %77, %78 : vector<1x32xf32>
      %c0_49 = arith.constant 0 : index
      %c0_50 = arith.constant 0 : index
      %80 = vector.load %arg6[%c0_49, %c0_50] : memref<1x32xf32, #tpu.memory_space<vmem>>, vector<1x32xf32>
      %cst_51 = arith.constant 9.99999974E-6 : f32
      %81 = vector.broadcast %cst_51 : f32 to vector<1x32xf32>
      %82 = arith.addf %79, %81 : vector<1x32xf32>
      %83 = math.rsqrt %82 : vector<1x32xf32>
      %84 = arith.mulf %80, %83 : vector<1x32xf32>
      %c0_52 = arith.constant 0 : index
      %c0_53 = arith.constant 0 : index
      %85 = vector.load %arg7[%c0_52, %c0_53] : memref<1x32xf32, #tpu.memory_space<vmem>>, vector<1x32xf32>
      %86 = arith.mulf %75, %84 : vector<1x32xf32>
      %87 = arith.subf %85, %86 : vector<1x32xf32>
      %88 = vector.broadcast %84 : vector<1x32xf32> to vector<160x32xf32>
      %89 = arith.mulf %60, %88 : vector<160x32xf32>
      %90 = vector.broadcast %87 : vector<1x32xf32> to vector<160x32xf32>
      %91 = arith.addf %89, %90 : vector<160x32xf32>
      %cst_54 = arith.constant 0.000000e+00 : f32
      %92 = vector.broadcast %cst_54 : f32 to vector<160x32xf32>
      %93 = arith.maximumf %91, %92 : vector<160x32xf32>
      %94 = vector.shape_cast %93 : vector<160x32xf32> to vector<10x16x32xf32>
      %c0_55 = arith.constant 0 : index
      %c0_56 = arith.constant 0 : index
      %c0_57 = arith.constant 0 : index
      %95 = vector.load %arg8[%c0_55, %c0_56, %c0_57] : memref<1x16x10xf32, #tpu.memory_space<vmem>>, vector<1x16x10xf32>
      %96 = vector.shape_cast %95 : vector<1x16x10xf32> to vector<16x10xf32>
      "tpu.trace_start"() <{level = 10 : i32, message = "oh,hwc->owc"}> : () -> ()
      %cst_58 = arith.constant dense<0.000000e+00> : vector<16x16x32xf32>
      %97 = tpu.matmul %96, %94, %cst_58 {dimension_numbers = #tpu.dot_dimension_numbers<[1], [0], [0], [1, 2], [0, 0, 1, 1, 1, 2], [], []>} : vector<16x10xf32>, vector<10x16x32xf32>, vector<16x16x32xf32> -> vector<16x16x32xf32>
      "tpu.trace_stop"() : () -> ()
      %c0_59 = arith.constant 0 : index
      %c0_60 = arith.constant 0 : index
      %98 = vector.load %arg9[%c0_59, %c0_60] : memref<32x16xf32, #tpu.memory_space<vmem>>, vector<32x16xf32>
      "tpu.trace_start"() <{level = 10 : i32, message = "pw,owc->opc"}> : () -> ()
      %cst_61 = arith.constant dense<0.000000e+00> : vector<16x32x32xf32>
      %99 = tpu.matmul %97, %98, %cst_61 {dimension_numbers = #tpu.dot_dimension_numbers<[1], [1], [0, 2], [0], [0, 0, 0, 2, 1, 0], [], []>} : vector<16x16x32xf32>, vector<32x16xf32>, vector<16x32x32xf32> -> vector<16x32x32xf32>
      %100 = tpu.transpose %99, [0, 2, 1] : vector<16x32x32xf32> -> vector<16x32x32xf32>
      "tpu.trace_stop"() : () -> ()
      %101 = arith.truncf %100 : vector<16x32x32xf32> to vector<16x32x32xbf16>
      %c0_62 = arith.constant 0 : index
      %c0_63 = arith.constant 0 : index
      %c0_64 = arith.constant 0 : index
      %c0_65 = arith.constant 0 : index
      %102 = vector.load %arg10[%c0_62, %c0_63, %c0_64, %c0_65] : memref<1x16x32x32xbf16, #tpu.memory_space<vmem>>, vector<1x16x32x32xbf16>
      %103 = vector.shape_cast %102 : vector<1x16x32x32xbf16> to vector<16x32x32xbf16>
      %104 = vector.shape_cast %101 : vector<16x32x32xbf16> to vector<1x16x32x32xbf16>
      tpu.vector_store %arg10[%c0_62, %c0_63, %c0_64, %c0_65], %104 {strides = array<i32>} : memref<1x16x32x32xbf16, #tpu.memory_space<vmem>>, vector<1x16x32x32xbf16>,
    } else {
    }
    return
  }
  func.func @transform_1(%arg0: i32, %arg1: i32, %arg2: i32) -> (i32, i32, i32, i32) {
    %c0_i32 = arith.constant 0 : i32
    %c0_i32_0 = arith.constant 0 : i32
    %c0_i32_1 = arith.constant 0 : i32
    return %arg0, %arg2, %c0_i32, %c0_i32_0 : i32, i32, i32, i32
  }
  func.func @transform_2(%arg0: i32, %arg1: i32, %arg2: i32) -> (i32, i32, i32) {
    %c0_i32 = arith.constant 0 : i32
    %c0_i32_0 = arith.constant 0 : i32
    %c0_i32_1 = arith.constant 0 : i32
    %c0_i32_2 = arith.constant 0 : i32
    return %c0_i32, %c0_i32_0, %c0_i32_1 : i32, i32, i32
  }
  func.func @transform_3(%arg0: i32, %arg1: i32, %arg2: i32) -> (i32, i32) {
    %c0_i32 = arith.constant 0 : i32
    %c0_i32_0 = arith.constant 0 : i32
    %c0_i32_1 = arith.constant 0 : i32
    return %c0_i32, %c0_i32_0 : i32, i32
  }
  func.func @transform_4(%arg0: i32, %arg1: i32, %arg2: i32) -> (i32, i32) {
    %c0_i32 = arith.constant 0 : i32
    %c0_i32_0 = arith.constant 0 : i32
    %c0_i32_1 = arith.constant 0 : i32
    return %c0_i32, %c0_i32_0 : i32, i32
  }
  func.func @transform_5(%arg0: i32, %arg1: i32, %arg2: i32) -> (i32, i32, i32) {
    %c0_i32 = arith.constant 0 : i32
    %c0_i32_0 = arith.constant 0 : i32
    %c0_i32_1 = arith.constant 0 : i32
    return %arg2, %c0_i32, %c0_i32_0 : i32, i32, i32
  }
  func.func @transform_6(%arg0: i32, %arg1: i32, %arg2: i32) -> (i32, i32) {
    %c0_i32 = arith.constant 0 : i32
    %c0_i32_0 = arith.constant 0 : i32
    %c0_i32_1 = arith.constant 0 : i32
    return %c0_i32, %c0_i32_0 : i32, i32
  }
  func.func @transform_7(%arg0: i32, %arg1: i32, %arg2: i32) -> (i32, i32, i32, i32) {
    %0 = arith.muli %arg1, %arg2 : i32
    %c0_i32 = arith.constant 0 : i32
    %c0_i32_0 = arith.constant 0 : i32
    %c0_i32_1 = arith.constant 0 : i32
    return %arg0, %0, %c0_i32, %c0_i32_0 : i32, i32, i32, i32
  }
}

</mosaic_0001>

<llo_original>
// kernel: tpu_custom_call.1
$region0: #{tpu_custom_call.1}
  #allocation0 [shape = 'u32[]', space=smem, size = 0x4, offset = 0x4, fixed_abs, tag = 'smem constant byte address 0x4 - core index']
  #allocation1 [shape = 'u32[72,128]{1,0:T(1,128)}', space=vmem, size = 0x9000, scoped, tag = 'internal scratch']
  #allocation2 [shape = 'bf16[4,16,16]{2,1,0:T(8,128)(2,1)}', space=vmem, size = 0x4000, scoped, tag = 'scratch operand']
  #allocation3 [shape = 's32[2]{0}', space=sflag, size = 0x8, scoped, tag = 'scratch operand']
  #allocation4 [shape = 'f32[1,32]{1,0:T(1,128)}', space=vmem, size = 0x200, scoped, tag = 'scratch operand']
  #allocation5 [shape = 'f32[1,32]{1,0:T(1,128)}', space=vmem, size = 0x200, scoped, tag = 'scratch operand']
  #allocation10 [shape = 's32[]', space=sflag, size = 0x4, offset = 0, fixed_abs, tag = 'sflag constant byte address 0x0 - dummy sync flag']
  #allocation11 [shape = 's32[]', space=sflag, size = 0x4, offset = 0, fixed_abs, tag = 'sflag constant byte address 0x0 - dummy sync flag']
  #allocation12 [shape = 'u32[]', space=smem, size = 0x4, offset = 0x44, fixed_abs, tag = 'smem constant byte address 0x44 - assertion arg 0']
  #allocation13 [shape = 'u32[]', space=smem, size = 0x4, offset = 0x48, fixed_abs, tag = 'smem constant byte address 0x48 - assertion arg 1']
  #allocation14 [shape = 's32[]', space=sflag, size = 0x4, offset = 0, fixed_abs, tag = 'sflag constant byte address 0x0 - dummy sync flag']
  #allocation15 [shape = 's32[]', space=sflag, size = 0x4, offset = 0, fixed_abs, tag = 'sflag constant byte address 0x0 - dummy sync flag']
  %s0 = inlined_call_operand.hbm [shape: bf16[2,16,16,16], index: 0, kind: input, shape index: {}]
  %s1 = inlined_call_operand.hbm [shape: bf16[2,16,16,16], index: 1, kind: input, shape index: {}]
  %s2 = inlined_call_operand.vmem [shape: bf16[3,48,32], index: 2, kind: input, shape index: {}]
  %s3 = inlined_call_operand.vmem [shape: f32[1,32], index: 3, kind: input, shape index: {}]
  %s4 = inlined_call_operand.vmem [shape: f32[1,32], index: 4, kind: input, shape index: {}]
  %s5 = inlined_call_operand.vmem [shape: f32[2,16,10], index: 5, kind: input, shape index: {}]
  %s6 = inlined_call_operand.vmem [shape: f32[32,16], index: 6, kind: input, shape index: {}]
  %s7 = inlined_call_operand.hbm [shape: bf16[2,32,32,32], index: 7, kind: output, shape index: {}]
  %s8 = sld [smem:[#allocation0]]
  $region105: #{tpu_custom_call.1} parent=0
    _
  %s10 = ssub.s32 1, %s8
  %s11 = scalar_select 0, %s10, %s8
  $region1: #{tpu_custom_call.1} parent=0
    #allocation6 [shape = 'u8[65536]{0}', space=vmem, size = 0x10000, scoped, tag = 'input window, operand 1']
    #allocation7 [shape = 's32[2]{0}', space=sflag, size = 0x8, scoped, tag = 'scoped memory for tpu_custom_call.1']
    #allocation8 [shape = 's32[2]{0}', space=sflag, size = 0x8, scoped, tag = 'scoped memory for tpu_custom_call.1']
    #allocation9 [shape = 'u8[262144]{0}', space=vmem, size = 0x40000, scoped, tag = 'output window, operand 0']
    %12 = vsyncpa [#allocation7], 0
    %s13 = scalar_lea.sflag [#allocation7], 1
    %14 = vsyncpa %s13, 0
    %15 = vsyncpa [#allocation8], 0
    %s16 = scalar_lea.sflag [#allocation8], 1
    %17 = vsyncpa %s16, 0
    loop: start=0, step=1, limit=10
    $region2: #{tpu_custom_call.1} parent=1 // loop_pre_header
      _
    $region3: #{tpu_custom_call.1} parent=1 // loop_header
      %s19 = sphi 0, %s23
      %p20 = scmp.ge.s32.totalorder %s19, 10
      %s26 = sphi 0, %s45
      %s27 = sphi 0, %s41
      %s28 = sphi 0, %s37
      %s29 = sphi 0, %s26
      %s30 = sphi 0, %s27
      %s31 = sphi 0, %s28
      %s32 = sphi 0, %s29
      %s33 = sphi 0, %s30
      %s34 = sphi 0, %s31
      %s50 = sphi 0, %s52
      %s53 = sphi 0, %s50
      %s54 = sphi 0, %s53
      %s70 = sphi 0, %s54
      %s74 = sphi 0, %s74
      %s76 = sphi 0, %s74
      %s77 = sphi 0, %s76
      %s91 = sphi 0, %s77
      %s95 = sphi 0, %s95
      %s97 = sphi 0, %s95
      %s98 = sphi 0, %s97
      %s112 = sphi 0, %s98
      %s116 = sphi 0, %s116
      %s118 = sphi 0, %s116
      %s119 = sphi 0, %s118
      %s133 = sphi 0, %s119
      %s139 = sphi 0, %s141
      %s142 = sphi 0, %s139
      %s143 = sphi 0, %s142
      %s159 = sphi 0, %s143
      %s163 = sphi 0, %s163
      %s165 = sphi 0, %s163
      %s166 = sphi 0, %s165
      %s180 = sphi 0, %s166
      %s190 = sphi 0, %s192
      %s193 = sphi 0, %s190
      %s194 = sphi 0, %s193
      %s210 = sphi 0, %s194
    $region4: #{tpu_custom_call.1} parent=1 // loop_header_branch
      %22 = sbr.rel (%p20) target = $region8
    $region5: #{tpu_custom_call.1} parent=1 // loop_body
      %s24 = ssub.s32 %s19, 1
      %s25 = ssub.s32 %s19, 2
      %s35 = sadd.s32 1, %s28
      %p36 = scmp.ge.s32.totalorder %s35, 2
      %s37 = scalar_select %p36, 0, %s35
      %s38 = sadd.s32 1, %s27
      %s39 = scalar_select %p36, %s38, %s27
      %p40 = scmp.ge.s32.totalorder %s39, 2
      %s41 = scalar_select %p40, 0, %s39
      %s42 = sadd.s32 1, %s26
      %s43 = scalar_select %p40, %s42, %s26
      %p44 = scmp.ge.s32.totalorder %s43, 2
      %s45 = scalar_select %p44, 0, %s43
      %s46 = ssub.s32 %s26, %s45
      %s47 = ssub.s32 %s28, %s37
      %s48 = sor.u32 %s46, %s47
      %p49 = scmp.eq.s32.totalorder %s48, 0
      %s51 = sadd.s32 %s50, 1
      %s52 = scalar_select %p49, %s50, %s51
      %p55 = pneg %p49
      %p56 = scmp.eq.s32.totalorder %s19, 7
      %p57 = por %p55, %p56
      %p58 = scmp.ne.s32.totalorder %s50, %s53
      %p59 = scmp.eq.s32.totalorder %s19, 0
      %p60 = por %p58, %p59
      %p61 = scmp.ne.s32.totalorder %s50, %s53
      %p62 = scmp.eq.s32.totalorder %s24, 7
      %p63 = por %p61, %p62
      %p64 = scmp.ne.s32.totalorder %s53, %s54
      %p65 = scmp.eq.s32.totalorder %s24, 0
      %p66 = por %p64, %p65
      %p67 = scmp.ne.s32.totalorder %s53, %s54
      %p68 = scmp.eq.s32.totalorder %s25, 7
      %p69 = por %p67, %p68
      %p71 = scmp.ne.s32.totalorder %s54, %s70
      %p72 = scmp.eq.s32.totalorder %s25, 0
      %p73 = por %p71, %p72
      %s75 = sadd.s32 %s74, 1
      %p78 = scmp.eq.s32.totalorder %s19, 7
      %p79 = scmp.ne.s32.totalorder %s74, %s76
      %p80 = scmp.eq.s32.totalorder %s19, 0
      %p81 = por %p79, %p80
      %p82 = scmp.ne.s32.totalorder %s74, %s76
      %p83 = scmp.eq.s32.totalorder %s24, 7
      %p84 = por %p82, %p83
      %p85 = scmp.ne.s32.totalorder %s76, %s77
      %p86 = scmp.eq.s32.totalorder %s24, 0
      %p87 = por %p85, %p86
      %p88 = scmp.ne.s32.totalorder %s76, %s77
      %p89 = scmp.eq.s32.totalorder %s25, 7
      %p90 = por %p88, %p89
      %p92 = scmp.ne.s32.totalorder %s77, %s91
      %p93 = scmp.eq.s32.totalorder %s25, 0
      %p94 = por %p92, %p93
      %s96 = sadd.s32 %s95, 1
      %p99 = scmp.eq.s32.totalorder %s19, 7
      %p100 = scmp.ne.s32.totalorder %s95, %s97
      %p101 = scmp.eq.s32.totalorder %s19, 0
      %p102 = por %p100, %p101
      %p103 = scmp.ne.s32.totalorder %s95, %s97
      %p104 = scmp.eq.s32.totalorder %s24, 7
      %p105 = por %p103, %p104
      %p106 = scmp.ne.s32.totalorder %s97, %s98
      %p107 = scmp.eq.s32.totalorder %s24, 0
      %p108 = por %p106, %p107
      %p109 = scmp.ne.s32.totalorder %s97, %s98
      %p110 = scmp.eq.s32.totalorder %s25, 7
      %p111 = por %p109, %p110
      %p113 = scmp.ne.s32.totalorder %s98, %s112
      %p114 = scmp.eq.s32.totalorder %s25, 0
      %p115 = por %p113, %p114
      %s117 = sadd.s32 %s116, 1
      %p120 = scmp.eq.s32.totalorder %s19, 7
      %p121 = scmp.ne.s32.totalorder %s116, %s118
      %p122 = scmp.eq.s32.totalorder %s19, 0
      %p123 = por %p121, %p122
      %p124 = scmp.ne.s32.totalorder %s116, %s118
      %p125 = scmp.eq.s32.totalorder %s24, 7
      %p126 = por %p124, %p125
      %p127 = scmp.ne.s32.totalorder %s118, %s119
      %p128 = scmp.eq.s32.totalorder %s24, 0
      %p129 = por %p127, %p128
      %p130 = scmp.ne.s32.totalorder %s118, %s119
      %p131 = scmp.eq.s32.totalorder %s25, 7
      %p132 = por %p130, %p131
      %p134 = scmp.ne.s32.totalorder %s119, %s133
      %p135 = scmp.eq.s32.totalorder %s25, 0
      %p136 = por %p134, %p135
      %s137 = ssub.s32 %s28, %s37
      %p138 = scmp.eq.s32.totalorder %s137, 0
      %s140 = sadd.s32 %s139, 1
      %s141 = scalar_select %p138, %s139, %s140
      %p144 = pneg %p138
      %p145 = scmp.eq.s32.totalorder %s19, 7
      %p146 = por %p144, %p145
      %p147 = scmp.ne.s32.totalorder %s139, %s142
      %p148 = scmp.eq.s32.totalorder %s19, 0
      %p149 = por %p147, %p148
      %p150 = scmp.ne.s32.totalorder %s139, %s142
      %p151 = scmp.eq.s32.totalorder %s24, 7
      %p152 = por %p150, %p151
      %p153 = scmp.ne.s32.totalorder %s142, %s143
      %p154 = scmp.eq.s32.totalorder %s24, 0
      %p155 = por %p153, %p154
      %p156 = scmp.ne.s32.totalorder %s142, %s143
      %p157 = scmp.eq.s32.totalorder %s25, 7
      %p158 = por %p156, %p157
      %p160 = scmp.ne.s32.totalorder %s143, %s159
      %p161 = scmp.eq.s32.totalorder %s25, 0
      %p162 = por %p160, %p161
      %s164 = sadd.s32 %s163, 1
      %p167 = scmp.eq.s32.totalorder %s19, 7
      %p168 = scmp.ne.s32.totalorder %s163, %s165
      %p169 = scmp.eq.s32.totalorder %s19, 0
      %p170 = por %p168, %p169
      %p171 = scmp.ne.s32.totalorder %s163, %s165
      %p172 = scmp.eq.s32.totalorder %s24, 7
      %p173 = por %p171, %p172
      %p174 = scmp.ne.s32.totalorder %s165, %s166
      %p175 = scmp.eq.s32.totalorder %s24, 0
      %p176 = por %p174, %p175
      %p177 = scmp.ne.s32.totalorder %s165, %s166
      %p178 = scmp.eq.s32.totalorder %s25, 7
      %p179 = por %p177, %p178
      %p181 = scmp.ne.s32.totalorder %s166, %s180
      %p182 = scmp.eq.s32.totalorder %s25, 0
      %p183 = por %p181, %p182
      %s184 = smul.u32 %s27, %s28
      %s185 = smul.u32 %s41, %s37
      %s186 = ssub.s32 %s26, %s45
      %s187 = ssub.s32 %s184, %s185
      %s188 = sor.u32 %s186, %s187
      %p189 = scmp.eq.s32.totalorder %s188, 0
      %s191 = sadd.s32 %s190, 1
      %s192 = scalar_select %p189, %s190, %s191
      %p195 = pneg %p189
      %p196 = scmp.eq.s32.totalorder %s19, 7
      %p197 = por %p195, %p196
      %p198 = scmp.ne.s32.totalorder %s190, %s193
      %p199 = scmp.eq.s32.totalorder %s19, 0
      %p200 = por %p198, %p199
      %p201 = scmp.ne.s32.totalorder %s190, %s193
      %p202 = scmp.eq.s32.totalorder %s24, 7
      %p203 = por %p201, %p202
      %p204 = scmp.ne.s32.totalorder %s193, %s194
      %p205 = scmp.eq.s32.totalorder %s24, 0
      %p206 = por %p204, %p205
      %p207 = scmp.ne.s32.totalorder %s193, %s194
      %p208 = scmp.eq.s32.totalorder %s25, 7
      %p209 = por %p207, %p208
      %p211 = scmp.ne.s32.totalorder %s194, %s210
      %p212 = scmp.eq.s32.totalorder %s25, 0
      %p213 = por %p211, %p212
      %p214 = scmp.le.s32.totalorder 1, %s19
      %p215 = scmp.lt.s32.totalorder %s19, 9
      %p216 = pnand %p214, %p215
      %p217 = pneg %p216
      // Predicated region
      $region9: #{tpu_custom_call.1} parent=5 // pred_check
        _
      $region10: #{tpu_custom_call.1} parent=5 // pred_check_branch
        %219 = sbr.rel (%p216) target = $region12
      $region11: #{tpu_custom_call.1} parent=5 // pred_region
        %s220 = ssub.s32 %s19, 1
        // Predicated region
        $region13: #{tpu_custom_call.1} parent=11 // pred_check
          %p221 = pneg %p87
        $region14: #{tpu_custom_call.1} parent=11 // pred_check_branch
          %223 = sbr.rel (%p221) target = $region16
        $region15: #{tpu_custom_call.1} parent=11 // pred_region
          _
        $region16: #{tpu_custom_call.1} parent=11 // pred_fallthru
          _
        // Predicated region
        $region17: #{tpu_custom_call.1} parent=11 // pred_check
          %p224 = pneg %p108
        $region18: #{tpu_custom_call.1} parent=11 // pred_check_branch
          %226 = sbr.rel (%p224) target = $region20
        $region19: #{tpu_custom_call.1} parent=11 // pred_region
          _
        $region20: #{tpu_custom_call.1} parent=11 // pred_fallthru
          _
        // Predicated region
        $region21: #{tpu_custom_call.1} parent=11 // pred_check
          %p227 = pneg %p129
        $region22: #{tpu_custom_call.1} parent=11 // pred_check_branch
          %229 = sbr.rel (%p227) target = $region24
        $region23: #{tpu_custom_call.1} parent=11 // pred_region
          _
        $region24: #{tpu_custom_call.1} parent=11 // pred_fallthru
          _
        // Predicated region
        $region25: #{tpu_custom_call.1} parent=11 // pred_check
          %p230 = pneg %p176
        $region26: #{tpu_custom_call.1} parent=11 // pred_check_branch
          %232 = sbr.rel (%p230) target = $region28
        $region27: #{tpu_custom_call.1} parent=11 // pred_region
          _
        $region28: #{tpu_custom_call.1} parent=11 // pred_fallthru
          _
      $region12: #{tpu_custom_call.1} parent=5 // pred_fallthru
        _
      %p233 = scmp.lt.s32.totalorder %s19, 8
      // Predicated region
      $region29: #{tpu_custom_call.1} parent=5 // pred_check
        %p234 = pneg %p233
      $region30: #{tpu_custom_call.1} parent=5 // pred_check_branch
        %236 = sbr.rel (%p234) target = $region32
      $region31: #{tpu_custom_call.1} parent=5 // pred_region
        // Predicated region
        $region33: #{tpu_custom_call.1} parent=31 // pred_check
          %p237 = pneg %p60
        $region34: #{tpu_custom_call.1} parent=31 // pred_check_branch
          %239 = sbr.rel (%p237) target = $region36
        $region35: #{tpu_custom_call.1} parent=31 // pred_region
          %s240 = sand.u32 %s50, 1
          %s241 = scalar_lea.sflag [#allocation7], %s240
          %s242 = sand.u32 %s50, 1
          %s243 = smul.addr %s242, 64
          %s244 = scalar_lea.vmem [#allocation6], %s243
          %s245 = smul.u32 8, %s28
          %247 = vsyncadd %s241, 0
          %s248 = smul.addr %s245, 2
          %s249 = smul.addr %s26, 32
          %s250 = sadd.s32 %s248, %s249
          %s251 = smul.addr %s250, 4
          %s252 = scalar_lea.hbm %s1, %s251
          %s253 = sshll.u32 %s252, 4
          %s254 = int_to_ptr.hbm [resolvable:$true] %s253
          %s255 = sshll.u32 %s244, 4
          %s256 = int_to_ptr.vmem [resolvable:$true] %s255
          %261 = dma.hbm_to_vmem [thread:$0]  %s254, 1024, %s256, %s241, 64, 64, 4
        $region36: #{tpu_custom_call.1} parent=31 // pred_fallthru
          _
        // Predicated region
        $region37: #{tpu_custom_call.1} parent=31 // pred_check
          %p262 = pneg %p149
        $region38: #{tpu_custom_call.1} parent=31 // pred_check_branch
          %264 = sbr.rel (%p262) target = $region40
        $region39: #{tpu_custom_call.1} parent=31 // pred_region
          %p265 = scmp.lt.s32.totalorder %s28, 1
          %s266 = scalar_select %p265, %s28, 1
          %s267 = smul.addr %s266, 2
          %s268 = smul.addr %s267, 8
          %s269 = scalar_lea.vmem %s5, %s268
        $region40: #{tpu_custom_call.1} parent=31 // pred_fallthru
          _
      $region32: #{tpu_custom_call.1} parent=5 // pred_fallthru
        _
      %p270 = scmp.le.s32.totalorder 1, %s19
      %p271 = scmp.lt.s32.totalorder %s19, 9
      %p272 = pnand %p270, %p271
      %p273 = pneg %p272
      // Predicated region
      $region41: #{tpu_custom_call.1} parent=5 // pred_check
        _
      $region42: #{tpu_custom_call.1} parent=5 // pred_check_branch
        %275 = sbr.rel (%p272) target = $region44
      $region43: #{tpu_custom_call.1} parent=5 // pred_region
        %s276 = ssub.s32 %s19, 1
        %s277 = sand.u32 %s53, 1
        %s278 = scalar_lea.sflag [#allocation7], %s277
        %s279 = sand.u32 %s53, 1
        %s280 = smul.addr %s279, 64
        %s281 = scalar_lea.vmem [#allocation6], %s280
        // Predicated region
        $region45: #{tpu_custom_call.1} parent=43 // pred_check
          %p282 = pneg %p66
        $region46: #{tpu_custom_call.1} parent=43 // pred_check_branch
          %284 = sbr.rel (%p282) target = $region48
        $region47: #{tpu_custom_call.1} parent=43 // pred_region
          %286 = dma.done %s278, 1024
        $region48: #{tpu_custom_call.1} parent=43 // pred_fallthru
          _
        %s287 = sand.u32 %s53, 1
        %s288 = scalar_lea.sflag [#allocation7], %s287
        %s289 = sand.u32 %s53, 1
        %s290 = smul.addr %s289, 64
        %s291 = scalar_lea.vmem [#allocation6], %s290
        %p292 = pneg %p66
        %p293 = pneg %p63
        %p294 = pneg %p87
        %p295 = pneg %p84
        %p296 = pneg %p108
        %p297 = pneg %p105
        %p298 = pneg %p129
        %p299 = pneg %p126
        %p300 = scmp.lt.s32.totalorder %s31, 1
        %s301 = scalar_select %p300, %s31, 1
        %s302 = smul.addr %s301, 2
        %s303 = smul.addr %s302, 8
        %s304 = scalar_lea.vmem %s5, %s303
        %p305 = pneg %p155
        %p306 = pneg %p152
        %p307 = pneg %p176
        %p308 = pneg %p173
        %p309 = pneg %p206
        %p310 = pneg %p203
        %s311 = sand.u32 %s193, 1
        %s312 = scalar_lea.sflag [#allocation8], %s311
        %s313 = sand.u32 %s193, 1
        %s314 = smul.addr %s313, 256
        %s315 = scalar_lea.vmem [#allocation9], %s314
        %s316 = smul.u32 8, %s31
        %p317 = scmp.lt.s32.totalorder %s31, 1
        %s318 = scalar_select %p317, %s31, 1
        %s319 = smul.addr %s318, 2
        %s320 = smul.addr %s319, 8
        %s321 = scalar_lea.vmem %s5, %s320
        %s322 = smul.u32 %s30, %s31
        %s323 = smul.u32 16, %s322
        %s325 = smul.u32 %s31, 8
        %s326 = ssub.s32 %s325, 2
        %p327 = scmp.gt.s32.totalorder %s326, 0
        %s328 = scalar_select %p327, %s326, 0
        %s329 = sadd.s32 %s325, 8
        %p330 = scmp.lt.s32.totalorder %s329, 14
        %s331 = scalar_select %p330, %s329, 14
        %p332 = scmp.gt.s32.totalorder %s31, 0
        // Predicated region
        $region49: #{tpu_custom_call.1} parent=43 // pred_check
          %p333 = pneg %p332
        $region50: #{tpu_custom_call.1} parent=43 // pred_check_branch
          %335 = sbr.rel (%p333) target = $region52
        $region51: #{tpu_custom_call.1} parent=43 // pred_region
          %s336 = smul.u32 %s328, 2
          %s337 = smul.u32 %s29, 32
          %s338 = sadd.s32 %s336, %s337
          %s339 = smul.addr %s338, 4
          %s340 = scalar_lea.hbm %s0, %s339
          // Predicated region
          $region53: #{tpu_custom_call.1} parent=51 // pred_check
            _
          $region54: #{tpu_custom_call.1} parent=51 // pred_check_branch
            %342 = sbr.rel target = $region56
          $region55: #{tpu_custom_call.1} parent=51 // pred_region
            %343 = sst [smem:[#allocation12]] [#allocation11]
            %344 = sst [smem:[#allocation13]] [#allocation10]
          $region56: #{tpu_custom_call.1} parent=51 // pred_fallthru
            _
          %346 = shalt.err (0)
          %s348 = sshll.u32 %s340, 4
          %s349 = int_to_ptr.hbm [resolvable:$true] %s348
          %s350 = sshll.u32 [#allocation2], 4
          %s351 = int_to_ptr.vmem [resolvable:$true] %s350
          %353 = dma.hbm_to_vmem [thread:$0]  %s349, 256, %s351, [#allocation3]
        $region52: #{tpu_custom_call.1} parent=43 // pred_fallthru
          _
        %p354 = scmp.lt.s32.totalorder %s31, 1
        // Predicated region
        $region57: #{tpu_custom_call.1} parent=43 // pred_check
          %p355 = pneg %p354
        $region58: #{tpu_custom_call.1} parent=43 // pred_check_branch
          %357 = sbr.rel (%p355) target = $region60
        $region59: #{tpu_custom_call.1} parent=43 // pred_region
          %s358 = smul.u32 %s331, 2
          %s359 = smul.u32 %s29, 32
          %s360 = sadd.s32 %s358, %s359
          %s361 = smul.addr %s360, 4
          %s362 = scalar_lea.hbm %s0, %s361
          %s363 = scalar_lea.vmem [#allocation2], 16
          %s364 = scalar_lea.sflag [#allocation3], 1
          // Predicated region
          $region61: #{tpu_custom_call.1} parent=59 // pred_check
            _
          $region62: #{tpu_custom_call.1} parent=59 // pred_check_branch
            %366 = sbr.rel target = $region64
          $region63: #{tpu_custom_call.1} parent=59 // pred_region
            %367 = sst [smem:[#allocation12]] [#allocation15]
            %368 = sst [smem:[#allocation13]] [#allocation14]
          $region64: #{tpu_custom_call.1} parent=59 // pred_fallthru
            _
          %370 = shalt.err (0)
          %s372 = sshll.u32 %s362, 4
          %s373 = int_to_ptr.hbm [resolvable:$true] %s372
          %s374 = sshll.u32 %s363, 4
          %s375 = int_to_ptr.vmem [resolvable:$true] %s374
          %377 = dma.hbm_to_vmem [thread:$0]  %s373, 256, %s375, %s364
        $region60: #{tpu_custom_call.1} parent=43 // pred_fallthru
          _
        %p378 = scmp.eq.s32.totalorder %s31, 0
        // Predicated region
        $region65: #{tpu_custom_call.1} parent=43 // pred_check
          %p379 = pneg %p378
        $region66: #{tpu_custom_call.1} parent=43 // pred_check_branch
          %381 = sbr.rel (%p379) target = $region68
        $region67: #{tpu_custom_call.1} parent=43 // pred_region
          %vm382 = vcmask 125952
          %383 = vst.msk [vmem:[#allocation2] sm:$0xf] %vm382, 0
          %384 = vst.msk [vmem:[#allocation2 + $0x4] sm:$0xf] %vm382, 0
          %385 = vst.msk [vmem:[#allocation2 + $0x8] sm:$0xf] %vm382, 0
          %386 = vst.msk [vmem:[#allocation2 + $0xc] sm:$0xf] %vm382, 0
        $region68: #{tpu_custom_call.1} parent=43 // pred_fallthru
          _
        %p387 = scmp.eq.s32.totalorder %s31, 1
        // Predicated region
        $region69: #{tpu_custom_call.1} parent=43 // pred_check
          %p388 = pneg %p387
        $region70: #{tpu_custom_call.1} parent=43 // pred_check_branch
          %390 = sbr.rel (%p388) target = $region72
        $region71: #{tpu_custom_call.1} parent=43 // pred_region
          %s391 = scalar_lea.vmem [#allocation2], 16
          %vm392 = vcmask 125952
          %393 = vst.msk [vmem:[%s391] sm:$0xf] %vm392, 0
          %394 = vst.msk [vmem:[%s391 + $0x4] sm:$0xf] %vm392, 0
          %395 = vst.msk [vmem:[%s391 + $0x8] sm:$0xf] %vm392, 0
          %396 = vst.msk [vmem:[%s391 + $0xc] sm:$0xf] %vm392, 0
        $region72: #{tpu_custom_call.1} parent=43 // pred_fallthru
          _
        // Predicated region
        $region73: #{tpu_custom_call.1} parent=43 // pred_check
          %p397 = pneg %p332
        $region74: #{tpu_custom_call.1} parent=43 // pred_check_branch
          %399 = sbr.rel (%p397) target = $region76
        $region75: #{tpu_custom_call.1} parent=43 // pred_region
          %s400 = smul.u32 4, 2
          %s401 = smul.u32 %s400, 2
          %s402 = smul.u32 %s401, 1
          %s403 = sshll.u32 %s402, 4
          %404 = dma.done [#allocation3], %s403
        $region76: #{tpu_custom_call.1} parent=43 // pred_fallthru
          _
        // Predicated region
        $region77: #{tpu_custom_call.1} parent=43 // pred_check
          %p405 = pneg %p354
        $region78: #{tpu_custom_call.1} parent=43 // pred_check_branch
          %407 = sbr.rel (%p405) target = $region80
        $region79: #{tpu_custom_call.1} parent=43 // pred_region
          %s408 = scalar_lea.sflag [#allocation3], 1
          %s409 = smul.u32 4, 2
          %s410 = smul.u32 %s409, 2
          %s411 = smul.u32 %s410, 1
          %s412 = sshll.u32 %s411, 4
          %413 = dma.done %s408, %s412
        $region80: #{tpu_custom_call.1} parent=43 // pred_fallthru
          _
        %v414 = vld [vmem:[#allocation2] sm:$0xf]
        %v415 = vld [vmem:[#allocation2 + $0x4] sm:$0xf]
        %v416 = vld [vmem:[#allocation2 + $0x8] sm:$0xf]
        %v417 = vld [vmem:[#allocation2 + $0xc] sm:$0xf]
        %v418 = vld [vmem:[%s281] sm:$0xf]
        %v419 = vld [vmem:[%s281 + $0x4] sm:$0xf]
        %v420 = vld [vmem:[%s281 + $0x8] sm:$0xf]
        %v421 = vld [vmem:[%s281 + $0xc] sm:$0xf]
        %v422 = vld [vmem:[%s281 + $0x10] sm:$0xf]
        %v423 = vld [vmem:[%s281 + $0x14] sm:$0xf]
        %v424 = vld [vmem:[%s281 + $0x18] sm:$0xf]
        %v425 = vld [vmem:[%s281 + $0x1c] sm:$0xf]
        %v426 = vld [vmem:[%s281 + $0x20] sm:$0xf]
        %v427 = vld [vmem:[%s281 + $0x24] sm:$0xf]
        %v428 = vld [vmem:[%s281 + $0x28] sm:$0xf]
        %v429 = vld [vmem:[%s281 + $0x2c] sm:$0xf]
        %v430 = vld [vmem:[%s281 + $0x30] sm:$0xf]
        %v431 = vld [vmem:[%s281 + $0x34] sm:$0xf]
        %v432 = vld [vmem:[%s281 + $0x38] sm:$0xf]
        %v433 = vld [vmem:[%s281 + $0x3c] sm:$0xf]
        %s434 = scalar_lea.vmem [#allocation2], 16
        %v435 = vld [vmem:[%s434] sm:$0xf]
        %v436 = vld [vmem:[%s434 + $0x4] sm:$0xf]
        %v437 = vld [vmem:[%s434 + $0x8] sm:$0xf]
        %v438 = vld [vmem:[%s434 + $0xc] sm:$0xf]
        %v463 = vunpack.c.l.b16 %v414
        %v464 = vunpack.c.l.b16 %v415
        %v465 = vunpack.c.l.b16 %v416
        %v466 = vunpack.c.l.b16 %v417
        %v467 = vunpack.c.l.b16 %v418
        %v468 = vunpack.c.l.b16 %v419
        %v469 = vunpack.c.l.b16 %v420
        %v470 = vunpack.c.l.b16 %v421
        %v471 = vunpack.c.l.b16 %v422
        %v472 = vunpack.c.l.b16 %v423
        %v473 = vunpack.c.l.b16 %v424
        %v474 = vunpack.c.l.b16 %v425
        %v475 = vunpack.c.l.b16 %v426
        %v476 = vunpack.c.l.b16 %v427
        %v477 = vunpack.c.l.b16 %v428
        %v478 = vunpack.c.l.b16 %v429
        %v479 = vunpack.c.l.b16 %v430
        %v480 = vunpack.c.l.b16 %v431
        %v481 = vunpack.c.l.b16 %v432
        %v482 = vunpack.c.l.b16 %v433
        %v483 = vunpack.c.l.b16 %v435
        %v484 = vunpack.c.l.b16 %v436
        %v485 = vunpack.c.l.b16 %v437
        %v486 = vunpack.c.l.b16 %v438
        %v487 = vpack.c.b16 %v464, %v463
        %v488 = vpack.c.b16 %v466, %v465
        %v489 = vpack.c.b16 %v468, %v467
        %v490 = vpack.c.b16 %v470, %v469
        %v491 = vpack.c.b16 %v472, %v471
        %v492 = vpack.c.b16 %v474, %v473
        %v493 = vpack.c.b16 %v476, %v475
        %v494 = vpack.c.b16 %v478, %v477
        %v495 = vpack.c.b16 %v480, %v479
        %v496 = vpack.c.b16 %v482, %v481
        %v497 = vpack.c.b16 %v484, %v483
        %v498 = vpack.c.b16 %v486, %v485
        %v500 = vshrl.u32 %v487, 16
        %v502 = vrot.slane %v500, 7
        %v503 = vshll.u32 %v487, 16
        %v505 = vor.u32 %v502, %v503
        %v507 = vshrl.u32 %v488, 16
        %v509 = vrot.slane %v507, 7
        %v510 = vshll.u32 %v488, 16
        %v512 = vor.u32 %v509, %v510
        %v514 = vshrl.u32 %v489, 16
        %v516 = vrot.slane %v514, 7
        %v517 = vshll.u32 %v489, 16
        %v519 = vor.u32 %v516, %v517
        %v521 = vshrl.u32 %v490, 16
        %v523 = vrot.slane %v521, 7
        %v524 = vshll.u32 %v490, 16
        %v526 = vor.u32 %v523, %v524
        %v528 = vshrl.u32 %v491, 16
        %v530 = vrot.slane %v528, 7
        %v531 = vshll.u32 %v491, 16
        %v533 = vor.u32 %v530, %v531
        %v535 = vshrl.u32 %v492, 16
        %v537 = vrot.slane %v535, 7
        %v538 = vshll.u32 %v492, 16
        %v540 = vor.u32 %v537, %v538
        %v542 = vshrl.u32 %v493, 16
        %v544 = vrot.slane %v542, 7
        %v545 = vshll.u32 %v493, 16
        %v547 = vor.u32 %v544, %v545
        %v549 = vshrl.u32 %v494, 16
        %v551 = vrot.slane %v549, 7
        %v552 = vshll.u32 %v494, 16
        %v554 = vor.u32 %v551, %v552
        %v556 = vshrl.u32 %v495, 16
        %v558 = vrot.slane %v556, 7
        %v559 = vshll.u32 %v495, 16
        %v561 = vor.u32 %v558, %v559
        %v563 = vshrl.u32 %v496, 16
        %v565 = vrot.slane %v563, 7
        %v566 = vshll.u32 %v496, 16
        %v568 = vor.u32 %v565, %v566
        %v570 = vshrl.u32 %v497, 16
        %v572 = vrot.slane %v570, 7
        %v573 = vshll.u32 %v497, 16
        %v575 = vor.u32 %v572, %v573
        %v577 = vshrl.u32 %v498, 16
        %v579 = vrot.slane %v577, 7
        %v580 = vshll.u32 %v498, 16
        %v582 = vor.u32 %v579, %v580
        %vm595 = vcmask 1040384
        %vm596 = vsmask.f32 256
        %vm597 = vmand %vm595, %vm596
        %v598 = vsel %vm597, 0, %v505
        %v599 = vsel %vm597, 0, %v512
        %v600 = vsel %vm597, 0, %v519
        %v601 = vsel %vm597, 0, %v526
        %v602 = vsel %vm597, 0, %v533
        %v603 = vsel %vm597, 0, %v540
        %v604 = vsel %vm597, 0, %v547
        %v605 = vsel %vm597, 0, %v554
        %v606 = vsel %vm597, 0, %v561
        %v607 = vsel %vm597, 0, %v568
        %v608 = vsel %vm597, 0, %v575
        %v609 = vsel %vm597, 0, %v582
        %v610 = vrot.slane %v503, 1
        %v611 = vor.u32 %v500, %v610
        %v612 = vrot.slane %v510, 1
        %v613 = vor.u32 %v507, %v612
        %v614 = vrot.slane %v517, 1
        %v615 = vor.u32 %v514, %v614
        %v616 = vrot.slane %v524, 1
        %v617 = vor.u32 %v521, %v616
        %v618 = vrot.slane %v531, 1
        %v619 = vor.u32 %v528, %v618
        %v620 = vrot.slane %v538, 1
        %v621 = vor.u32 %v535, %v620
        %v622 = vrot.slane %v545, 1
        %v623 = vor.u32 %v542, %v622
        %v624 = vrot.slane %v552, 1
        %v625 = vor.u32 %v549, %v624
        %v626 = vrot.slane %v559, 1
        %v627 = vor.u32 %v556, %v626
        %v628 = vrot.slane %v566, 1
        %v629 = vor.u32 %v563, %v628
        %v630 = vrot.slane %v573, 1
        %v631 = vor.u32 %v570, %v630
        %v632 = vrot.slane %v580, 1
        %v633 = vor.u32 %v577, %v632
        %vm646 = vcmask 1047552
        %vm647 = vsmask.f32 7424
        %vm648 = vmand %vm646, %vm647
        %v649 = vsel %vm648, %v611, 0
        %v650 = vsel %vm648, %v613, 0
        %v651 = vsel %vm648, %v615, 0
        %v652 = vsel %vm648, %v617, 0
        %v653 = vsel %vm648, %v619, 0
        %v654 = vsel %vm648, %v621, 0
        %v655 = vsel %vm648, %v623, 0
        %v656 = vsel %vm648, %v625, 0
        %v657 = vsel %vm648, %v627, 0
        %v658 = vsel %vm648, %v629, 0
        %v659 = vsel %vm648, %v631, 0
        %v660 = vsel %vm648, %v633, 0
        %671 = vrot.lane.b32.xlu0 %v599, 16
        %v672 = vpop.permute.xlu0 %671
        %673 = vrot.lane.b32.xlu0 %v600, 16
        %v674 = vpop.permute.xlu0 %673
        %675 = vrot.lane.b32.xlu0 %v601, 16
        %v676 = vpop.permute.xlu0 %675
        %677 = vrot.lane.b32.xlu0 %v602, 16
        %v678 = vpop.permute.xlu0 %677
        %679 = vrot.lane.b32.xlu0 %v603, 16
        %v680 = vpop.permute.xlu0 %679
        %681 = vrot.lane.b32.xlu0 %v604, 16
        %v682 = vpop.permute.xlu0 %681
        %683 = vrot.lane.b32.xlu0 %v605, 16
        %v684 = vpop.permute.xlu0 %683
        %685 = vrot.lane.b32.xlu0 %v606, 16
        %v686 = vpop.permute.xlu0 %685
        %687 = vrot.lane.b32.xlu0 %v607, 16
        %v688 = vpop.permute.xlu0 %687
        %689 = vrot.lane.b32.xlu0 %v608, 16
        %v690 = vpop.permute.xlu0 %689
        %692 = vrot.lane.b32.xlu0 %v600, 32
        %v693 = vpop.permute.xlu0 %692
        %694 = vrot.lane.b32.xlu0 %v601, 32
        %v695 = vpop.permute.xlu0 %694
        %696 = vrot.lane.b32.xlu0 %v602, 32
        %v697 = vpop.permute.xlu0 %696
        %698 = vrot.lane.b32.xlu0 %v603, 32
        %v699 = vpop.permute.xlu0 %698
        %700 = vrot.lane.b32.xlu0 %v604, 32
        %v701 = vpop.permute.xlu0 %700
        %702 = vrot.lane.b32.xlu0 %v605, 32
        %v703 = vpop.permute.xlu0 %702
        %704 = vrot.lane.b32.xlu0 %v606, 32
        %v705 = vpop.permute.xlu0 %704
        %706 = vrot.lane.b32.xlu0 %v607, 32
        %v707 = vpop.permute.xlu0 %706
        %708 = vrot.lane.b32.xlu0 %v608, 32
        %v709 = vpop.permute.xlu0 %708
        %710 = vrot.lane.b32.xlu0 %v609, 32
        %v711 = vpop.permute.xlu0 %710
        %vm712 = vcmask 130048
        %v715 = vsel %vm712, %v598, %v672
        %v718 = vsel %vm712, %v599, %v674
        %v721 = vsel %vm712, %v600, %v676
        %v724 = vsel %vm712, %v601, %v678
        %v727 = vsel %vm712, %v602, %v680
        %v730 = vsel %vm712, %v603, %v682
        %v733 = vsel %vm712, %v604, %v684
        %v736 = vsel %vm712, %v605, %v686
        %v739 = vsel %vm712, %v606, %v688
        %v742 = vsel %vm712, %v607, %v690
        %vm743 = vcmask 261120
        %v745 = vsel %vm743, %v715, %v693
        %v747 = vsel %vm743, %v718, %v695
        %v749 = vsel %vm743, %v721, %v697
        %v751 = vsel %vm743, %v724, %v699
        %v753 = vsel %vm743, %v727, %v701
        %v755 = vsel %vm743, %v730, %v703
        %v757 = vsel %vm743, %v733, %v705
        %v759 = vsel %vm743, %v736, %v707
        %v761 = vsel %vm743, %v739, %v709
        %v763 = vsel %vm743, %v742, %v711
        %v764 = vld [vmem:[%s2] sm:$0xf]
        %v765 = vld [vmem:[%s2 + $0x4] sm:$0xf]
        %v766 = vld [vmem:[%s2 + $0x8] sm:$0xf]
        %v767 = vld [vmem:[%s2 + $0xc] sm:$0xf]
        %v768 = vld [vmem:[%s2 + $0x10] sm:$0xf]
        %v769 = vld [vmem:[%s2 + $0x14] sm:$0xf]
        %770 = vrot.lane.b32.xlu0 %v488, 16
        %v771 = vpop.permute.xlu0 %770
        %772 = vrot.lane.b32.xlu0 %v489, 16
        %v773 = vpop.permute.xlu0 %772
        %774 = vrot.lane.b32.xlu0 %v490, 16
        %v775 = vpop.permute.xlu0 %774
        %776 = vrot.lane.b32.xlu0 %v491, 16
        %v777 = vpop.permute.xlu0 %776
        %778 = vrot.lane.b32.xlu0 %v492, 16
        %v779 = vpop.permute.xlu0 %778
        %780 = vrot.lane.b32.xlu0 %v493, 16
        %v781 = vpop.permute.xlu0 %780
        %782 = vrot.lane.b32.xlu0 %v494, 16
        %v783 = vpop.permute.xlu0 %782
        %784 = vrot.lane.b32.xlu0 %v495, 16
        %v785 = vpop.permute.xlu0 %784
        %786 = vrot.lane.b32.xlu0 %v496, 16
        %v787 = vpop.permute.xlu0 %786
        %788 = vrot.lane.b32.xlu0 %v497, 16
        %v789 = vpop.permute.xlu0 %788
        %790 = vrot.lane.b32.xlu0 %v489, 32
        %v791 = vpop.permute.xlu0 %790
        %792 = vrot.lane.b32.xlu0 %v490, 32
        %v793 = vpop.permute.xlu0 %792
        %794 = vrot.lane.b32.xlu0 %v491, 32
        %v795 = vpop.permute.xlu0 %794
        %796 = vrot.lane.b32.xlu0 %v492, 32
        %v797 = vpop.permute.xlu0 %796
        %798 = vrot.lane.b32.xlu0 %v493, 32
        %v799 = vpop.permute.xlu0 %798
        %800 = vrot.lane.b32.xlu0 %v494, 32
        %v801 = vpop.permute.xlu0 %800
        %802 = vrot.lane.b32.xlu0 %v495, 32
        %v803 = vpop.permute.xlu0 %802
        %804 = vrot.lane.b32.xlu0 %v496, 32
        %v805 = vpop.permute.xlu0 %804
        %806 = vrot.lane.b32.xlu0 %v497, 32
        %v807 = vpop.permute.xlu0 %806
        %808 = vrot.lane.b32.xlu0 %v498, 32
        %v809 = vpop.permute.xlu0 %808
        %v811 = vsel %vm712, %v487, %v771
        %v813 = vsel %vm712, %v488, %v773
        %v815 = vsel %vm712, %v489, %v775
        %v817 = vsel %vm712, %v490, %v777
        %v819 = vsel %vm712, %v491, %v779
        %v821 = vsel %vm712, %v492, %v781
        %v823 = vsel %vm712, %v493, %v783
        %v825 = vsel %vm712, %v494, %v785
        %v827 = vsel %vm712, %v495, %v787
        %v829 = vsel %vm712, %v496, %v789
        %v831 = vsel %vm743, %v811, %v791
        %v833 = vsel %vm743, %v813, %v793
        %v835 = vsel %vm743, %v815, %v795
        %v837 = vsel %vm743, %v817, %v797
        %v839 = vsel %vm743, %v819, %v799
        %v841 = vsel %vm743, %v821, %v801
        %v843 = vsel %vm743, %v823, %v803
        %v845 = vsel %vm743, %v825, %v805
        %v847 = vsel %vm743, %v827, %v807
        %v849 = vsel %vm743, %v829, %v809
        %s850 = scalar_lea.vmem %s2, 24
        %v851 = vld [vmem:[%s850] sm:$0xf]
        %v852 = vld [vmem:[%s850 + $0x4] sm:$0xf]
        %v853 = vld [vmem:[%s850 + $0x8] sm:$0xf]
        %v854 = vld [vmem:[%s850 + $0xc] sm:$0xf]
        %v855 = vld [vmem:[%s850 + $0x10] sm:$0xf]
        %v856 = vld [vmem:[%s850 + $0x14] sm:$0xf]
        %v863 = vunpack.c.l.b16 %v851
        %v864 = vunpack.c.l.b16 %v852
        %v865 = vunpack.c.l.b16 %v853
        %v866 = vunpack.c.l.b16 %v854
        %v867 = vunpack.c.l.b16 %v855
        %v868 = vunpack.c.l.b16 %v856
        %v869 = vpack.c.b16 %v864, %v863
        %v870 = vpack.c.b16 %v866, %v865
        %v871 = vpack.c.b16 %v868, %v867
        %vm875 = vcmask 392192
        %v876 = vsel %vm875, %v831, 0
        %v878 = vsel %vm875, %v833, 0
        %v880 = vsel %vm875, %v835, 0
        %v882 = vsel %vm875, %v837, 0
        %v884 = vsel %vm875, %v839, 0
        %v886 = vsel %vm875, %v841, 0
        %v888 = vsel %vm875, %v843, 0
        %v890 = vsel %vm875, %v845, 0
        %v892 = vsel %vm875, %v847, 0
        %v894 = vsel %vm875, %v849, 0
        %896 = vmatpush.bf16.msra.mxu0 0
        %897 = vmatpush.bf16.msra.mxu0 0
        %898 = vmatpush.bf16.msra.mxu0 0
        %899 = vmatpush.bf16.msra.mxu0 0
        %900 = vmatpush.bf16.msra.mxu0 0
        %901 = vmatpush.bf16.msra.mxu0 %v871
        %902 = vmatpush.bf16.msra.mxu0 %v870
        %903 = vmatpush.bf16.msra.mxu0 %v869
        %904 = vmatmul.bf16.gmra.mxu0 %v876
        %v905 = vpop.f32.mrf.mxu0
        %v906 = vadd.f32 0.0, %v905
        %v907 = vpop.f32.mrf.mxu0
        %v908 = vadd.f32 0.0, %v907
        %909 = vmatmul.bf16.gmra.mxu0 %v878
        %v910 = vpop.f32.mrf.mxu0
        %v911 = vadd.f32 0.0, %v910
        %v912 = vpop.f32.mrf.mxu0
        %v913 = vadd.f32 0.0, %v912
        %914 = vmatmul.bf16.gmra.mxu0 %v880
        %v915 = vpop.f32.mrf.mxu0
        %v916 = vadd.f32 0.0, %v915
        %v917 = vpop.f32.mrf.mxu0
        %v918 = vadd.f32 0.0, %v917
        %919 = vmatmul.bf16.gmra.mxu0 %v882
        %v920 = vpop.f32.mrf.mxu0
        %v921 = vadd.f32 0.0, %v920
        %v922 = vpop.f32.mrf.mxu0
        %v923 = vadd.f32 0.0, %v922
        %924 = vmatmul.bf16.gmra.mxu0 %v884
        %v925 = vpop.f32.mrf.mxu0
        %v926 = vadd.f32 0.0, %v925
        %v927 = vpop.f32.mrf.mxu0
        %v928 = vadd.f32 0.0, %v927
        %929 = vmatmul.bf16.gmra.mxu0 %v886
        %v930 = vpop.f32.mrf.mxu0
        %v931 = vadd.f32 0.0, %v930
        %v932 = vpop.f32.mrf.mxu0
        %v933 = vadd.f32 0.0, %v932
        %934 = vmatmul.bf16.gmra.mxu0 %v888
        %v935 = vpop.f32.mrf.mxu0
        %v936 = vadd.f32 0.0, %v935
        %v937 = vpop.f32.mrf.mxu0
        %v938 = vadd.f32 0.0, %v937
        %939 = vmatmul.bf16.gmra.mxu0 %v890
        %v940 = vpop.f32.mrf.mxu0
        %v941 = vadd.f32 0.0, %v940
        %v942 = vpop.f32.mrf.mxu0
        %v943 = vadd.f32 0.0, %v942
        %944 = vmatmul.bf16.gmra.mxu0 %v892
        %v945 = vpop.f32.mrf.mxu0
        %v946 = vadd.f32 0.0, %v945
        %v947 = vpop.f32.mrf.mxu0
        %v948 = vadd.f32 0.0, %v947
        %949 = vmatmul.bf16.gmra.mxu0 %v894
        %v950 = vpop.f32.mrf.mxu0
        %v951 = vadd.f32 0.0, %v950
        %v952 = vpop.f32.mrf.mxu0
        %v953 = vadd.f32 0.0, %v952
        %954 = vdwg.mxu0
        %v961 = vunpack.c.l.b16 %v764
        %v962 = vunpack.c.l.b16 %v765
        %v963 = vunpack.c.l.b16 %v766
        %v964 = vunpack.c.l.b16 %v767
        %v965 = vunpack.c.l.b16 %v768
        %v966 = vunpack.c.l.b16 %v769
        %v967 = vpack.c.b16 %v962, %v961
        %v968 = vpack.c.b16 %v964, %v963
        %v969 = vpack.c.b16 %v966, %v965
        %v973 = vsel %vm875, %v745, 0
        %v975 = vsel %vm875, %v747, 0
        %v977 = vsel %vm875, %v749, 0
        %v979 = vsel %vm875, %v751, 0
        %v981 = vsel %vm875, %v753, 0
        %v983 = vsel %vm875, %v755, 0
        %v985 = vsel %vm875, %v757, 0
        %v987 = vsel %vm875, %v759, 0
        %v989 = vsel %vm875, %v761, 0
        %v991 = vsel %vm875, %v763, 0
        %993 = vmatpush.bf16.msra.mxu0 0
        %994 = vmatpush.bf16.msra.mxu0 0
        %995 = vmatpush.bf16.msra.mxu0 0
        %996 = vmatpush.bf16.msra.mxu0 0
        %997 = vmatpush.bf16.msra.mxu0 0
        %998 = vmatpush.bf16.msra.mxu0 %v969
        %999 = vmatpush.bf16.msra.mxu0 %v968
        %1000 = vmatpush.bf16.msra.mxu0 %v967
        %1001 = vmatmul.bf16.gmra.mxu0 %v973
        %v1002 = vpop.f32.mrf.mxu0
        %v1003 = vadd.f32 %v906, %v1002
        %v1004 = vpop.f32.mrf.mxu0
        %v1005 = vadd.f32 %v908, %v1004
        %1006 = vmatmul.bf16.gmra.mxu0 %v975
        %v1007 = vpop.f32.mrf.mxu0
        %v1008 = vadd.f32 %v911, %v1007
        %v1009 = vpop.f32.mrf.mxu0
        %v1010 = vadd.f32 %v913, %v1009
        %1011 = vmatmul.bf16.gmra.mxu0 %v977
        %v1012 = vpop.f32.mrf.mxu0
        %v1013 = vadd.f32 %v916, %v1012
        %v1014 = vpop.f32.mrf.mxu0
        %v1015 = vadd.f32 %v918, %v1014
        %1016 = vmatmul.bf16.gmra.mxu0 %v979
        %v1017 = vpop.f32.mrf.mxu0
        %v1018 = vadd.f32 %v921, %v1017
        %v1019 = vpop.f32.mrf.mxu0
        %v1020 = vadd.f32 %v923, %v1019
        %1021 = vmatmul.bf16.gmra.mxu0 %v981
        %v1022 = vpop.f32.mrf.mxu0
        %v1023 = vadd.f32 %v926, %v1022
        %v1024 = vpop.f32.mrf.mxu0
        %v1025 = vadd.f32 %v928, %v1024
        %1026 = vmatmul.bf16.gmra.mxu0 %v983
        %v1027 = vpop.f32.mrf.mxu0
        %v1028 = vadd.f32 %v931, %v1027
        %v1029 = vpop.f32.mrf.mxu0
        %v1030 = vadd.f32 %v933, %v1029
        %1031 = vmatmul.bf16.gmra.mxu0 %v985
        %v1032 = vpop.f32.mrf.mxu0
        %v1033 = vadd.f32 %v936, %v1032
        %v1034 = vpop.f32.mrf.mxu0
        %v1035 = vadd.f32 %v938, %v1034
        %1036 = vmatmul.bf16.gmra.mxu0 %v987
        %v1037 = vpop.f32.mrf.mxu0
        %v1038 = vadd.f32 %v941, %v1037
        %v1039 = vpop.f32.mrf.mxu0
        %v1040 = vadd.f32 %v943, %v1039
        %1041 = vmatmul.bf16.gmra.mxu0 %v989
        %v1042 = vpop.f32.mrf.mxu0
        %v1043 = vadd.f32 %v946, %v1042
        %v1044 = vpop.f32.mrf.mxu0
        %v1045 = vadd.f32 %v948, %v1044
        %1046 = vmatmul.bf16.gmra.mxu0 %v991
        %v1047 = vpop.f32.mrf.mxu0
        %v1048 = vadd.f32 %v951, %v1047
        %v1049 = vpop.f32.mrf.mxu0
        %v1050 = vadd.f32 %v953, %v1049
        %1051 = vdwg.mxu0
        %1062 = vrot.lane.b32.xlu0 %v650, 16
        %v1063 = vpop.permute.xlu0 %1062
        %1064 = vrot.lane.b32.xlu0 %v651, 16
        %v1065 = vpop.permute.xlu0 %1064
        %1066 = vrot.lane.b32.xlu0 %v652, 16
        %v1067 = vpop.permute.xlu0 %1066
        %1068 = vrot.lane.b32.xlu0 %v653, 16
        %v1069 = vpop.permute.xlu0 %1068
        %1070 = vrot.lane.b32.xlu0 %v654, 16
        %v1071 = vpop.permute.xlu0 %1070
        %1072 = vrot.lane.b32.xlu0 %v655, 16
        %v1073 = vpop.permute.xlu0 %1072
        %1074 = vrot.lane.b32.xlu0 %v656, 16
        %v1075 = vpop.permute.xlu0 %1074
        %1076 = vrot.lane.b32.xlu0 %v657, 16
        %v1077 = vpop.permute.xlu0 %1076
        %1078 = vrot.lane.b32.xlu0 %v658, 16
        %v1079 = vpop.permute.xlu0 %1078
        %1080 = vrot.lane.b32.xlu0 %v659, 16
        %v1081 = vpop.permute.xlu0 %1080
        %1083 = vrot.lane.b32.xlu0 %v651, 32
        %v1084 = vpop.permute.xlu0 %1083
        %1085 = vrot.lane.b32.xlu0 %v652, 32
        %v1086 = vpop.permute.xlu0 %1085
        %1087 = vrot.lane.b32.xlu0 %v653, 32
        %v1088 = vpop.permute.xlu0 %1087
        %1089 = vrot.lane.b32.xlu0 %v654, 32
        %v1090 = vpop.permute.xlu0 %1089
        %1091 = vrot.lane.b32.xlu0 %v655, 32
        %v1092 = vpop.permute.xlu0 %1091
        %1093 = vrot.lane.b32.xlu0 %v656, 32
        %v1094 = vpop.permute.xlu0 %1093
        %1095 = vrot.lane.b32.xlu0 %v657, 32
        %v1096 = vpop.permute.xlu0 %1095
        %1097 = vrot.lane.b32.xlu0 %v658, 32
        %v1098 = vpop.permute.xlu0 %1097
        %1099 = vrot.lane.b32.xlu0 %v659, 32
        %v1100 = vpop.permute.xlu0 %1099
        %1101 = vrot.lane.b32.xlu0 %v660, 32
        %v1102 = vpop.permute.xlu0 %1101
        %v1105 = vsel %vm712, %v649, %v1063
        %v1108 = vsel %vm712, %v650, %v1065
        %v1111 = vsel %vm712, %v651, %v1067
        %v1114 = vsel %vm712, %v652, %v1069
        %v1117 = vsel %vm712, %v653, %v1071
        %v1120 = vsel %vm712, %v654, %v1073
        %v1123 = vsel %vm712, %v655, %v1075
        %v1126 = vsel %vm712, %v656, %v1077
        %v1129 = vsel %vm712, %v657, %v1079
        %v1132 = vsel %vm712, %v658, %v1081
        %v1134 = vsel %vm743, %v1105, %v1084
        %v1136 = vsel %vm743, %v1108, %v1086
        %v1138 = vsel %vm743, %v1111, %v1088
        %v1140 = vsel %vm743, %v1114, %v1090
        %v1142 = vsel %vm743, %v1117, %v1092
        %v1144 = vsel %vm743, %v1120, %v1094
        %v1146 = vsel %vm743, %v1123, %v1096
        %v1148 = vsel %vm743, %v1126, %v1098
        %v1150 = vsel %vm743, %v1129, %v1100
        %v1152 = vsel %vm743, %v1132, %v1102
        %s1153 = scalar_lea.vmem %s2, 48
        %v1154 = vld [vmem:[%s1153] sm:$0xf]
        %v1155 = vld [vmem:[%s1153 + $0x4] sm:$0xf]
        %v1156 = vld [vmem:[%s1153 + $0x8] sm:$0xf]
        %v1157 = vld [vmem:[%s1153 + $0xc] sm:$0xf]
        %v1158 = vld [vmem:[%s1153 + $0x10] sm:$0xf]
        %v1159 = vld [vmem:[%s1153 + $0x14] sm:$0xf]
        %v1166 = vunpack.c.l.b16 %v1154
        %v1167 = vunpack.c.l.b16 %v1155
        %v1168 = vunpack.c.l.b16 %v1156
        %v1169 = vunpack.c.l.b16 %v1157
        %v1170 = vunpack.c.l.b16 %v1158
        %v1171 = vunpack.c.l.b16 %v1159
        %v1172 = vpack.c.b16 %v1167, %v1166
        %v1173 = vpack.c.b16 %v1169, %v1168
        %v1174 = vpack.c.b16 %v1171, %v1170
        %v1178 = vsel %vm875, %v1134, 0
        %v1180 = vsel %vm875, %v1136, 0
        %v1182 = vsel %vm875, %v1138, 0
        %v1184 = vsel %vm875, %v1140, 0
        %v1186 = vsel %vm875, %v1142, 0
        %v1188 = vsel %vm875, %v1144, 0
        %v1190 = vsel %vm875, %v1146, 0
        %v1192 = vsel %vm875, %v1148, 0
        %v1194 = vsel %vm875, %v1150, 0
        %v1196 = vsel %vm875, %v1152, 0
        %1198 = vmatpush.bf16.msra.mxu0 0
        %1199 = vmatpush.bf16.msra.mxu0 0
        %1200 = vmatpush.bf16.msra.mxu0 0
        %1201 = vmatpush.bf16.msra.mxu0 0
        %1202 = vmatpush.bf16.msra.mxu0 0
        %1203 = vmatpush.bf16.msra.mxu0 %v1174
        %1204 = vmatpush.bf16.msra.mxu0 %v1173
        %1205 = vmatpush.bf16.msra.mxu0 %v1172
        %1206 = vmatmul.bf16.gmra.mxu0 %v1178
        %v1207 = vpop.f32.mrf.mxu0
        %v1208 = vadd.f32 0.0, %v1207
        %v1209 = vpop.f32.mrf.mxu0
        %v1210 = vadd.f32 0.0, %v1209
        %1211 = vmatmul.bf16.gmra.mxu0 %v1180
        %v1212 = vpop.f32.mrf.mxu0
        %v1213 = vadd.f32 0.0, %v1212
        %v1214 = vpop.f32.mrf.mxu0
        %v1215 = vadd.f32 0.0, %v1214
        %1216 = vmatmul.bf16.gmra.mxu0 %v1182
        %v1217 = vpop.f32.mrf.mxu0
        %v1218 = vadd.f32 0.0, %v1217
        %v1219 = vpop.f32.mrf.mxu0
        %v1220 = vadd.f32 0.0, %v1219
        %1221 = vmatmul.bf16.gmra.mxu0 %v1184
        %v1222 = vpop.f32.mrf.mxu0
        %v1223 = vadd.f32 0.0, %v1222
        %v1224 = vpop.f32.mrf.mxu0
        %v1225 = vadd.f32 0.0, %v1224
        %1226 = vmatmul.bf16.gmra.mxu0 %v1186
        %v1227 = vpop.f32.mrf.mxu0
        %v1228 = vadd.f32 0.0, %v1227
        %v1229 = vpop.f32.mrf.mxu0
        %v1230 = vadd.f32 0.0, %v1229
        %1231 = vmatmul.bf16.gmra.mxu0 %v1188
        %v1232 = vpop.f32.mrf.mxu0
        %v1233 = vadd.f32 0.0, %v1232
        %v1234 = vpop.f32.mrf.mxu0
        %v1235 = vadd.f32 0.0, %v1234
        %1236 = vmatmul.bf16.gmra.mxu0 %v1190
        %v1237 = vpop.f32.mrf.mxu0
        %v1238 = vadd.f32 0.0, %v1237
        %v1239 = vpop.f32.mrf.mxu0
        %v1240 = vadd.f32 0.0, %v1239
        %1241 = vmatmul.bf16.gmra.mxu0 %v1192
        %v1242 = vpop.f32.mrf.mxu0
        %v1243 = vadd.f32 0.0, %v1242
        %v1244 = vpop.f32.mrf.mxu0
        %v1245 = vadd.f32 0.0, %v1244
        %1246 = vmatmul.bf16.gmra.mxu0 %v1194
        %v1247 = vpop.f32.mrf.mxu0
        %v1248 = vadd.f32 0.0, %v1247
        %v1249 = vpop.f32.mrf.mxu0
        %v1250 = vadd.f32 0.0, %v1249
        %1251 = vmatmul.bf16.gmra.mxu0 %v1196
        %v1252 = vpop.f32.mrf.mxu0
        %v1253 = vadd.f32 0.0, %v1252
        %v1254 = vpop.f32.mrf.mxu0
        %v1255 = vadd.f32 0.0, %v1254
        %1256 = vdwg.mxu0
        %v1257 = vadd.f32 %v1003, %v1208
        %v1258 = vadd.f32 %v1005, %v1210
        %v1259 = vadd.f32 %v1008, %v1213
        %v1260 = vadd.f32 %v1010, %v1215
        %v1261 = vadd.f32 %v1013, %v1218
        %v1262 = vadd.f32 %v1015, %v1220
        %v1263 = vadd.f32 %v1018, %v1223
        %v1264 = vadd.f32 %v1020, %v1225
        %v1265 = vadd.f32 %v1023, %v1228
        %v1266 = vadd.f32 %v1025, %v1230
        %v1267 = vadd.f32 %v1028, %v1233
        %v1268 = vadd.f32 %v1030, %v1235
        %v1269 = vadd.f32 %v1033, %v1238
        %v1270 = vadd.f32 %v1035, %v1240
        %v1271 = vadd.f32 %v1038, %v1243
        %v1272 = vadd.f32 %v1040, %v1245
        %v1273 = vadd.f32 %v1043, %v1248
        %v1274 = vadd.f32 %v1045, %v1250
        %v1275 = vadd.f32 %v1048, %v1253
        %v1276 = vadd.f32 %v1050, %v1255
        %p1277 = scmp.eq.s32.totalorder %s30, 0
        %p1278 = pnand %p1277, %p378
        %p1279 = pneg %p1278
        // Predicated region
        $region81: #{tpu_custom_call.1} parent=43 // pred_check
          _
        $region82: #{tpu_custom_call.1} parent=43 // pred_check_branch
          %1281 = sbr.rel (%p1278) target = $region84
        $region83: #{tpu_custom_call.1} parent=43 // pred_region
          %vm1282 = vcmask 253952
          %1283 = vst.msk [vmem:[#allocation4] sm:$0x1] %vm1282, 0.0
          %1284 = vst.msk [vmem:[#allocation5] sm:$0x1] %vm1282, 0.0
        $region84: #{tpu_custom_call.1} parent=43 // pred_fallthru
          _
        // Predicated region
        $region85: #{tpu_custom_call.1} parent=43 // pred_check
          %p1285 = pneg %p1277
        $region86: #{tpu_custom_call.1} parent=43 // pred_check_branch
          %1287 = sbr.rel (%p1285) target = $region88
        $region87: #{tpu_custom_call.1} parent=43 // pred_region
          %v1288 = vld [vmem:[#allocation4] sm:$0x1]
          %v1289 = vsel %vm743, %v1259, 0.0
          %v1290 = vsel %vm743, %v1260, 0.0
          %v1291 = vadd.f32 %v1289, %v1290
          %v1292 = vsel %vm743, %v1261, 0.0
          %v1293 = vadd.f32 %v1291, %v1292
          %v1294 = vsel %vm743, %v1262, 0.0
          %v1295 = vadd.f32 %v1293, %v1294
          %v1296 = vsel %vm743, %v1263, 0.0
          %v1297 = vadd.f32 %v1295, %v1296
          %v1298 = vsel %vm743, %v1264, 0.0
          %v1299 = vadd.f32 %v1297, %v1298
          %v1300 = vsel %vm743, %v1265, 0.0
          %v1301 = vadd.f32 %v1299, %v1300
          %v1302 = vsel %vm743, %v1266, 0.0
          %v1303 = vadd.f32 %v1301, %v1302
          %v1304 = vsel %vm743, %v1267, 0.0
          %v1305 = vadd.f32 %v1303, %v1304
          %v1306 = vsel %vm743, %v1268, 0.0
          %v1307 = vadd.f32 %v1305, %v1306
          %v1308 = vsel %vm743, %v1269, 0.0
          %v1309 = vadd.f32 %v1307, %v1308
          %v1310 = vsel %vm743, %v1270, 0.0
          %v1311 = vadd.f32 %v1309, %v1310
          %v1312 = vsel %vm743, %v1271, 0.0
          %v1313 = vadd.f32 %v1311, %v1312
          %v1314 = vsel %vm743, %v1272, 0.0
          %v1315 = vadd.f32 %v1313, %v1314
          %v1316 = vsel %vm743, %v1273, 0.0
          %v1317 = vadd.f32 %v1315, %v1316
          %v1318 = vsel %vm743, %v1274, 0.0
          %v1319 = vadd.f32 %v1317, %v1318
          %v1320 = vrot.slane %v1319, 4
          %v1321 = vadd.f32 %v1319, %v1320
          %v1322 = vrot.slane %v1321, 2
          %v1323 = vadd.f32 %v1321, %v1322
          %v1324 = vrot.slane %v1323, 1
          %v1325 = vadd.f32 %v1323, %v1324
          %v1326 = vadd.f32 %v1288, %v1325
          %vm1327 = vcmask 253952
          %1328 = vst.msk [vmem:[#allocation4] sm:$0x1] %vm1327, %v1326
          %v1329 = vld [vmem:[#allocation5] sm:$0x1]
          %v1330 = vmul.f32 %v1259, %v1259
          %v1331 = vmul.f32 %v1260, %v1260
          %v1332 = vmul.f32 %v1261, %v1261
          %v1333 = vmul.f32 %v1262, %v1262
          %v1334 = vmul.f32 %v1263, %v1263
          %v1335 = vmul.f32 %v1264, %v1264
          %v1336 = vmul.f32 %v1265, %v1265
          %v1337 = vmul.f32 %v1266, %v1266
          %v1338 = vmul.f32 %v1267, %v1267
          %v1339 = vmul.f32 %v1268, %v1268
          %v1340 = vmul.f32 %v1269, %v1269
          %v1341 = vmul.f32 %v1270, %v1270
          %v1342 = vmul.f32 %v1271, %v1271
          %v1343 = vmul.f32 %v1272, %v1272
          %v1344 = vmul.f32 %v1273, %v1273
          %v1345 = vmul.f32 %v1274, %v1274
          %v1346 = vsel %vm743, %v1330, 0.0
          %v1347 = vsel %vm743, %v1331, 0.0
          %v1348 = vadd.f32 %v1346, %v1347
          %v1349 = vsel %vm743, %v1332, 0.0
          %v1350 = vadd.f32 %v1348, %v1349
          %v1351 = vsel %vm743, %v1333, 0.0
          %v1352 = vadd.f32 %v1350, %v1351
          %v1353 = vsel %vm743, %v1334, 0.0
          %v1354 = vadd.f32 %v1352, %v1353
          %v1355 = vsel %vm743, %v1335, 0.0
          %v1356 = vadd.f32 %v1354, %v1355
          %v1357 = vsel %vm743, %v1336, 0.0
          %v1358 = vadd.f32 %v1356, %v1357
          %v1359 = vsel %vm743, %v1337, 0.0
          %v1360 = vadd.f32 %v1358, %v1359
          %v1361 = vsel %vm743, %v1338, 0.0
          %v1362 = vadd.f32 %v1360, %v1361
          %v1363 = vsel %vm743, %v1339, 0.0
          %v1364 = vadd.f32 %v1362, %v1363
          %v1365 = vsel %vm743, %v1340, 0.0
          %v1366 = vadd.f32 %v1364, %v1365
          %v1367 = vsel %vm743, %v1341, 0.0
          %v1368 = vadd.f32 %v1366, %v1367
          %v1369 = vsel %vm743, %v1342, 0.0
          %v1370 = vadd.f32 %v1368, %v1369
          %v1371 = vsel %vm743, %v1343, 0.0
          %v1372 = vadd.f32 %v1370, %v1371
          %v1373 = vsel %vm743, %v1344, 0.0
          %v1374 = vadd.f32 %v1372, %v1373
          %v1375 = vsel %vm743, %v1345, 0.0
          %v1376 = vadd.f32 %v1374, %v1375
          %v1377 = vrot.slane %v1376, 4
          %v1378 = vadd.f32 %v1376, %v1377
          %v1379 = vrot.slane %v1378, 2
          %v1380 = vadd.f32 %v1378, %v1379
          %v1381 = vrot.slane %v1380, 1
          %v1382 = vadd.f32 %v1380, %v1381
          %v1383 = vadd.f32 %v1329, %v1382
          %1384 = vst.msk [vmem:[#allocation5] sm:$0x1] %vm1327, %v1383
        $region88: #{tpu_custom_call.1} parent=43 // pred_fallthru
          _
        %p1385 = scmp.eq.s32.totalorder %s30, 1
        // Predicated region
        $region89: #{tpu_custom_call.1} parent=43 // pred_check
          %p1386 = pneg %p1385
        $region90: #{tpu_custom_call.1} parent=43 // pred_check_branch
          %1388 = sbr.rel (%p1386) target = $region92
        $region91: #{tpu_custom_call.1} parent=43 // pred_region
          %v1389 = vld [vmem:[#allocation4] sm:$0x1]
          %v1390 = vld [vmem:[#allocation5] sm:$0x1]
          %v1391 = vrcp.pop 256.0
          %v1392 = vmul.f32 256.0, %v1391
          %v1393 = vsub.f32 1.0, %v1392
          %v1394 = vmul.f32 %v1391, %v1393
          %v1395 = vadd.f32 %v1391, %v1394
          %vm1396 = vweird.f32 %v1391
          %v1397 = vsel %vm1396, %v1391, %v1395
          %v1398 = vmul.f32 %v1389, %v1397
          %v1399 = vmul.f32 %v1390, %v1397
          %v1400 = vmul.f32 %v1398, %v1398
          %v1401 = vsub.f32 %v1399, %v1400
          %v1402 = vld [vmem:[%s3] sm:$0x1]
          %v1403 = vadd.f32 %v1401, 1e-05
          %v1404 = vrsqrt.pop %v1403
          %v1405 = vmul.f32 %v1404, %v1403
          %v1406 = vmul.f32 %v1405, %v1404
          %v1407 = vmul.f32 0.5, %v1406
          %v1408 = vsub.f32 1.5, %v1407
          %v1409 = vmul.f32 %v1404, %v1408
          %vm1410 = vweird.f32 %v1403
          %vm1411 = vweird.f32 %v1404
          %vm1412 = vmor %vm1410, %vm1411
          %v1413 = vsel %vm1412, %v1404, %v1409
          %v1414 = vmul.f32 %v1402, %v1413
          %v1415 = vld [vmem:[%s4] sm:$0x1]
          %v1416 = vmul.f32 %v1398, %v1414
          %v1417 = vsub.f32 %v1415, %v1416
          %v1419 = vperm.slane %v1414, 0
          %v1421 = vmul.f32 %v1257, %v1419
          %v1422 = vmul.f32 %v1258, %v1419
          %v1423 = vmul.f32 %v1259, %v1419
          %v1424 = vmul.f32 %v1260, %v1419
          %v1425 = vmul.f32 %v1261, %v1419
          %v1426 = vmul.f32 %v1262, %v1419
          %v1427 = vmul.f32 %v1263, %v1419
          %v1428 = vmul.f32 %v1264, %v1419
          %v1429 = vmul.f32 %v1265, %v1419
          %v1430 = vmul.f32 %v1266, %v1419
          %v1431 = vmul.f32 %v1267, %v1419
          %v1432 = vmul.f32 %v1268, %v1419
          %v1433 = vmul.f32 %v1269, %v1419
          %v1434 = vmul.f32 %v1270, %v1419
          %v1435 = vmul.f32 %v1271, %v1419
          %v1436 = vmul.f32 %v1272, %v1419
          %v1437 = vmul.f32 %v1273, %v1419
          %v1438 = vmul.f32 %v1274, %v1419
          %v1439 = vmul.f32 %v1275, %v1419
          %v1440 = vmul.f32 %v1276, %v1419
          %v1442 = vperm.slane %v1417, 0
          %v1444 = vadd.f32 %v1421, %v1442
          %v1445 = vadd.f32 %v1422, %v1442
          %v1446 = vadd.f32 %v1423, %v1442
          %v1447 = vadd.f32 %v1424, %v1442
          %v1448 = vadd.f32 %v1425, %v1442
          %v1449 = vadd.f32 %v1426, %v1442
          %v1450 = vadd.f32 %v1427, %v1442
          %v1451 = vadd.f32 %v1428, %v1442
          %v1452 = vadd.f32 %v1429, %v1442
          %v1453 = vadd.f32 %v1430, %v1442
          %v1454 = vadd.f32 %v1431, %v1442
          %v1455 = vadd.f32 %v1432, %v1442
          %v1456 = vadd.f32 %v1433, %v1442
          %v1457 = vadd.f32 %v1434, %v1442
          %v1458 = vadd.f32 %v1435, %v1442
          %v1459 = vadd.f32 %v1436, %v1442
          %v1460 = vadd.f32 %v1437, %v1442
          %v1461 = vadd.f32 %v1438, %v1442
          %v1462 = vadd.f32 %v1439, %v1442
          %v1463 = vadd.f32 %v1440, %v1442
          %v1464 = vmax.f32 %v1444, 0.0
          %v1465 = vmax.f32 %v1445, 0.0
          %v1466 = vmax.f32 %v1446, 0.0
          %v1467 = vmax.f32 %v1447, 0.0
          %v1468 = vmax.f32 %v1448, 0.0
          %v1469 = vmax.f32 %v1449, 0.0
          %v1470 = vmax.f32 %v1450, 0.0
          %v1471 = vmax.f32 %v1451, 0.0
          %v1472 = vmax.f32 %v1452, 0.0
          %v1473 = vmax.f32 %v1453, 0.0
          %v1474 = vmax.f32 %v1454, 0.0
          %v1475 = vmax.f32 %v1455, 0.0
          %v1476 = vmax.f32 %v1456, 0.0
          %v1477 = vmax.f32 %v1457, 0.0
          %v1478 = vmax.f32 %v1458, 0.0
          %v1479 = vmax.f32 %v1459, 0.0
          %v1480 = vmax.f32 %v1460, 0.0
          %v1481 = vmax.f32 %v1461, 0.0
          %v1482 = vmax.f32 %v1462, 0.0
          %v1483 = vmax.f32 %v1463, 0.0
          %v1484 = vld [vmem:[%s321] sm:$0xff]
          %v1485 = vld [vmem:[%s321 + $0x8] sm:$0xff]
          %v1486 = vrot.slane %v1468, 4
          %vm1487 = vcmask 1047556
          %v1488 = vsel %vm1487, %v1486, %v1464
          %v1489 = vrot.slane %v1464, 4
          %v1490 = vsel %vm1487, %v1468, %v1489
          %v1492 = vunpack.c.l.s4 1983009808
          %v1493 = vunpack.c.0.s8 %v1492
          %v1494 = vperm.slane %v1488, %v1493
          %v1496 = vunpack.c.l.s4 1983009808
          %v1497 = vunpack.c.0.s8 %v1496
          %v1498 = vperm.slane %v1490, %v1497
          %v1499 = vrot.slane %v1470, 4
          %v1500 = vsel %vm1487, %v1499, %v1466
          %v1501 = vrot.slane %v1466, 4
          %v1502 = vsel %vm1487, %v1470, %v1501
          %v1504 = vunpack.c.l.s4 1983009808
          %v1505 = vunpack.c.0.s8 %v1504
          %v1506 = vperm.slane %v1500, %v1505
          %v1508 = vunpack.c.l.s4 1983009808
          %v1509 = vunpack.c.0.s8 %v1508
          %v1510 = vperm.slane %v1502, %v1509
          %v1511 = vrot.slane %v1476, 4
          %v1512 = vsel %vm1487, %v1511, %v1472
          %v1513 = vrot.slane %v1472, 4
          %v1514 = vsel %vm1487, %v1476, %v1513
          %v1516 = vunpack.c.l.s4 1983009808
          %v1517 = vunpack.c.0.s8 %v1516
          %v1518 = vperm.slane %v1512, %v1517
          %v1520 = vunpack.c.l.s4 1983009808
          %v1521 = vunpack.c.0.s8 %v1520
          %v1522 = vperm.slane %v1514, %v1521
          %v1523 = vrot.slane %v1478, 4
          %v1524 = vsel %vm1487, %v1523, %v1474
          %v1525 = vrot.slane %v1474, 4
          %v1526 = vsel %vm1487, %v1478, %v1525
          %v1528 = vunpack.c.l.s4 1983009808
          %v1529 = vunpack.c.0.s8 %v1528
          %v1530 = vperm.slane %v1524, %v1529
          %v1532 = vunpack.c.l.s4 1983009808
          %v1533 = vunpack.c.0.s8 %v1532
          %v1534 = vperm.slane %v1526, %v1533
          %v1535 = vrot.slane %v1506, 4
          %v1536 = vsel %vm1487, %v1535, %v1494
          %v1537 = vrot.slane %v1494, 4
          %v1538 = vsel %vm1487, %v1506, %v1537
          %v1540 = vunpack.c.l.s4 1934713408
          %v1541 = vunpack.c.0.s8 %v1540
          %v1542 = vperm.slane %v1536, %v1541
          %v1544 = vunpack.c.l.s4 1934713408
          %v1545 = vunpack.c.0.s8 %v1544
          %v1546 = vperm.slane %v1538, %v1545
          %v1547 = vrot.slane %v1510, 4
          %v1548 = vsel %vm1487, %v1547, %v1498
          %v1549 = vrot.slane %v1498, 4
          %v1550 = vsel %vm1487, %v1510, %v1549
          %v1552 = vunpack.c.l.s4 1934713408
          %v1553 = vunpack.c.0.s8 %v1552
          %v1554 = vperm.slane %v1548, %v1553
          %v1556 = vunpack.c.l.s4 1934713408
          %v1557 = vunpack.c.0.s8 %v1556
          %v1558 = vperm.slane %v1550, %v1557
          %v1559 = vrot.slane %v1530, 4
          %v1560 = vsel %vm1487, %v1559, %v1518
          %v1561 = vrot.slane %v1518, 4
          %v1562 = vsel %vm1487, %v1530, %v1561
          %v1564 = vunpack.c.l.s4 1934713408
          %v1565 = vunpack.c.0.s8 %v1564
          %v1566 = vperm.slane %v1560, %v1565
          %v1568 = vunpack.c.l.s4 1934713408
          %v1569 = vunpack.c.0.s8 %v1568
          %v1570 = vperm.slane %v1562, %v1569
          %v1571 = vrot.slane %v1534, 4
          %v1572 = vsel %vm1487, %v1571, %v1522
          %v1573 = vrot.slane %v1522, 4
          %v1574 = vsel %vm1487, %v1534, %v1573
          %v1576 = vunpack.c.l.s4 1934713408
          %v1577 = vunpack.c.0.s8 %v1576
          %v1578 = vperm.slane %v1572, %v1577
          %v1580 = vunpack.c.l.s4 1934713408
          %v1581 = vunpack.c.0.s8 %v1580
          %v1582 = vperm.slane %v1574, %v1581
          %v1583 = vrot.slane %v1566, 4
          %v1584 = vsel %vm1487, %v1583, %v1542
          %v1585 = vrot.slane %v1542, 4
          %v1586 = vsel %vm1487, %v1566, %v1585
          %v1587 = vrot.slane %v1570, 4
          %v1588 = vsel %vm1487, %v1587, %v1546
          %v1589 = vrot.slane %v1546, 4
          %v1590 = vsel %vm1487, %v1570, %v1589
          %v1591 = vrot.slane %v1578, 4
          %v1592 = vsel %vm1487, %v1591, %v1554
          %v1593 = vrot.slane %v1554, 4
          %v1594 = vsel %vm1487, %v1578, %v1593
          %v1595 = vrot.slane %v1582, 4
          %v1596 = vsel %vm1487, %v1595, %v1558
          %v1597 = vrot.slane %v1558, 4
          %v1598 = vsel %vm1487, %v1582, %v1597
          %v1599 = vrot.slane %v1480, 4
          %v1600 = vsel %vm1487, 0.0, %v1599
          %v1602 = vunpack.c.l.s4 1983009808
          %v1603 = vunpack.c.0.s8 %v1602
          %v1604 = vperm.slane %v1480, %v1603
          %v1606 = vunpack.c.l.s4 1983009808
          %v1607 = vunpack.c.0.s8 %v1606
          %v1608 = vperm.slane %v1600, %v1607
          %v1609 = vrot.slane %v1482, 4
          %v1610 = vsel %vm1487, 0.0, %v1609
          %v1612 = vunpack.c.l.s4 1983009808
          %v1613 = vunpack.c.0.s8 %v1612
          %v1614 = vperm.slane %v1482, %v1613
          %v1616 = vunpack.c.l.s4 1983009808
          %v1617 = vunpack.c.0.s8 %v1616
          %v1618 = vperm.slane %v1610, %v1617
          %v1619 = vrot.slane %v1614, 4
          %v1620 = vsel %vm1487, %v1619, %v1604
          %v1621 = vrot.slane %v1604, 4
          %v1622 = vsel %vm1487, %v1614, %v1621
          %v1624 = vunpack.c.l.s4 1934713408
          %v1625 = vunpack.c.0.s8 %v1624
          %v1626 = vperm.slane %v1620, %v1625
          %v1628 = vunpack.c.l.s4 1934713408
          %v1629 = vunpack.c.0.s8 %v1628
          %v1630 = vperm.slane %v1622, %v1629
          %v1631 = vrot.slane %v1618, 4
          %v1632 = vsel %vm1487, %v1631, %v1608
          %v1633 = vrot.slane %v1608, 4
          %v1634 = vsel %vm1487, %v1618, %v1633
          %v1636 = vunpack.c.l.s4 1934713408
          %v1637 = vunpack.c.0.s8 %v1636
          %v1638 = vperm.slane %v1632, %v1637
          %v1640 = vunpack.c.l.s4 1934713408
          %v1641 = vunpack.c.0.s8 %v1640
          %v1642 = vperm.slane %v1634, %v1641
          %v1643 = vrot.slane %v1626, 4
          %v1644 = vsel %vm1487, 0.0, %v1643
          %v1645 = vrot.slane %v1630, 4
          %v1646 = vsel %vm1487, 0.0, %v1645
          %v1647 = vrot.slane %v1638, 4
          %v1648 = vsel %vm1487, 0.0, %v1647
          %v1649 = vrot.slane %v1642, 4
          %v1650 = vsel %vm1487, 0.0, %v1649
          %v1651 = vrot.slane %v1469, 4
          %v1652 = vsel %vm1487, %v1651, %v1465
          %v1653 = vrot.slane %v1465, 4
          %v1654 = vsel %vm1487, %v1469, %v1653
          %v1656 = vunpack.c.l.s4 1983009808
          %v1657 = vunpack.c.0.s8 %v1656
          %v1658 = vperm.slane %v1652, %v1657
          %v1660 = vunpack.c.l.s4 1983009808
          %v1661 = vunpack.c.0.s8 %v1660
          %v1662 = vperm.slane %v1654, %v1661
          %v1663 = vrot.slane %v1471, 4
          %v1664 = vsel %vm1487, %v1663, %v1467
          %v1665 = vrot.slane %v1467, 4
          %v1666 = vsel %vm1487, %v1471, %v1665
          %v1668 = vunpack.c.l.s4 1983009808
          %v1669 = vunpack.c.0.s8 %v1668
          %v1670 = vperm.slane %v1664, %v1669
          %v1672 = vunpack.c.l.s4 1983009808
          %v1673 = vunpack.c.0.s8 %v1672
          %v1674 = vperm.slane %v1666, %v1673
          %v1675 = vrot.slane %v1477, 4
          %v1676 = vsel %vm1487, %v1675, %v1473
          %v1677 = vrot.slane %v1473, 4
          %v1678 = vsel %vm1487, %v1477, %v1677
          %v1680 = vunpack.c.l.s4 1983009808
          %v1681 = vunpack.c.0.s8 %v1680
          %v1682 = vperm.slane %v1676, %v1681
          %v1684 = vunpack.c.l.s4 1983009808
          %v1685 = vunpack.c.0.s8 %v1684
          %v1686 = vperm.slane %v1678, %v1685
          %v1687 = vrot.slane %v1479, 4
          %v1688 = vsel %vm1487, %v1687, %v1475
          %v1689 = vrot.slane %v1475, 4
          %v1690 = vsel %vm1487, %v1479, %v1689
          %v1692 = vunpack.c.l.s4 1983009808
          %v1693 = vunpack.c.0.s8 %v1692
          %v1694 = vperm.slane %v1688, %v1693
          %v1696 = vunpack.c.l.s4 1983009808
          %v1697 = vunpack.c.0.s8 %v1696
          %v1698 = vperm.slane %v1690, %v1697
          %v1699 = vrot.slane %v1670, 4
          %v1700 = vsel %vm1487, %v1699, %v1658
          %v1701 = vrot.slane %v1658, 4
          %v1702 = vsel %vm1487, %v1670, %v1701
          %v1704 = vunpack.c.l.s4 1934713408
          %v1705 = vunpack.c.0.s8 %v1704
          %v1706 = vperm.slane %v1700, %v1705
          %v1708 = vunpack.c.l.s4 1934713408
          %v1709 = vunpack.c.0.s8 %v1708
          %v1710 = vperm.slane %v1702, %v1709
          %v1711 = vrot.slane %v1674, 4
          %v1712 = vsel %vm1487, %v1711, %v1662
          %v1713 = vrot.slane %v1662, 4
          %v1714 = vsel %vm1487, %v1674, %v1713
          %v1716 = vunpack.c.l.s4 1934713408
          %v1717 = vunpack.c.0.s8 %v1716
          %v1718 = vperm.slane %v1712, %v1717
          %v1720 = vunpack.c.l.s4 1934713408
          %v1721 = vunpack.c.0.s8 %v1720
          %v1722 = vperm.slane %v1714, %v1721
          %v1723 = vrot.slane %v1694, 4
          %v1724 = vsel %vm1487, %v1723, %v1682
          %v1725 = vrot.slane %v1682, 4
          %v1726 = vsel %vm1487, %v1694, %v1725
          %v1728 = vunpack.c.l.s4 1934713408
          %v1729 = vunpack.c.0.s8 %v1728
          %v1730 = vperm.slane %v1724, %v1729
          %v1732 = vunpack.c.l.s4 1934713408
          %v1733 = vunpack.c.0.s8 %v1732
          %v1734 = vperm.slane %v1726, %v1733
          %v1735 = vrot.slane %v1698, 4
          %v1736 = vsel %vm1487, %v1735, %v1686
          %v1737 = vrot.slane %v1686, 4
          %v1738 = vsel %vm1487, %v1698, %v1737
          %v1740 = vunpack.c.l.s4 1934713408
          %v1741 = vunpack.c.0.s8 %v1740
          %v1742 = vperm.slane %v1736, %v1741
          %v1744 = vunpack.c.l.s4 1934713408
          %v1745 = vunpack.c.0.s8 %v1744
          %v1746 = vperm.slane %v1738, %v1745
          %v1747 = vrot.slane %v1730, 4
          %v1748 = vsel %vm1487, %v1747, %v1706
          %v1749 = vrot.slane %v1706, 4
          %v1750 = vsel %vm1487, %v1730, %v1749
          %v1751 = vrot.slane %v1734, 4
          %v1752 = vsel %vm1487, %v1751, %v1710
          %v1753 = vrot.slane %v1710, 4
          %v1754 = vsel %vm1487, %v1734, %v1753
          %v1755 = vrot.slane %v1742, 4
          %v1756 = vsel %vm1487, %v1755, %v1718
          %v1757 = vrot.slane %v1718, 4
          %v1758 = vsel %vm1487, %v1742, %v1757
          %v1759 = vrot.slane %v1746, 4
          %v1760 = vsel %vm1487, %v1759, %v1722
          %v1761 = vrot.slane %v1722, 4
          %v1762 = vsel %vm1487, %v1746, %v1761
          %v1763 = vrot.slane %v1481, 4
          %v1764 = vsel %vm1487, 0.0, %v1763
          %v1766 = vunpack.c.l.s4 1983009808
          %v1767 = vunpack.c.0.s8 %v1766
          %v1768 = vperm.slane %v1481, %v1767
          %v1770 = vunpack.c.l.s4 1983009808
          %v1771 = vunpack.c.0.s8 %v1770
          %v1772 = vperm.slane %v1764, %v1771
          %v1773 = vrot.slane %v1483, 4
          %v1774 = vsel %vm1487, 0.0, %v1773
          %v1776 = vunpack.c.l.s4 1983009808
          %v1777 = vunpack.c.0.s8 %v1776
          %v1778 = vperm.slane %v1483, %v1777
          %v1780 = vunpack.c.l.s4 1983009808
          %v1781 = vunpack.c.0.s8 %v1780
          %v1782 = vperm.slane %v1774, %v1781
          %v1783 = vrot.slane %v1778, 4
          %v1784 = vsel %vm1487, %v1783, %v1768
          %v1785 = vrot.slane %v1768, 4
          %v1786 = vsel %vm1487, %v1778, %v1785
          %v1788 = vunpack.c.l.s4 1934713408
          %v1789 = vunpack.c.0.s8 %v1788
          %v1790 = vperm.slane %v1784, %v1789
          %v1792 = vunpack.c.l.s4 1934713408
          %v1793 = vunpack.c.0.s8 %v1792
          %v1794 = vperm.slane %v1786, %v1793
          %v1795 = vrot.slane %v1782, 4
          %v1796 = vsel %vm1487, %v1795, %v1772
          %v1797 = vrot.slane %v1772, 4
          %v1798 = vsel %vm1487, %v1782, %v1797
          %v1800 = vunpack.c.l.s4 1934713408
          %v1801 = vunpack.c.0.s8 %v1800
          %v1802 = vperm.slane %v1796, %v1801
          %v1804 = vunpack.c.l.s4 1934713408
          %v1805 = vunpack.c.0.s8 %v1804
          %v1806 = vperm.slane %v1798, %v1805
          %v1807 = vrot.slane %v1790, 4
          %v1808 = vsel %vm1487, 0.0, %v1807
          %v1809 = vrot.slane %v1794, 4
          %v1810 = vsel %vm1487, 0.0, %v1809
          %v1811 = vrot.slane %v1802, 4
          %v1812 = vsel %vm1487, 0.0, %v1811
          %v1813 = vrot.slane %v1806, 4
          %v1814 = vsel %vm1487, 0.0, %v1813
          %1817 = vrot.lane.b32.xlu0 %v1586, 32
          %v1818 = vpop.permute.xlu0 %1817
          %1819 = vrot.lane.b32.xlu0 %v1644, 32
          %v1820 = vpop.permute.xlu0 %1819
          %1825 = vrot.lane.b32.xlu0 %v1588, 64
          %v1826 = vpop.permute.xlu0 %1825
          %1827 = vrot.lane.b32.xlu0 %v1630, 64
          %v1828 = vpop.permute.xlu0 %1827
          %1833 = vrot.lane.b32.xlu0 %v1590, 96
          %v1834 = vpop.permute.xlu0 %1833
          %1835 = vrot.lane.b32.xlu0 %v1646, 96
          %v1836 = vpop.permute.xlu0 %1835
          %1841 = vrot.lane.b32.xlu0 %v1594, 32
          %v1842 = vpop.permute.xlu0 %1841
          %1843 = vrot.lane.b32.xlu0 %v1648, 32
          %v1844 = vpop.permute.xlu0 %1843
          %1849 = vrot.lane.b32.xlu0 %v1596, 64
          %v1850 = vpop.permute.xlu0 %1849
          %1851 = vrot.lane.b32.xlu0 %v1642, 64
          %v1852 = vpop.permute.xlu0 %1851
          %1857 = vrot.lane.b32.xlu0 %v1598, 96
          %v1858 = vpop.permute.xlu0 %1857
          %1859 = vrot.lane.b32.xlu0 %v1650, 96
          %v1860 = vpop.permute.xlu0 %1859
          %1865 = vrot.lane.b32.xlu0 %v1750, 32
          %v1866 = vpop.permute.xlu0 %1865
          %1867 = vrot.lane.b32.xlu0 %v1808, 32
          %v1868 = vpop.permute.xlu0 %1867
          %1873 = vrot.lane.b32.xlu0 %v1752, 64
          %v1874 = vpop.permute.xlu0 %1873
          %1875 = vrot.lane.b32.xlu0 %v1794, 64
          %v1876 = vpop.permute.xlu0 %1875
          %1881 = vrot.lane.b32.xlu0 %v1754, 96
          %v1882 = vpop.permute.xlu0 %1881
          %1883 = vrot.lane.b32.xlu0 %v1810, 96
          %v1884 = vpop.permute.xlu0 %1883
          %1889 = vrot.lane.b32.xlu0 %v1758, 32
          %v1890 = vpop.permute.xlu0 %1889
          %1891 = vrot.lane.b32.xlu0 %v1812, 32
          %v1892 = vpop.permute.xlu0 %1891
          %1897 = vrot.lane.b32.xlu0 %v1760, 64
          %v1898 = vpop.permute.xlu0 %1897
          %1899 = vrot.lane.b32.xlu0 %v1806, 64
          %v1900 = vpop.permute.xlu0 %1899
          %1905 = vrot.lane.b32.xlu0 %v1762, 96
          %v1906 = vpop.permute.xlu0 %1905
          %1907 = vrot.lane.b32.xlu0 %v1814, 96
          %v1908 = vpop.permute.xlu0 %1907
          %v1911 = vsel %vm743, %v1584, %v1818
          %v1912 = vsel %vm743, %v1626, %v1820
          %vm1913 = vcmask 523264
          %v1914 = vsel %vm1913, %v1911, %v1826
          %v1915 = vsel %vm1913, %v1912, %v1828
          %vm1916 = vcmask 785408
          %v1917 = vsel %vm1916, %v1914, %v1834
          %v1918 = vsel %vm1916, %v1915, %v1836
          %v1919 = vsel %vm743, %v1592, %v1842
          %v1920 = vsel %vm743, %v1638, %v1844
          %v1921 = vsel %vm1913, %v1919, %v1850
          %v1922 = vsel %vm1913, %v1920, %v1852
          %v1923 = vsel %vm1916, %v1921, %v1858
          %v1924 = vsel %vm1916, %v1922, %v1860
          %v1925 = vsel %vm743, %v1748, %v1866
          %v1926 = vsel %vm743, %v1790, %v1868
          %v1927 = vsel %vm1913, %v1925, %v1874
          %v1928 = vsel %vm1913, %v1926, %v1876
          %v1929 = vsel %vm1916, %v1927, %v1882
          %v1930 = vsel %vm1916, %v1928, %v1884
          %v1931 = vsel %vm743, %v1756, %v1890
          %v1932 = vsel %vm743, %v1802, %v1892
          %v1933 = vsel %vm1913, %v1931, %v1898
          %v1934 = vsel %vm1913, %v1932, %v1900
          %v1935 = vsel %vm1916, %v1933, %v1906
          %v1936 = vsel %vm1916, %v1934, %v1908
          %v1937 = vsel %vm1487, 0.0, 0.0
          %v1938 = vsel %vm1487, 0.0, 0.0
          %v1940 = vunpack.c.l.s4 1983009808
          %v1941 = vunpack.c.0.s8 %v1940
          %v1942 = vperm.slane %v1937, %v1941
          %v1944 = vunpack.c.l.s4 1983009808
          %v1945 = vunpack.c.0.s8 %v1944
          %v1946 = vperm.slane %v1938, %v1945
          %v1947 = vrot.slane %v1942, 4
          %v1948 = vsel %vm1487, %v1947, %v1942
          %v1949 = vsel %vm1487, %v1942, %v1947
          %v1951 = vunpack.c.l.s4 1934713408
          %v1952 = vunpack.c.0.s8 %v1951
          %v1953 = vperm.slane %v1948, %v1952
          %v1955 = vunpack.c.l.s4 1934713408
          %v1956 = vunpack.c.0.s8 %v1955
          %v1957 = vperm.slane %v1949, %v1956
          %v1958 = vrot.slane %v1946, 4
          %v1959 = vsel %vm1487, %v1958, %v1946
          %v1960 = vsel %vm1487, %v1946, %v1958
          %v1962 = vunpack.c.l.s4 1934713408
          %v1963 = vunpack.c.0.s8 %v1962
          %v1964 = vperm.slane %v1959, %v1963
          %v1966 = vunpack.c.l.s4 1934713408
          %v1967 = vunpack.c.0.s8 %v1966
          %v1968 = vperm.slane %v1960, %v1967
          %v1969 = vrot.slane %v1953, 4
          %v1970 = vsel %vm1487, %v1969, %v1953
          %v1971 = vsel %vm1487, %v1953, %v1969
          %v1972 = vrot.slane %v1957, 4
          %v1973 = vsel %vm1487, %v1972, %v1957
          %v1974 = vsel %vm1487, %v1957, %v1972
          %v1975 = vrot.slane %v1964, 4
          %v1976 = vsel %vm1487, %v1975, %v1964
          %v1977 = vsel %vm1487, %v1964, %v1975
          %v1978 = vrot.slane %v1968, 4
          %v1979 = vsel %vm1487, %v1978, %v1968
          %v1980 = vsel %vm1487, %v1968, %v1978
          %1982 = vrot.lane.b32.xlu0 %v1971, 32
          %v1983 = vpop.permute.xlu0 %1982
          %1986 = vrot.lane.b32.xlu0 %v1973, 64
          %v1987 = vpop.permute.xlu0 %1986
          %1990 = vrot.lane.b32.xlu0 %v1974, 96
          %v1991 = vpop.permute.xlu0 %1990
          %1994 = vrot.lane.b32.xlu0 %v1977, 32
          %v1995 = vpop.permute.xlu0 %1994
          %1998 = vrot.lane.b32.xlu0 %v1979, 64
          %v1999 = vpop.permute.xlu0 %1998
          %2002 = vrot.lane.b32.xlu0 %v1980, 96
          %v2003 = vpop.permute.xlu0 %2002
          %v2005 = vsel %vm743, %v1970, %v1983
          %v2006 = vsel %vm1913, %v2005, %v1987
          %v2007 = vsel %vm1916, %v2006, %v1991
          %v2008 = vsel %vm743, %v1976, %v1995
          %v2009 = vsel %vm1913, %v2008, %v1999
          %v2010 = vsel %vm1916, %v2009, %v2003
          %vm2011 = vcmask 80896
          %v2013 = vsel %vm2011, %v1484, 0
          %v2016 = vsel %vm2011, %v1485, 0
          %vm2018 = vcmask 1041408
          %v2020 = vsel %vm2018, %v1918, 0
          %v2023 = vsel %vm2018, %v1924, 0
          %v2026 = vsel %vm2018, %v1930, 0
          %v2029 = vsel %vm2018, %v1936, 0
          %2031 = vmatpush.msra.mxu0 0.0
          %2032 = vmatpush.msra.mxu0 0.0
          %2033 = vmatpush.msra.mxu0 0.0
          %2034 = vmatpush.msra.mxu0 0.0
          %2035 = vmatpush.msra.mxu0 0.0
          %2036 = vmatpush.msra.mxu0 0.0
          %2037 = vmatpush.msra.mxu0 0.0
          %2038 = vmatpush.msra.mxu0 0.0
          %2039 = vmatpush.msra.mxu0 0.0
          %2040 = vmatpush.msra.mxu0 0.0
          %2041 = vmatpush.msra.mxu0 0.0
          %2042 = vmatpush.msra.mxu0 0.0
          %2043 = vmatpush.msra.mxu0 0.0
          %2044 = vmatpush.msra.mxu0 0.0
          %2045 = vmatpush.msra.mxu0 %v2020
          %2046 = vmatpush.msra.mxu0 %v1917
          %2047 = vmatmul.f32.gmra.mxu0 %v2013
          %v2048 = vpop.f32.mrf.mxu0
          %v2049 = vadd.f32 %v2007, %v2048
          %2050 = vmatmul.f32.gmra.mxu0 %v2016
          %v2051 = vpop.f32.mrf.mxu0
          %v2052 = vadd.f32 %v2007, %v2051
          %2053 = vdwg.mxu0
          %2054 = vmatpush.msra.mxu0 0.0
          %2055 = vmatpush.msra.mxu0 0.0
          %2056 = vmatpush.msra.mxu0 0.0
          %2057 = vmatpush.msra.mxu0 0.0
          %2058 = vmatpush.msra.mxu0 0.0
          %2059 = vmatpush.msra.mxu0 0.0
          %2060 = vmatpush.msra.mxu0 0.0
          %2061 = vmatpush.msra.mxu0 0.0
          %2062 = vmatpush.msra.mxu0 0.0
          %2063 = vmatpush.msra.mxu0 0.0
          %2064 = vmatpush.msra.mxu0 0.0
          %2065 = vmatpush.msra.mxu0 0.0
          %2066 = vmatpush.msra.mxu0 0.0
          %2067 = vmatpush.msra.mxu0 0.0
          %2068 = vmatpush.msra.mxu0 %v2023
          %2069 = vmatpush.msra.mxu0 %v1923
          %2070 = vmatmul.f32.gmra.mxu0 %v2013
          %v2071 = vpop.f32.mrf.mxu0
          %v2072 = vadd.f32 %v2010, %v2071
          %2073 = vmatmul.f32.gmra.mxu0 %v2016
          %v2074 = vpop.f32.mrf.mxu0
          %v2075 = vadd.f32 %v2010, %v2074
          %2076 = vdwg.mxu0
          %2077 = vmatpush.msra.mxu0 0.0
          %2078 = vmatpush.msra.mxu0 0.0
          %2079 = vmatpush.msra.mxu0 0.0
          %2080 = vmatpush.msra.mxu0 0.0
          %2081 = vmatpush.msra.mxu0 0.0
          %2082 = vmatpush.msra.mxu0 0.0
          %2083 = vmatpush.msra.mxu0 0.0
          %2084 = vmatpush.msra.mxu0 0.0
          %2085 = vmatpush.msra.mxu0 0.0
          %2086 = vmatpush.msra.mxu0 0.0
          %2087 = vmatpush.msra.mxu0 0.0
          %2088 = vmatpush.msra.mxu0 0.0
          %2089 = vmatpush.msra.mxu0 0.0
          %2090 = vmatpush.msra.mxu0 0.0
          %2091 = vmatpush.msra.mxu0 %v2026
          %2092 = vmatpush.msra.mxu0 %v1929
          %2093 = vmatmul.f32.gmra.mxu0 %v2013
          %v2094 = vpop.f32.mrf.mxu0
          %v2095 = vadd.f32 %v2007, %v2094
          %2096 = vmatmul.f32.gmra.mxu0 %v2016
          %v2097 = vpop.f32.mrf.mxu0
          %v2098 = vadd.f32 %v2007, %v2097
          %2099 = vdwg.mxu0
          %2100 = vmatpush.msra.mxu0 0.0
          %2101 = vmatpush.msra.mxu0 0.0
          %2102 = vmatpush.msra.mxu0 0.0
          %2103 = vmatpush.msra.mxu0 0.0
          %2104 = vmatpush.msra.mxu0 0.0
          %2105 = vmatpush.msra.mxu0 0.0
          %2106 = vmatpush.msra.mxu0 0.0
          %2107 = vmatpush.msra.mxu0 0.0
          %2108 = vmatpush.msra.mxu0 0.0
          %2109 = vmatpush.msra.mxu0 0.0
          %2110 = vmatpush.msra.mxu0 0.0
          %2111 = vmatpush.msra.mxu0 0.0
          %2112 = vmatpush.msra.mxu0 0.0
          %2113 = vmatpush.msra.mxu0 0.0
          %2114 = vmatpush.msra.mxu0 %v2029
          %2115 = vmatpush.msra.mxu0 %v1935
          %2116 = vmatmul.f32.gmra.mxu0 %v2013
          %v2117 = vpop.f32.mrf.mxu0
          %v2118 = vadd.f32 %v2010, %v2117
          %2119 = vmatmul.f32.gmra.mxu0 %v2016
          %v2120 = vpop.f32.mrf.mxu0
          %v2121 = vadd.f32 %v2010, %v2120
          %2122 = vdwg.mxu0
          %2125 = vrot.lane.b32.xlu0 %v2049, 96
          %v2126 = vpop.permute.xlu0 %2125
          %2127 = vrot.lane.b32.xlu0 %v2052, 96
          %v2128 = vpop.permute.xlu0 %2127
          %2131 = vrot.lane.b32.xlu0 %v2049, 64
          %v2132 = vpop.permute.xlu0 %2131
          %2133 = vrot.lane.b32.xlu0 %v2052, 64
          %v2134 = vpop.permute.xlu0 %2133
          %2137 = vrot.lane.b32.xlu0 %v2049, 32
          %v2138 = vpop.permute.xlu0 %2137
          %2139 = vrot.lane.b32.xlu0 %v2052, 32
          %v2140 = vpop.permute.xlu0 %2139
          %2145 = vrot.lane.b32.xlu0 %v2072, 96
          %v2146 = vpop.permute.xlu0 %2145
          %2147 = vrot.lane.b32.xlu0 %v2075, 96
          %v2148 = vpop.permute.xlu0 %2147
          %2151 = vrot.lane.b32.xlu0 %v2072, 64
          %v2152 = vpop.permute.xlu0 %2151
          %2153 = vrot.lane.b32.xlu0 %v2075, 64
          %v2154 = vpop.permute.xlu0 %2153
          %2157 = vrot.lane.b32.xlu0 %v2072, 32
          %v2158 = vpop.permute.xlu0 %2157
          %2159 = vrot.lane.b32.xlu0 %v2075, 32
          %v2160 = vpop.permute.xlu0 %2159
          %2165 = vrot.lane.b32.xlu0 %v2095, 96
          %v2166 = vpop.permute.xlu0 %2165
          %2167 = vrot.lane.b32.xlu0 %v2098, 96
          %v2168 = vpop.permute.xlu0 %2167
          %2171 = vrot.lane.b32.xlu0 %v2095, 64
          %v2172 = vpop.permute.xlu0 %2171
          %2173 = vrot.lane.b32.xlu0 %v2098, 64
          %v2174 = vpop.permute.xlu0 %2173
          %2177 = vrot.lane.b32.xlu0 %v2095, 32
          %v2178 = vpop.permute.xlu0 %2177
          %2179 = vrot.lane.b32.xlu0 %v2098, 32
          %v2180 = vpop.permute.xlu0 %2179
          %2185 = vrot.lane.b32.xlu0 %v2118, 96
          %v2186 = vpop.permute.xlu0 %2185
          %2187 = vrot.lane.b32.xlu0 %v2121, 96
          %v2188 = vpop.permute.xlu0 %2187
          %2191 = vrot.lane.b32.xlu0 %v2118, 64
          %v2192 = vpop.permute.xlu0 %2191
          %2193 = vrot.lane.b32.xlu0 %v2121, 64
          %v2194 = vpop.permute.xlu0 %2193
          %2197 = vrot.lane.b32.xlu0 %v2118, 32
          %v2198 = vpop.permute.xlu0 %2197
          %2199 = vrot.lane.b32.xlu0 %v2121, 32
          %v2200 = vpop.permute.xlu0 %2199
          %v2203 = vld [vmem:[%s6] sm:$0xff]
          %v2204 = vld [vmem:[%s6 + $0x8] sm:$0xff]
          %v2205 = vld [vmem:[%s6 + $0x10] sm:$0xff]
          %v2206 = vld [vmem:[%s6 + $0x18] sm:$0xff]
          %2207 = vxpose.xlu0.b32.start [1/16] %v2049, 128
          %2208 = vxpose.xlu0.b32.cont [2/16] %v2052, 128
          %2209 = vxpose.xlu0.b32.cont [3/16] 0.0, 128
          %2210 = vxpose.xlu0.b32.cont [4/16] 0.0, 128
          %2211 = vxpose.xlu0.b32.cont [5/16] 0.0, 128
          %2212 = vxpose.xlu0.b32.cont [6/16] 0.0, 128
          %2213 = vxpose.xlu0.b32.cont [7/16] 0.0, 128
          %2214 = vxpose.xlu0.b32.cont [8/16] 0.0, 128
          %2215 = vxpose.xlu0.b32.cont [9/16] 0.0, 128
          %2216 = vxpose.xlu0.b32.cont [10/16] 0.0, 128
          %2217 = vxpose.xlu0.b32.cont [11/16] 0.0, 128
          %2218 = vxpose.xlu0.b32.cont [12/16] 0.0, 128
          %2219 = vxpose.xlu0.b32.cont [13/16] 0.0, 128
          %2220 = vxpose.xlu0.b32.cont [14/16] 0.0, 128
          %2221 = vxpose.xlu0.b32.cont [15/16] 0.0, 128
          %2222 = vxpose.xlu0.b32.end [16/16] 0.0, 128
          %v2223 = vpop.trf.xlu0
          %v2224 = vpop.trf.xlu0
          %v2225 = vpop.trf.xlu0
          %v2226 = vpop.trf.xlu0
          %v2227 = vpop.trf.xlu0
          %v2228 = vpop.trf.xlu0
          %v2229 = vpop.trf.xlu0
          %v2230 = vpop.trf.xlu0
          %v2231 = vpop.trf.xlu0
          %v2232 = vpop.trf.xlu0
          %v2233 = vpop.trf.xlu0
          %v2234 = vpop.trf.xlu0
          %v2235 = vpop.trf.xlu0
          %v2236 = vpop.trf.xlu0
          %v2237 = vpop.trf.xlu0
          %v2238 = vpop.trf.xlu0
          %2239 = vxpose.xlu0.b32.start [1/16] %v2126, 128
          %2240 = vxpose.xlu0.b32.cont [2/16] %v2128, 128
          %2241 = vxpose.xlu0.b32.cont [3/16] 0.0, 128
          %2242 = vxpose.xlu0.b32.cont [4/16] 0.0, 128
          %2243 = vxpose.xlu0.b32.cont [5/16] 0.0, 128
          %2244 = vxpose.xlu0.b32.cont [6/16] 0.0, 128
          %2245 = vxpose.xlu0.b32.cont [7/16] 0.0, 128
          %2246 = vxpose.xlu0.b32.cont [8/16] 0.0, 128
          %2247 = vxpose.xlu0.b32.cont [9/16] 0.0, 128
          %2248 = vxpose.xlu0.b32.cont [10/16] 0.0, 128
          %2249 = vxpose.xlu0.b32.cont [11/16] 0.0, 128
          %2250 = vxpose.xlu0.b32.cont [12/16] 0.0, 128
          %2251 = vxpose.xlu0.b32.cont [13/16] 0.0, 128
          %2252 = vxpose.xlu0.b32.cont [14/16] 0.0, 128
          %2253 = vxpose.xlu0.b32.cont [15/16] 0.0, 128
          %2254 = vxpose.xlu0.b32.end [16/16] 0.0, 128
          %v2255 = vpop.trf.xlu0
          %v2256 = vpop.trf.xlu0
          %v2257 = vpop.trf.xlu0
          %v2258 = vpop.trf.xlu0
          %v2259 = vpop.trf.xlu0
          %v2260 = vpop.trf.xlu0
          %v2261 = vpop.trf.xlu0
          %v2262 = vpop.trf.xlu0
          %v2263 = vpop.trf.xlu0
          %v2264 = vpop.trf.xlu0
          %v2265 = vpop.trf.xlu0
          %v2266 = vpop.trf.xlu0
          %v2267 = vpop.trf.xlu0
          %v2268 = vpop.trf.xlu0
          %v2269 = vpop.trf.xlu0
          %v2270 = vpop.trf.xlu0
          %2271 = vxpose.xlu0.b32.start [1/16] %v2132, 128
          %2272 = vxpose.xlu0.b32.cont [2/16] %v2134, 128
          %2273 = vxpose.xlu0.b32.cont [3/16] 0.0, 128
          %2274 = vxpose.xlu0.b32.cont [4/16] 0.0, 128
          %2275 = vxpose.xlu0.b32.cont [5/16] 0.0, 128
          %2276 = vxpose.xlu0.b32.cont [6/16] 0.0, 128
          %2277 = vxpose.xlu0.b32.cont [7/16] 0.0, 128
          %2278 = vxpose.xlu0.b32.cont [8/16] 0.0, 128
          %2279 = vxpose.xlu0.b32.cont [9/16] 0.0, 128
          %2280 = vxpose.xlu0.b32.cont [10/16] 0.0, 128
          %2281 = vxpose.xlu0.b32.cont [11/16] 0.0, 128
          %2282 = vxpose.xlu0.b32.cont [12/16] 0.0, 128
          %2283 = vxpose.xlu0.b32.cont [13/16] 0.0, 128
          %2284 = vxpose.xlu0.b32.cont [14/16] 0.0, 128
          %2285 = vxpose.xlu0.b32.cont [15/16] 0.0, 128
          %2286 = vxpose.xlu0.b32.end [16/16] 0.0, 128
          %v2287 = vpop.trf.xlu0
          %v2288 = vpop.trf.xlu0
          %v2289 = vpop.trf.xlu0
          %v2290 = vpop.trf.xlu0
          %v2291 = vpop.trf.xlu0
          %v2292 = vpop.trf.xlu0
          %v2293 = vpop.trf.xlu0
          %v2294 = vpop.trf.xlu0
          %v2295 = vpop.trf.xlu0
          %v2296 = vpop.trf.xlu0
          %v2297 = vpop.trf.xlu0
          %v2298 = vpop.trf.xlu0
          %v2299 = vpop.trf.xlu0
          %v2300 = vpop.trf.xlu0
          %v2301 = vpop.trf.xlu0
          %v2302 = vpop.trf.xlu0
          %2303 = vxpose.xlu0.b32.start [1/16] %v2138, 128
          %2304 = vxpose.xlu0.b32.cont [2/16] %v2140, 128
          %2305 = vxpose.xlu0.b32.cont [3/16] 0.0, 128
          %2306 = vxpose.xlu0.b32.cont [4/16] 0.0, 128
          %2307 = vxpose.xlu0.b32.cont [5/16] 0.0, 128
          %2308 = vxpose.xlu0.b32.cont [6/16] 0.0, 128
          %2309 = vxpose.xlu0.b32.cont [7/16] 0.0, 128
          %2310 = vxpose.xlu0.b32.cont [8/16] 0.0, 128
          %2311 = vxpose.xlu0.b32.cont [9/16] 0.0, 128
          %2312 = vxpose.xlu0.b32.cont [10/16] 0.0, 128
          %2313 = vxpose.xlu0.b32.cont [11/16] 0.0, 128
          %2314 = vxpose.xlu0.b32.cont [12/16] 0.0, 128
          %2315 = vxpose.xlu0.b32.cont [13/16] 0.0, 128
          %2316 = vxpose.xlu0.b32.cont [14/16] 0.0, 128
          %2317 = vxpose.xlu0.b32.cont [15/16] 0.0, 128
          %2318 = vxpose.xlu0.b32.end [16/16] 0.0, 128
          %v2319 = vpop.trf.xlu0
          %v2320 = vpop.trf.xlu0
          %v2321 = vpop.trf.xlu0
          %v2322 = vpop.trf.xlu0
          %v2323 = vpop.trf.xlu0
          %v2324 = vpop.trf.xlu0
          %v2325 = vpop.trf.xlu0
          %v2326 = vpop.trf.xlu0
          %v2327 = vpop.trf.xlu0
          %v2328 = vpop.trf.xlu0
          %v2329 = vpop.trf.xlu0
          %v2330 = vpop.trf.xlu0
          %v2331 = vpop.trf.xlu0
          %v2332 = vpop.trf.xlu0
          %v2333 = vpop.trf.xlu0
          %v2334 = vpop.trf.xlu0
          %2335 = vxpose.xlu0.b32.start [1/16] %v2072, 128
          %2336 = vxpose.xlu0.b32.cont [2/16] %v2075, 128
          %2337 = vxpose.xlu0.b32.cont [3/16] 0.0, 128
          %2338 = vxpose.xlu0.b32.cont [4/16] 0.0, 128
          %2339 = vxpose.xlu0.b32.cont [5/16] 0.0, 128
          %2340 = vxpose.xlu0.b32.cont [6/16] 0.0, 128
          %2341 = vxpose.xlu0.b32.cont [7/16] 0.0, 128
          %2342 = vxpose.xlu0.b32.cont [8/16] 0.0, 128
          %2343 = vxpose.xlu0.b32.cont [9/16] 0.0, 128
          %2344 = vxpose.xlu0.b32.cont [10/16] 0.0, 128
          %2345 = vxpose.xlu0.b32.cont [11/16] 0.0, 128
          %2346 = vxpose.xlu0.b32.cont [12/16] 0.0, 128
          %2347 = vxpose.xlu0.b32.cont [13/16] 0.0, 128
          %2348 = vxpose.xlu0.b32.cont [14/16] 0.0, 128
          %2349 = vxpose.xlu0.b32.cont [15/16] 0.0, 128
          %2350 = vxpose.xlu0.b32.end [16/16] 0.0, 128
          %v2351 = vpop.trf.xlu0
          %v2352 = vpop.trf.xlu0
          %v2353 = vpop.trf.xlu0
          %v2354 = vpop.trf.xlu0
          %v2355 = vpop.trf.xlu0
          %v2356 = vpop.trf.xlu0
          %v2357 = vpop.trf.xlu0
          %v2358 = vpop.trf.xlu0
          %v2359 = vpop.trf.xlu0
          %v2360 = vpop.trf.xlu0
          %v2361 = vpop.trf.xlu0
          %v2362 = vpop.trf.xlu0
          %v2363 = vpop.trf.xlu0
          %v2364 = vpop.trf.xlu0
          %v2365 = vpop.trf.xlu0
          %v2366 = vpop.trf.xlu0
          %2367 = vxpose.xlu0.b32.start [1/16] %v2146, 128
          %2368 = vxpose.xlu0.b32.cont [2/16] %v2148, 128
          %2369 = vxpose.xlu0.b32.cont [3/16] 0.0, 128
          %2370 = vxpose.xlu0.b32.cont [4/16] 0.0, 128
          %2371 = vxpose.xlu0.b32.cont [5/16] 0.0, 128
          %2372 = vxpose.xlu0.b32.cont [6/16] 0.0, 128
          %2373 = vxpose.xlu0.b32.cont [7/16] 0.0, 128
          %2374 = vxpose.xlu0.b32.cont [8/16] 0.0, 128
          %2375 = vxpose.xlu0.b32.cont [9/16] 0.0, 128
          %2376 = vxpose.xlu0.b32.cont [10/16] 0.0, 128
          %2377 = vxpose.xlu0.b32.cont [11/16] 0.0, 128
          %2378 = vxpose.xlu0.b32.cont [12/16] 0.0, 128
          %2379 = vxpose.xlu0.b32.cont [13/16] 0.0, 128
          %2380 = vxpose.xlu0.b32.cont [14/16] 0.0, 128
          %2381 = vxpose.xlu0.b32.cont [15/16] 0.0, 128
          %2382 = vxpose.xlu0.b32.end [16/16] 0.0, 128
          %v2383 = vpop.trf.xlu0
          %v2384 = vpop.trf.xlu0
          %v2385 = vpop.trf.xlu0
          %v2386 = vpop.trf.xlu0
          %v2387 = vpop.trf.xlu0
          %v2388 = vpop.trf.xlu0
          %v2389 = vpop.trf.xlu0
          %v2390 = vpop.trf.xlu0
          %v2391 = vpop.trf.xlu0
          %v2392 = vpop.trf.xlu0
          %v2393 = vpop.trf.xlu0
          %v2394 = vpop.trf.xlu0
          %v2395 = vpop.trf.xlu0
          %v2396 = vpop.trf.xlu0
          %v2397 = vpop.trf.xlu0
          %v2398 = vpop.trf.xlu0
          %2399 = vxpose.xlu0.b32.start [1/16] %v2152, 128
          %2400 = vxpose.xlu0.b32.cont [2/16] %v2154, 128
          %2401 = vxpose.xlu0.b32.cont [3/16] 0.0, 128
          %2402 = vxpose.xlu0.b32.cont [4/16] 0.0, 128
          %2403 = vxpose.xlu0.b32.cont [5/16] 0.0, 128
          %2404 = vxpose.xlu0.b32.cont [6/16] 0.0, 128
          %2405 = vxpose.xlu0.b32.cont [7/16] 0.0, 128
          %2406 = vxpose.xlu0.b32.cont [8/16] 0.0, 128
          %2407 = vxpose.xlu0.b32.cont [9/16] 0.0, 128
          %2408 = vxpose.xlu0.b32.cont [10/16] 0.0, 128
          %2409 = vxpose.xlu0.b32.cont [11/16] 0.0, 128
          %2410 = vxpose.xlu0.b32.cont [12/16] 0.0, 128
          %2411 = vxpose.xlu0.b32.cont [13/16] 0.0, 128
          %2412 = vxpose.xlu0.b32.cont [14/16] 0.0, 128
          %2413 = vxpose.xlu0.b32.cont [15/16] 0.0, 128
          %2414 = vxpose.xlu0.b32.end [16/16] 0.0, 128
          %v2415 = vpop.trf.xlu0
          %v2416 = vpop.trf.xlu0
          %v2417 = vpop.trf.xlu0
          %v2418 = vpop.trf.xlu0
          %v2419 = vpop.trf.xlu0
          %v2420 = vpop.trf.xlu0
          %v2421 = vpop.trf.xlu0
          %v2422 = vpop.trf.xlu0
          %v2423 = vpop.trf.xlu0
          %v2424 = vpop.trf.xlu0
          %v2425 = vpop.trf.xlu0
          %v2426 = vpop.trf.xlu0
          %v2427 = vpop.trf.xlu0
          %v2428 = vpop.trf.xlu0
          %v2429 = vpop.trf.xlu0
          %v2430 = vpop.trf.xlu0
          %2431 = vxpose.xlu0.b32.start [1/16] %v2158, 128
          %2432 = vxpose.xlu0.b32.cont [2/16] %v2160, 128
          %2433 = vxpose.xlu0.b32.cont [3/16] 0.0, 128
          %2434 = vxpose.xlu0.b32.cont [4/16] 0.0, 128
          %2435 = vxpose.xlu0.b32.cont [5/16] 0.0, 128
          %2436 = vxpose.xlu0.b32.cont [6/16] 0.0, 128
          %2437 = vxpose.xlu0.b32.cont [7/16] 0.0, 128
          %2438 = vxpose.xlu0.b32.cont [8/16] 0.0, 128
          %2439 = vxpose.xlu0.b32.cont [9/16] 0.0, 128
          %2440 = vxpose.xlu0.b32.cont [10/16] 0.0, 128
          %2441 = vxpose.xlu0.b32.cont [11/16] 0.0, 128
          %2442 = vxpose.xlu0.b32.cont [12/16] 0.0, 128
          %2443 = vxpose.xlu0.b32.cont [13/16] 0.0, 128
          %2444 = vxpose.xlu0.b32.cont [14/16] 0.0, 128
          %2445 = vxpose.xlu0.b32.cont [15/16] 0.0, 128
          %2446 = vxpose.xlu0.b32.end [16/16] 0.0, 128
          %v2447 = vpop.trf.xlu0
          %v2448 = vpop.trf.xlu0
          %v2449 = vpop.trf.xlu0
          %v2450 = vpop.trf.xlu0
          %v2451 = vpop.trf.xlu0
          %v2452 = vpop.trf.xlu0
          %v2453 = vpop.trf.xlu0
          %v2454 = vpop.trf.xlu0
          %v2455 = vpop.trf.xlu0
          %v2456 = vpop.trf.xlu0
          %v2457 = vpop.trf.xlu0
          %v2458 = vpop.trf.xlu0
          %v2459 = vpop.trf.xlu0
          %v2460 = vpop.trf.xlu0
          %v2461 = vpop.trf.xlu0
          %v2462 = vpop.trf.xlu0
          %2463 = vxpose.xlu0.b32.start [1/16] %v2095, 128
          %2464 = vxpose.xlu0.b32.cont [2/16] %v2098, 128
          %2465 = vxpose.xlu0.b32.cont [3/16] 0.0, 128
          %2466 = vxpose.xlu0.b32.cont [4/16] 0.0, 128
          %2467 = vxpose.xlu0.b32.cont [5/16] 0.0, 128
          %2468 = vxpose.xlu0.b32.cont [6/16] 0.0, 128
          %2469 = vxpose.xlu0.b32.cont [7/16] 0.0, 128
          %2470 = vxpose.xlu0.b32.cont [8/16] 0.0, 128
          %2471 = vxpose.xlu0.b32.cont [9/16] 0.0, 128
          %2472 = vxpose.xlu0.b32.cont [10/16] 0.0, 128
          %2473 = vxpose.xlu0.b32.cont [11/16] 0.0, 128
          %2474 = vxpose.xlu0.b32.cont [12/16] 0.0, 128
          %2475 = vxpose.xlu0.b32.cont [13/16] 0.0, 128
          %2476 = vxpose.xlu0.b32.cont [14/16] 0.0, 128
          %2477 = vxpose.xlu0.b32.cont [15/16] 0.0, 128
          %2478 = vxpose.xlu0.b32.end [16/16] 0.0, 128
          %v2479 = vpop.trf.xlu0
          %v2480 = vpop.trf.xlu0
          %v2481 = vpop.trf.xlu0
          %v2482 = vpop.trf.xlu0
          %v2483 = vpop.trf.xlu0
          %v2484 = vpop.trf.xlu0
          %v2485 = vpop.trf.xlu0
          %v2486 = vpop.trf.xlu0
          %v2487 = vpop.trf.xlu0
          %v2488 = vpop.trf.xlu0
          %v2489 = vpop.trf.xlu0
          %v2490 = vpop.trf.xlu0
          %v2491 = vpop.trf.xlu0
          %v2492 = vpop.trf.xlu0
          %v2493 = vpop.trf.xlu0
          %v2494 = vpop.trf.xlu0
          %2495 = vxpose.xlu0.b32.start [1/16] %v2166, 128
          %2496 = vxpose.xlu0.b32.cont [2/16] %v2168, 128
          %2497 = vxpose.xlu0.b32.cont [3/16] 0.0, 128
          %2498 = vxpose.xlu0.b32.cont [4/16] 0.0, 128
          %2499 = vxpose.xlu0.b32.cont [5/16] 0.0, 128
          %2500 = vxpose.xlu0.b32.cont [6/16] 0.0, 128
          %2501 = vxpose.xlu0.b32.cont [7/16] 0.0, 128
          %2502 = vxpose.xlu0.b32.cont [8/16] 0.0, 128
          %2503 = vxpose.xlu0.b32.cont [9/16] 0.0, 128
          %2504 = vxpose.xlu0.b32.cont [10/16] 0.0, 128
          %2505 = vxpose.xlu0.b32.cont [11/16] 0.0, 128
          %2506 = vxpose.xlu0.b32.cont [12/16] 0.0, 128
          %2507 = vxpose.xlu0.b32.cont [13/16] 0.0, 128
          %2508 = vxpose.xlu0.b32.cont [14/16] 0.0, 128
          %2509 = vxpose.xlu0.b32.cont [15/16] 0.0, 128
          %2510 = vxpose.xlu0.b32.end [16/16] 0.0, 128
          %v2511 = vpop.trf.xlu0
          %v2512 = vpop.trf.xlu0
          %v2513 = vpop.trf.xlu0
          %v2514 = vpop.trf.xlu0
          %v2515 = vpop.trf.xlu0
          %v2516 = vpop.trf.xlu0
          %v2517 = vpop.trf.xlu0
          %v2518 = vpop.trf.xlu0
          %v2519 = vpop.trf.xlu0
          %v2520 = vpop.trf.xlu0
          %v2521 = vpop.trf.xlu0
          %v2522 = vpop.trf.xlu0
          %v2523 = vpop.trf.xlu0
          %v2524 = vpop.trf.xlu0
          %v2525 = vpop.trf.xlu0
          %v2526 = vpop.trf.xlu0
          %2527 = vxpose.xlu0.b32.start [1/16] %v2172, 128
          %2528 = vxpose.xlu0.b32.cont [2/16] %v2174, 128
          %2529 = vxpose.xlu0.b32.cont [3/16] 0.0, 128
          %2530 = vxpose.xlu0.b32.cont [4/16] 0.0, 128
          %2531 = vxpose.xlu0.b32.cont [5/16] 0.0, 128
          %2532 = vxpose.xlu0.b32.cont [6/16] 0.0, 128
          %2533 = vxpose.xlu0.b32.cont [7/16] 0.0, 128
          %2534 = vxpose.xlu0.b32.cont [8/16] 0.0, 128
          %2535 = vxpose.xlu0.b32.cont [9/16] 0.0, 128
          %2536 = vxpose.xlu0.b32.cont [10/16] 0.0, 128
          %2537 = vxpose.xlu0.b32.cont [11/16] 0.0, 128
          %2538 = vxpose.xlu0.b32.cont [12/16] 0.0, 128
          %2539 = vxpose.xlu0.b32.cont [13/16] 0.0, 128
          %2540 = vxpose.xlu0.b32.cont [14/16] 0.0, 128
          %2541 = vxpose.xlu0.b32.cont [15/16] 0.0, 128
          %2542 = vxpose.xlu0.b32.end [16/16] 0.0, 128
          %v2543 = vpop.trf.xlu0
          %v2544 = vpop.trf.xlu0
          %v2545 = vpop.trf.xlu0
          %v2546 = vpop.trf.xlu0
          %v2547 = vpop.trf.xlu0
          %v2548 = vpop.trf.xlu0
          %v2549 = vpop.trf.xlu0
          %v2550 = vpop.trf.xlu0
          %v2551 = vpop.trf.xlu0
          %v2552 = vpop.trf.xlu0
          %v2553 = vpop.trf.xlu0
          %v2554 = vpop.trf.xlu0
          %v2555 = vpop.trf.xlu0
          %v2556 = vpop.trf.xlu0
          %v2557 = vpop.trf.xlu0
          %v2558 = vpop.trf.xlu0
          %2559 = vxpose.xlu0.b32.start [1/16] %v2178, 128
          %2560 = vxpose.xlu0.b32.cont [2/16] %v2180, 128
          %2561 = vxpose.xlu0.b32.cont [3/16] 0.0, 128
          %2562 = vxpose.xlu0.b32.cont [4/16] 0.0, 128
          %2563 = vxpose.xlu0.b32.cont [5/16] 0.0, 128
          %2564 = vxpose.xlu0.b32.cont [6/16] 0.0, 128
          %2565 = vxpose.xlu0.b32.cont [7/16] 0.0, 128
          %2566 = vxpose.xlu0.b32.cont [8/16] 0.0, 128
          %2567 = vxpose.xlu0.b32.cont [9/16] 0.0, 128
          %2568 = vxpose.xlu0.b32.cont [10/16] 0.0, 128
          %2569 = vxpose.xlu0.b32.cont [11/16] 0.0, 128
          %2570 = vxpose.xlu0.b32.cont [12/16] 0.0, 128
          %2571 = vxpose.xlu0.b32.cont [13/16] 0.0, 128
          %2572 = vxpose.xlu0.b32.cont [14/16] 0.0, 128
          %2573 = vxpose.xlu0.b32.cont [15/16] 0.0, 128
          %2574 = vxpose.xlu0.b32.end [16/16] 0.0, 128
          %v2575 = vpop.trf.xlu0
          %v2576 = vpop.trf.xlu0
          %v2577 = vpop.trf.xlu0
          %v2578 = vpop.trf.xlu0
          %v2579 = vpop.trf.xlu0
          %v2580 = vpop.trf.xlu0
          %v2581 = vpop.trf.xlu0
          %v2582 = vpop.trf.xlu0
          %v2583 = vpop.trf.xlu0
          %v2584 = vpop.trf.xlu0
          %v2585 = vpop.trf.xlu0
          %v2586 = vpop.trf.xlu0
          %v2587 = vpop.trf.xlu0
          %v2588 = vpop.trf.xlu0
          %v2589 = vpop.trf.xlu0
          %v2590 = vpop.trf.xlu0
          %2591 = vxpose.xlu0.b32.start [1/16] %v2118, 128
          %2592 = vxpose.xlu0.b32.cont [2/16] %v2121, 128
          %2593 = vxpose.xlu0.b32.cont [3/16] 0.0, 128
          %2594 = vxpose.xlu0.b32.cont [4/16] 0.0, 128
          %2595 = vxpose.xlu0.b32.cont [5/16] 0.0, 128
          %2596 = vxpose.xlu0.b32.cont [6/16] 0.0, 128
          %2597 = vxpose.xlu0.b32.cont [7/16] 0.0, 128
          %2598 = vxpose.xlu0.b32.cont [8/16] 0.0, 128
          %2599 = vxpose.xlu0.b32.cont [9/16] 0.0, 128
          %2600 = vxpose.xlu0.b32.cont [10/16] 0.0, 128
          %2601 = vxpose.xlu0.b32.cont [11/16] 0.0, 128
          %2602 = vxpose.xlu0.b32.cont [12/16] 0.0, 128
          %2603 = vxpose.xlu0.b32.cont [13/16] 0.0, 128
          %2604 = vxpose.xlu0.b32.cont [14/16] 0.0, 128
          %2605 = vxpose.xlu0.b32.cont [15/16] 0.0, 128
          %2606 = vxpose.xlu0.b32.end [16/16] 0.0, 128
          %v2607 = vpop.trf.xlu0
          %v2608 = vpop.trf.xlu0
          %v2609 = vpop.trf.xlu0
          %v2610 = vpop.trf.xlu0
          %v2611 = vpop.trf.xlu0
          %v2612 = vpop.trf.xlu0
          %v2613 = vpop.trf.xlu0
          %v2614 = vpop.trf.xlu0
          %v2615 = vpop.trf.xlu0
          %v2616 = vpop.trf.xlu0
          %v2617 = vpop.trf.xlu0
          %v2618 = vpop.trf.xlu0
          %v2619 = vpop.trf.xlu0
          %v2620 = vpop.trf.xlu0
          %v2621 = vpop.trf.xlu0
          %v2622 = vpop.trf.xlu0
          %2623 = vxpose.xlu0.b32.start [1/16] %v2186, 128
          %2624 = vxpose.xlu0.b32.cont [2/16] %v2188, 128
          %2625 = vxpose.xlu0.b32.cont [3/16] 0.0, 128
          %2626 = vxpose.xlu0.b32.cont [4/16] 0.0, 128
          %2627 = vxpose.xlu0.b32.cont [5/16] 0.0, 128
          %2628 = vxpose.xlu0.b32.cont [6/16] 0.0, 128
          %2629 = vxpose.xlu0.b32.cont [7/16] 0.0, 128
          %2630 = vxpose.xlu0.b32.cont [8/16] 0.0, 128
          %2631 = vxpose.xlu0.b32.cont [9/16] 0.0, 128
          %2632 = vxpose.xlu0.b32.cont [10/16] 0.0, 128
          %2633 = vxpose.xlu0.b32.cont [11/16] 0.0, 128
          %2634 = vxpose.xlu0.b32.cont [12/16] 0.0, 128
          %2635 = vxpose.xlu0.b32.cont [13/16] 0.0, 128
          %2636 = vxpose.xlu0.b32.cont [14/16] 0.0, 128
          %2637 = vxpose.xlu0.b32.cont [15/16] 0.0, 128
          %2638 = vxpose.xlu0.b32.end [16/16] 0.0, 128
          %v2639 = vpop.trf.xlu0
          %v2640 = vpop.trf.xlu0
          %v2641 = vpop.trf.xlu0
          %v2642 = vpop.trf.xlu0
          %v2643 = vpop.trf.xlu0
          %v2644 = vpop.trf.xlu0
          %v2645 = vpop.trf.xlu0
          %v2646 = vpop.trf.xlu0
          %v2647 = vpop.trf.xlu0
          %v2648 = vpop.trf.xlu0
          %v2649 = vpop.trf.xlu0
          %v2650 = vpop.trf.xlu0
          %v2651 = vpop.trf.xlu0
          %v2652 = vpop.trf.xlu0
          %v2653 = vpop.trf.xlu0
          %v2654 = vpop.trf.xlu0
          %2655 = vxpose.xlu0.b32.start [1/16] %v2192, 128
          %2656 = vxpose.xlu0.b32.cont [2/16] %v2194, 128
          %2657 = vxpose.xlu0.b32.cont [3/16] 0.0, 128
          %2658 = vxpose.xlu0.b32.cont [4/16] 0.0, 128
          %2659 = vxpose.xlu0.b32.cont [5/16] 0.0, 128
          %2660 = vxpose.xlu0.b32.cont [6/16] 0.0, 128
          %2661 = vxpose.xlu0.b32.cont [7/16] 0.0, 128
          %2662 = vxpose.xlu0.b32.cont [8/16] 0.0, 128
          %2663 = vxpose.xlu0.b32.cont [9/16] 0.0, 128
          %2664 = vxpose.xlu0.b32.cont [10/16] 0.0, 128
          %2665 = vxpose.xlu0.b32.cont [11/16] 0.0, 128
          %2666 = vxpose.xlu0.b32.cont [12/16] 0.0, 128
          %2667 = vxpose.xlu0.b32.cont [13/16] 0.0, 128
          %2668 = vxpose.xlu0.b32.cont [14/16] 0.0, 128
          %2669 = vxpose.xlu0.b32.cont [15/16] 0.0, 128
          %2670 = vxpose.xlu0.b32.end [16/16] 0.0, 128
          %v2671 = vpop.trf.xlu0
          %v2672 = vpop.trf.xlu0
          %v2673 = vpop.trf.xlu0
          %v2674 = vpop.trf.xlu0
          %v2675 = vpop.trf.xlu0
          %v2676 = vpop.trf.xlu0
          %v2677 = vpop.trf.xlu0
          %v2678 = vpop.trf.xlu0
          %v2679 = vpop.trf.xlu0
          %v2680 = vpop.trf.xlu0
          %v2681 = vpop.trf.xlu0
          %v2682 = vpop.trf.xlu0
          %v2683 = vpop.trf.xlu0
          %v2684 = vpop.trf.xlu0
          %v2685 = vpop.trf.xlu0
          %v2686 = vpop.trf.xlu0
          %2687 = vxpose.xlu0.b32.start [1/16] %v2198, 128
          %2688 = vxpose.xlu0.b32.cont [2/16] %v2200, 128
          %2689 = vxpose.xlu0.b32.cont [3/16] 0.0, 128
          %2690 = vxpose.xlu0.b32.cont [4/16] 0.0, 128
          %2691 = vxpose.xlu0.b32.cont [5/16] 0.0, 128
          %2692 = vxpose.xlu0.b32.cont [6/16] 0.0, 128
          %2693 = vxpose.xlu0.b32.cont [7/16] 0.0, 128
          %2694 = vxpose.xlu0.b32.cont [8/16] 0.0, 128
          %2695 = vxpose.xlu0.b32.cont [9/16] 0.0, 128
          %2696 = vxpose.xlu0.b32.cont [10/16] 0.0, 128
          %2697 = vxpose.xlu0.b32.cont [11/16] 0.0, 128
          %2698 = vxpose.xlu0.b32.cont [12/16] 0.0, 128
          %2699 = vxpose.xlu0.b32.cont [13/16] 0.0, 128
          %2700 = vxpose.xlu0.b32.cont [14/16] 0.0, 128
          %2701 = vxpose.xlu0.b32.cont [15/16] 0.0, 128
          %2702 = vxpose.xlu0.b32.end [16/16] 0.0, 128
          %v2703 = vpop.trf.xlu0
          %v2704 = vpop.trf.xlu0
          %v2705 = vpop.trf.xlu0
          %v2706 = vpop.trf.xlu0
          %v2707 = vpop.trf.xlu0
          %v2708 = vpop.trf.xlu0
          %v2709 = vpop.trf.xlu0
          %v2710 = vpop.trf.xlu0
          %v2711 = vpop.trf.xlu0
          %v2712 = vpop.trf.xlu0
          %v2713 = vpop.trf.xlu0
          %v2714 = vpop.trf.xlu0
          %v2715 = vpop.trf.xlu0
          %v2716 = vpop.trf.xlu0
          %v2717 = vpop.trf.xlu0
          %v2718 = vpop.trf.xlu0
          %v2719 = vrot.slane %v2287, 4
          %v2720 = vsel %vm1487, %v2719, %v2223
          %v2721 = vrot.slane %v2223, 4
          %v2722 = vsel %vm1487, %v2287, %v2721
          %v2724 = vunpack.c.l.s4 1983009808
          %v2725 = vunpack.c.0.s8 %v2724
          %v2726 = vperm.slane %v2720, %v2725
          %v2728 = vunpack.c.l.s4 1983009808
          %v2729 = vunpack.c.0.s8 %v2728
          %v2730 = vperm.slane %v2722, %v2729
          %v2731 = vrot.slane %v2319, 4
          %v2732 = vsel %vm1487, %v2731, %v2255
          %v2733 = vrot.slane %v2255, 4
          %v2734 = vsel %vm1487, %v2319, %v2733
          %v2736 = vunpack.c.l.s4 1983009808
          %v2737 = vunpack.c.0.s8 %v2736
          %v2738 = vperm.slane %v2732, %v2737
          %v2740 = vunpack.c.l.s4 1983009808
          %v2741 = vunpack.c.0.s8 %v2740
          %v2742 = vperm.slane %v2734, %v2741
          %v2743 = vrot.slane %v2415, 4
          %v2744 = vsel %vm1487, %v2743, %v2351
          %v2745 = vrot.slane %v2351, 4
          %v2746 = vsel %vm1487, %v2415, %v2745
          %v2748 = vunpack.c.l.s4 1983009808
          %v2749 = vunpack.c.0.s8 %v2748
          %v2750 = vperm.slane %v2744, %v2749
          %v2752 = vunpack.c.l.s4 1983009808
          %v2753 = vunpack.c.0.s8 %v2752
          %v2754 = vperm.slane %v2746, %v2753
          %v2755 = vrot.slane %v2447, 4
          %v2756 = vsel %vm1487, %v2755, %v2383
          %v2757 = vrot.slane %v2383, 4
          %v2758 = vsel %vm1487, %v2447, %v2757
          %v2760 = vunpack.c.l.s4 1983009808
          %v2761 = vunpack.c.0.s8 %v2760
          %v2762 = vperm.slane %v2756, %v2761
          %v2764 = vunpack.c.l.s4 1983009808
          %v2765 = vunpack.c.0.s8 %v2764
          %v2766 = vperm.slane %v2758, %v2765
          %v2767 = vrot.slane %v2738, 4
          %v2768 = vsel %vm1487, %v2767, %v2726
          %v2769 = vrot.slane %v2726, 4
          %v2770 = vsel %vm1487, %v2738, %v2769
          %v2772 = vunpack.c.l.s4 1934713408
          %v2773 = vunpack.c.0.s8 %v2772
          %v2774 = vperm.slane %v2768, %v2773
          %v2776 = vunpack.c.l.s4 1934713408
          %v2777 = vunpack.c.0.s8 %v2776
          %v2778 = vperm.slane %v2770, %v2777
          %v2779 = vrot.slane %v2742, 4
          %v2780 = vsel %vm1487, %v2779, %v2730
          %v2781 = vrot.slane %v2730, 4
          %v2782 = vsel %vm1487, %v2742, %v2781
          %v2784 = vunpack.c.l.s4 1934713408
          %v2785 = vunpack.c.0.s8 %v2784
          %v2786 = vperm.slane %v2780, %v2785
          %v2788 = vunpack.c.l.s4 1934713408
          %v2789 = vunpack.c.0.s8 %v2788
          %v2790 = vperm.slane %v2782, %v2789
          %v2791 = vrot.slane %v2762, 4
          %v2792 = vsel %vm1487, %v2791, %v2750
          %v2793 = vrot.slane %v2750, 4
          %v2794 = vsel %vm1487, %v2762, %v2793
          %v2796 = vunpack.c.l.s4 1934713408
          %v2797 = vunpack.c.0.s8 %v2796
          %v2798 = vperm.slane %v2792, %v2797
          %v2800 = vunpack.c.l.s4 1934713408
          %v2801 = vunpack.c.0.s8 %v2800
          %v2802 = vperm.slane %v2794, %v2801
          %v2803 = vrot.slane %v2766, 4
          %v2804 = vsel %vm1487, %v2803, %v2754
          %v2805 = vrot.slane %v2754, 4
          %v2806 = vsel %vm1487, %v2766, %v2805
          %v2808 = vunpack.c.l.s4 1934713408
          %v2809 = vunpack.c.0.s8 %v2808
          %v2810 = vperm.slane %v2804, %v2809
          %v2812 = vunpack.c.l.s4 1934713408
          %v2813 = vunpack.c.0.s8 %v2812
          %v2814 = vperm.slane %v2806, %v2813
          %v2815 = vrot.slane %v2798, 4
          %v2816 = vsel %vm1487, %v2815, %v2774
          %v2817 = vrot.slane %v2774, 4
          %v2818 = vsel %vm1487, %v2798, %v2817
          %v2819 = vrot.slane %v2802, 4
          %v2820 = vsel %vm1487, %v2819, %v2778
          %v2821 = vrot.slane %v2778, 4
          %v2822 = vsel %vm1487, %v2802, %v2821
          %v2823 = vrot.slane %v2810, 4
          %v2824 = vsel %vm1487, %v2823, %v2786
          %v2825 = vrot.slane %v2786, 4
          %v2826 = vsel %vm1487, %v2810, %v2825
          %v2827 = vrot.slane %v2814, 4
          %v2828 = vsel %vm1487, %v2827, %v2790
          %v2829 = vrot.slane %v2790, 4
          %v2830 = vsel %vm1487, %v2814, %v2829
          %v2831 = vrot.slane %v2543, 4
          %v2832 = vsel %vm1487, %v2831, %v2479
          %v2833 = vrot.slane %v2479, 4
          %v2834 = vsel %vm1487, %v2543, %v2833
          %v2836 = vunpack.c.l.s4 1983009808
          %v2837 = vunpack.c.0.s8 %v2836
          %v2838 = vperm.slane %v2832, %v2837
          %v2840 = vunpack.c.l.s4 1983009808
          %v2841 = vunpack.c.0.s8 %v2840
          %v2842 = vperm.slane %v2834, %v2841
          %v2843 = vrot.slane %v2575, 4
          %v2844 = vsel %vm1487, %v2843, %v2511
          %v2845 = vrot.slane %v2511, 4
          %v2846 = vsel %vm1487, %v2575, %v2845
          %v2848 = vunpack.c.l.s4 1983009808
          %v2849 = vunpack.c.0.s8 %v2848
          %v2850 = vperm.slane %v2844, %v2849
          %v2852 = vunpack.c.l.s4 1983009808
          %v2853 = vunpack.c.0.s8 %v2852
          %v2854 = vperm.slane %v2846, %v2853
          %v2855 = vrot.slane %v2671, 4
          %v2856 = vsel %vm1487, %v2855, %v2607
          %v2857 = vrot.slane %v2607, 4
          %v2858 = vsel %vm1487, %v2671, %v2857
          %v2860 = vunpack.c.l.s4 1983009808
          %v2861 = vunpack.c.0.s8 %v2860
          %v2862 = vperm.slane %v2856, %v2861
          %v2864 = vunpack.c.l.s4 1983009808
          %v2865 = vunpack.c.0.s8 %v2864
          %v2866 = vperm.slane %v2858, %v2865
          %v2867 = vrot.slane %v2703, 4
          %v2868 = vsel %vm1487, %v2867, %v2639
          %v2869 = vrot.slane %v2639, 4
          %v2870 = vsel %vm1487, %v2703, %v2869
          %v2872 = vunpack.c.l.s4 1983009808
          %v2873 = vunpack.c.0.s8 %v2872
          %v2874 = vperm.slane %v2868, %v2873
          %v2876 = vunpack.c.l.s4 1983009808
          %v2877 = vunpack.c.0.s8 %v2876
          %v2878 = vperm.slane %v2870, %v2877
          %v2879 = vrot.slane %v2850, 4
          %v2880 = vsel %vm1487, %v2879, %v2838
          %v2881 = vrot.slane %v2838, 4
          %v2882 = vsel %vm1487, %v2850, %v2881
          %v2884 = vunpack.c.l.s4 1934713408
          %v2885 = vunpack.c.0.s8 %v2884
          %v2886 = vperm.slane %v2880, %v2885
          %v2888 = vunpack.c.l.s4 1934713408
          %v2889 = vunpack.c.0.s8 %v2888
          %v2890 = vperm.slane %v2882, %v2889
          %v2891 = vrot.slane %v2854, 4
          %v2892 = vsel %vm1487, %v2891, %v2842
          %v2893 = vrot.slane %v2842, 4
          %v2894 = vsel %vm1487, %v2854, %v2893
          %v2896 = vunpack.c.l.s4 1934713408
          %v2897 = vunpack.c.0.s8 %v2896
          %v2898 = vperm.slane %v2892, %v2897
          %v2900 = vunpack.c.l.s4 1934713408
          %v2901 = vunpack.c.0.s8 %v2900
          %v2902 = vperm.slane %v2894, %v2901
          %v2903 = vrot.slane %v2874, 4
          %v2904 = vsel %vm1487, %v2903, %v2862
          %v2905 = vrot.slane %v2862, 4
          %v2906 = vsel %vm1487, %v2874, %v2905
          %v2908 = vunpack.c.l.s4 1934713408
          %v2909 = vunpack.c.0.s8 %v2908
          %v2910 = vperm.slane %v2904, %v2909
          %v2912 = vunpack.c.l.s4 1934713408
          %v2913 = vunpack.c.0.s8 %v2912
          %v2914 = vperm.slane %v2906, %v2913
          %v2915 = vrot.slane %v2878, 4
          %v2916 = vsel %vm1487, %v2915, %v2866
          %v2917 = vrot.slane %v2866, 4
          %v2918 = vsel %vm1487, %v2878, %v2917
          %v2920 = vunpack.c.l.s4 1934713408
          %v2921 = vunpack.c.0.s8 %v2920
          %v2922 = vperm.slane %v2916, %v2921
          %v2924 = vunpack.c.l.s4 1934713408
          %v2925 = vunpack.c.0.s8 %v2924
          %v2926 = vperm.slane %v2918, %v2925
          %v2927 = vrot.slane %v2910, 4
          %v2928 = vsel %vm1487, %v2927, %v2886
          %v2929 = vrot.slane %v2886, 4
          %v2930 = vsel %vm1487, %v2910, %v2929
          %v2931 = vrot.slane %v2914, 4
          %v2932 = vsel %vm1487, %v2931, %v2890
          %v2933 = vrot.slane %v2890, 4
          %v2934 = vsel %vm1487, %v2914, %v2933
          %v2935 = vrot.slane %v2922, 4
          %v2936 = vsel %vm1487, %v2935, %v2898
          %v2937 = vrot.slane %v2898, 4
          %v2938 = vsel %vm1487, %v2922, %v2937
          %v2939 = vrot.slane %v2926, 4
          %v2940 = vsel %vm1487, %v2939, %v2902
          %v2941 = vrot.slane %v2902, 4
          %v2942 = vsel %vm1487, %v2926, %v2941
          %v2943 = vrot.slane %v2288, 4
          %v2944 = vsel %vm1487, %v2943, %v2224
          %v2945 = vrot.slane %v2224, 4
          %v2946 = vsel %vm1487, %v2288, %v2945
          %v2948 = vunpack.c.l.s4 1983009808
          %v2949 = vunpack.c.0.s8 %v2948
          %v2950 = vperm.slane %v2944, %v2949
          %v2952 = vunpack.c.l.s4 1983009808
          %v2953 = vunpack.c.0.s8 %v2952
          %v2954 = vperm.slane %v2946, %v2953
          %v2955 = vrot.slane %v2320, 4
          %v2956 = vsel %vm1487, %v2955, %v2256
          %v2957 = vrot.slane %v2256, 4
          %v2958 = vsel %vm1487, %v2320, %v2957
          %v2960 = vunpack.c.l.s4 1983009808
          %v2961 = vunpack.c.0.s8 %v2960
          %v2962 = vperm.slane %v2956, %v2961
          %v2964 = vunpack.c.l.s4 1983009808
          %v2965 = vunpack.c.0.s8 %v2964
          %v2966 = vperm.slane %v2958, %v2965
          %v2967 = vrot.slane %v2416, 4
          %v2968 = vsel %vm1487, %v2967, %v2352
          %v2969 = vrot.slane %v2352, 4
          %v2970 = vsel %vm1487, %v2416, %v2969
          %v2972 = vunpack.c.l.s4 1983009808
          %v2973 = vunpack.c.0.s8 %v2972
          %v2974 = vperm.slane %v2968, %v2973
          %v2976 = vunpack.c.l.s4 1983009808
          %v2977 = vunpack.c.0.s8 %v2976
          %v2978 = vperm.slane %v2970, %v2977
          %v2979 = vrot.slane %v2448, 4
          %v2980 = vsel %vm1487, %v2979, %v2384
          %v2981 = vrot.slane %v2384, 4
          %v2982 = vsel %vm1487, %v2448, %v2981
          %v2984 = vunpack.c.l.s4 1983009808
          %v2985 = vunpack.c.0.s8 %v2984
          %v2986 = vperm.slane %v2980, %v2985
          %v2988 = vunpack.c.l.s4 1983009808
          %v2989 = vunpack.c.0.s8 %v2988
          %v2990 = vperm.slane %v2982, %v2989
          %v2991 = vrot.slane %v2962, 4
          %v2992 = vsel %vm1487, %v2991, %v2950
          %v2993 = vrot.slane %v2950, 4
          %v2994 = vsel %vm1487, %v2962, %v2993
          %v2996 = vunpack.c.l.s4 1934713408
          %v2997 = vunpack.c.0.s8 %v2996
          %v2998 = vperm.slane %v2992, %v2997
          %v3000 = vunpack.c.l.s4 1934713408
          %v3001 = vunpack.c.0.s8 %v3000
          %v3002 = vperm.slane %v2994, %v3001
          %v3003 = vrot.slane %v2966, 4
          %v3004 = vsel %vm1487, %v3003, %v2954
          %v3005 = vrot.slane %v2954, 4
          %v3006 = vsel %vm1487, %v2966, %v3005
          %v3008 = vunpack.c.l.s4 1934713408
          %v3009 = vunpack.c.0.s8 %v3008
          %v3010 = vperm.slane %v3004, %v3009
          %v3012 = vunpack.c.l.s4 1934713408
          %v3013 = vunpack.c.0.s8 %v3012
          %v3014 = vperm.slane %v3006, %v3013
          %v3015 = vrot.slane %v2986, 4
          %v3016 = vsel %vm1487, %v3015, %v2974
          %v3017 = vrot.slane %v2974, 4
          %v3018 = vsel %vm1487, %v2986, %v3017
          %v3020 = vunpack.c.l.s4 1934713408
          %v3021 = vunpack.c.0.s8 %v3020
          %v3022 = vperm.slane %v3016, %v3021
          %v3024 = vunpack.c.l.s4 1934713408
          %v3025 = vunpack.c.0.s8 %v3024
          %v3026 = vperm.slane %v3018, %v3025
          %v3027 = vrot.slane %v2990, 4
          %v3028 = vsel %vm1487, %v3027, %v2978
          %v3029 = vrot.slane %v2978, 4
          %v3030 = vsel %vm1487, %v2990, %v3029
          %v3032 = vunpack.c.l.s4 1934713408
          %v3033 = vunpack.c.0.s8 %v3032
          %v3034 = vperm.slane %v3028, %v3033
          %v3036 = vunpack.c.l.s4 1934713408
          %v3037 = vunpack.c.0.s8 %v3036
          %v3038 = vperm.slane %v3030, %v3037
          %v3039 = vrot.slane %v3022, 4
          %v3040 = vsel %vm1487, %v3039, %v2998
          %v3041 = vrot.slane %v2998, 4
          %v3042 = vsel %vm1487, %v3022, %v3041
          %v3043 = vrot.slane %v3026, 4
          %v3044 = vsel %vm1487, %v3043, %v3002
          %v3045 = vrot.slane %v3002, 4
          %v3046 = vsel %vm1487, %v3026, %v3045
          %v3047 = vrot.slane %v3034, 4
          %v3048 = vsel %vm1487, %v3047, %v3010
          %v3049 = vrot.slane %v3010, 4
          %v3050 = vsel %vm1487, %v3034, %v3049
          %v3051 = vrot.slane %v3038, 4
          %v3052 = vsel %vm1487, %v3051, %v3014
          %v3053 = vrot.slane %v3014, 4
          %v3054 = vsel %vm1487, %v3038, %v3053
          %v3055 = vrot.slane %v2544, 4
          %v3056 = vsel %vm1487, %v3055, %v2480
          %v3057 = vrot.slane %v2480, 4
          %v3058 = vsel %vm1487, %v2544, %v3057
          %v3060 = vunpack.c.l.s4 1983009808
          %v3061 = vunpack.c.0.s8 %v3060
          %v3062 = vperm.slane %v3056, %v3061
          %v3064 = vunpack.c.l.s4 1983009808
          %v3065 = vunpack.c.0.s8 %v3064
          %v3066 = vperm.slane %v3058, %v3065
          %v3067 = vrot.slane %v2576, 4
          %v3068 = vsel %vm1487, %v3067, %v2512
          %v3069 = vrot.slane %v2512, 4
          %v3070 = vsel %vm1487, %v2576, %v3069
          %v3072 = vunpack.c.l.s4 1983009808
          %v3073 = vunpack.c.0.s8 %v3072
          %v3074 = vperm.slane %v3068, %v3073
          %v3076 = vunpack.c.l.s4 1983009808
          %v3077 = vunpack.c.0.s8 %v3076
          %v3078 = vperm.slane %v3070, %v3077
          %v3079 = vrot.slane %v2672, 4
          %v3080 = vsel %vm1487, %v3079, %v2608
          %v3081 = vrot.slane %v2608, 4
          %v3082 = vsel %vm1487, %v2672, %v3081
          %v3084 = vunpack.c.l.s4 1983009808
          %v3085 = vunpack.c.0.s8 %v3084
          %v3086 = vperm.slane %v3080, %v3085
          %v3088 = vunpack.c.l.s4 1983009808
          %v3089 = vunpack.c.0.s8 %v3088
          %v3090 = vperm.slane %v3082, %v3089
          %v3091 = vrot.slane %v2704, 4
          %v3092 = vsel %vm1487, %v3091, %v2640
          %v3093 = vrot.slane %v2640, 4
          %v3094 = vsel %vm1487, %v2704, %v3093
          %v3096 = vunpack.c.l.s4 1983009808
          %v3097 = vunpack.c.0.s8 %v3096
          %v3098 = vperm.slane %v3092, %v3097
          %v3100 = vunpack.c.l.s4 1983009808
          %v3101 = vunpack.c.0.s8 %v3100
          %v3102 = vperm.slane %v3094, %v3101
          %v3103 = vrot.slane %v3074, 4
          %v3104 = vsel %vm1487, %v3103, %v3062
          %v3105 = vrot.slane %v3062, 4
          %v3106 = vsel %vm1487, %v3074, %v3105
          %v3108 = vunpack.c.l.s4 1934713408
          %v3109 = vunpack.c.0.s8 %v3108
          %v3110 = vperm.slane %v3104, %v3109
          %v3112 = vunpack.c.l.s4 1934713408
          %v3113 = vunpack.c.0.s8 %v3112
          %v3114 = vperm.slane %v3106, %v3113
          %v3115 = vrot.slane %v3078, 4
          %v3116 = vsel %vm1487, %v3115, %v3066
          %v3117 = vrot.slane %v3066, 4
          %v3118 = vsel %vm1487, %v3078, %v3117
          %v3120 = vunpack.c.l.s4 1934713408
          %v3121 = vunpack.c.0.s8 %v3120
          %v3122 = vperm.slane %v3116, %v3121
          %v3124 = vunpack.c.l.s4 1934713408
          %v3125 = vunpack.c.0.s8 %v3124
          %v3126 = vperm.slane %v3118, %v3125
          %v3127 = vrot.slane %v3098, 4
          %v3128 = vsel %vm1487, %v3127, %v3086
          %v3129 = vrot.slane %v3086, 4
          %v3130 = vsel %vm1487, %v3098, %v3129
          %v3132 = vunpack.c.l.s4 1934713408
          %v3133 = vunpack.c.0.s8 %v3132
          %v3134 = vperm.slane %v3128, %v3133
          %v3136 = vunpack.c.l.s4 1934713408
          %v3137 = vunpack.c.0.s8 %v3136
          %v3138 = vperm.slane %v3130, %v3137
          %v3139 = vrot.slane %v3102, 4
          %v3140 = vsel %vm1487, %v3139, %v3090
          %v3141 = vrot.slane %v3090, 4
          %v3142 = vsel %vm1487, %v3102, %v3141
          %v3144 = vunpack.c.l.s4 1934713408
          %v3145 = vunpack.c.0.s8 %v3144
          %v3146 = vperm.slane %v3140, %v3145
          %v3148 = vunpack.c.l.s4 1934713408
          %v3149 = vunpack.c.0.s8 %v3148
          %v3150 = vperm.slane %v3142, %v3149
          %v3151 = vrot.slane %v3134, 4
          %v3152 = vsel %vm1487, %v3151, %v3110
          %v3153 = vrot.slane %v3110, 4
          %v3154 = vsel %vm1487, %v3134, %v3153
          %v3155 = vrot.slane %v3138, 4
          %v3156 = vsel %vm1487, %v3155, %v3114
          %v3157 = vrot.slane %v3114, 4
          %v3158 = vsel %vm1487, %v3138, %v3157
          %v3159 = vrot.slane %v3146, 4
          %v3160 = vsel %vm1487, %v3159, %v3122
          %v3161 = vrot.slane %v3122, 4
          %v3162 = vsel %vm1487, %v3146, %v3161
          %v3163 = vrot.slane %v3150, 4
          %v3164 = vsel %vm1487, %v3163, %v3126
          %v3165 = vrot.slane %v3126, 4
          %v3166 = vsel %vm1487, %v3150, %v3165
          %v3167 = vrot.slane %v2289, 4
          %v3168 = vsel %vm1487, %v3167, %v2225
          %v3169 = vrot.slane %v2225, 4
          %v3170 = vsel %vm1487, %v2289, %v3169
          %v3172 = vunpack.c.l.s4 1983009808
          %v3173 = vunpack.c.0.s8 %v3172
          %v3174 = vperm.slane %v3168, %v3173
          %v3176 = vunpack.c.l.s4 1983009808
          %v3177 = vunpack.c.0.s8 %v3176
          %v3178 = vperm.slane %v3170, %v3177
          %v3179 = vrot.slane %v2321, 4
          %v3180 = vsel %vm1487, %v3179, %v2257
          %v3181 = vrot.slane %v2257, 4
          %v3182 = vsel %vm1487, %v2321, %v3181
          %v3184 = vunpack.c.l.s4 1983009808
          %v3185 = vunpack.c.0.s8 %v3184
          %v3186 = vperm.slane %v3180, %v3185
          %v3188 = vunpack.c.l.s4 1983009808
          %v3189 = vunpack.c.0.s8 %v3188
          %v3190 = vperm.slane %v3182, %v3189
          %v3191 = vrot.slane %v2417, 4
          %v3192 = vsel %vm1487, %v3191, %v2353
          %v3193 = vrot.slane %v2353, 4
          %v3194 = vsel %vm1487, %v2417, %v3193
          %v3196 = vunpack.c.l.s4 1983009808
          %v3197 = vunpack.c.0.s8 %v3196
          %v3198 = vperm.slane %v3192, %v3197
          %v3200 = vunpack.c.l.s4 1983009808
          %v3201 = vunpack.c.0.s8 %v3200
          %v3202 = vperm.slane %v3194, %v3201
          %v3203 = vrot.slane %v2449, 4
          %v3204 = vsel %vm1487, %v3203, %v2385
          %v3205 = vrot.slane %v2385, 4
          %v3206 = vsel %vm1487, %v2449, %v3205
          %v3208 = vunpack.c.l.s4 1983009808
          %v3209 = vunpack.c.0.s8 %v3208
          %v3210 = vperm.slane %v3204, %v3209
          %v3212 = vunpack.c.l.s4 1983009808
          %v3213 = vunpack.c.0.s8 %v3212
          %v3214 = vperm.slane %v3206, %v3213
          %v3215 = vrot.slane %v3186, 4
          %v3216 = vsel %vm1487, %v3215, %v3174
          %v3217 = vrot.slane %v3174, 4
          %v3218 = vsel %vm1487, %v3186, %v3217
          %v3220 = vunpack.c.l.s4 1934713408
          %v3221 = vunpack.c.0.s8 %v3220
          %v3222 = vperm.slane %v3216, %v3221
          %v3224 = vunpack.c.l.s4 1934713408
          %v3225 = vunpack.c.0.s8 %v3224
          %v3226 = vperm.slane %v3218, %v3225
          %v3227 = vrot.slane %v3190, 4
          %v3228 = vsel %vm1487, %v3227, %v3178
          %v3229 = vrot.slane %v3178, 4
          %v3230 = vsel %vm1487, %v3190, %v3229
          %v3232 = vunpack.c.l.s4 1934713408
          %v3233 = vunpack.c.0.s8 %v3232
          %v3234 = vperm.slane %v3228, %v3233
          %v3236 = vunpack.c.l.s4 1934713408
          %v3237 = vunpack.c.0.s8 %v3236
          %v3238 = vperm.slane %v3230, %v3237
          %v3239 = vrot.slane %v3210, 4
          %v3240 = vsel %vm1487, %v3239, %v3198
          %v3241 = vrot.slane %v3198, 4
          %v3242 = vsel %vm1487, %v3210, %v3241
          %v3244 = vunpack.c.l.s4 1934713408
          %v3245 = vunpack.c.0.s8 %v3244
          %v3246 = vperm.slane %v3240, %v3245
          %v3248 = vunpack.c.l.s4 1934713408
          %v3249 = vunpack.c.0.s8 %v3248
          %v3250 = vperm.slane %v3242, %v3249
          %v3251 = vrot.slane %v3214, 4
          %v3252 = vsel %vm1487, %v3251, %v3202
          %v3253 = vrot.slane %v3202, 4
          %v3254 = vsel %vm1487, %v3214, %v3253
          %v3256 = vunpack.c.l.s4 1934713408
          %v3257 = vunpack.c.0.s8 %v3256
          %v3258 = vperm.slane %v3252, %v3257
          %v3260 = vunpack.c.l.s4 1934713408
          %v3261 = vunpack.c.0.s8 %v3260
          %v3262 = vperm.slane %v3254, %v3261
          %v3263 = vrot.slane %v3246, 4
          %v3264 = vsel %vm1487, %v3263, %v3222
          %v3265 = vrot.slane %v3222, 4
          %v3266 = vsel %vm1487, %v3246, %v3265
          %v3267 = vrot.slane %v3250, 4
          %v3268 = vsel %vm1487, %v3267, %v3226
          %v3269 = vrot.slane %v3226, 4
          %v3270 = vsel %vm1487, %v3250, %v3269
          %v3271 = vrot.slane %v3258, 4
          %v3272 = vsel %vm1487, %v3271, %v3234
          %v3273 = vrot.slane %v3234, 4
          %v3274 = vsel %vm1487, %v3258, %v3273
          %v3275 = vrot.slane %v3262, 4
          %v3276 = vsel %vm1487, %v3275, %v3238
          %v3277 = vrot.slane %v3238, 4
          %v3278 = vsel %vm1487, %v3262, %v3277
          %v3279 = vrot.slane %v2545, 4
          %v3280 = vsel %vm1487, %v3279, %v2481
          %v3281 = vrot.slane %v2481, 4
          %v3282 = vsel %vm1487, %v2545, %v3281
          %v3284 = vunpack.c.l.s4 1983009808
          %v3285 = vunpack.c.0.s8 %v3284
          %v3286 = vperm.slane %v3280, %v3285
          %v3288 = vunpack.c.l.s4 1983009808
          %v3289 = vunpack.c.0.s8 %v3288
          %v3290 = vperm.slane %v3282, %v3289
          %v3291 = vrot.slane %v2577, 4
          %v3292 = vsel %vm1487, %v3291, %v2513
          %v3293 = vrot.slane %v2513, 4
          %v3294 = vsel %vm1487, %v2577, %v3293
          %v3296 = vunpack.c.l.s4 1983009808
          %v3297 = vunpack.c.0.s8 %v3296
          %v3298 = vperm.slane %v3292, %v3297
          %v3300 = vunpack.c.l.s4 1983009808
          %v3301 = vunpack.c.0.s8 %v3300
          %v3302 = vperm.slane %v3294, %v3301
          %v3303 = vrot.slane %v2673, 4
          %v3304 = vsel %vm1487, %v3303, %v2609
          %v3305 = vrot.slane %v2609, 4
          %v3306 = vsel %vm1487, %v2673, %v3305
          %v3308 = vunpack.c.l.s4 1983009808
          %v3309 = vunpack.c.0.s8 %v3308
          %v3310 = vperm.slane %v3304, %v3309
          %v3312 = vunpack.c.l.s4 1983009808
          %v3313 = vunpack.c.0.s8 %v3312
          %v3314 = vperm.slane %v3306, %v3313
          %v3315 = vrot.slane %v2705, 4
          %v3316 = vsel %vm1487, %v3315, %v2641
          %v3317 = vrot.slane %v2641, 4
          %v3318 = vsel %vm1487, %v2705, %v3317
          %v3320 = vunpack.c.l.s4 1983009808
          %v3321 = vunpack.c.0.s8 %v3320
          %v3322 = vperm.slane %v3316, %v3321
          %v3324 = vunpack.c.l.s4 1983009808
          %v3325 = vunpack.c.0.s8 %v3324
          %v3326 = vperm.slane %v3318, %v3325
          %v3327 = vrot.slane %v3298, 4
          %v3328 = vsel %vm1487, %v3327, %v3286
          %v3329 = vrot.slane %v3286, 4
          %v3330 = vsel %vm1487, %v3298, %v3329
          %v3332 = vunpack.c.l.s4 1934713408
          %v3333 = vunpack.c.0.s8 %v3332
          %v3334 = vperm.slane %v3328, %v3333
          %v3336 = vunpack.c.l.s4 1934713408
          %v3337 = vunpack.c.0.s8 %v3336
          %v3338 = vperm.slane %v3330, %v3337
          %v3339 = vrot.slane %v3302, 4
          %v3340 = vsel %vm1487, %v3339, %v3290
          %v3341 = vrot.slane %v3290, 4
          %v3342 = vsel %vm1487, %v3302, %v3341
          %v3344 = vunpack.c.l.s4 1934713408
          %v3345 = vunpack.c.0.s8 %v3344
          %v3346 = vperm.slane %v3340, %v3345
          %v3348 = vunpack.c.l.s4 1934713408
          %v3349 = vunpack.c.0.s8 %v3348
          %v3350 = vperm.slane %v3342, %v3349
          %v3351 = vrot.slane %v3322, 4
          %v3352 = vsel %vm1487, %v3351, %v3310
          %v3353 = vrot.slane %v3310, 4
          %v3354 = vsel %vm1487, %v3322, %v3353
          %v3356 = vunpack.c.l.s4 1934713408
          %v3357 = vunpack.c.0.s8 %v3356
          %v3358 = vperm.slane %v3352, %v3357
          %v3360 = vunpack.c.l.s4 1934713408
          %v3361 = vunpack.c.0.s8 %v3360
          %v3362 = vperm.slane %v3354, %v3361
          %v3363 = vrot.slane %v3326, 4
          %v3364 = vsel %vm1487, %v3363, %v3314
          %v3365 = vrot.slane %v3314, 4
          %v3366 = vsel %vm1487, %v3326, %v3365
          %v3368 = vunpack.c.l.s4 1934713408
          %v3369 = vunpack.c.0.s8 %v3368
          %v3370 = vperm.slane %v3364, %v3369
          %v3372 = vunpack.c.l.s4 1934713408
          %v3373 = vunpack.c.0.s8 %v3372
          %v3374 = vperm.slane %v3366, %v3373
          %v3375 = vrot.slane %v3358, 4
          %v3376 = vsel %vm1487, %v3375, %v3334
          %v3377 = vrot.slane %v3334, 4
          %v3378 = vsel %vm1487, %v3358, %v3377
          %v3379 = vrot.slane %v3362, 4
          %v3380 = vsel %vm1487, %v3379, %v3338
          %v3381 = vrot.slane %v3338, 4
          %v3382 = vsel %vm1487, %v3362, %v3381
          %v3383 = vrot.slane %v3370, 4
          %v3384 = vsel %vm1487, %v3383, %v3346
          %v3385 = vrot.slane %v3346, 4
          %v3386 = vsel %vm1487, %v3370, %v3385
          %v3387 = vrot.slane %v3374, 4
          %v3388 = vsel %vm1487, %v3387, %v3350
          %v3389 = vrot.slane %v3350, 4
          %v3390 = vsel %vm1487, %v3374, %v3389
          %v3391 = vrot.slane %v2290, 4
          %v3392 = vsel %vm1487, %v3391, %v2226
          %v3393 = vrot.slane %v2226, 4
          %v3394 = vsel %vm1487, %v2290, %v3393
          %v3396 = vunpack.c.l.s4 1983009808
          %v3397 = vunpack.c.0.s8 %v3396
          %v3398 = vperm.slane %v3392, %v3397
          %v3400 = vunpack.c.l.s4 1983009808
          %v3401 = vunpack.c.0.s8 %v3400
          %v3402 = vperm.slane %v3394, %v3401
          %v3403 = vrot.slane %v2322, 4
          %v3404 = vsel %vm1487, %v3403, %v2258
          %v3405 = vrot.slane %v2258, 4
          %v3406 = vsel %vm1487, %v2322, %v3405
          %v3408 = vunpack.c.l.s4 1983009808
          %v3409 = vunpack.c.0.s8 %v3408
          %v3410 = vperm.slane %v3404, %v3409
          %v3412 = vunpack.c.l.s4 1983009808
          %v3413 = vunpack.c.0.s8 %v3412
          %v3414 = vperm.slane %v3406, %v3413
          %v3415 = vrot.slane %v2418, 4
          %v3416 = vsel %vm1487, %v3415, %v2354
          %v3417 = vrot.slane %v2354, 4
          %v3418 = vsel %vm1487, %v2418, %v3417
          %v3420 = vunpack.c.l.s4 1983009808
          %v3421 = vunpack.c.0.s8 %v3420
          %v3422 = vperm.slane %v3416, %v3421
          %v3424 = vunpack.c.l.s4 1983009808
          %v3425 = vunpack.c.0.s8 %v3424
          %v3426 = vperm.slane %v3418, %v3425
          %v3427 = vrot.slane %v2450, 4
          %v3428 = vsel %vm1487, %v3427, %v2386
          %v3429 = vrot.slane %v2386, 4
          %v3430 = vsel %vm1487, %v2450, %v3429
          %v3432 = vunpack.c.l.s4 1983009808
          %v3433 = vunpack.c.0.s8 %v3432
          %v3434 = vperm.slane %v3428, %v3433
          %v3436 = vunpack.c.l.s4 1983009808
          %v3437 = vunpack.c.0.s8 %v3436
          %v3438 = vperm.slane %v3430, %v3437
          %v3439 = vrot.slane %v3410, 4
          %v3440 = vsel %vm1487, %v3439, %v3398
          %v3441 = vrot.slane %v3398, 4
          %v3442 = vsel %vm1487, %v3410, %v3441
          %v3444 = vunpack.c.l.s4 1934713408
          %v3445 = vunpack.c.0.s8 %v3444
          %v3446 = vperm.slane %v3440, %v3445
          %v3448 = vunpack.c.l.s4 1934713408
          %v3449 = vunpack.c.0.s8 %v3448
          %v3450 = vperm.slane %v3442, %v3449
          %v3451 = vrot.slane %v3414, 4
          %v3452 = vsel %vm1487, %v3451, %v3402
          %v3453 = vrot.slane %v3402, 4
          %v3454 = vsel %vm1487, %v3414, %v3453
          %v3456 = vunpack.c.l.s4 1934713408
          %v3457 = vunpack.c.0.s8 %v3456
          %v3458 = vperm.slane %v3452, %v3457
          %v3460 = vunpack.c.l.s4 1934713408
          %v3461 = vunpack.c.0.s8 %v3460
          %v3462 = vperm.slane %v3454, %v3461
          %v3463 = vrot.slane %v3434, 4
          %v3464 = vsel %vm1487, %v3463, %v3422
          %v3465 = vrot.slane %v3422, 4
          %v3466 = vsel %vm1487, %v3434, %v3465
          %v3468 = vunpack.c.l.s4 1934713408
          %v3469 = vunpack.c.0.s8 %v3468
          %v3470 = vperm.slane %v3464, %v3469
          %v3472 = vunpack.c.l.s4 1934713408
          %v3473 = vunpack.c.0.s8 %v3472
          %v3474 = vperm.slane %v3466, %v3473
          %v3475 = vrot.slane %v3438, 4
          %v3476 = vsel %vm1487, %v3475, %v3426
          %v3477 = vrot.slane %v3426, 4
          %v3478 = vsel %vm1487, %v3438, %v3477
          %v3480 = vunpack.c.l.s4 1934713408
          %v3481 = vunpack.c.0.s8 %v3480
          %v3482 = vperm.slane %v3476, %v3481
          %v3484 = vunpack.c.l.s4 1934713408
          %v3485 = vunpack.c.0.s8 %v3484
          %v3486 = vperm.slane %v3478, %v3485
          %v3487 = vrot.slane %v3470, 4
          %v3488 = vsel %vm1487, %v3487, %v3446
          %v3489 = vrot.slane %v3446, 4
          %v3490 = vsel %vm1487, %v3470, %v3489
          %v3491 = vrot.slane %v3474, 4
          %v3492 = vsel %vm1487, %v3491, %v3450
          %v3493 = vrot.slane %v3450, 4
          %v3494 = vsel %vm1487, %v3474, %v3493
          %v3495 = vrot.slane %v3482, 4
          %v3496 = vsel %vm1487, %v3495, %v3458
          %v3497 = vrot.slane %v3458, 4
          %v3498 = vsel %vm1487, %v3482, %v3497
          %v3499 = vrot.slane %v3486, 4
          %v3500 = vsel %vm1487, %v3499, %v3462
          %v3501 = vrot.slane %v3462, 4
          %v3502 = vsel %vm1487, %v3486, %v3501
          %v3503 = vrot.slane %v2546, 4
          %v3504 = vsel %vm1487, %v3503, %v2482
          %v3505 = vrot.slane %v2482, 4
          %v3506 = vsel %vm1487, %v2546, %v3505
          %v3508 = vunpack.c.l.s4 1983009808
          %v3509 = vunpack.c.0.s8 %v3508
          %v3510 = vperm.slane %v3504, %v3509
          %v3512 = vunpack.c.l.s4 1983009808
          %v3513 = vunpack.c.0.s8 %v3512
          %v3514 = vperm.slane %v3506, %v3513
          %v3515 = vrot.slane %v2578, 4
          %v3516 = vsel %vm1487, %v3515, %v2514
          %v3517 = vrot.slane %v2514, 4
          %v3518 = vsel %vm1487, %v2578, %v3517
          %v3520 = vunpack.c.l.s4 1983009808
          %v3521 = vunpack.c.0.s8 %v3520
          %v3522 = vperm.slane %v3516, %v3521
          %v3524 = vunpack.c.l.s4 1983009808
          %v3525 = vunpack.c.0.s8 %v3524
          %v3526 = vperm.slane %v3518, %v3525
          %v3527 = vrot.slane %v2674, 4
          %v3528 = vsel %vm1487, %v3527, %v2610
          %v3529 = vrot.slane %v2610, 4
          %v3530 = vsel %vm1487, %v2674, %v3529
          %v3532 = vunpack.c.l.s4 1983009808
          %v3533 = vunpack.c.0.s8 %v3532
          %v3534 = vperm.slane %v3528, %v3533
          %v3536 = vunpack.c.l.s4 1983009808
          %v3537 = vunpack.c.0.s8 %v3536
          %v3538 = vperm.slane %v3530, %v3537
          %v3539 = vrot.slane %v2706, 4
          %v3540 = vsel %vm1487, %v3539, %v2642
          %v3541 = vrot.slane %v2642, 4
          %v3542 = vsel %vm1487, %v2706, %v3541
          %v3544 = vunpack.c.l.s4 1983009808
          %v3545 = vunpack.c.0.s8 %v3544
          %v3546 = vperm.slane %v3540, %v3545
          %v3548 = vunpack.c.l.s4 1983009808
          %v3549 = vunpack.c.0.s8 %v3548
          %v3550 = vperm.slane %v3542, %v3549
          %v3551 = vrot.slane %v3522, 4
          %v3552 = vsel %vm1487, %v3551, %v3510
          %v3553 = vrot.slane %v3510, 4
          %v3554 = vsel %vm1487, %v3522, %v3553
          %v3556 = vunpack.c.l.s4 1934713408
          %v3557 = vunpack.c.0.s8 %v3556
          %v3558 = vperm.slane %v3552, %v3557
          %v3560 = vunpack.c.l.s4 1934713408
          %v3561 = vunpack.c.0.s8 %v3560
          %v3562 = vperm.slane %v3554, %v3561
          %v3563 = vrot.slane %v3526, 4
          %v3564 = vsel %vm1487, %v3563, %v3514
          %v3565 = vrot.slane %v3514, 4
          %v3566 = vsel %vm1487, %v3526, %v3565
          %v3568 = vunpack.c.l.s4 1934713408
          %v3569 = vunpack.c.0.s8 %v3568
          %v3570 = vperm.slane %v3564, %v3569
          %v3572 = vunpack.c.l.s4 1934713408
          %v3573 = vunpack.c.0.s8 %v3572
          %v3574 = vperm.slane %v3566, %v3573
          %v3575 = vrot.slane %v3546, 4
          %v3576 = vsel %vm1487, %v3575, %v3534
          %v3577 = vrot.slane %v3534, 4
          %v3578 = vsel %vm1487, %v3546, %v3577
          %v3580 = vunpack.c.l.s4 1934713408
          %v3581 = vunpack.c.0.s8 %v3580
          %v3582 = vperm.slane %v3576, %v3581
          %v3584 = vunpack.c.l.s4 1934713408
          %v3585 = vunpack.c.0.s8 %v3584
          %v3586 = vperm.slane %v3578, %v3585
          %v3587 = vrot.slane %v3550, 4
          %v3588 = vsel %vm1487, %v3587, %v3538
          %v3589 = vrot.slane %v3538, 4
          %v3590 = vsel %vm1487, %v3550, %v3589
          %v3592 = vunpack.c.l.s4 1934713408
          %v3593 = vunpack.c.0.s8 %v3592
          %v3594 = vperm.slane %v3588, %v3593
          %v3596 = vunpack.c.l.s4 1934713408
          %v3597 = vunpack.c.0.s8 %v3596
          %v3598 = vperm.slane %v3590, %v3597
          %v3599 = vrot.slane %v3582, 4
          %v3600 = vsel %vm1487, %v3599, %v3558
          %v3601 = vrot.slane %v3558, 4
          %v3602 = vsel %vm1487, %v3582, %v3601
          %v3603 = vrot.slane %v3586, 4
          %v3604 = vsel %vm1487, %v3603, %v3562
          %v3605 = vrot.slane %v3562, 4
          %v3606 = vsel %vm1487, %v3586, %v3605
          %v3607 = vrot.slane %v3594, 4
          %v3608 = vsel %vm1487, %v3607, %v3570
          %v3609 = vrot.slane %v3570, 4
          %v3610 = vsel %vm1487, %v3594, %v3609
          %v3611 = vrot.slane %v3598, 4
          %v3612 = vsel %vm1487, %v3611, %v3574
          %v3613 = vrot.slane %v3574, 4
          %v3614 = vsel %vm1487, %v3598, %v3613
          %3615 = vxpose.xlu0.b32.start [1/16] %v2816, 128
          %3616 = vxpose.xlu0.b32.cont [2/16] %v2928, 128
          %3617 = vxpose.xlu0.b32.cont [3/16] 0.0, 128
          %3618 = vxpose.xlu0.b32.cont [4/16] 0.0, 128
          %3619 = vxpose.xlu0.b32.cont [5/16] 0.0, 128
          %3620 = vxpose.xlu0.b32.cont [6/16] 0.0, 128
          %3621 = vxpose.xlu0.b32.cont [7/16] 0.0, 128
          %3622 = vxpose.xlu0.b32.cont [8/16] 0.0, 128
          %3623 = vxpose.xlu0.b32.cont [9/16] 0.0, 128
          %3624 = vxpose.xlu0.b32.cont [10/16] 0.0, 128
          %3625 = vxpose.xlu0.b32.cont [11/16] 0.0, 128
          %3626 = vxpose.xlu0.b32.cont [12/16] 0.0, 128
          %3627 = vxpose.xlu0.b32.cont [13/16] 0.0, 128
          %3628 = vxpose.xlu0.b32.cont [14/16] 0.0, 128
          %3629 = vxpose.xlu0.b32.cont [15/16] 0.0, 128
          %3630 = vxpose.xlu0.b32.end [16/16] 0.0, 128
          %v3631 = vpop.trf.xlu0
          %v3632 = vpop.trf.xlu0
          %v3633 = vpop.trf.xlu0
          %v3634 = vpop.trf.xlu0
          %v3635 = vpop.trf.xlu0
          %v3636 = vpop.trf.xlu0
          %v3637 = vpop.trf.xlu0
          %v3638 = vpop.trf.xlu0
          %v3639 = vpop.trf.xlu0
          %v3640 = vpop.trf.xlu0
          %v3641 = vpop.trf.xlu0
          %v3642 = vpop.trf.xlu0
          %v3643 = vpop.trf.xlu0
          %v3644 = vpop.trf.xlu0
          %v3645 = vpop.trf.xlu0
          %v3646 = vpop.trf.xlu0
          %3647 = vxpose.xlu0.b32.start [1/16] %v2818, 128
          %3648 = vxpose.xlu0.b32.cont [2/16] %v2930, 128
          %3649 = vxpose.xlu0.b32.cont [3/16] 0.0, 128
          %3650 = vxpose.xlu0.b32.cont [4/16] 0.0, 128
          %3651 = vxpose.xlu0.b32.cont [5/16] 0.0, 128
          %3652 = vxpose.xlu0.b32.cont [6/16] 0.0, 128
          %3653 = vxpose.xlu0.b32.cont [7/16] 0.0, 128
          %3654 = vxpose.xlu0.b32.cont [8/16] 0.0, 128
          %3655 = vxpose.xlu0.b32.cont [9/16] 0.0, 128
          %3656 = vxpose.xlu0.b32.cont [10/16] 0.0, 128
          %3657 = vxpose.xlu0.b32.cont [11/16] 0.0, 128
          %3658 = vxpose.xlu0.b32.cont [12/16] 0.0, 128
          %3659 = vxpose.xlu0.b32.cont [13/16] 0.0, 128
          %3660 = vxpose.xlu0.b32.cont [14/16] 0.0, 128
          %3661 = vxpose.xlu0.b32.cont [15/16] 0.0, 128
          %3662 = vxpose.xlu0.b32.end [16/16] 0.0, 128
          %v3663 = vpop.trf.xlu0
          %v3664 = vpop.trf.xlu0
          %v3665 = vpop.trf.xlu0
          %v3666 = vpop.trf.xlu0
          %v3667 = vpop.trf.xlu0
          %v3668 = vpop.trf.xlu0
          %v3669 = vpop.trf.xlu0
          %v3670 = vpop.trf.xlu0
          %v3671 = vpop.trf.xlu0
          %v3672 = vpop.trf.xlu0
          %v3673 = vpop.trf.xlu0
          %v3674 = vpop.trf.xlu0
          %v3675 = vpop.trf.xlu0
          %v3676 = vpop.trf.xlu0
          %v3677 = vpop.trf.xlu0
          %v3678 = vpop.trf.xlu0
          %3679 = vxpose.xlu0.b32.start [1/16] %v2820, 128
          %3680 = vxpose.xlu0.b32.cont [2/16] %v2932, 128
          %3681 = vxpose.xlu0.b32.cont [3/16] 0.0, 128
          %3682 = vxpose.xlu0.b32.cont [4/16] 0.0, 128
          %3683 = vxpose.xlu0.b32.cont [5/16] 0.0, 128
          %3684 = vxpose.xlu0.b32.cont [6/16] 0.0, 128
          %3685 = vxpose.xlu0.b32.cont [7/16] 0.0, 128
          %3686 = vxpose.xlu0.b32.cont [8/16] 0.0, 128
          %3687 = vxpose.xlu0.b32.cont [9/16] 0.0, 128
          %3688 = vxpose.xlu0.b32.cont [10/16] 0.0, 128
          %3689 = vxpose.xlu0.b32.cont [11/16] 0.0, 128
          %3690 = vxpose.xlu0.b32.cont [12/16] 0.0, 128
          %3691 = vxpose.xlu0.b32.cont [13/16] 0.0, 128
          %3692 = vxpose.xlu0.b32.cont [14/16] 0.0, 128
          %3693 = vxpose.xlu0.b32.cont [15/16] 0.0, 128
          %3694 = vxpose.xlu0.b32.end [16/16] 0.0, 128
          %v3695 = vpop.trf.xlu0
          %v3696 = vpop.trf.xlu0
          %v3697 = vpop.trf.xlu0
          %v3698 = vpop.trf.xlu0
          %v3699 = vpop.trf.xlu0
          %v3700 = vpop.trf.xlu0
          %v3701 = vpop.trf.xlu0
          %v3702 = vpop.trf.xlu0
          %v3703 = vpop.trf.xlu0
          %v3704 = vpop.trf.xlu0
          %v3705 = vpop.trf.xlu0
          %v3706 = vpop.trf.xlu0
          %v3707 = vpop.trf.xlu0
          %v3708 = vpop.trf.xlu0
          %v3709 = vpop.trf.xlu0
          %v3710 = vpop.trf.xlu0
          %3711 = vxpose.xlu0.b32.start [1/16] %v2822, 128
          %3712 = vxpose.xlu0.b32.cont [2/16] %v2934, 128
          %3713 = vxpose.xlu0.b32.cont [3/16] 0.0, 128
          %3714 = vxpose.xlu0.b32.cont [4/16] 0.0, 128
          %3715 = vxpose.xlu0.b32.cont [5/16] 0.0, 128
          %3716 = vxpose.xlu0.b32.cont [6/16] 0.0, 128
          %3717 = vxpose.xlu0.b32.cont [7/16] 0.0, 128
          %3718 = vxpose.xlu0.b32.cont [8/16] 0.0, 128
          %3719 = vxpose.xlu0.b32.cont [9/16] 0.0, 128
          %3720 = vxpose.xlu0.b32.cont [10/16] 0.0, 128
          %3721 = vxpose.xlu0.b32.cont [11/16] 0.0, 128
          %3722 = vxpose.xlu0.b32.cont [12/16] 0.0, 128
          %3723 = vxpose.xlu0.b32.cont [13/16] 0.0, 128
          %3724 = vxpose.xlu0.b32.cont [14/16] 0.0, 128
          %3725 = vxpose.xlu0.b32.cont [15/16] 0.0, 128
          %3726 = vxpose.xlu0.b32.end [16/16] 0.0, 128
          %v3727 = vpop.trf.xlu0
          %v3728 = vpop.trf.xlu0
          %v3729 = vpop.trf.xlu0
          %v3730 = vpop.trf.xlu0
          %v3731 = vpop.trf.xlu0
          %v3732 = vpop.trf.xlu0
          %v3733 = vpop.trf.xlu0
          %v3734 = vpop.trf.xlu0
          %v3735 = vpop.trf.xlu0
          %v3736 = vpop.trf.xlu0
          %v3737 = vpop.trf.xlu0
          %v3738 = vpop.trf.xlu0
          %v3739 = vpop.trf.xlu0
          %v3740 = vpop.trf.xlu0
          %v3741 = vpop.trf.xlu0
          %v3742 = vpop.trf.xlu0
          %3743 = vxpose.xlu0.b32.start [1/16] %v2824, 128
          %3744 = vxpose.xlu0.b32.cont [2/16] %v2936, 128
          %3745 = vxpose.xlu0.b32.cont [3/16] 0.0, 128
          %3746 = vxpose.xlu0.b32.cont [4/16] 0.0, 128
          %3747 = vxpose.xlu0.b32.cont [5/16] 0.0, 128
          %3748 = vxpose.xlu0.b32.cont [6/16] 0.0, 128
          %3749 = vxpose.xlu0.b32.cont [7/16] 0.0, 128
          %3750 = vxpose.xlu0.b32.cont [8/16] 0.0, 128
          %3751 = vxpose.xlu0.b32.cont [9/16] 0.0, 128
          %3752 = vxpose.xlu0.b32.cont [10/16] 0.0, 128
          %3753 = vxpose.xlu0.b32.cont [11/16] 0.0, 128
          %3754 = vxpose.xlu0.b32.cont [12/16] 0.0, 128
          %3755 = vxpose.xlu0.b32.cont [13/16] 0.0, 128
          %3756 = vxpose.xlu0.b32.cont [14/16] 0.0, 128
          %3757 = vxpose.xlu0.b32.cont [15/16] 0.0, 128
          %3758 = vxpose.xlu0.b32.end [16/16] 0.0, 128
          %v3759 = vpop.trf.xlu0
          %v3760 = vpop.trf.xlu0
          %v3761 = vpop.trf.xlu0
          %v3762 = vpop.trf.xlu0
          %v3763 = vpop.trf.xlu0
          %v3764 = vpop.trf.xlu0
          %v3765 = vpop.trf.xlu0
          %v3766 = vpop.trf.xlu0
          %v3767 = vpop.trf.xlu0
          %v3768 = vpop.trf.xlu0
          %v3769 = vpop.trf.xlu0
          %v3770 = vpop.trf.xlu0
          %v3771 = vpop.trf.xlu0
          %v3772 = vpop.trf.xlu0
          %v3773 = vpop.trf.xlu0
          %v3774 = vpop.trf.xlu0
          %3775 = vxpose.xlu0.b32.start [1/16] %v2826, 128
          %3776 = vxpose.xlu0.b32.cont [2/16] %v2938, 128
          %3777 = vxpose.xlu0.b32.cont [3/16] 0.0, 128
          %3778 = vxpose.xlu0.b32.cont [4/16] 0.0, 128
          %3779 = vxpose.xlu0.b32.cont [5/16] 0.0, 128
          %3780 = vxpose.xlu0.b32.cont [6/16] 0.0, 128
          %3781 = vxpose.xlu0.b32.cont [7/16] 0.0, 128
          %3782 = vxpose.xlu0.b32.cont [8/16] 0.0, 128
          %3783 = vxpose.xlu0.b32.cont [9/16] 0.0, 128
          %3784 = vxpose.xlu0.b32.cont [10/16] 0.0, 128
          %3785 = vxpose.xlu0.b32.cont [11/16] 0.0, 128
          %3786 = vxpose.xlu0.b32.cont [12/16] 0.0, 128
          %3787 = vxpose.xlu0.b32.cont [13/16] 0.0, 128
          %3788 = vxpose.xlu0.b32.cont [14/16] 0.0, 128
          %3789 = vxpose.xlu0.b32.cont [15/16] 0.0, 128
          %3790 = vxpose.xlu0.b32.end [16/16] 0.0, 128
          %v3791 = vpop.trf.xlu0
          %v3792 = vpop.trf.xlu0
          %v3793 = vpop.trf.xlu0
          %v3794 = vpop.trf.xlu0
          %v3795 = vpop.trf.xlu0
          %v3796 = vpop.trf.xlu0
          %v3797 = vpop.trf.xlu0
          %v3798 = vpop.trf.xlu0
          %v3799 = vpop.trf.xlu0
          %v3800 = vpop.trf.xlu0
          %v3801 = vpop.trf.xlu0
          %v3802 = vpop.trf.xlu0
          %v3803 = vpop.trf.xlu0
          %v3804 = vpop.trf.xlu0
          %v3805 = vpop.trf.xlu0
          %v3806 = vpop.trf.xlu0
          %3807 = vxpose.xlu0.b32.start [1/16] %v2828, 128
          %3808 = vxpose.xlu0.b32.cont [2/16] %v2940, 128
          %3809 = vxpose.xlu0.b32.cont [3/16] 0.0, 128
          %3810 = vxpose.xlu0.b32.cont [4/16] 0.0, 128
          %3811 = vxpose.xlu0.b32.cont [5/16] 0.0, 128
          %3812 = vxpose.xlu0.b32.cont [6/16] 0.0, 128
          %3813 = vxpose.xlu0.b32.cont [7/16] 0.0, 128
          %3814 = vxpose.xlu0.b32.cont [8/16] 0.0, 128
          %3815 = vxpose.xlu0.b32.cont [9/16] 0.0, 128
          %3816 = vxpose.xlu0.b32.cont [10/16] 0.0, 128
          %3817 = vxpose.xlu0.b32.cont [11/16] 0.0, 128
          %3818 = vxpose.xlu0.b32.cont [12/16] 0.0, 128
          %3819 = vxpose.xlu0.b32.cont [13/16] 0.0, 128
          %3820 = vxpose.xlu0.b32.cont [14/16] 0.0, 128
          %3821 = vxpose.xlu0.b32.cont [15/16] 0.0, 128
          %3822 = vxpose.xlu0.b32.end [16/16] 0.0, 128
          %v3823 = vpop.trf.xlu0
          %v3824 = vpop.trf.xlu0
          %v3825 = vpop.trf.xlu0
          %v3826 = vpop.trf.xlu0
          %v3827 = vpop.trf.xlu0
          %v3828 = vpop.trf.xlu0
          %v3829 = vpop.trf.xlu0
          %v3830 = vpop.trf.xlu0
          %v3831 = vpop.trf.xlu0
          %v3832 = vpop.trf.xlu0
          %v3833 = vpop.trf.xlu0
          %v3834 = vpop.trf.xlu0
          %v3835 = vpop.trf.xlu0
          %v3836 = vpop.trf.xlu0
          %v3837 = vpop.trf.xlu0
          %v3838 = vpop.trf.xlu0
          %3839 = vxpose.xlu0.b32.start [1/16] %v2830, 128
          %3840 = vxpose.xlu0.b32.cont [2/16] %v2942, 128
          %3841 = vxpose.xlu0.b32.cont [3/16] 0.0, 128
          %3842 = vxpose.xlu0.b32.cont [4/16] 0.0, 128
          %3843 = vxpose.xlu0.b32.cont [5/16] 0.0, 128
          %3844 = vxpose.xlu0.b32.cont [6/16] 0.0, 128
          %3845 = vxpose.xlu0.b32.cont [7/16] 0.0, 128
          %3846 = vxpose.xlu0.b32.cont [8/16] 0.0, 128
          %3847 = vxpose.xlu0.b32.cont [9/16] 0.0, 128
          %3848 = vxpose.xlu0.b32.cont [10/16] 0.0, 128
          %3849 = vxpose.xlu0.b32.cont [11/16] 0.0, 128
          %3850 = vxpose.xlu0.b32.cont [12/16] 0.0, 128
          %3851 = vxpose.xlu0.b32.cont [13/16] 0.0, 128
          %3852 = vxpose.xlu0.b32.cont [14/16] 0.0, 128
          %3853 = vxpose.xlu0.b32.cont [15/16] 0.0, 128
          %3854 = vxpose.xlu0.b32.end [16/16] 0.0, 128
          %v3855 = vpop.trf.xlu0
          %v3856 = vpop.trf.xlu0
          %v3857 = vpop.trf.xlu0
          %v3858 = vpop.trf.xlu0
          %v3859 = vpop.trf.xlu0
          %v3860 = vpop.trf.xlu0
          %v3861 = vpop.trf.xlu0
          %v3862 = vpop.trf.xlu0
          %v3863 = vpop.trf.xlu0
          %v3864 = vpop.trf.xlu0
          %v3865 = vpop.trf.xlu0
          %v3866 = vpop.trf.xlu0
          %v3867 = vpop.trf.xlu0
          %v3868 = vpop.trf.xlu0
          %v3869 = vpop.trf.xlu0
          %v3870 = vpop.trf.xlu0
          %3871 = vxpose.xlu0.b32.start [1/16] %v3040, 128
          %3872 = vxpose.xlu0.b32.cont [2/16] %v3152, 128
          %3873 = vxpose.xlu0.b32.cont [3/16] 0.0, 128
          %3874 = vxpose.xlu0.b32.cont [4/16] 0.0, 128
          %3875 = vxpose.xlu0.b32.cont [5/16] 0.0, 128
          %3876 = vxpose.xlu0.b32.cont [6/16] 0.0, 128
          %3877 = vxpose.xlu0.b32.cont [7/16] 0.0, 128
          %3878 = vxpose.xlu0.b32.cont [8/16] 0.0, 128
          %3879 = vxpose.xlu0.b32.cont [9/16] 0.0, 128
          %3880 = vxpose.xlu0.b32.cont [10/16] 0.0, 128
          %3881 = vxpose.xlu0.b32.cont [11/16] 0.0, 128
          %3882 = vxpose.xlu0.b32.cont [12/16] 0.0, 128
          %3883 = vxpose.xlu0.b32.cont [13/16] 0.0, 128
          %3884 = vxpose.xlu0.b32.cont [14/16] 0.0, 128
          %3885 = vxpose.xlu0.b32.cont [15/16] 0.0, 128
          %3886 = vxpose.xlu0.b32.end [16/16] 0.0, 128
          %v3887 = vpop.trf.xlu0
          %v3888 = vpop.trf.xlu0
          %v3889 = vpop.trf.xlu0
          %v3890 = vpop.trf.xlu0
          %v3891 = vpop.trf.xlu0
          %v3892 = vpop.trf.xlu0
          %v3893 = vpop.trf.xlu0
          %v3894 = vpop.trf.xlu0
          %v3895 = vpop.trf.xlu0
          %v3896 = vpop.trf.xlu0
          %v3897 = vpop.trf.xlu0
          %v3898 = vpop.trf.xlu0
          %v3899 = vpop.trf.xlu0
          %v3900 = vpop.trf.xlu0
          %v3901 = vpop.trf.xlu0
          %v3902 = vpop.trf.xlu0
          %3903 = vxpose.xlu0.b32.start [1/16] %v3042, 128
          %3904 = vxpose.xlu0.b32.cont [2/16] %v3154, 128
          %3905 = vxpose.xlu0.b32.cont [3/16] 0.0, 128
          %3906 = vxpose.xlu0.b32.cont [4/16] 0.0, 128
          %3907 = vxpose.xlu0.b32.cont [5/16] 0.0, 128
          %3908 = vxpose.xlu0.b32.cont [6/16] 0.0, 128
          %3909 = vxpose.xlu0.b32.cont [7/16] 0.0, 128
          %3910 = vxpose.xlu0.b32.cont [8/16] 0.0, 128
          %3911 = vxpose.xlu0.b32.cont [9/16] 0.0, 128
          %3912 = vxpose.xlu0.b32.cont [10/16] 0.0, 128
          %3913 = vxpose.xlu0.b32.cont [11/16] 0.0, 128
          %3914 = vxpose.xlu0.b32.cont [12/16] 0.0, 128
          %3915 = vxpose.xlu0.b32.cont [13/16] 0.0, 128
          %3916 = vxpose.xlu0.b32.cont [14/16] 0.0, 128
          %3917 = vxpose.xlu0.b32.cont [15/16] 0.0, 128
          %3918 = vxpose.xlu0.b32.end [16/16] 0.0, 128
          %v3919 = vpop.trf.xlu0
          %v3920 = vpop.trf.xlu0
          %v3921 = vpop.trf.xlu0
          %v3922 = vpop.trf.xlu0
          %v3923 = vpop.trf.xlu0
          %v3924 = vpop.trf.xlu0
          %v3925 = vpop.trf.xlu0
          %v3926 = vpop.trf.xlu0
          %v3927 = vpop.trf.xlu0
          %v3928 = vpop.trf.xlu0
          %v3929 = vpop.trf.xlu0
          %v3930 = vpop.trf.xlu0
          %v3931 = vpop.trf.xlu0
          %v3932 = vpop.trf.xlu0
          %v3933 = vpop.trf.xlu0
          %v3934 = vpop.trf.xlu0
          %3935 = vxpose.xlu0.b32.start [1/16] %v3044, 128
          %3936 = vxpose.xlu0.b32.cont [2/16] %v3156, 128
          %3937 = vxpose.xlu0.b32.cont [3/16] 0.0, 128
          %3938 = vxpose.xlu0.b32.cont [4/16] 0.0, 128
          %3939 = vxpose.xlu0.b32.cont [5/16] 0.0, 128
          %3940 = vxpose.xlu0.b32.cont [6/16] 0.0, 128
          %3941 = vxpose.xlu0.b32.cont [7/16] 0.0, 128
          %3942 = vxpose.xlu0.b32.cont [8/16] 0.0, 128
          %3943 = vxpose.xlu0.b32.cont [9/16] 0.0, 128
          %3944 = vxpose.xlu0.b32.cont [10/16] 0.0, 128
          %3945 = vxpose.xlu0.b32.cont [11/16] 0.0, 128
          %3946 = vxpose.xlu0.b32.cont [12/16] 0.0, 128
          %3947 = vxpose.xlu0.b32.cont [13/16] 0.0, 128
          %3948 = vxpose.xlu0.b32.cont [14/16] 0.0, 128
          %3949 = vxpose.xlu0.b32.cont [15/16] 0.0, 128
          %3950 = vxpose.xlu0.b32.end [16/16] 0.0, 128
          %v3951 = vpop.trf.xlu0
          %v3952 = vpop.trf.xlu0
          %v3953 = vpop.trf.xlu0
          %v3954 = vpop.trf.xlu0
          %v3955 = vpop.trf.xlu0
          %v3956 = vpop.trf.xlu0
          %v3957 = vpop.trf.xlu0
          %v3958 = vpop.trf.xlu0
          %v3959 = vpop.trf.xlu0
          %v3960 = vpop.trf.xlu0
          %v3961 = vpop.trf.xlu0
          %v3962 = vpop.trf.xlu0
          %v3963 = vpop.trf.xlu0
          %v3964 = vpop.trf.xlu0
          %v3965 = vpop.trf.xlu0
          %v3966 = vpop.trf.xlu0
          %3967 = vxpose.xlu0.b32.start [1/16] %v3046, 128
          %3968 = vxpose.xlu0.b32.cont [2/16] %v3158, 128
          %3969 = vxpose.xlu0.b32.cont [3/16] 0.0, 128
          %3970 = vxpose.xlu0.b32.cont [4/16] 0.0, 128
          %3971 = vxpose.xlu0.b32.cont [5/16] 0.0, 128
          %3972 = vxpose.xlu0.b32.cont [6/16] 0.0, 128
          %3973 = vxpose.xlu0.b32.cont [7/16] 0.0, 128
          %3974 = vxpose.xlu0.b32.cont [8/16] 0.0, 128
          %3975 = vxpose.xlu0.b32.cont [9/16] 0.0, 128
          %3976 = vxpose.xlu0.b32.cont [10/16] 0.0, 128
          %3977 = vxpose.xlu0.b32.cont [11/16] 0.0, 128
          %3978 = vxpose.xlu0.b32.cont [12/16] 0.0, 128
          %3979 = vxpose.xlu0.b32.cont [13/16] 0.0, 128
          %3980 = vxpose.xlu0.b32.cont [14/16] 0.0, 128
          %3981 = vxpose.xlu0.b32.cont [15/16] 0.0, 128
          %3982 = vxpose.xlu0.b32.end [16/16] 0.0, 128
          %v3983 = vpop.trf.xlu0
          %v3984 = vpop.trf.xlu0
          %v3985 = vpop.trf.xlu0
          %v3986 = vpop.trf.xlu0
          %v3987 = vpop.trf.xlu0
          %v3988 = vpop.trf.xlu0
          %v3989 = vpop.trf.xlu0
          %v3990 = vpop.trf.xlu0
          %v3991 = vpop.trf.xlu0
          %v3992 = vpop.trf.xlu0
          %v3993 = vpop.trf.xlu0
          %v3994 = vpop.trf.xlu0
          %v3995 = vpop.trf.xlu0
          %v3996 = vpop.trf.xlu0
          %v3997 = vpop.trf.xlu0
          %v3998 = vpop.trf.xlu0
          %3999 = vxpose.xlu0.b32.start [1/16] %v3048, 128
          %4000 = vxpose.xlu0.b32.cont [2/16] %v3160, 128
          %4001 = vxpose.xlu0.b32.cont [3/16] 0.0, 128
          %4002 = vxpose.xlu0.b32.cont [4/16] 0.0, 128
          %4003 = vxpose.xlu0.b32.cont [5/16] 0.0, 128
          %4004 = vxpose.xlu0.b32.cont [6/16] 0.0, 128
          %4005 = vxpose.xlu0.b32.cont [7/16] 0.0, 128
          %4006 = vxpose.xlu0.b32.cont [8/16] 0.0, 128
          %4007 = vxpose.xlu0.b32.cont [9/16] 0.0, 128
          %4008 = vxpose.xlu0.b32.cont [10/16] 0.0, 128
          %4009 = vxpose.xlu0.b32.cont [11/16] 0.0, 128
          %4010 = vxpose.xlu0.b32.cont [12/16] 0.0, 128
          %4011 = vxpose.xlu0.b32.cont [13/16] 0.0, 128
          %4012 = vxpose.xlu0.b32.cont [14/16] 0.0, 128
          %4013 = vxpose.xlu0.b32.cont [15/16] 0.0, 128
          %4014 = vxpose.xlu0.b32.end [16/16] 0.0, 128
          %v4015 = vpop.trf.xlu0
          %v4016 = vpop.trf.xlu0
          %v4017 = vpop.trf.xlu0
          %v4018 = vpop.trf.xlu0
          %v4019 = vpop.trf.xlu0
          %v4020 = vpop.trf.xlu0
          %v4021 = vpop.trf.xlu0
          %v4022 = vpop.trf.xlu0
          %v4023 = vpop.trf.xlu0
          %v4024 = vpop.trf.xlu0
          %v4025 = vpop.trf.xlu0
          %v4026 = vpop.trf.xlu0
          %v4027 = vpop.trf.xlu0
          %v4028 = vpop.trf.xlu0
          %v4029 = vpop.trf.xlu0
          %v4030 = vpop.trf.xlu0
          %4031 = vxpose.xlu0.b32.start [1/16] %v3050, 128
          %4032 = vxpose.xlu0.b32.cont [2/16] %v3162, 128
          %4033 = vxpose.xlu0.b32.cont [3/16] 0.0, 128
          %4034 = vxpose.xlu0.b32.cont [4/16] 0.0, 128
          %4035 = vxpose.xlu0.b32.cont [5/16] 0.0, 128
          %4036 = vxpose.xlu0.b32.cont [6/16] 0.0, 128
          %4037 = vxpose.xlu0.b32.cont [7/16] 0.0, 128
          %4038 = vxpose.xlu0.b32.cont [8/16] 0.0, 128
          %4039 = vxpose.xlu0.b32.cont [9/16] 0.0, 128
          %4040 = vxpose.xlu0.b32.cont [10/16] 0.0, 128
          %4041 = vxpose.xlu0.b32.cont [11/16] 0.0, 128
          %4042 = vxpose.xlu0.b32.cont [12/16] 0.0, 128
          %4043 = vxpose.xlu0.b32.cont [13/16] 0.0, 128
          %4044 = vxpose.xlu0.b32.cont [14/16] 0.0, 128
          %4045 = vxpose.xlu0.b32.cont [15/16] 0.0, 128
          %4046 = vxpose.xlu0.b32.end [16/16] 0.0, 128
          %v4047 = vpop.trf.xlu0
          %v4048 = vpop.trf.xlu0
          %v4049 = vpop.trf.xlu0
          %v4050 = vpop.trf.xlu0
          %v4051 = vpop.trf.xlu0
          %v4052 = vpop.trf.xlu0
          %v4053 = vpop.trf.xlu0
          %v4054 = vpop.trf.xlu0
          %v4055 = vpop.trf.xlu0
          %v4056 = vpop.trf.xlu0
          %v4057 = vpop.trf.xlu0
          %v4058 = vpop.trf.xlu0
          %v4059 = vpop.trf.xlu0
          %v4060 = vpop.trf.xlu0
          %v4061 = vpop.trf.xlu0
          %v4062 = vpop.trf.xlu0
          %4063 = vxpose.xlu0.b32.start [1/16] %v3052, 128
          %4064 = vxpose.xlu0.b32.cont [2/16] %v3164, 128
          %4065 = vxpose.xlu0.b32.cont [3/16] 0.0, 128
          %4066 = vxpose.xlu0.b32.cont [4/16] 0.0, 128
          %4067 = vxpose.xlu0.b32.cont [5/16] 0.0, 128
          %4068 = vxpose.xlu0.b32.cont [6/16] 0.0, 128
          %4069 = vxpose.xlu0.b32.cont [7/16] 0.0, 128
          %4070 = vxpose.xlu0.b32.cont [8/16] 0.0, 128
          %4071 = vxpose.xlu0.b32.cont [9/16] 0.0, 128
          %4072 = vxpose.xlu0.b32.cont [10/16] 0.0, 128
          %4073 = vxpose.xlu0.b32.cont [11/16] 0.0, 128
          %4074 = vxpose.xlu0.b32.cont [12/16] 0.0, 128
          %4075 = vxpose.xlu0.b32.cont [13/16] 0.0, 128
          %4076 = vxpose.xlu0.b32.cont [14/16] 0.0, 128
          %4077 = vxpose.xlu0.b32.cont [15/16] 0.0, 128
          %4078 = vxpose.xlu0.b32.end [16/16] 0.0, 128
          %v4079 = vpop.trf.xlu0
          %v4080 = vpop.trf.xlu0
          %v4081 = vpop.trf.xlu0
          %v4082 = vpop.trf.xlu0
          %v4083 = vpop.trf.xlu0
          %v4084 = vpop.trf.xlu0
          %v4085 = vpop.trf.xlu0
          %v4086 = vpop.trf.xlu0
          %v4087 = vpop.trf.xlu0
          %v4088 = vpop.trf.xlu0
          %v4089 = vpop.trf.xlu0
          %v4090 = vpop.trf.xlu0
          %v4091 = vpop.trf.xlu0
          %v4092 = vpop.trf.xlu0
          %v4093 = vpop.trf.xlu0
          %v4094 = vpop.trf.xlu0
          %4095 = vxpose.xlu0.b32.start [1/16] %v3054, 128
          %4096 = vxpose.xlu0.b32.cont [2/16] %v3166, 128
          %4097 = vxpose.xlu0.b32.cont [3/16] 0.0, 128
          %4098 = vxpose.xlu0.b32.cont [4/16] 0.0, 128
          %4099 = vxpose.xlu0.b32.cont [5/16] 0.0, 128
          %4100 = vxpose.xlu0.b32.cont [6/16] 0.0, 128
          %4101 = vxpose.xlu0.b32.cont [7/16] 0.0, 128
          %4102 = vxpose.xlu0.b32.cont [8/16] 0.0, 128
          %4103 = vxpose.xlu0.b32.cont [9/16] 0.0, 128
          %4104 = vxpose.xlu0.b32.cont [10/16] 0.0, 128
          %4105 = vxpose.xlu0.b32.cont [11/16] 0.0, 128
          %4106 = vxpose.xlu0.b32.cont [12/16] 0.0, 128
          %4107 = vxpose.xlu0.b32.cont [13/16] 0.0, 128
          %4108 = vxpose.xlu0.b32.cont [14/16] 0.0, 128
          %4109 = vxpose.xlu0.b32.cont [15/16] 0.0, 128
          %4110 = vxpose.xlu0.b32.end [16/16] 0.0, 128
          %v4111 = vpop.trf.xlu0
          %v4112 = vpop.trf.xlu0
          %v4113 = vpop.trf.xlu0
          %v4114 = vpop.trf.xlu0
          %v4115 = vpop.trf.xlu0
          %v4116 = vpop.trf.xlu0
          %v4117 = vpop.trf.xlu0
          %v4118 = vpop.trf.xlu0
          %v4119 = vpop.trf.xlu0
          %v4120 = vpop.trf.xlu0
          %v4121 = vpop.trf.xlu0
          %v4122 = vpop.trf.xlu0
          %v4123 = vpop.trf.xlu0
          %v4124 = vpop.trf.xlu0
          %v4125 = vpop.trf.xlu0
          %v4126 = vpop.trf.xlu0
          %4127 = vxpose.xlu0.b32.start [1/16] %v3264, 128
          %4128 = vxpose.xlu0.b32.cont [2/16] %v3376, 128
          %4129 = vxpose.xlu0.b32.cont [3/16] 0.0, 128
          %4130 = vxpose.xlu0.b32.cont [4/16] 0.0, 128
          %4131 = vxpose.xlu0.b32.cont [5/16] 0.0, 128
          %4132 = vxpose.xlu0.b32.cont [6/16] 0.0, 128
          %4133 = vxpose.xlu0.b32.cont [7/16] 0.0, 128
          %4134 = vxpose.xlu0.b32.cont [8/16] 0.0, 128
          %4135 = vxpose.xlu0.b32.cont [9/16] 0.0, 128
          %4136 = vxpose.xlu0.b32.cont [10/16] 0.0, 128
          %4137 = vxpose.xlu0.b32.cont [11/16] 0.0, 128
          %4138 = vxpose.xlu0.b32.cont [12/16] 0.0, 128
          %4139 = vxpose.xlu0.b32.cont [13/16] 0.0, 128
          %4140 = vxpose.xlu0.b32.cont [14/16] 0.0, 128
          %4141 = vxpose.xlu0.b32.cont [15/16] 0.0, 128
          %4142 = vxpose.xlu0.b32.end [16/16] 0.0, 128
          %v4143 = vpop.trf.xlu0
          %v4144 = vpop.trf.xlu0
          %v4145 = vpop.trf.xlu0
          %v4146 = vpop.trf.xlu0
          %v4147 = vpop.trf.xlu0
          %v4148 = vpop.trf.xlu0
          %v4149 = vpop.trf.xlu0
          %v4150 = vpop.trf.xlu0
          %v4151 = vpop.trf.xlu0
          %v4152 = vpop.trf.xlu0
          %v4153 = vpop.trf.xlu0
          %v4154 = vpop.trf.xlu0
          %v4155 = vpop.trf.xlu0
          %v4156 = vpop.trf.xlu0
          %v4157 = vpop.trf.xlu0
          %v4158 = vpop.trf.xlu0
          %4159 = vxpose.xlu0.b32.start [1/16] %v3266, 128
          %4160 = vxpose.xlu0.b32.cont [2/16] %v3378, 128
          %4161 = vxpose.xlu0.b32.cont [3/16] 0.0, 128
          %4162 = vxpose.xlu0.b32.cont [4/16] 0.0, 128
          %4163 = vxpose.xlu0.b32.cont [5/16] 0.0, 128
          %4164 = vxpose.xlu0.b32.cont [6/16] 0.0, 128
          %4165 = vxpose.xlu0.b32.cont [7/16] 0.0, 128
          %4166 = vxpose.xlu0.b32.cont [8/16] 0.0, 128
          %4167 = vxpose.xlu0.b32.cont [9/16] 0.0, 128
          %4168 = vxpose.xlu0.b32.cont [10/16] 0.0, 128
          %4169 = vxpose.xlu0.b32.cont [11/16] 0.0, 128
          %4170 = vxpose.xlu0.b32.cont [12/16] 0.0, 128
          %4171 = vxpose.xlu0.b32.cont [13/16] 0.0, 128
          %4172 = vxpose.xlu0.b32.cont [14/16] 0.0, 128
          %4173 = vxpose.xlu0.b32.cont [15/16] 0.0, 128
          %4174 = vxpose.xlu0.b32.end [16/16] 0.0, 128
          %v4175 = vpop.trf.xlu0
          %v4176 = vpop.trf.xlu0
          %v4177 = vpop.trf.xlu0
          %v4178 = vpop.trf.xlu0
          %v4179 = vpop.trf.xlu0
          %v4180 = vpop.trf.xlu0
          %v4181 = vpop.trf.xlu0
          %v4182 = vpop.trf.xlu0
          %v4183 = vpop.trf.xlu0
          %v4184 = vpop.trf.xlu0
          %v4185 = vpop.trf.xlu0
          %v4186 = vpop.trf.xlu0
          %v4187 = vpop.trf.xlu0
          %v4188 = vpop.trf.xlu0
          %v4189 = vpop.trf.xlu0
          %v4190 = vpop.trf.xlu0
          %4191 = vxpose.xlu0.b32.start [1/16] %v3268, 128
          %4192 = vxpose.xlu0.b32.cont [2/16] %v3380, 128
          %4193 = vxpose.xlu0.b32.cont [3/16] 0.0, 128
          %4194 = vxpose.xlu0.b32.cont [4/16] 0.0, 128
          %4195 = vxpose.xlu0.b32.cont [5/16] 0.0, 128
          %4196 = vxpose.xlu0.b32.cont [6/16] 0.0, 128
          %4197 = vxpose.xlu0.b32.cont [7/16] 0.0, 128
          %4198 = vxpose.xlu0.b32.cont [8/16] 0.0, 128
          %4199 = vxpose.xlu0.b32.cont [9/16] 0.0, 128
          %4200 = vxpose.xlu0.b32.cont [10/16] 0.0, 128
          %4201 = vxpose.xlu0.b32.cont [11/16] 0.0, 128
          %4202 = vxpose.xlu0.b32.cont [12/16] 0.0, 128
          %4203 = vxpose.xlu0.b32.cont [13/16] 0.0, 128
          %4204 = vxpose.xlu0.b32.cont [14/16] 0.0, 128
          %4205 = vxpose.xlu0.b32.cont [15/16] 0.0, 128
          %4206 = vxpose.xlu0.b32.end [16/16] 0.0, 128
          %v4207 = vpop.trf.xlu0
          %v4208 = vpop.trf.xlu0
          %v4209 = vpop.trf.xlu0
          %v4210 = vpop.trf.xlu0
          %v4211 = vpop.trf.xlu0
          %v4212 = vpop.trf.xlu0
          %v4213 = vpop.trf.xlu0
          %v4214 = vpop.trf.xlu0
          %v4215 = vpop.trf.xlu0
          %v4216 = vpop.trf.xlu0
          %v4217 = vpop.trf.xlu0
          %v4218 = vpop.trf.xlu0
          %v4219 = vpop.trf.xlu0
          %v4220 = vpop.trf.xlu0
          %v4221 = vpop.trf.xlu0
          %v4222 = vpop.trf.xlu0
          %4223 = vxpose.xlu0.b32.start [1/16] %v3270, 128
          %4224 = vxpose.xlu0.b32.cont [2/16] %v3382, 128
          %4225 = vxpose.xlu0.b32.cont [3/16] 0.0, 128
          %4226 = vxpose.xlu0.b32.cont [4/16] 0.0, 128
          %4227 = vxpose.xlu0.b32.cont [5/16] 0.0, 128
          %4228 = vxpose.xlu0.b32.cont [6/16] 0.0, 128
          %4229 = vxpose.xlu0.b32.cont [7/16] 0.0, 128
          %4230 = vxpose.xlu0.b32.cont [8/16] 0.0, 128
          %4231 = vxpose.xlu0.b32.cont [9/16] 0.0, 128
          %4232 = vxpose.xlu0.b32.cont [10/16] 0.0, 128
          %4233 = vxpose.xlu0.b32.cont [11/16] 0.0, 128
          %4234 = vxpose.xlu0.b32.cont [12/16] 0.0, 128
          %4235 = vxpose.xlu0.b32.cont [13/16] 0.0, 128
          %4236 = vxpose.xlu0.b32.cont [14/16] 0.0, 128
          %4237 = vxpose.xlu0.b32.cont [15/16] 0.0, 128
          %4238 = vxpose.xlu0.b32.end [16/16] 0.0, 128
          %v4239 = vpop.trf.xlu0
          %v4240 = vpop.trf.xlu0
          %v4241 = vpop.trf.xlu0
          %v4242 = vpop.trf.xlu0
          %v4243 = vpop.trf.xlu0
          %v4244 = vpop.trf.xlu0
          %v4245 = vpop.trf.xlu0
          %v4246 = vpop.trf.xlu0
          %v4247 = vpop.trf.xlu0
          %v4248 = vpop.trf.xlu0
          %v4249 = vpop.trf.xlu0
          %v4250 = vpop.trf.xlu0
          %v4251 = vpop.trf.xlu0
          %v4252 = vpop.trf.xlu0
          %v4253 = vpop.trf.xlu0
          %v4254 = vpop.trf.xlu0
          %4255 = vxpose.xlu0.b32.start [1/16] %v3272, 128
          %4256 = vxpose.xlu0.b32.cont [2/16] %v3384, 128
          %4257 = vxpose.xlu0.b32.cont [3/16] 0.0, 128
          %4258 = vxpose.xlu0.b32.cont [4/16] 0.0, 128
          %4259 = vxpose.xlu0.b32.cont [5/16] 0.0, 128
          %4260 = vxpose.xlu0.b32.cont [6/16] 0.0, 128
          %4261 = vxpose.xlu0.b32.cont [7/16] 0.0, 128
          %4262 = vxpose.xlu0.b32.cont [8/16] 0.0, 128
          %4263 = vxpose.xlu0.b32.cont [9/16] 0.0, 128
          %4264 = vxpose.xlu0.b32.cont [10/16] 0.0, 128
          %4265 = vxpose.xlu0.b32.cont [11/16] 0.0, 128
          %4266 = vxpose.xlu0.b32.cont [12/16] 0.0, 128
          %4267 = vxpose.xlu0.b32.cont [13/16] 0.0, 128
          %4268 = vxpose.xlu0.b32.cont [14/16] 0.0, 128
          %4269 = vxpose.xlu0.b32.cont [15/16] 0.0, 128
          %4270 = vxpose.xlu0.b32.end [16/16] 0.0, 128
          %v4271 = vpop.trf.xlu0
          %v4272 = vpop.trf.xlu0
          %v4273 = vpop.trf.xlu0
          %v4274 = vpop.trf.xlu0
          %v4275 = vpop.trf.xlu0
          %v4276 = vpop.trf.xlu0
          %v4277 = vpop.trf.xlu0
          %v4278 = vpop.trf.xlu0
          %v4279 = vpop.trf.xlu0
          %v4280 = vpop.trf.xlu0
          %v4281 = vpop.trf.xlu0
          %v4282 = vpop.trf.xlu0
          %v4283 = vpop.trf.xlu0
          %v4284 = vpop.trf.xlu0
          %v4285 = vpop.trf.xlu0
          %v4286 = vpop.trf.xlu0
          %4287 = vxpose.xlu0.b32.start [1/16] %v3274, 128
          %4288 = vxpose.xlu0.b32.cont [2/16] %v3386, 128
          %4289 = vxpose.xlu0.b32.cont [3/16] 0.0, 128
          %4290 = vxpose.xlu0.b32.cont [4/16] 0.0, 128
          %4291 = vxpose.xlu0.b32.cont [5/16] 0.0, 128
          %4292 = vxpose.xlu0.b32.cont [6/16] 0.0, 128
          %4293 = vxpose.xlu0.b32.cont [7/16] 0.0, 128
          %4294 = vxpose.xlu0.b32.cont [8/16] 0.0, 128
          %4295 = vxpose.xlu0.b32.cont [9/16] 0.0, 128
          %4296 = vxpose.xlu0.b32.cont [10/16] 0.0, 128
          %4297 = vxpose.xlu0.b32.cont [11/16] 0.0, 128
          %4298 = vxpose.xlu0.b32.cont [12/16] 0.0, 128
          %4299 = vxpose.xlu0.b32.cont [13/16] 0.0, 128
          %4300 = vxpose.xlu0.b32.cont [14/16] 0.0, 128
          %4301 = vxpose.xlu0.b32.cont [15/16] 0.0, 128
          %4302 = vxpose.xlu0.b32.end [16/16] 0.0, 128
          %v4303 = vpop.trf.xlu0
          %v4304 = vpop.trf.xlu0
          %v4305 = vpop.trf.xlu0
          %v4306 = vpop.trf.xlu0
          %v4307 = vpop.trf.xlu0
          %v4308 = vpop.trf.xlu0
          %v4309 = vpop.trf.xlu0
          %v4310 = vpop.trf.xlu0
          %v4311 = vpop.trf.xlu0
          %v4312 = vpop.trf.xlu0
          %v4313 = vpop.trf.xlu0
          %v4314 = vpop.trf.xlu0
          %v4315 = vpop.trf.xlu0
          %v4316 = vpop.trf.xlu0
          %v4317 = vpop.trf.xlu0
          %v4318 = vpop.trf.xlu0
          %4319 = vxpose.xlu0.b32.start [1/16] %v3276, 128
          %4320 = vxpose.xlu0.b32.cont [2/16] %v3388, 128
          %4321 = vxpose.xlu0.b32.cont [3/16] 0.0, 128
          %4322 = vxpose.xlu0.b32.cont [4/16] 0.0, 128
          %4323 = vxpose.xlu0.b32.cont [5/16] 0.0, 128
          %4324 = vxpose.xlu0.b32.cont [6/16] 0.0, 128
          %4325 = vxpose.xlu0.b32.cont [7/16] 0.0, 128
          %4326 = vxpose.xlu0.b32.cont [8/16] 0.0, 128
          %4327 = vxpose.xlu0.b32.cont [9/16] 0.0, 128
          %4328 = vxpose.xlu0.b32.cont [10/16] 0.0, 128
          %4329 = vxpose.xlu0.b32.cont [11/16] 0.0, 128
          %4330 = vxpose.xlu0.b32.cont [12/16] 0.0, 128
          %4331 = vxpose.xlu0.b32.cont [13/16] 0.0, 128
          %4332 = vxpose.xlu0.b32.cont [14/16] 0.0, 128
          %4333 = vxpose.xlu0.b32.cont [15/16] 0.0, 128
          %4334 = vxpose.xlu0.b32.end [16/16] 0.0, 128
          %v4335 = vpop.trf.xlu0
          %v4336 = vpop.trf.xlu0
          %v4337 = vpop.trf.xlu0
          %v4338 = vpop.trf.xlu0
          %v4339 = vpop.trf.xlu0
          %v4340 = vpop.trf.xlu0
          %v4341 = vpop.trf.xlu0
          %v4342 = vpop.trf.xlu0
          %v4343 = vpop.trf.xlu0
          %v4344 = vpop.trf.xlu0
          %v4345 = vpop.trf.xlu0
          %v4346 = vpop.trf.xlu0
          %v4347 = vpop.trf.xlu0
          %v4348 = vpop.trf.xlu0
          %v4349 = vpop.trf.xlu0
          %v4350 = vpop.trf.xlu0
          %4351 = vxpose.xlu0.b32.start [1/16] %v3278, 128
          %4352 = vxpose.xlu0.b32.cont [2/16] %v3390, 128
          %4353 = vxpose.xlu0.b32.cont [3/16] 0.0, 128
          %4354 = vxpose.xlu0.b32.cont [4/16] 0.0, 128
          %4355 = vxpose.xlu0.b32.cont [5/16] 0.0, 128
          %4356 = vxpose.xlu0.b32.cont [6/16] 0.0, 128
          %4357 = vxpose.xlu0.b32.cont [7/16] 0.0, 128
          %4358 = vxpose.xlu0.b32.cont [8/16] 0.0, 128
          %4359 = vxpose.xlu0.b32.cont [9/16] 0.0, 128
          %4360 = vxpose.xlu0.b32.cont [10/16] 0.0, 128
          %4361 = vxpose.xlu0.b32.cont [11/16] 0.0, 128
          %4362 = vxpose.xlu0.b32.cont [12/16] 0.0, 128
          %4363 = vxpose.xlu0.b32.cont [13/16] 0.0, 128
          %4364 = vxpose.xlu0.b32.cont [14/16] 0.0, 128
          %4365 = vxpose.xlu0.b32.cont [15/16] 0.0, 128
          %4366 = vxpose.xlu0.b32.end [16/16] 0.0, 128
          %v4367 = vpop.trf.xlu0
          %v4368 = vpop.trf.xlu0
          %v4369 = vpop.trf.xlu0
          %v4370 = vpop.trf.xlu0
          %v4371 = vpop.trf.xlu0
          %v4372 = vpop.trf.xlu0
          %v4373 = vpop.trf.xlu0
          %v4374 = vpop.trf.xlu0
          %v4375 = vpop.trf.xlu0
          %v4376 = vpop.trf.xlu0
          %v4377 = vpop.trf.xlu0
          %v4378 = vpop.trf.xlu0
          %v4379 = vpop.trf.xlu0
          %v4380 = vpop.trf.xlu0
          %v4381 = vpop.trf.xlu0
          %v4382 = vpop.trf.xlu0
          %4383 = vxpose.xlu0.b32.start [1/16] %v3488, 128
          %4384 = vxpose.xlu0.b32.cont [2/16] %v3600, 128
          %4385 = vxpose.xlu0.b32.cont [3/16] 0.0, 128
          %4386 = vxpose.xlu0.b32.cont [4/16] 0.0, 128
          %4387 = vxpose.xlu0.b32.cont [5/16] 0.0, 128
          %4388 = vxpose.xlu0.b32.cont [6/16] 0.0, 128
          %4389 = vxpose.xlu0.b32.cont [7/16] 0.0, 128
          %4390 = vxpose.xlu0.b32.cont [8/16] 0.0, 128
          %4391 = vxpose.xlu0.b32.cont [9/16] 0.0, 128
          %4392 = vxpose.xlu0.b32.cont [10/16] 0.0, 128
          %4393 = vxpose.xlu0.b32.cont [11/16] 0.0, 128
          %4394 = vxpose.xlu0.b32.cont [12/16] 0.0, 128
          %4395 = vxpose.xlu0.b32.cont [13/16] 0.0, 128
          %4396 = vxpose.xlu0.b32.cont [14/16] 0.0, 128
          %4397 = vxpose.xlu0.b32.cont [15/16] 0.0, 128
          %4398 = vxpose.xlu0.b32.end [16/16] 0.0, 128
          %v4399 = vpop.trf.xlu0
          %v4400 = vpop.trf.xlu0
          %v4401 = vpop.trf.xlu0
          %v4402 = vpop.trf.xlu0
          %v4403 = vpop.trf.xlu0
          %v4404 = vpop.trf.xlu0
          %v4405 = vpop.trf.xlu0
          %v4406 = vpop.trf.xlu0
          %v4407 = vpop.trf.xlu0
          %v4408 = vpop.trf.xlu0
          %v4409 = vpop.trf.xlu0
          %v4410 = vpop.trf.xlu0
          %v4411 = vpop.trf.xlu0
          %v4412 = vpop.trf.xlu0
          %v4413 = vpop.trf.xlu0
          %v4414 = vpop.trf.xlu0
          %4415 = vxpose.xlu0.b32.start [1/16] %v3490, 128
          %4416 = vxpose.xlu0.b32.cont [2/16] %v3602, 128
          %4417 = vxpose.xlu0.b32.cont [3/16] 0.0, 128
          %4418 = vxpose.xlu0.b32.cont [4/16] 0.0, 128
          %4419 = vxpose.xlu0.b32.cont [5/16] 0.0, 128
          %4420 = vxpose.xlu0.b32.cont [6/16] 0.0, 128
          %4421 = vxpose.xlu0.b32.cont [7/16] 0.0, 128
          %4422 = vxpose.xlu0.b32.cont [8/16] 0.0, 128
          %4423 = vxpose.xlu0.b32.cont [9/16] 0.0, 128
          %4424 = vxpose.xlu0.b32.cont [10/16] 0.0, 128
          %4425 = vxpose.xlu0.b32.cont [11/16] 0.0, 128
          %4426 = vxpose.xlu0.b32.cont [12/16] 0.0, 128
          %4427 = vxpose.xlu0.b32.cont [13/16] 0.0, 128
          %4428 = vxpose.xlu0.b32.cont [14/16] 0.0, 128
          %4429 = vxpose.xlu0.b32.cont [15/16] 0.0, 128
          %4430 = vxpose.xlu0.b32.end [16/16] 0.0, 128
          %v4431 = vpop.trf.xlu0
          %v4432 = vpop.trf.xlu0
          %v4433 = vpop.trf.xlu0
          %v4434 = vpop.trf.xlu0
          %v4435 = vpop.trf.xlu0
          %v4436 = vpop.trf.xlu0
          %v4437 = vpop.trf.xlu0
          %v4438 = vpop.trf.xlu0
          %v4439 = vpop.trf.xlu0
          %v4440 = vpop.trf.xlu0
          %v4441 = vpop.trf.xlu0
          %v4442 = vpop.trf.xlu0
          %v4443 = vpop.trf.xlu0
          %v4444 = vpop.trf.xlu0
          %v4445 = vpop.trf.xlu0
          %v4446 = vpop.trf.xlu0
          %4447 = vxpose.xlu0.b32.start [1/16] %v3492, 128
          %4448 = vxpose.xlu0.b32.cont [2/16] %v3604, 128
          %4449 = vxpose.xlu0.b32.cont [3/16] 0.0, 128
          %4450 = vxpose.xlu0.b32.cont [4/16] 0.0, 128
          %4451 = vxpose.xlu0.b32.cont [5/16] 0.0, 128
          %4452 = vxpose.xlu0.b32.cont [6/16] 0.0, 128
          %4453 = vxpose.xlu0.b32.cont [7/16] 0.0, 128
          %4454 = vxpose.xlu0.b32.cont [8/16] 0.0, 128
          %4455 = vxpose.xlu0.b32.cont [9/16] 0.0, 128
          %4456 = vxpose.xlu0.b32.cont [10/16] 0.0, 128
          %4457 = vxpose.xlu0.b32.cont [11/16] 0.0, 128
          %4458 = vxpose.xlu0.b32.cont [12/16] 0.0, 128
          %4459 = vxpose.xlu0.b32.cont [13/16] 0.0, 128
          %4460 = vxpose.xlu0.b32.cont [14/16] 0.0, 128
          %4461 = vxpose.xlu0.b32.cont [15/16] 0.0, 128
          %4462 = vxpose.xlu0.b32.end [16/16] 0.0, 128
          %v4463 = vpop.trf.xlu0
          %v4464 = vpop.trf.xlu0
          %v4465 = vpop.trf.xlu0
          %v4466 = vpop.trf.xlu0
          %v4467 = vpop.trf.xlu0
          %v4468 = vpop.trf.xlu0
          %v4469 = vpop.trf.xlu0
          %v4470 = vpop.trf.xlu0
          %v4471 = vpop.trf.xlu0
          %v4472 = vpop.trf.xlu0
          %v4473 = vpop.trf.xlu0
          %v4474 = vpop.trf.xlu0
          %v4475 = vpop.trf.xlu0
          %v4476 = vpop.trf.xlu0
          %v4477 = vpop.trf.xlu0
          %v4478 = vpop.trf.xlu0
          %4479 = vxpose.xlu0.b32.start [1/16] %v3494, 128
          %4480 = vxpose.xlu0.b32.cont [2/16] %v3606, 128
          %4481 = vxpose.xlu0.b32.cont [3/16] 0.0, 128
          %4482 = vxpose.xlu0.b32.cont [4/16] 0.0, 128
          %4483 = vxpose.xlu0.b32.cont [5/16] 0.0, 128
          %4484 = vxpose.xlu0.b32.cont [6/16] 0.0, 128
          %4485 = vxpose.xlu0.b32.cont [7/16] 0.0, 128
          %4486 = vxpose.xlu0.b32.cont [8/16] 0.0, 128
          %4487 = vxpose.xlu0.b32.cont [9/16] 0.0, 128
          %4488 = vxpose.xlu0.b32.cont [10/16] 0.0, 128
          %4489 = vxpose.xlu0.b32.cont [11/16] 0.0, 128
          %4490 = vxpose.xlu0.b32.cont [12/16] 0.0, 128
          %4491 = vxpose.xlu0.b32.cont [13/16] 0.0, 128
          %4492 = vxpose.xlu0.b32.cont [14/16] 0.0, 128
          %4493 = vxpose.xlu0.b32.cont [15/16] 0.0, 128
          %4494 = vxpose.xlu0.b32.end [16/16] 0.0, 128
          %v4495 = vpop.trf.xlu0
          %v4496 = vpop.trf.xlu0
          %v4497 = vpop.trf.xlu0
          %v4498 = vpop.trf.xlu0
          %v4499 = vpop.trf.xlu0
          %v4500 = vpop.trf.xlu0
          %v4501 = vpop.trf.xlu0
          %v4502 = vpop.trf.xlu0
          %v4503 = vpop.trf.xlu0
          %v4504 = vpop.trf.xlu0
          %v4505 = vpop.trf.xlu0
          %v4506 = vpop.trf.xlu0
          %v4507 = vpop.trf.xlu0
          %v4508 = vpop.trf.xlu0
          %v4509 = vpop.trf.xlu0
          %v4510 = vpop.trf.xlu0
          %4511 = vxpose.xlu0.b32.start [1/16] %v3496, 128
          %4512 = vxpose.xlu0.b32.cont [2/16] %v3608, 128
          %4513 = vxpose.xlu0.b32.cont [3/16] 0.0, 128
          %4514 = vxpose.xlu0.b32.cont [4/16] 0.0, 128
          %4515 = vxpose.xlu0.b32.cont [5/16] 0.0, 128
          %4516 = vxpose.xlu0.b32.cont [6/16] 0.0, 128
          %4517 = vxpose.xlu0.b32.cont [7/16] 0.0, 128
          %4518 = vxpose.xlu0.b32.cont [8/16] 0.0, 128
          %4519 = vxpose.xlu0.b32.cont [9/16] 0.0, 128
          %4520 = vxpose.xlu0.b32.cont [10/16] 0.0, 128
          %4521 = vxpose.xlu0.b32.cont [11/16] 0.0, 128
          %4522 = vxpose.xlu0.b32.cont [12/16] 0.0, 128
          %4523 = vxpose.xlu0.b32.cont [13/16] 0.0, 128
          %4524 = vxpose.xlu0.b32.cont [14/16] 0.0, 128
          %4525 = vxpose.xlu0.b32.cont [15/16] 0.0, 128
          %4526 = vxpose.xlu0.b32.end [16/16] 0.0, 128
          %v4527 = vpop.trf.xlu0
          %v4528 = vpop.trf.xlu0
          %v4529 = vpop.trf.xlu0
          %v4530 = vpop.trf.xlu0
          %v4531 = vpop.trf.xlu0
          %v4532 = vpop.trf.xlu0
          %v4533 = vpop.trf.xlu0
          %v4534 = vpop.trf.xlu0
          %v4535 = vpop.trf.xlu0
          %v4536 = vpop.trf.xlu0
          %v4537 = vpop.trf.xlu0
          %v4538 = vpop.trf.xlu0
          %v4539 = vpop.trf.xlu0
          %v4540 = vpop.trf.xlu0
          %v4541 = vpop.trf.xlu0
          %v4542 = vpop.trf.xlu0
          %4543 = vxpose.xlu0.b32.start [1/16] %v3498, 128
          %4544 = vxpose.xlu0.b32.cont [2/16] %v3610, 128
          %4545 = vxpose.xlu0.b32.cont [3/16] 0.0, 128
          %4546 = vxpose.xlu0.b32.cont [4/16] 0.0, 128
          %4547 = vxpose.xlu0.b32.cont [5/16] 0.0, 128
          %4548 = vxpose.xlu0.b32.cont [6/16] 0.0, 128
          %4549 = vxpose.xlu0.b32.cont [7/16] 0.0, 128
          %4550 = vxpose.xlu0.b32.cont [8/16] 0.0, 128
          %4551 = vxpose.xlu0.b32.cont [9/16] 0.0, 128
          %4552 = vxpose.xlu0.b32.cont [10/16] 0.0, 128
          %4553 = vxpose.xlu0.b32.cont [11/16] 0.0, 128
          %4554 = vxpose.xlu0.b32.cont [12/16] 0.0, 128
          %4555 = vxpose.xlu0.b32.cont [13/16] 0.0, 128
          %4556 = vxpose.xlu0.b32.cont [14/16] 0.0, 128
          %4557 = vxpose.xlu0.b32.cont [15/16] 0.0, 128
          %4558 = vxpose.xlu0.b32.end [16/16] 0.0, 128
          %v4559 = vpop.trf.xlu0
          %v4560 = vpop.trf.xlu0
          %v4561 = vpop.trf.xlu0
          %v4562 = vpop.trf.xlu0
          %v4563 = vpop.trf.xlu0
          %v4564 = vpop.trf.xlu0
          %v4565 = vpop.trf.xlu0
          %v4566 = vpop.trf.xlu0
          %v4567 = vpop.trf.xlu0
          %v4568 = vpop.trf.xlu0
          %v4569 = vpop.trf.xlu0
          %v4570 = vpop.trf.xlu0
          %v4571 = vpop.trf.xlu0
          %v4572 = vpop.trf.xlu0
          %v4573 = vpop.trf.xlu0
          %v4574 = vpop.trf.xlu0
          %4575 = vxpose.xlu0.b32.start [1/16] %v3500, 128
          %4576 = vxpose.xlu0.b32.cont [2/16] %v3612, 128
          %4577 = vxpose.xlu0.b32.cont [3/16] 0.0, 128
          %4578 = vxpose.xlu0.b32.cont [4/16] 0.0, 128
          %4579 = vxpose.xlu0.b32.cont [5/16] 0.0, 128
          %4580 = vxpose.xlu0.b32.cont [6/16] 0.0, 128
          %4581 = vxpose.xlu0.b32.cont [7/16] 0.0, 128
          %4582 = vxpose.xlu0.b32.cont [8/16] 0.0, 128
          %4583 = vxpose.xlu0.b32.cont [9/16] 0.0, 128
          %4584 = vxpose.xlu0.b32.cont [10/16] 0.0, 128
          %4585 = vxpose.xlu0.b32.cont [11/16] 0.0, 128
          %4586 = vxpose.xlu0.b32.cont [12/16] 0.0, 128
          %4587 = vxpose.xlu0.b32.cont [13/16] 0.0, 128
          %4588 = vxpose.xlu0.b32.cont [14/16] 0.0, 128
          %4589 = vxpose.xlu0.b32.cont [15/16] 0.0, 128
          %4590 = vxpose.xlu0.b32.end [16/16] 0.0, 128
          %v4591 = vpop.trf.xlu0
          %v4592 = vpop.trf.xlu0
          %v4593 = vpop.trf.xlu0
          %v4594 = vpop.trf.xlu0
          %v4595 = vpop.trf.xlu0
          %v4596 = vpop.trf.xlu0
          %v4597 = vpop.trf.xlu0
          %v4598 = vpop.trf.xlu0
          %v4599 = vpop.trf.xlu0
          %v4600 = vpop.trf.xlu0
          %v4601 = vpop.trf.xlu0
          %v4602 = vpop.trf.xlu0
          %v4603 = vpop.trf.xlu0
          %v4604 = vpop.trf.xlu0
          %v4605 = vpop.trf.xlu0
          %v4606 = vpop.trf.xlu0
          %4607 = vxpose.xlu0.b32.start [1/16] %v3502, 128
          %4608 = vxpose.xlu0.b32.cont [2/16] %v3614, 128
          %4609 = vxpose.xlu0.b32.cont [3/16] 0.0, 128
          %4610 = vxpose.xlu0.b32.cont [4/16] 0.0, 128
          %4611 = vxpose.xlu0.b32.cont [5/16] 0.0, 128
          %4612 = vxpose.xlu0.b32.cont [6/16] 0.0, 128
          %4613 = vxpose.xlu0.b32.cont [7/16] 0.0, 128
          %4614 = vxpose.xlu0.b32.cont [8/16] 0.0, 128
          %4615 = vxpose.xlu0.b32.cont [9/16] 0.0, 128
          %4616 = vxpose.xlu0.b32.cont [10/16] 0.0, 128
          %4617 = vxpose.xlu0.b32.cont [11/16] 0.0, 128
          %4618 = vxpose.xlu0.b32.cont [12/16] 0.0, 128
          %4619 = vxpose.xlu0.b32.cont [13/16] 0.0, 128
          %4620 = vxpose.xlu0.b32.cont [14/16] 0.0, 128
          %4621 = vxpose.xlu0.b32.cont [15/16] 0.0, 128
          %4622 = vxpose.xlu0.b32.end [16/16] 0.0, 128
          %v4623 = vpop.trf.xlu0
          %v4624 = vpop.trf.xlu0
          %v4625 = vpop.trf.xlu0
          %v4626 = vpop.trf.xlu0
          %v4627 = vpop.trf.xlu0
          %v4628 = vpop.trf.xlu0
          %v4629 = vpop.trf.xlu0
          %v4630 = vpop.trf.xlu0
          %v4631 = vpop.trf.xlu0
          %v4632 = vpop.trf.xlu0
          %v4633 = vpop.trf.xlu0
          %v4634 = vpop.trf.xlu0
          %v4635 = vpop.trf.xlu0
          %v4636 = vpop.trf.xlu0
          %v4637 = vpop.trf.xlu0
          %v4638 = vpop.trf.xlu0
          %v4639 = vrot.slane %v3695, 4
          %v4640 = vsel %vm1487, %v4639, %v3631
          %v4641 = vrot.slane %v3631, 4
          %v4642 = vsel %vm1487, %v3695, %v4641
          %v4644 = vunpack.c.l.s4 1983009808
          %v4645 = vunpack.c.0.s8 %v4644
          %v4646 = vperm.slane %v4640, %v4645
          %v4648 = vunpack.c.l.s4 1983009808
          %v4649 = vunpack.c.0.s8 %v4648
          %v4650 = vperm.slane %v4642, %v4649
          %v4651 = vrot.slane %v3727, 4
          %v4652 = vsel %vm1487, %v4651, %v3663
          %v4653 = vrot.slane %v3663, 4
          %v4654 = vsel %vm1487, %v3727, %v4653
          %v4656 = vunpack.c.l.s4 1983009808
          %v4657 = vunpack.c.0.s8 %v4656
          %v4658 = vperm.slane %v4652, %v4657
          %v4660 = vunpack.c.l.s4 1983009808
          %v4661 = vunpack.c.0.s8 %v4660
          %v4662 = vperm.slane %v4654, %v4661
          %v4663 = vrot.slane %v3823, 4
          %v4664 = vsel %vm1487, %v4663, %v3759
          %v4665 = vrot.slane %v3759, 4
          %v4666 = vsel %vm1487, %v3823, %v4665
          %v4668 = vunpack.c.l.s4 1983009808
          %v4669 = vunpack.c.0.s8 %v4668
          %v4670 = vperm.slane %v4664, %v4669
          %v4672 = vunpack.c.l.s4 1983009808
          %v4673 = vunpack.c.0.s8 %v4672
          %v4674 = vperm.slane %v4666, %v4673
          %v4675 = vrot.slane %v3855, 4
          %v4676 = vsel %vm1487, %v4675, %v3791
          %v4677 = vrot.slane %v3791, 4
          %v4678 = vsel %vm1487, %v3855, %v4677
          %v4680 = vunpack.c.l.s4 1983009808
          %v4681 = vunpack.c.0.s8 %v4680
          %v4682 = vperm.slane %v4676, %v4681
          %v4684 = vunpack.c.l.s4 1983009808
          %v4685 = vunpack.c.0.s8 %v4684
          %v4686 = vperm.slane %v4678, %v4685
          %v4687 = vrot.slane %v4658, 4
          %v4688 = vsel %vm1487, %v4687, %v4646
          %v4689 = vrot.slane %v4646, 4
          %v4690 = vsel %vm1487, %v4658, %v4689
          %v4692 = vunpack.c.l.s4 1934713408
          %v4693 = vunpack.c.0.s8 %v4692
          %v4694 = vperm.slane %v4688, %v4693
          %v4696 = vunpack.c.l.s4 1934713408
          %v4697 = vunpack.c.0.s8 %v4696
          %v4698 = vperm.slane %v4690, %v4697
          %v4699 = vrot.slane %v4662, 4
          %v4700 = vsel %vm1487, %v4699, %v4650
          %v4701 = vrot.slane %v4650, 4
          %v4702 = vsel %vm1487, %v4662, %v4701
          %v4704 = vunpack.c.l.s4 1934713408
          %v4705 = vunpack.c.0.s8 %v4704
          %v4706 = vperm.slane %v4700, %v4705
          %v4708 = vunpack.c.l.s4 1934713408
          %v4709 = vunpack.c.0.s8 %v4708
          %v4710 = vperm.slane %v4702, %v4709
          %v4711 = vrot.slane %v4682, 4
          %v4712 = vsel %vm1487, %v4711, %v4670
          %v4713 = vrot.slane %v4670, 4
          %v4714 = vsel %vm1487, %v4682, %v4713
          %v4716 = vunpack.c.l.s4 1934713408
          %v4717 = vunpack.c.0.s8 %v4716
          %v4718 = vperm.slane %v4712, %v4717
          %v4720 = vunpack.c.l.s4 1934713408
          %v4721 = vunpack.c.0.s8 %v4720
          %v4722 = vperm.slane %v4714, %v4721
          %v4723 = vrot.slane %v4686, 4
          %v4724 = vsel %vm1487, %v4723, %v4674
          %v4725 = vrot.slane %v4674, 4
          %v4726 = vsel %vm1487, %v4686, %v4725
          %v4728 = vunpack.c.l.s4 1934713408
          %v4729 = vunpack.c.0.s8 %v4728
          %v4730 = vperm.slane %v4724, %v4729
          %v4732 = vunpack.c.l.s4 1934713408
          %v4733 = vunpack.c.0.s8 %v4732
          %v4734 = vperm.slane %v4726, %v4733
          %v4735 = vrot.slane %v4718, 4
          %v4736 = vsel %vm1487, %v4735, %v4694
          %v4737 = vrot.slane %v4694, 4
          %v4738 = vsel %vm1487, %v4718, %v4737
          %v4739 = vrot.slane %v4722, 4
          %v4740 = vsel %vm1487, %v4739, %v4698
          %v4741 = vrot.slane %v4698, 4
          %v4742 = vsel %vm1487, %v4722, %v4741
          %v4743 = vrot.slane %v4730, 4
          %v4744 = vsel %vm1487, %v4743, %v4706
          %v4745 = vrot.slane %v4706, 4
          %v4746 = vsel %vm1487, %v4730, %v4745
          %v4747 = vrot.slane %v4734, 4
          %v4748 = vsel %vm1487, %v4747, %v4710
          %v4749 = vrot.slane %v4710, 4
          %v4750 = vsel %vm1487, %v4734, %v4749
          %v4751 = vrot.slane %v3951, 4
          %v4752 = vsel %vm1487, %v4751, %v3887
          %v4753 = vrot.slane %v3887, 4
          %v4754 = vsel %vm1487, %v3951, %v4753
          %v4756 = vunpack.c.l.s4 1983009808
          %v4757 = vunpack.c.0.s8 %v4756
          %v4758 = vperm.slane %v4752, %v4757
          %v4760 = vunpack.c.l.s4 1983009808
          %v4761 = vunpack.c.0.s8 %v4760
          %v4762 = vperm.slane %v4754, %v4761
          %v4763 = vrot.slane %v3983, 4
          %v4764 = vsel %vm1487, %v4763, %v3919
          %v4765 = vrot.slane %v3919, 4
          %v4766 = vsel %vm1487, %v3983, %v4765
          %v4768 = vunpack.c.l.s4 1983009808
          %v4769 = vunpack.c.0.s8 %v4768
          %v4770 = vperm.slane %v4764, %v4769
          %v4772 = vunpack.c.l.s4 1983009808
          %v4773 = vunpack.c.0.s8 %v4772
          %v4774 = vperm.slane %v4766, %v4773
          %v4775 = vrot.slane %v4079, 4
          %v4776 = vsel %vm1487, %v4775, %v4015
          %v4777 = vrot.slane %v4015, 4
          %v4778 = vsel %vm1487, %v4079, %v4777
          %v4780 = vunpack.c.l.s4 1983009808
          %v4781 = vunpack.c.0.s8 %v4780
          %v4782 = vperm.slane %v4776, %v4781
          %v4784 = vunpack.c.l.s4 1983009808
          %v4785 = vunpack.c.0.s8 %v4784
          %v4786 = vperm.slane %v4778, %v4785
          %v4787 = vrot.slane %v4111, 4
          %v4788 = vsel %vm1487, %v4787, %v4047
          %v4789 = vrot.slane %v4047, 4
          %v4790 = vsel %vm1487, %v4111, %v4789
          %v4792 = vunpack.c.l.s4 1983009808
          %v4793 = vunpack.c.0.s8 %v4792
          %v4794 = vperm.slane %v4788, %v4793
          %v4796 = vunpack.c.l.s4 1983009808
          %v4797 = vunpack.c.0.s8 %v4796
          %v4798 = vperm.slane %v4790, %v4797
          %v4799 = vrot.slane %v4770, 4
          %v4800 = vsel %vm1487, %v4799, %v4758
          %v4801 = vrot.slane %v4758, 4
          %v4802 = vsel %vm1487, %v4770, %v4801
          %v4804 = vunpack.c.l.s4 1934713408
          %v4805 = vunpack.c.0.s8 %v4804
          %v4806 = vperm.slane %v4800, %v4805
          %v4808 = vunpack.c.l.s4 1934713408
          %v4809 = vunpack.c.0.s8 %v4808
          %v4810 = vperm.slane %v4802, %v4809
          %v4811 = vrot.slane %v4774, 4
          %v4812 = vsel %vm1487, %v4811, %v4762
          %v4813 = vrot.slane %v4762, 4
          %v4814 = vsel %vm1487, %v4774, %v4813
          %v4816 = vunpack.c.l.s4 1934713408
          %v4817 = vunpack.c.0.s8 %v4816
          %v4818 = vperm.slane %v4812, %v4817
          %v4820 = vunpack.c.l.s4 1934713408
          %v4821 = vunpack.c.0.s8 %v4820
          %v4822 = vperm.slane %v4814, %v4821
          %v4823 = vrot.slane %v4794, 4
          %v4824 = vsel %vm1487, %v4823, %v4782
          %v4825 = vrot.slane %v4782, 4
          %v4826 = vsel %vm1487, %v4794, %v4825
          %v4828 = vunpack.c.l.s4 1934713408
          %v4829 = vunpack.c.0.s8 %v4828
          %v4830 = vperm.slane %v4824, %v4829
          %v4832 = vunpack.c.l.s4 1934713408
          %v4833 = vunpack.c.0.s8 %v4832
          %v4834 = vperm.slane %v4826, %v4833
          %v4835 = vrot.slane %v4798, 4
          %v4836 = vsel %vm1487, %v4835, %v4786
          %v4837 = vrot.slane %v4786, 4
          %v4838 = vsel %vm1487, %v4798, %v4837
          %v4840 = vunpack.c.l.s4 1934713408
          %v4841 = vunpack.c.0.s8 %v4840
          %v4842 = vperm.slane %v4836, %v4841
          %v4844 = vunpack.c.l.s4 1934713408
          %v4845 = vunpack.c.0.s8 %v4844
          %v4846 = vperm.slane %v4838, %v4845
          %v4847 = vrot.slane %v4830, 4
          %v4848 = vsel %vm1487, %v4847, %v4806
          %v4849 = vrot.slane %v4806, 4
          %v4850 = vsel %vm1487, %v4830, %v4849
          %v4851 = vrot.slane %v4834, 4
          %v4852 = vsel %vm1487, %v4851, %v4810
          %v4853 = vrot.slane %v4810, 4
          %v4854 = vsel %vm1487, %v4834, %v4853
          %v4855 = vrot.slane %v4842, 4
          %v4856 = vsel %vm1487, %v4855, %v4818
          %v4857 = vrot.slane %v4818, 4
          %v4858 = vsel %vm1487, %v4842, %v4857
          %v4859 = vrot.slane %v4846, 4
          %v4860 = vsel %vm1487, %v4859, %v4822
          %v4861 = vrot.slane %v4822, 4
          %v4862 = vsel %vm1487, %v4846, %v4861
          %v4863 = vrot.slane %v4207, 4
          %v4864 = vsel %vm1487, %v4863, %v4143
          %v4865 = vrot.slane %v4143, 4
          %v4866 = vsel %vm1487, %v4207, %v4865
          %v4868 = vunpack.c.l.s4 1983009808
          %v4869 = vunpack.c.0.s8 %v4868
          %v4870 = vperm.slane %v4864, %v4869
          %v4872 = vunpack.c.l.s4 1983009808
          %v4873 = vunpack.c.0.s8 %v4872
          %v4874 = vperm.slane %v4866, %v4873
          %v4875 = vrot.slane %v4239, 4
          %v4876 = vsel %vm1487, %v4875, %v4175
          %v4877 = vrot.slane %v4175, 4
          %v4878 = vsel %vm1487, %v4239, %v4877
          %v4880 = vunpack.c.l.s4 1983009808
          %v4881 = vunpack.c.0.s8 %v4880
          %v4882 = vperm.slane %v4876, %v4881
          %v4884 = vunpack.c.l.s4 1983009808
          %v4885 = vunpack.c.0.s8 %v4884
          %v4886 = vperm.slane %v4878, %v4885
          %v4887 = vrot.slane %v4335, 4
          %v4888 = vsel %vm1487, %v4887, %v4271
          %v4889 = vrot.slane %v4271, 4
          %v4890 = vsel %vm1487, %v4335, %v4889
          %v4892 = vunpack.c.l.s4 1983009808
          %v4893 = vunpack.c.0.s8 %v4892
          %v4894 = vperm.slane %v4888, %v4893
          %v4896 = vunpack.c.l.s4 1983009808
          %v4897 = vunpack.c.0.s8 %v4896
          %v4898 = vperm.slane %v4890, %v4897
          %v4899 = vrot.slane %v4367, 4
          %v4900 = vsel %vm1487, %v4899, %v4303
          %v4901 = vrot.slane %v4303, 4
          %v4902 = vsel %vm1487, %v4367, %v4901
          %v4904 = vunpack.c.l.s4 1983009808
          %v4905 = vunpack.c.0.s8 %v4904
          %v4906 = vperm.slane %v4900, %v4905
          %v4908 = vunpack.c.l.s4 1983009808
          %v4909 = vunpack.c.0.s8 %v4908
          %v4910 = vperm.slane %v4902, %v4909
          %v4911 = vrot.slane %v4882, 4
          %v4912 = vsel %vm1487, %v4911, %v4870
          %v4913 = vrot.slane %v4870, 4
          %v4914 = vsel %vm1487, %v4882, %v4913
          %v4916 = vunpack.c.l.s4 1934713408
          %v4917 = vunpack.c.0.s8 %v4916
          %v4918 = vperm.slane %v4912, %v4917
          %v4920 = vunpack.c.l.s4 1934713408
          %v4921 = vunpack.c.0.s8 %v4920
          %v4922 = vperm.slane %v4914, %v4921
          %v4923 = vrot.slane %v4886, 4
          %v4924 = vsel %vm1487, %v4923, %v4874
          %v4925 = vrot.slane %v4874, 4
          %v4926 = vsel %vm1487, %v4886, %v4925
          %v4928 = vunpack.c.l.s4 1934713408
          %v4929 = vunpack.c.0.s8 %v4928
          %v4930 = vperm.slane %v4924, %v4929
          %v4932 = vunpack.c.l.s4 1934713408
          %v4933 = vunpack.c.0.s8 %v4932
          %v4934 = vperm.slane %v4926, %v4933
          %v4935 = vrot.slane %v4906, 4
          %v4936 = vsel %vm1487, %v4935, %v4894
          %v4937 = vrot.slane %v4894, 4
          %v4938 = vsel %vm1487, %v4906, %v4937
          %v4940 = vunpack.c.l.s4 1934713408
          %v4941 = vunpack.c.0.s8 %v4940
          %v4942 = vperm.slane %v4936, %v4941
          %v4944 = vunpack.c.l.s4 1934713408
          %v4945 = vunpack.c.0.s8 %v4944
          %v4946 = vperm.slane %v4938, %v4945
          %v4947 = vrot.slane %v4910, 4
          %v4948 = vsel %vm1487, %v4947, %v4898
          %v4949 = vrot.slane %v4898, 4
          %v4950 = vsel %vm1487, %v4910, %v4949
          %v4952 = vunpack.c.l.s4 1934713408
          %v4953 = vunpack.c.0.s8 %v4952
          %v4954 = vperm.slane %v4948, %v4953
          %v4956 = vunpack.c.l.s4 1934713408
          %v4957 = vunpack.c.0.s8 %v4956
          %v4958 = vperm.slane %v4950, %v4957
          %v4959 = vrot.slane %v4942, 4
          %v4960 = vsel %vm1487, %v4959, %v4918
          %v4961 = vrot.slane %v4918, 4
          %v4962 = vsel %vm1487, %v4942, %v4961
          %v4963 = vrot.slane %v4946, 4
          %v4964 = vsel %vm1487, %v4963, %v4922
          %v4965 = vrot.slane %v4922, 4
          %v4966 = vsel %vm1487, %v4946, %v4965
          %v4967 = vrot.slane %v4954, 4
          %v4968 = vsel %vm1487, %v4967, %v4930
          %v4969 = vrot.slane %v4930, 4
          %v4970 = vsel %vm1487, %v4954, %v4969
          %v4971 = vrot.slane %v4958, 4
          %v4972 = vsel %vm1487, %v4971, %v4934
          %v4973 = vrot.slane %v4934, 4
          %v4974 = vsel %vm1487, %v4958, %v4973
          %v4975 = vrot.slane %v4463, 4
          %v4976 = vsel %vm1487, %v4975, %v4399
          %v4977 = vrot.slane %v4399, 4
          %v4978 = vsel %vm1487, %v4463, %v4977
          %v4980 = vunpack.c.l.s4 1983009808
          %v4981 = vunpack.c.0.s8 %v4980
          %v4982 = vperm.slane %v4976, %v4981
          %v4984 = vunpack.c.l.s4 1983009808
          %v4985 = vunpack.c.0.s8 %v4984
          %v4986 = vperm.slane %v4978, %v4985
          %v4987 = vrot.slane %v4495, 4
          %v4988 = vsel %vm1487, %v4987, %v4431
          %v4989 = vrot.slane %v4431, 4
          %v4990 = vsel %vm1487, %v4495, %v4989
          %v4992 = vunpack.c.l.s4 1983009808
          %v4993 = vunpack.c.0.s8 %v4992
          %v4994 = vperm.slane %v4988, %v4993
          %v4996 = vunpack.c.l.s4 1983009808
          %v4997 = vunpack.c.0.s8 %v4996
          %v4998 = vperm.slane %v4990, %v4997
          %v4999 = vrot.slane %v4591, 4
          %v5000 = vsel %vm1487, %v4999, %v4527
          %v5001 = vrot.slane %v4527, 4
          %v5002 = vsel %vm1487, %v4591, %v5001
          %v5004 = vunpack.c.l.s4 1983009808
          %v5005 = vunpack.c.0.s8 %v5004
          %v5006 = vperm.slane %v5000, %v5005
          %v5008 = vunpack.c.l.s4 1983009808
          %v5009 = vunpack.c.0.s8 %v5008
          %v5010 = vperm.slane %v5002, %v5009
          %v5011 = vrot.slane %v4623, 4
          %v5012 = vsel %vm1487, %v5011, %v4559
          %v5013 = vrot.slane %v4559, 4
          %v5014 = vsel %vm1487, %v4623, %v5013
          %v5016 = vunpack.c.l.s4 1983009808
          %v5017 = vunpack.c.0.s8 %v5016
          %v5018 = vperm.slane %v5012, %v5017
          %v5020 = vunpack.c.l.s4 1983009808
          %v5021 = vunpack.c.0.s8 %v5020
          %v5022 = vperm.slane %v5014, %v5021
          %v5023 = vrot.slane %v4994, 4
          %v5024 = vsel %vm1487, %v5023, %v4982
          %v5025 = vrot.slane %v4982, 4
          %v5026 = vsel %vm1487, %v4994, %v5025
          %v5028 = vunpack.c.l.s4 1934713408
          %v5029 = vunpack.c.0.s8 %v5028
          %v5030 = vperm.slane %v5024, %v5029
          %v5032 = vunpack.c.l.s4 1934713408
          %v5033 = vunpack.c.0.s8 %v5032
          %v5034 = vperm.slane %v5026, %v5033
          %v5035 = vrot.slane %v4998, 4
          %v5036 = vsel %vm1487, %v5035, %v4986
          %v5037 = vrot.slane %v4986, 4
          %v5038 = vsel %vm1487, %v4998, %v5037
          %v5040 = vunpack.c.l.s4 1934713408
          %v5041 = vunpack.c.0.s8 %v5040
          %v5042 = vperm.slane %v5036, %v5041
          %v5044 = vunpack.c.l.s4 1934713408
          %v5045 = vunpack.c.0.s8 %v5044
          %v5046 = vperm.slane %v5038, %v5045
          %v5047 = vrot.slane %v5018, 4
          %v5048 = vsel %vm1487, %v5047, %v5006
          %v5049 = vrot.slane %v5006, 4
          %v5050 = vsel %vm1487, %v5018, %v5049
          %v5052 = vunpack.c.l.s4 1934713408
          %v5053 = vunpack.c.0.s8 %v5052
          %v5054 = vperm.slane %v5048, %v5053
          %v5056 = vunpack.c.l.s4 1934713408
          %v5057 = vunpack.c.0.s8 %v5056
          %v5058 = vperm.slane %v5050, %v5057
          %v5059 = vrot.slane %v5022, 4
          %v5060 = vsel %vm1487, %v5059, %v5010
          %v5061 = vrot.slane %v5010, 4
          %v5062 = vsel %vm1487, %v5022, %v5061
          %v5064 = vunpack.c.l.s4 1934713408
          %v5065 = vunpack.c.0.s8 %v5064
          %v5066 = vperm.slane %v5060, %v5065
          %v5068 = vunpack.c.l.s4 1934713408
          %v5069 = vunpack.c.0.s8 %v5068
          %v5070 = vperm.slane %v5062, %v5069
          %v5071 = vrot.slane %v5054, 4
          %v5072 = vsel %vm1487, %v5071, %v5030
          %v5073 = vrot.slane %v5030, 4
          %v5074 = vsel %vm1487, %v5054, %v5073
          %v5075 = vrot.slane %v5058, 4
          %v5076 = vsel %vm1487, %v5075, %v5034
          %v5077 = vrot.slane %v5034, 4
          %v5078 = vsel %vm1487, %v5058, %v5077
          %v5079 = vrot.slane %v5066, 4
          %v5080 = vsel %vm1487, %v5079, %v5042
          %v5081 = vrot.slane %v5042, 4
          %v5082 = vsel %vm1487, %v5066, %v5081
          %v5083 = vrot.slane %v5070, 4
          %v5084 = vsel %vm1487, %v5083, %v5046
          %v5085 = vrot.slane %v5046, 4
          %v5086 = vsel %vm1487, %v5070, %v5085
          %v5087 = vrot.slane %v3696, 4
          %v5088 = vsel %vm1487, %v5087, %v3632
          %v5089 = vrot.slane %v3632, 4
          %v5090 = vsel %vm1487, %v3696, %v5089
          %v5092 = vunpack.c.l.s4 1983009808
          %v5093 = vunpack.c.0.s8 %v5092
          %v5094 = vperm.slane %v5088, %v5093
          %v5096 = vunpack.c.l.s4 1983009808
          %v5097 = vunpack.c.0.s8 %v5096
          %v5098 = vperm.slane %v5090, %v5097
          %v5099 = vrot.slane %v3728, 4
          %v5100 = vsel %vm1487, %v5099, %v3664
          %v5101 = vrot.slane %v3664, 4
          %v5102 = vsel %vm1487, %v3728, %v5101
          %v5104 = vunpack.c.l.s4 1983009808
          %v5105 = vunpack.c.0.s8 %v5104
          %v5106 = vperm.slane %v5100, %v5105
          %v5108 = vunpack.c.l.s4 1983009808
          %v5109 = vunpack.c.0.s8 %v5108
          %v5110 = vperm.slane %v5102, %v5109
          %v5111 = vrot.slane %v3824, 4
          %v5112 = vsel %vm1487, %v5111, %v3760
          %v5113 = vrot.slane %v3760, 4
          %v5114 = vsel %vm1487, %v3824, %v5113
          %v5116 = vunpack.c.l.s4 1983009808
          %v5117 = vunpack.c.0.s8 %v5116
          %v5118 = vperm.slane %v5112, %v5117
          %v5120 = vunpack.c.l.s4 1983009808
          %v5121 = vunpack.c.0.s8 %v5120
          %v5122 = vperm.slane %v5114, %v5121
          %v5123 = vrot.slane %v3856, 4
          %v5124 = vsel %vm1487, %v5123, %v3792
          %v5125 = vrot.slane %v3792, 4
          %v5126 = vsel %vm1487, %v3856, %v5125
          %v5128 = vunpack.c.l.s4 1983009808
          %v5129 = vunpack.c.0.s8 %v5128
          %v5130 = vperm.slane %v5124, %v5129
          %v5132 = vunpack.c.l.s4 1983009808
          %v5133 = vunpack.c.0.s8 %v5132
          %v5134 = vperm.slane %v5126, %v5133
          %v5135 = vrot.slane %v5106, 4
          %v5136 = vsel %vm1487, %v5135, %v5094
          %v5137 = vrot.slane %v5094, 4
          %v5138 = vsel %vm1487, %v5106, %v5137
          %v5140 = vunpack.c.l.s4 1934713408
          %v5141 = vunpack.c.0.s8 %v5140
          %v5142 = vperm.slane %v5136, %v5141
          %v5144 = vunpack.c.l.s4 1934713408
          %v5145 = vunpack.c.0.s8 %v5144
          %v5146 = vperm.slane %v5138, %v5145
          %v5147 = vrot.slane %v5110, 4
          %v5148 = vsel %vm1487, %v5147, %v5098
          %v5149 = vrot.slane %v5098, 4
          %v5150 = vsel %vm1487, %v5110, %v5149
          %v5152 = vunpack.c.l.s4 1934713408
          %v5153 = vunpack.c.0.s8 %v5152
          %v5154 = vperm.slane %v5148, %v5153
          %v5156 = vunpack.c.l.s4 1934713408
          %v5157 = vunpack.c.0.s8 %v5156
          %v5158 = vperm.slane %v5150, %v5157
          %v5159 = vrot.slane %v5130, 4
          %v5160 = vsel %vm1487, %v5159, %v5118
          %v5161 = vrot.slane %v5118, 4
          %v5162 = vsel %vm1487, %v5130, %v5161
          %v5164 = vunpack.c.l.s4 1934713408
          %v5165 = vunpack.c.0.s8 %v5164
          %v5166 = vperm.slane %v5160, %v5165
          %v5168 = vunpack.c.l.s4 1934713408
          %v5169 = vunpack.c.0.s8 %v5168
          %v5170 = vperm.slane %v5162, %v5169
          %v5171 = vrot.slane %v5134, 4
          %v5172 = vsel %vm1487, %v5171, %v5122
          %v5173 = vrot.slane %v5122, 4
          %v5174 = vsel %vm1487, %v5134, %v5173
          %v5176 = vunpack.c.l.s4 1934713408
          %v5177 = vunpack.c.0.s8 %v5176
          %v5178 = vperm.slane %v5172, %v5177
          %v5180 = vunpack.c.l.s4 1934713408
          %v5181 = vunpack.c.0.s8 %v5180
          %v5182 = vperm.slane %v5174, %v5181
          %v5183 = vrot.slane %v5166, 4
          %v5184 = vsel %vm1487, %v5183, %v5142
          %v5185 = vrot.slane %v5142, 4
          %v5186 = vsel %vm1487, %v5166, %v5185
          %v5187 = vrot.slane %v5170, 4
          %v5188 = vsel %vm1487, %v5187, %v5146
          %v5189 = vrot.slane %v5146, 4
          %v5190 = vsel %vm1487, %v5170, %v5189
          %v5191 = vrot.slane %v5178, 4
          %v5192 = vsel %vm1487, %v5191, %v5154
          %v5193 = vrot.slane %v5154, 4
          %v5194 = vsel %vm1487, %v5178, %v5193
          %v5195 = vrot.slane %v5182, 4
          %v5196 = vsel %vm1487, %v5195, %v5158
          %v5197 = vrot.slane %v5158, 4
          %v5198 = vsel %vm1487, %v5182, %v5197
          %v5199 = vrot.slane %v3952, 4
          %v5200 = vsel %vm1487, %v5199, %v3888
          %v5201 = vrot.slane %v3888, 4
          %v5202 = vsel %vm1487, %v3952, %v5201
          %v5204 = vunpack.c.l.s4 1983009808
          %v5205 = vunpack.c.0.s8 %v5204
          %v5206 = vperm.slane %v5200, %v5205
          %v5208 = vunpack.c.l.s4 1983009808
          %v5209 = vunpack.c.0.s8 %v5208
          %v5210 = vperm.slane %v5202, %v5209
          %v5211 = vrot.slane %v3984, 4
          %v5212 = vsel %vm1487, %v5211, %v3920
          %v5213 = vrot.slane %v3920, 4
          %v5214 = vsel %vm1487, %v3984, %v5213
          %v5216 = vunpack.c.l.s4 1983009808
          %v5217 = vunpack.c.0.s8 %v5216
          %v5218 = vperm.slane %v5212, %v5217
          %v5220 = vunpack.c.l.s4 1983009808
          %v5221 = vunpack.c.0.s8 %v5220
          %v5222 = vperm.slane %v5214, %v5221
          %v5223 = vrot.slane %v4080, 4
          %v5224 = vsel %vm1487, %v5223, %v4016
          %v5225 = vrot.slane %v4016, 4
          %v5226 = vsel %vm1487, %v4080, %v5225
          %v5228 = vunpack.c.l.s4 1983009808
          %v5229 = vunpack.c.0.s8 %v5228
          %v5230 = vperm.slane %v5224, %v5229
          %v5232 = vunpack.c.l.s4 1983009808
          %v5233 = vunpack.c.0.s8 %v5232
          %v5234 = vperm.slane %v5226, %v5233
          %v5235 = vrot.slane %v4112, 4
          %v5236 = vsel %vm1487, %v5235, %v4048
          %v5237 = vrot.slane %v4048, 4
          %v5238 = vsel %vm1487, %v4112, %v5237
          %v5240 = vunpack.c.l.s4 1983009808
          %v5241 = vunpack.c.0.s8 %v5240
          %v5242 = vperm.slane %v5236, %v5241
          %v5244 = vunpack.c.l.s4 1983009808
          %v5245 = vunpack.c.0.s8 %v5244
          %v5246 = vperm.slane %v5238, %v5245
          %v5247 = vrot.slane %v5218, 4
          %v5248 = vsel %vm1487, %v5247, %v5206
          %v5249 = vrot.slane %v5206, 4
          %v5250 = vsel %vm1487, %v5218, %v5249
          %v5252 = vunpack.c.l.s4 1934713408
          %v5253 = vunpack.c.0.s8 %v5252
          %v5254 = vperm.slane %v5248, %v5253
          %v5256 = vunpack.c.l.s4 1934713408
          %v5257 = vunpack.c.0.s8 %v5256
          %v5258 = vperm.slane %v5250, %v5257
          %v5259 = vrot.slane %v5222, 4
          %v5260 = vsel %vm1487, %v5259, %v5210
          %v5261 = vrot.slane %v5210, 4
          %v5262 = vsel %vm1487, %v5222, %v5261
          %v5264 = vunpack.c.l.s4 1934713408
          %v5265 = vunpack.c.0.s8 %v5264
          %v5266 = vperm.slane %v5260, %v5265
          %v5268 = vunpack.c.l.s4 1934713408
          %v5269 = vunpack.c.0.s8 %v5268
          %v5270 = vperm.slane %v5262, %v5269
          %v5271 = vrot.slane %v5242, 4
          %v5272 = vsel %vm1487, %v5271, %v5230
          %v5273 = vrot.slane %v5230, 4
          %v5274 = vsel %vm1487, %v5242, %v5273
          %v5276 = vunpack.c.l.s4 1934713408
          %v5277 = vunpack.c.0.s8 %v5276
          %v5278 = vperm.slane %v5272, %v5277
          %v5280 = vunpack.c.l.s4 1934713408
          %v5281 = vunpack.c.0.s8 %v5280
          %v5282 = vperm.slane %v5274, %v5281
          %v5283 = vrot.slane %v5246, 4
          %v5284 = vsel %vm1487, %v5283, %v5234
          %v5285 = vrot.slane %v5234, 4
          %v5286 = vsel %vm1487, %v5246, %v5285
          %v5288 = vunpack.c.l.s4 1934713408
          %v5289 = vunpack.c.0.s8 %v5288
          %v5290 = vperm.slane %v5284, %v5289
          %v5292 = vunpack.c.l.s4 1934713408
          %v5293 = vunpack.c.0.s8 %v5292
          %v5294 = vperm.slane %v5286, %v5293
          %v5295 = vrot.slane %v5278, 4
          %v5296 = vsel %vm1487, %v5295, %v5254
          %v5297 = vrot.slane %v5254, 4
          %v5298 = vsel %vm1487, %v5278, %v5297
          %v5299 = vrot.slane %v5282, 4
          %v5300 = vsel %vm1487, %v5299, %v5258
          %v5301 = vrot.slane %v5258, 4
          %v5302 = vsel %vm1487, %v5282, %v5301
          %v5303 = vrot.slane %v5290, 4
          %v5304 = vsel %vm1487, %v5303, %v5266
          %v5305 = vrot.slane %v5266, 4
          %v5306 = vsel %vm1487, %v5290, %v5305
          %v5307 = vrot.slane %v5294, 4
          %v5308 = vsel %vm1487, %v5307, %v5270
          %v5309 = vrot.slane %v5270, 4
          %v5310 = vsel %vm1487, %v5294, %v5309
          %v5311 = vrot.slane %v4208, 4
          %v5312 = vsel %vm1487, %v5311, %v4144
          %v5313 = vrot.slane %v4144, 4
          %v5314 = vsel %vm1487, %v4208, %v5313
          %v5316 = vunpack.c.l.s4 1983009808
          %v5317 = vunpack.c.0.s8 %v5316
          %v5318 = vperm.slane %v5312, %v5317
          %v5320 = vunpack.c.l.s4 1983009808
          %v5321 = vunpack.c.0.s8 %v5320
          %v5322 = vperm.slane %v5314, %v5321
          %v5323 = vrot.slane %v4240, 4
          %v5324 = vsel %vm1487, %v5323, %v4176
          %v5325 = vrot.slane %v4176, 4
          %v5326 = vsel %vm1487, %v4240, %v5325
          %v5328 = vunpack.c.l.s4 1983009808
          %v5329 = vunpack.c.0.s8 %v5328
          %v5330 = vperm.slane %v5324, %v5329
          %v5332 = vunpack.c.l.s4 1983009808
          %v5333 = vunpack.c.0.s8 %v5332
          %v5334 = vperm.slane %v5326, %v5333
          %v5335 = vrot.slane %v4336, 4
          %v5336 = vsel %vm1487, %v5335, %v4272
          %v5337 = vrot.slane %v4272, 4
          %v5338 = vsel %vm1487, %v4336, %v5337
          %v5340 = vunpack.c.l.s4 1983009808
          %v5341 = vunpack.c.0.s8 %v5340
          %v5342 = vperm.slane %v5336, %v5341
          %v5344 = vunpack.c.l.s4 1983009808
          %v5345 = vunpack.c.0.s8 %v5344
          %v5346 = vperm.slane %v5338, %v5345
          %v5347 = vrot.slane %v4368, 4
          %v5348 = vsel %vm1487, %v5347, %v4304
          %v5349 = vrot.slane %v4304, 4
          %v5350 = vsel %vm1487, %v4368, %v5349
          %v5352 = vunpack.c.l.s4 1983009808
          %v5353 = vunpack.c.0.s8 %v5352
          %v5354 = vperm.slane %v5348, %v5353
          %v5356 = vunpack.c.l.s4 1983009808
          %v5357 = vunpack.c.0.s8 %v5356
          %v5358 = vperm.slane %v5350, %v5357
          %v5359 = vrot.slane %v5330, 4
          %v5360 = vsel %vm1487, %v5359, %v5318
          %v5361 = vrot.slane %v5318, 4
          %v5362 = vsel %vm1487, %v5330, %v5361
          %v5364 = vunpack.c.l.s4 1934713408
          %v5365 = vunpack.c.0.s8 %v5364
          %v5366 = vperm.slane %v5360, %v5365
          %v5368 = vunpack.c.l.s4 1934713408
          %v5369 = vunpack.c.0.s8 %v5368
          %v5370 = vperm.slane %v5362, %v5369
          %v5371 = vrot.slane %v5334, 4
          %v5372 = vsel %vm1487, %v5371, %v5322
          %v5373 = vrot.slane %v5322, 4
          %v5374 = vsel %vm1487, %v5334, %v5373
          %v5376 = vunpack.c.l.s4 1934713408
          %v5377 = vunpack.c.0.s8 %v5376
          %v5378 = vperm.slane %v5372, %v5377
          %v5380 = vunpack.c.l.s4 1934713408
          %v5381 = vunpack.c.0.s8 %v5380
          %v5382 = vperm.slane %v5374, %v5381
          %v5383 = vrot.slane %v5354, 4
          %v5384 = vsel %vm1487, %v5383, %v5342
          %v5385 = vrot.slane %v5342, 4
          %v5386 = vsel %vm1487, %v5354, %v5385
          %v5388 = vunpack.c.l.s4 1934713408
          %v5389 = vunpack.c.0.s8 %v5388
          %v5390 = vperm.slane %v5384, %v5389
          %v5392 = vunpack.c.l.s4 1934713408
          %v5393 = vunpack.c.0.s8 %v5392
          %v5394 = vperm.slane %v5386, %v5393
          %v5395 = vrot.slane %v5358, 4
          %v5396 = vsel %vm1487, %v5395, %v5346
          %v5397 = vrot.slane %v5346, 4
          %v5398 = vsel %vm1487, %v5358, %v5397
          %v5400 = vunpack.c.l.s4 1934713408
          %v5401 = vunpack.c.0.s8 %v5400
          %v5402 = vperm.slane %v5396, %v5401
          %v5404 = vunpack.c.l.s4 1934713408
          %v5405 = vunpack.c.0.s8 %v5404
          %v5406 = vperm.slane %v5398, %v5405
          %v5407 = vrot.slane %v5390, 4
          %v5408 = vsel %vm1487, %v5407, %v5366
          %v5409 = vrot.slane %v5366, 4
          %v5410 = vsel %vm1487, %v5390, %v5409
          %v5411 = vrot.slane %v5394, 4
          %v5412 = vsel %vm1487, %v5411, %v5370
          %v5413 = vrot.slane %v5370, 4
          %v5414 = vsel %vm1487, %v5394, %v5413
          %v5415 = vrot.slane %v5402, 4
          %v5416 = vsel %vm1487, %v5415, %v5378
          %v5417 = vrot.slane %v5378, 4
          %v5418 = vsel %vm1487, %v5402, %v5417
          %v5419 = vrot.slane %v5406, 4
          %v5420 = vsel %vm1487, %v5419, %v5382
          %v5421 = vrot.slane %v5382, 4
          %v5422 = vsel %vm1487, %v5406, %v5421
          %v5423 = vrot.slane %v4464, 4
          %v5424 = vsel %vm1487, %v5423, %v4400
          %v5425 = vrot.slane %v4400, 4
          %v5426 = vsel %vm1487, %v4464, %v5425
          %v5428 = vunpack.c.l.s4 1983009808
          %v5429 = vunpack.c.0.s8 %v5428
          %v5430 = vperm.slane %v5424, %v5429
          %v5432 = vunpack.c.l.s4 1983009808
          %v5433 = vunpack.c.0.s8 %v5432
          %v5434 = vperm.slane %v5426, %v5433
          %v5435 = vrot.slane %v4496, 4
          %v5436 = vsel %vm1487, %v5435, %v4432
          %v5437 = vrot.slane %v4432, 4
          %v5438 = vsel %vm1487, %v4496, %v5437
          %v5440 = vunpack.c.l.s4 1983009808
          %v5441 = vunpack.c.0.s8 %v5440
          %v5442 = vperm.slane %v5436, %v5441
          %v5444 = vunpack.c.l.s4 1983009808
          %v5445 = vunpack.c.0.s8 %v5444
          %v5446 = vperm.slane %v5438, %v5445
          %v5447 = vrot.slane %v4592, 4
          %v5448 = vsel %vm1487, %v5447, %v4528
          %v5449 = vrot.slane %v4528, 4
          %v5450 = vsel %vm1487, %v4592, %v5449
          %v5452 = vunpack.c.l.s4 1983009808
          %v5453 = vunpack.c.0.s8 %v5452
          %v5454 = vperm.slane %v5448, %v5453
          %v5456 = vunpack.c.l.s4 1983009808
          %v5457 = vunpack.c.0.s8 %v5456
          %v5458 = vperm.slane %v5450, %v5457
          %v5459 = vrot.slane %v4624, 4
          %v5460 = vsel %vm1487, %v5459, %v4560
          %v5461 = vrot.slane %v4560, 4
          %v5462 = vsel %vm1487, %v4624, %v5461
          %v5464 = vunpack.c.l.s4 1983009808
          %v5465 = vunpack.c.0.s8 %v5464
          %v5466 = vperm.slane %v5460, %v5465
          %v5468 = vunpack.c.l.s4 1983009808
          %v5469 = vunpack.c.0.s8 %v5468
          %v5470 = vperm.slane %v5462, %v5469
          %v5471 = vrot.slane %v5442, 4
          %v5472 = vsel %vm1487, %v5471, %v5430
          %v5473 = vrot.slane %v5430, 4
          %v5474 = vsel %vm1487, %v5442, %v5473
          %v5476 = vunpack.c.l.s4 1934713408
          %v5477 = vunpack.c.0.s8 %v5476
          %v5478 = vperm.slane %v5472, %v5477
          %v5480 = vunpack.c.l.s4 1934713408
          %v5481 = vunpack.c.0.s8 %v5480
          %v5482 = vperm.slane %v5474, %v5481
          %v5483 = vrot.slane %v5446, 4
          %v5484 = vsel %vm1487, %v5483, %v5434
          %v5485 = vrot.slane %v5434, 4
          %v5486 = vsel %vm1487, %v5446, %v5485
          %v5488 = vunpack.c.l.s4 1934713408
          %v5489 = vunpack.c.0.s8 %v5488
          %v5490 = vperm.slane %v5484, %v5489
          %v5492 = vunpack.c.l.s4 1934713408
          %v5493 = vunpack.c.0.s8 %v5492
          %v5494 = vperm.slane %v5486, %v5493
          %v5495 = vrot.slane %v5466, 4
          %v5496 = vsel %vm1487, %v5495, %v5454
          %v5497 = vrot.slane %v5454, 4
          %v5498 = vsel %vm1487, %v5466, %v5497
          %v5500 = vunpack.c.l.s4 1934713408
          %v5501 = vunpack.c.0.s8 %v5500
          %v5502 = vperm.slane %v5496, %v5501
          %v5504 = vunpack.c.l.s4 1934713408
          %v5505 = vunpack.c.0.s8 %v5504
          %v5506 = vperm.slane %v5498, %v5505
          %v5507 = vrot.slane %v5470, 4
          %v5508 = vsel %vm1487, %v5507, %v5458
          %v5509 = vrot.slane %v5458, 4
          %v5510 = vsel %vm1487, %v5470, %v5509
          %v5512 = vunpack.c.l.s4 1934713408
          %v5513 = vunpack.c.0.s8 %v5512
          %v5514 = vperm.slane %v5508, %v5513
          %v5516 = vunpack.c.l.s4 1934713408
          %v5517 = vunpack.c.0.s8 %v5516
          %v5518 = vperm.slane %v5510, %v5517
          %v5519 = vrot.slane %v5502, 4
          %v5520 = vsel %vm1487, %v5519, %v5478
          %v5521 = vrot.slane %v5478, 4
          %v5522 = vsel %vm1487, %v5502, %v5521
          %v5523 = vrot.slane %v5506, 4
          %v5524 = vsel %vm1487, %v5523, %v5482
          %v5525 = vrot.slane %v5482, 4
          %v5526 = vsel %vm1487, %v5506, %v5525
          %v5527 = vrot.slane %v5514, 4
          %v5528 = vsel %vm1487, %v5527, %v5490
          %v5529 = vrot.slane %v5490, 4
          %v5530 = vsel %vm1487, %v5514, %v5529
          %v5531 = vrot.slane %v5518, 4
          %v5532 = vsel %vm1487, %v5531, %v5494
          %v5533 = vrot.slane %v5494, 4
          %v5534 = vsel %vm1487, %v5518, %v5533
          %v5536 = vsel %vm712, %v4736, 0
          %v5539 = vsel %vm712, %v4848, 0
          %v5542 = vsel %vm712, %v4960, 0
          %v5545 = vsel %vm712, %v5072, 0
          %v5548 = vsel %vm712, %v4738, 0
          %v5551 = vsel %vm712, %v4850, 0
          %v5554 = vsel %vm712, %v4962, 0
          %v5557 = vsel %vm712, %v5074, 0
          %v5560 = vsel %vm712, %v4740, 0
          %v5563 = vsel %vm712, %v4852, 0
          %v5566 = vsel %vm712, %v4964, 0
          %v5569 = vsel %vm712, %v5076, 0
          %v5572 = vsel %vm712, %v4742, 0
          %v5575 = vsel %vm712, %v4854, 0
          %v5578 = vsel %vm712, %v4966, 0
          %v5581 = vsel %vm712, %v5078, 0
          %v5584 = vsel %vm712, %v4744, 0
          %v5587 = vsel %vm712, %v4856, 0
          %v5590 = vsel %vm712, %v4968, 0
          %v5593 = vsel %vm712, %v5080, 0
          %v5596 = vsel %vm712, %v4746, 0
          %v5599 = vsel %vm712, %v4858, 0
          %v5602 = vsel %vm712, %v4970, 0
          %v5605 = vsel %vm712, %v5082, 0
          %v5608 = vsel %vm712, %v4748, 0
          %v5611 = vsel %vm712, %v4860, 0
          %v5614 = vsel %vm712, %v4972, 0
          %v5617 = vsel %vm712, %v5084, 0
          %v5620 = vsel %vm712, %v4750, 0
          %v5623 = vsel %vm712, %v4862, 0
          %v5626 = vsel %vm712, %v4974, 0
          %v5629 = vsel %vm712, %v5086, 0
          %v5632 = vsel %vm712, %v5184, 0
          %v5635 = vsel %vm712, %v5296, 0
          %v5638 = vsel %vm712, %v5408, 0
          %v5641 = vsel %vm712, %v5520, 0
          %v5644 = vsel %vm712, %v5186, 0
          %v5647 = vsel %vm712, %v5298, 0
          %v5650 = vsel %vm712, %v5410, 0
          %v5653 = vsel %vm712, %v5522, 0
          %v5656 = vsel %vm712, %v5188, 0
          %v5659 = vsel %vm712, %v5300, 0
          %v5662 = vsel %vm712, %v5412, 0
          %v5665 = vsel %vm712, %v5524, 0
          %v5668 = vsel %vm712, %v5190, 0
          %v5671 = vsel %vm712, %v5302, 0
          %v5674 = vsel %vm712, %v5414, 0
          %v5677 = vsel %vm712, %v5526, 0
          %v5680 = vsel %vm712, %v5192, 0
          %v5683 = vsel %vm712, %v5304, 0
          %v5686 = vsel %vm712, %v5416, 0
          %v5689 = vsel %vm712, %v5528, 0
          %v5692 = vsel %vm712, %v5194, 0
          %v5695 = vsel %vm712, %v5306, 0
          %v5698 = vsel %vm712, %v5418, 0
          %v5701 = vsel %vm712, %v5530, 0
          %v5704 = vsel %vm712, %v5196, 0
          %v5707 = vsel %vm712, %v5308, 0
          %v5710 = vsel %vm712, %v5420, 0
          %v5713 = vsel %vm712, %v5532, 0
          %v5716 = vsel %vm712, %v5198, 0
          %v5719 = vsel %vm712, %v5310, 0
          %v5722 = vsel %vm712, %v5422, 0
          %v5725 = vsel %vm712, %v5534, 0
          %v5728 = vsel %vm712, %v2203, 0
          %v5731 = vsel %vm712, %v2204, 0
          %v5734 = vsel %vm712, %v2205, 0
          %v5737 = vsel %vm712, %v2206, 0
          %5739 = vmatpush.xpose.msra.mxu0 0.0
          %5740 = vmatpush.xpose.msra.mxu0 0.0
          %5741 = vmatpush.xpose.msra.mxu0 0.0
          %5742 = vmatpush.xpose.msra.mxu0 0.0
          %5743 = vmatpush.xpose.msra.mxu0 0.0
          %5744 = vmatpush.xpose.msra.mxu0 0.0
          %5745 = vmatpush.xpose.msra.mxu0 0.0
          %5746 = vmatpush.xpose.msra.mxu0 0.0
          %5747 = vmatpush.xpose.msra.mxu0 0.0
          %5748 = vmatpush.xpose.msra.mxu0 0.0
          %5749 = vmatpush.xpose.msra.mxu0 0.0
          %5750 = vmatpush.xpose.msra.mxu0 0.0
          %5751 = vmatpush.xpose.msra.mxu0 %v5737
          %5752 = vmatpush.xpose.msra.mxu0 %v5734
          %5753 = vmatpush.xpose.msra.mxu0 %v5731
          %5754 = vmatpush.xpose.msra.mxu0 %v5728
          %5755 = vmatmul.f32.gmra.mxu0 %v5536
          %v5756 = vpop.f32.mrf.mxu0
          %v5757 = vadd.f32 0.0, %v5756
          %5758 = vmatmul.f32.gmra.mxu0 %v5539
          %v5759 = vpop.f32.mrf.mxu0
          %v5760 = vadd.f32 0.0, %v5759
          %5761 = vmatmul.f32.gmra.mxu0 %v5542
          %v5762 = vpop.f32.mrf.mxu0
          %v5763 = vadd.f32 0.0, %v5762
          %5764 = vmatmul.f32.gmra.mxu0 %v5545
          %v5765 = vpop.f32.mrf.mxu0
          %v5766 = vadd.f32 0.0, %v5765
          %5767 = vmatmul.f32.gmra.mxu0 %v5548
          %v5768 = vpop.f32.mrf.mxu0
          %v5769 = vadd.f32 0.0, %v5768
          %5770 = vmatmul.f32.gmra.mxu0 %v5551
          %v5771 = vpop.f32.mrf.mxu0
          %v5772 = vadd.f32 0.0, %v5771
          %5773 = vmatmul.f32.gmra.mxu0 %v5554
          %v5774 = vpop.f32.mrf.mxu0
          %v5775 = vadd.f32 0.0, %v5774
          %5776 = vmatmul.f32.gmra.mxu0 %v5557
          %v5777 = vpop.f32.mrf.mxu0
          %v5778 = vadd.f32 0.0, %v5777
          %5779 = vmatmul.f32.gmra.mxu0 %v5560
          %v5780 = vpop.f32.mrf.mxu0
          %v5781 = vadd.f32 0.0, %v5780
          %5782 = vmatmul.f32.gmra.mxu0 %v5563
          %v5783 = vpop.f32.mrf.mxu0
          %v5784 = vadd.f32 0.0, %v5783
          %5785 = vmatmul.f32.gmra.mxu0 %v5566
          %v5786 = vpop.f32.mrf.mxu0
          %v5787 = vadd.f32 0.0, %v5786
          %5788 = vmatmul.f32.gmra.mxu0 %v5569
          %v5789 = vpop.f32.mrf.mxu0
          %v5790 = vadd.f32 0.0, %v5789
          %5791 = vmatmul.f32.gmra.mxu0 %v5572
          %v5792 = vpop.f32.mrf.mxu0
          %v5793 = vadd.f32 0.0, %v5792
          %5794 = vmatmul.f32.gmra.mxu0 %v5575
          %v5795 = vpop.f32.mrf.mxu0
          %v5796 = vadd.f32 0.0, %v5795
          %5797 = vmatmul.f32.gmra.mxu0 %v5578
          %v5798 = vpop.f32.mrf.mxu0
          %v5799 = vadd.f32 0.0, %v5798
          %5800 = vmatmul.f32.gmra.mxu0 %v5581
          %v5801 = vpop.f32.mrf.mxu0
          %v5802 = vadd.f32 0.0, %v5801
          %5803 = vmatmul.f32.gmra.mxu0 %v5584
          %v5804 = vpop.f32.mrf.mxu0
          %v5805 = vadd.f32 0.0, %v5804
          %5806 = vmatmul.f32.gmra.mxu0 %v5587
          %v5807 = vpop.f32.mrf.mxu0
          %v5808 = vadd.f32 0.0, %v5807
          %5809 = vmatmul.f32.gmra.mxu0 %v5590
          %v5810 = vpop.f32.mrf.mxu0
          %v5811 = vadd.f32 0.0, %v5810
          %5812 = vmatmul.f32.gmra.mxu0 %v5593
          %v5813 = vpop.f32.mrf.mxu0
          %v5814 = vadd.f32 0.0, %v5813
          %5815 = vmatmul.f32.gmra.mxu0 %v5596
          %v5816 = vpop.f32.mrf.mxu0
          %v5817 = vadd.f32 0.0, %v5816
          %5818 = vmatmul.f32.gmra.mxu0 %v5599
          %v5819 = vpop.f32.mrf.mxu0
          %v5820 = vadd.f32 0.0, %v5819
          %5821 = vmatmul.f32.gmra.mxu0 %v5602
          %v5822 = vpop.f32.mrf.mxu0
          %v5823 = vadd.f32 0.0, %v5822
          %5824 = vmatmul.f32.gmra.mxu0 %v5605
          %v5825 = vpop.f32.mrf.mxu0
          %v5826 = vadd.f32 0.0, %v5825
          %5827 = vmatmul.f32.gmra.mxu0 %v5608
          %v5828 = vpop.f32.mrf.mxu0
          %v5829 = vadd.f32 0.0, %v5828
          %5830 = vmatmul.f32.gmra.mxu0 %v5611
          %v5831 = vpop.f32.mrf.mxu0
          %v5832 = vadd.f32 0.0, %v5831
          %5833 = vmatmul.f32.gmra.mxu0 %v5614
          %v5834 = vpop.f32.mrf.mxu0
          %v5835 = vadd.f32 0.0, %v5834
          %5836 = vmatmul.f32.gmra.mxu0 %v5617
          %v5837 = vpop.f32.mrf.mxu0
          %v5838 = vadd.f32 0.0, %v5837
          %5839 = vmatmul.f32.gmra.mxu0 %v5620
          %v5840 = vpop.f32.mrf.mxu0
          %v5841 = vadd.f32 0.0, %v5840
          %5842 = vmatmul.f32.gmra.mxu0 %v5623
          %v5843 = vpop.f32.mrf.mxu0
          %v5844 = vadd.f32 0.0, %v5843
          %5845 = vmatmul.f32.gmra.mxu0 %v5626
          %v5846 = vpop.f32.mrf.mxu0
          %v5847 = vadd.f32 0.0, %v5846
          %5848 = vmatmul.f32.gmra.mxu0 %v5629
          %v5849 = vpop.f32.mrf.mxu0
          %v5850 = vadd.f32 0.0, %v5849
          %5851 = vmatmul.f32.gmra.mxu0 %v5632
          %v5852 = vpop.f32.mrf.mxu0
          %v5853 = vadd.f32 0.0, %v5852
          %5854 = vmatmul.f32.gmra.mxu0 %v5635
          %v5855 = vpop.f32.mrf.mxu0
          %v5856 = vadd.f32 0.0, %v5855
          %5857 = vmatmul.f32.gmra.mxu0 %v5638
          %v5858 = vpop.f32.mrf.mxu0
          %v5859 = vadd.f32 0.0, %v5858
          %5860 = vmatmul.f32.gmra.mxu0 %v5641
          %v5861 = vpop.f32.mrf.mxu0
          %v5862 = vadd.f32 0.0, %v5861
          %5863 = vmatmul.f32.gmra.mxu0 %v5644
          %v5864 = vpop.f32.mrf.mxu0
          %v5865 = vadd.f32 0.0, %v5864
          %5866 = vmatmul.f32.gmra.mxu0 %v5647
          %v5867 = vpop.f32.mrf.mxu0
          %v5868 = vadd.f32 0.0, %v5867
          %5869 = vmatmul.f32.gmra.mxu0 %v5650
          %v5870 = vpop.f32.mrf.mxu0
          %v5871 = vadd.f32 0.0, %v5870
          %5872 = vmatmul.f32.gmra.mxu0 %v5653
          %v5873 = vpop.f32.mrf.mxu0
          %v5874 = vadd.f32 0.0, %v5873
          %5875 = vmatmul.f32.gmra.mxu0 %v5656
          %v5876 = vpop.f32.mrf.mxu0
          %v5877 = vadd.f32 0.0, %v5876
          %5878 = vmatmul.f32.gmra.mxu0 %v5659
          %v5879 = vpop.f32.mrf.mxu0
          %v5880 = vadd.f32 0.0, %v5879
          %5881 = vmatmul.f32.gmra.mxu0 %v5662
          %v5882 = vpop.f32.mrf.mxu0
          %v5883 = vadd.f32 0.0, %v5882
          %5884 = vmatmul.f32.gmra.mxu0 %v5665
          %v5885 = vpop.f32.mrf.mxu0
          %v5886 = vadd.f32 0.0, %v5885
          %5887 = vmatmul.f32.gmra.mxu0 %v5668
          %v5888 = vpop.f32.mrf.mxu0
          %v5889 = vadd.f32 0.0, %v5888
          %5890 = vmatmul.f32.gmra.mxu0 %v5671
          %v5891 = vpop.f32.mrf.mxu0
          %v5892 = vadd.f32 0.0, %v5891
          %5893 = vmatmul.f32.gmra.mxu0 %v5674
          %v5894 = vpop.f32.mrf.mxu0
          %v5895 = vadd.f32 0.0, %v5894
          %5896 = vmatmul.f32.gmra.mxu0 %v5677
          %v5897 = vpop.f32.mrf.mxu0
          %v5898 = vadd.f32 0.0, %v5897
          %5899 = vmatmul.f32.gmra.mxu0 %v5680
          %v5900 = vpop.f32.mrf.mxu0
          %v5901 = vadd.f32 0.0, %v5900
          %5902 = vmatmul.f32.gmra.mxu0 %v5683
          %v5903 = vpop.f32.mrf.mxu0
          %v5904 = vadd.f32 0.0, %v5903
          %5905 = vmatmul.f32.gmra.mxu0 %v5686
          %v5906 = vpop.f32.mrf.mxu0
          %v5907 = vadd.f32 0.0, %v5906
          %5908 = vmatmul.f32.gmra.mxu0 %v5689
          %v5909 = vpop.f32.mrf.mxu0
          %v5910 = vadd.f32 0.0, %v5909
          %5911 = vmatmul.f32.gmra.mxu0 %v5692
          %v5912 = vpop.f32.mrf.mxu0
          %v5913 = vadd.f32 0.0, %v5912
          %5914 = vmatmul.f32.gmra.mxu0 %v5695
          %v5915 = vpop.f32.mrf.mxu0
          %v5916 = vadd.f32 0.0, %v5915
          %5917 = vmatmul.f32.gmra.mxu0 %v5698
          %v5918 = vpop.f32.mrf.mxu0
          %v5919 = vadd.f32 0.0, %v5918
          %5920 = vmatmul.f32.gmra.mxu0 %v5701
          %v5921 = vpop.f32.mrf.mxu0
          %v5922 = vadd.f32 0.0, %v5921
          %5923 = vmatmul.f32.gmra.mxu0 %v5704
          %v5924 = vpop.f32.mrf.mxu0
          %v5925 = vadd.f32 0.0, %v5924
          %5926 = vmatmul.f32.gmra.mxu0 %v5707
          %v5927 = vpop.f32.mrf.mxu0
          %v5928 = vadd.f32 0.0, %v5927
          %5929 = vmatmul.f32.gmra.mxu0 %v5710
          %v5930 = vpop.f32.mrf.mxu0
          %v5931 = vadd.f32 0.0, %v5930
          %5932 = vmatmul.f32.gmra.mxu0 %v5713
          %v5933 = vpop.f32.mrf.mxu0
          %v5934 = vadd.f32 0.0, %v5933
          %5935 = vmatmul.f32.gmra.mxu0 %v5716
          %v5936 = vpop.f32.mrf.mxu0
          %v5937 = vadd.f32 0.0, %v5936
          %5938 = vmatmul.f32.gmra.mxu0 %v5719
          %v5939 = vpop.f32.mrf.mxu0
          %v5940 = vadd.f32 0.0, %v5939
          %5941 = vmatmul.f32.gmra.mxu0 %v5722
          %v5942 = vpop.f32.mrf.mxu0
          %v5943 = vadd.f32 0.0, %v5942
          %5944 = vmatmul.f32.gmra.mxu0 %v5725
          %v5945 = vpop.f32.mrf.mxu0
          %v5946 = vadd.f32 0.0, %v5945
          %5947 = vdwg.mxu0
          %5948 = vxpose.xlu0.b32.start [1/16] %v5757, 128
          %5949 = vxpose.xlu0.b32.cont [2/16] %v5760, 128
          %5950 = vxpose.xlu0.b32.cont [3/16] %v5763, 128
          %5951 = vxpose.xlu0.b32.cont [4/16] %v5766, 128
          %5952 = vxpose.xlu0.b32.cont [5/16] 0.0, 128
          %5953 = vxpose.xlu0.b32.cont [6/16] 0.0, 128
          %5954 = vxpose.xlu0.b32.cont [7/16] 0.0, 128
          %5955 = vxpose.xlu0.b32.cont [8/16] 0.0, 128
          %5956 = vxpose.xlu0.b32.cont [9/16] 0.0, 128
          %5957 = vxpose.xlu0.b32.cont [10/16] 0.0, 128
          %5958 = vxpose.xlu0.b32.cont [11/16] 0.0, 128
          %5959 = vxpose.xlu0.b32.cont [12/16] 0.0, 128
          %5960 = vxpose.xlu0.b32.cont [13/16] 0.0, 128
          %5961 = vxpose.xlu0.b32.cont [14/16] 0.0, 128
          %5962 = vxpose.xlu0.b32.cont [15/16] 0.0, 128
          %5963 = vxpose.xlu0.b32.end [16/16] 0.0, 128
          %v5964 = vpop.trf.xlu0
          %v5965 = vpop.trf.xlu0
          %v5966 = vpop.trf.xlu0
          %v5967 = vpop.trf.xlu0
          %v5968 = vpop.trf.xlu0
          %v5969 = vpop.trf.xlu0
          %v5970 = vpop.trf.xlu0
          %v5971 = vpop.trf.xlu0
          %v5972 = vpop.trf.xlu0
          %v5973 = vpop.trf.xlu0
          %v5974 = vpop.trf.xlu0
          %v5975 = vpop.trf.xlu0
          %v5976 = vpop.trf.xlu0
          %v5977 = vpop.trf.xlu0
          %v5978 = vpop.trf.xlu0
          %v5979 = vpop.trf.xlu0
          %5980 = vxpose.xlu0.b32.start [1/16] %v5769, 128
          %5981 = vxpose.xlu0.b32.cont [2/16] %v5772, 128
          %5982 = vxpose.xlu0.b32.cont [3/16] %v5775, 128
          %5983 = vxpose.xlu0.b32.cont [4/16] %v5778, 128
          %5984 = vxpose.xlu0.b32.cont [5/16] 0.0, 128
          %5985 = vxpose.xlu0.b32.cont [6/16] 0.0, 128
          %5986 = vxpose.xlu0.b32.cont [7/16] 0.0, 128
          %5987 = vxpose.xlu0.b32.cont [8/16] 0.0, 128
          %5988 = vxpose.xlu0.b32.cont [9/16] 0.0, 128
          %5989 = vxpose.xlu0.b32.cont [10/16] 0.0, 128
          %5990 = vxpose.xlu0.b32.cont [11/16] 0.0, 128
          %5991 = vxpose.xlu0.b32.cont [12/16] 0.0, 128
          %5992 = vxpose.xlu0.b32.cont [13/16] 0.0, 128
          %5993 = vxpose.xlu0.b32.cont [14/16] 0.0, 128
          %5994 = vxpose.xlu0.b32.cont [15/16] 0.0, 128
          %5995 = vxpose.xlu0.b32.end [16/16] 0.0, 128
          %v5996 = vpop.trf.xlu0
          %v5997 = vpop.trf.xlu0
          %v5998 = vpop.trf.xlu0
          %v5999 = vpop.trf.xlu0
          %v6000 = vpop.trf.xlu0
          %v6001 = vpop.trf.xlu0
          %v6002 = vpop.trf.xlu0
          %v6003 = vpop.trf.xlu0
          %v6004 = vpop.trf.xlu0
          %v6005 = vpop.trf.xlu0
          %v6006 = vpop.trf.xlu0
          %v6007 = vpop.trf.xlu0
          %v6008 = vpop.trf.xlu0
          %v6009 = vpop.trf.xlu0
          %v6010 = vpop.trf.xlu0
          %v6011 = vpop.trf.xlu0
          %6012 = vxpose.xlu0.b32.start [1/16] %v5781, 128
          %6013 = vxpose.xlu0.b32.cont [2/16] %v5784, 128
          %6014 = vxpose.xlu0.b32.cont [3/16] %v5787, 128
          %6015 = vxpose.xlu0.b32.cont [4/16] %v5790, 128
          %6016 = vxpose.xlu0.b32.cont [5/16] 0.0, 128
          %6017 = vxpose.xlu0.b32.cont [6/16] 0.0, 128
          %6018 = vxpose.xlu0.b32.cont [7/16] 0.0, 128
          %6019 = vxpose.xlu0.b32.cont [8/16] 0.0, 128
          %6020 = vxpose.xlu0.b32.cont [9/16] 0.0, 128
          %6021 = vxpose.xlu0.b32.cont [10/16] 0.0, 128
          %6022 = vxpose.xlu0.b32.cont [11/16] 0.0, 128
          %6023 = vxpose.xlu0.b32.cont [12/16] 0.0, 128
          %6024 = vxpose.xlu0.b32.cont [13/16] 0.0, 128
          %6025 = vxpose.xlu0.b32.cont [14/16] 0.0, 128
          %6026 = vxpose.xlu0.b32.cont [15/16] 0.0, 128
          %6027 = vxpose.xlu0.b32.end [16/16] 0.0, 128
          %v6028 = vpop.trf.xlu0
          %v6029 = vpop.trf.xlu0
          %v6030 = vpop.trf.xlu0
          %v6031 = vpop.trf.xlu0
          %v6032 = vpop.trf.xlu0
          %v6033 = vpop.trf.xlu0
          %v6034 = vpop.trf.xlu0
          %v6035 = vpop.trf.xlu0
          %v6036 = vpop.trf.xlu0
          %v6037 = vpop.trf.xlu0
          %v6038 = vpop.trf.xlu0
          %v6039 = vpop.trf.xlu0
          %v6040 = vpop.trf.xlu0
          %v6041 = vpop.trf.xlu0
          %v6042 = vpop.trf.xlu0
          %v6043 = vpop.trf.xlu0
          %6044 = vxpose.xlu0.b32.start [1/16] %v5793, 128
          %6045 = vxpose.xlu0.b32.cont [2/16] %v5796, 128
          %6046 = vxpose.xlu0.b32.cont [3/16] %v5799, 128
          %6047 = vxpose.xlu0.b32.cont [4/16] %v5802, 128
          %6048 = vxpose.xlu0.b32.cont [5/16] 0.0, 128
          %6049 = vxpose.xlu0.b32.cont [6/16] 0.0, 128
          %6050 = vxpose.xlu0.b32.cont [7/16] 0.0, 128
          %6051 = vxpose.xlu0.b32.cont [8/16] 0.0, 128
          %6052 = vxpose.xlu0.b32.cont [9/16] 0.0, 128
          %6053 = vxpose.xlu0.b32.cont [10/16] 0.0, 128
          %6054 = vxpose.xlu0.b32.cont [11/16] 0.0, 128
          %6055 = vxpose.xlu0.b32.cont [12/16] 0.0, 128
          %6056 = vxpose.xlu0.b32.cont [13/16] 0.0, 128
          %6057 = vxpose.xlu0.b32.cont [14/16] 0.0, 128
          %6058 = vxpose.xlu0.b32.cont [15/16] 0.0, 128
          %6059 = vxpose.xlu0.b32.end [16/16] 0.0, 128
          %v6060 = vpop.trf.xlu0
          %v6061 = vpop.trf.xlu0
          %v6062 = vpop.trf.xlu0
          %v6063 = vpop.trf.xlu0
          %v6064 = vpop.trf.xlu0
          %v6065 = vpop.trf.xlu0
          %v6066 = vpop.trf.xlu0
          %v6067 = vpop.trf.xlu0
          %v6068 = vpop.trf.xlu0
          %v6069 = vpop.trf.xlu0
          %v6070 = vpop.trf.xlu0
          %v6071 = vpop.trf.xlu0
          %v6072 = vpop.trf.xlu0
          %v6073 = vpop.trf.xlu0
          %v6074 = vpop.trf.xlu0
          %v6075 = vpop.trf.xlu0
          %6076 = vxpose.xlu0.b32.start [1/16] %v5805, 128
          %6077 = vxpose.xlu0.b32.cont [2/16] %v5808, 128
          %6078 = vxpose.xlu0.b32.cont [3/16] %v5811, 128
          %6079 = vxpose.xlu0.b32.cont [4/16] %v5814, 128
          %6080 = vxpose.xlu0.b32.cont [5/16] 0.0, 128
          %6081 = vxpose.xlu0.b32.cont [6/16] 0.0, 128
          %6082 = vxpose.xlu0.b32.cont [7/16] 0.0, 128
          %6083 = vxpose.xlu0.b32.cont [8/16] 0.0, 128
          %6084 = vxpose.xlu0.b32.cont [9/16] 0.0, 128
          %6085 = vxpose.xlu0.b32.cont [10/16] 0.0, 128
          %6086 = vxpose.xlu0.b32.cont [11/16] 0.0, 128
          %6087 = vxpose.xlu0.b32.cont [12/16] 0.0, 128
          %6088 = vxpose.xlu0.b32.cont [13/16] 0.0, 128
          %6089 = vxpose.xlu0.b32.cont [14/16] 0.0, 128
          %6090 = vxpose.xlu0.b32.cont [15/16] 0.0, 128
          %6091 = vxpose.xlu0.b32.end [16/16] 0.0, 128
          %v6092 = vpop.trf.xlu0
          %v6093 = vpop.trf.xlu0
          %v6094 = vpop.trf.xlu0
          %v6095 = vpop.trf.xlu0
          %v6096 = vpop.trf.xlu0
          %v6097 = vpop.trf.xlu0
          %v6098 = vpop.trf.xlu0
          %v6099 = vpop.trf.xlu0
          %v6100 = vpop.trf.xlu0
          %v6101 = vpop.trf.xlu0
          %v6102 = vpop.trf.xlu0
          %v6103 = vpop.trf.xlu0
          %v6104 = vpop.trf.xlu0
          %v6105 = vpop.trf.xlu0
          %v6106 = vpop.trf.xlu0
          %v6107 = vpop.trf.xlu0
          %6108 = vxpose.xlu0.b32.start [1/16] %v5817, 128
          %6109 = vxpose.xlu0.b32.cont [2/16] %v5820, 128
          %6110 = vxpose.xlu0.b32.cont [3/16] %v5823, 128
          %6111 = vxpose.xlu0.b32.cont [4/16] %v5826, 128
          %6112 = vxpose.xlu0.b32.cont [5/16] 0.0, 128
          %6113 = vxpose.xlu0.b32.cont [6/16] 0.0, 128
          %6114 = vxpose.xlu0.b32.cont [7/16] 0.0, 128
          %6115 = vxpose.xlu0.b32.cont [8/16] 0.0, 128
          %6116 = vxpose.xlu0.b32.cont [9/16] 0.0, 128
          %6117 = vxpose.xlu0.b32.cont [10/16] 0.0, 128
          %6118 = vxpose.xlu0.b32.cont [11/16] 0.0, 128
          %6119 = vxpose.xlu0.b32.cont [12/16] 0.0, 128
          %6120 = vxpose.xlu0.b32.cont [13/16] 0.0, 128
          %6121 = vxpose.xlu0.b32.cont [14/16] 0.0, 128
          %6122 = vxpose.xlu0.b32.cont [15/16] 0.0, 128
          %6123 = vxpose.xlu0.b32.end [16/16] 0.0, 128
          %v6124 = vpop.trf.xlu0
          %v6125 = vpop.trf.xlu0
          %v6126 = vpop.trf.xlu0
          %v6127 = vpop.trf.xlu0
          %v6128 = vpop.trf.xlu0
          %v6129 = vpop.trf.xlu0
          %v6130 = vpop.trf.xlu0
          %v6131 = vpop.trf.xlu0
          %v6132 = vpop.trf.xlu0
          %v6133 = vpop.trf.xlu0
          %v6134 = vpop.trf.xlu0
          %v6135 = vpop.trf.xlu0
          %v6136 = vpop.trf.xlu0
          %v6137 = vpop.trf.xlu0
          %v6138 = vpop.trf.xlu0
          %v6139 = vpop.trf.xlu0
          %6140 = vxpose.xlu0.b32.start [1/16] %v5829, 128
          %6141 = vxpose.xlu0.b32.cont [2/16] %v5832, 128
          %6142 = vxpose.xlu0.b32.cont [3/16] %v5835, 128
          %6143 = vxpose.xlu0.b32.cont [4/16] %v5838, 128
          %6144 = vxpose.xlu0.b32.cont [5/16] 0.0, 128
          %6145 = vxpose.xlu0.b32.cont [6/16] 0.0, 128
          %6146 = vxpose.xlu0.b32.cont [7/16] 0.0, 128
          %6147 = vxpose.xlu0.b32.cont [8/16] 0.0, 128
          %6148 = vxpose.xlu0.b32.cont [9/16] 0.0, 128
          %6149 = vxpose.xlu0.b32.cont [10/16] 0.0, 128
          %6150 = vxpose.xlu0.b32.cont [11/16] 0.0, 128
          %6151 = vxpose.xlu0.b32.cont [12/16] 0.0, 128
          %6152 = vxpose.xlu0.b32.cont [13/16] 0.0, 128
          %6153 = vxpose.xlu0.b32.cont [14/16] 0.0, 128
          %6154 = vxpose.xlu0.b32.cont [15/16] 0.0, 128
          %6155 = vxpose.xlu0.b32.end [16/16] 0.0, 128
          %v6156 = vpop.trf.xlu0
          %v6157 = vpop.trf.xlu0
          %v6158 = vpop.trf.xlu0
          %v6159 = vpop.trf.xlu0
          %v6160 = vpop.trf.xlu0
          %v6161 = vpop.trf.xlu0
          %v6162 = vpop.trf.xlu0
          %v6163 = vpop.trf.xlu0
          %v6164 = vpop.trf.xlu0
          %v6165 = vpop.trf.xlu0
          %v6166 = vpop.trf.xlu0
          %v6167 = vpop.trf.xlu0
          %v6168 = vpop.trf.xlu0
          %v6169 = vpop.trf.xlu0
          %v6170 = vpop.trf.xlu0
          %v6171 = vpop.trf.xlu0
          %6172 = vxpose.xlu0.b32.start [1/16] %v5841, 128
          %6173 = vxpose.xlu0.b32.cont [2/16] %v5844, 128
          %6174 = vxpose.xlu0.b32.cont [3/16] %v5847, 128
          %6175 = vxpose.xlu0.b32.cont [4/16] %v5850, 128
          %6176 = vxpose.xlu0.b32.cont [5/16] 0.0, 128
          %6177 = vxpose.xlu0.b32.cont [6/16] 0.0, 128
          %6178 = vxpose.xlu0.b32.cont [7/16] 0.0, 128
          %6179 = vxpose.xlu0.b32.cont [8/16] 0.0, 128
          %6180 = vxpose.xlu0.b32.cont [9/16] 0.0, 128
          %6181 = vxpose.xlu0.b32.cont [10/16] 0.0, 128
          %6182 = vxpose.xlu0.b32.cont [11/16] 0.0, 128
          %6183 = vxpose.xlu0.b32.cont [12/16] 0.0, 128
          %6184 = vxpose.xlu0.b32.cont [13/16] 0.0, 128
          %6185 = vxpose.xlu0.b32.cont [14/16] 0.0, 128
          %6186 = vxpose.xlu0.b32.cont [15/16] 0.0, 128
          %6187 = vxpose.xlu0.b32.end [16/16] 0.0, 128
          %v6188 = vpop.trf.xlu0
          %v6189 = vpop.trf.xlu0
          %v6190 = vpop.trf.xlu0
          %v6191 = vpop.trf.xlu0
          %v6192 = vpop.trf.xlu0
          %v6193 = vpop.trf.xlu0
          %v6194 = vpop.trf.xlu0
          %v6195 = vpop.trf.xlu0
          %v6196 = vpop.trf.xlu0
          %v6197 = vpop.trf.xlu0
          %v6198 = vpop.trf.xlu0
          %v6199 = vpop.trf.xlu0
          %v6200 = vpop.trf.xlu0
          %v6201 = vpop.trf.xlu0
          %v6202 = vpop.trf.xlu0
          %v6203 = vpop.trf.xlu0
          %6204 = vxpose.xlu0.b32.start [1/16] %v5853, 128
          %6205 = vxpose.xlu0.b32.cont [2/16] %v5856, 128
          %6206 = vxpose.xlu0.b32.cont [3/16] %v5859, 128
          %6207 = vxpose.xlu0.b32.cont [4/16] %v5862, 128
          %6208 = vxpose.xlu0.b32.cont [5/16] 0.0, 128
          %6209 = vxpose.xlu0.b32.cont [6/16] 0.0, 128
          %6210 = vxpose.xlu0.b32.cont [7/16] 0.0, 128
          %6211 = vxpose.xlu0.b32.cont [8/16] 0.0, 128
          %6212 = vxpose.xlu0.b32.cont [9/16] 0.0, 128
          %6213 = vxpose.xlu0.b32.cont [10/16] 0.0, 128
          %6214 = vxpose.xlu0.b32.cont [11/16] 0.0, 128
          %6215 = vxpose.xlu0.b32.cont [12/16] 0.0, 128
          %6216 = vxpose.xlu0.b32.cont [13/16] 0.0, 128
          %6217 = vxpose.xlu0.b32.cont [14/16] 0.0, 128
          %6218 = vxpose.xlu0.b32.cont [15/16] 0.0, 128
          %6219 = vxpose.xlu0.b32.end [16/16] 0.0, 128
          %v6220 = vpop.trf.xlu0
          %v6221 = vpop.trf.xlu0
          %v6222 = vpop.trf.xlu0
          %v6223 = vpop.trf.xlu0
          %v6224 = vpop.trf.xlu0
          %v6225 = vpop.trf.xlu0
          %v6226 = vpop.trf.xlu0
          %v6227 = vpop.trf.xlu0
          %v6228 = vpop.trf.xlu0
          %v6229 = vpop.trf.xlu0
          %v6230 = vpop.trf.xlu0
          %v6231 = vpop.trf.xlu0
          %v6232 = vpop.trf.xlu0
          %v6233 = vpop.trf.xlu0
          %v6234 = vpop.trf.xlu0
          %v6235 = vpop.trf.xlu0
          %6236 = vxpose.xlu0.b32.start [1/16] %v5865, 128
          %6237 = vxpose.xlu0.b32.cont [2/16] %v5868, 128
          %6238 = vxpose.xlu0.b32.cont [3/16] %v5871, 128
          %6239 = vxpose.xlu0.b32.cont [4/16] %v5874, 128
          %6240 = vxpose.xlu0.b32.cont [5/16] 0.0, 128
          %6241 = vxpose.xlu0.b32.cont [6/16] 0.0, 128
          %6242 = vxpose.xlu0.b32.cont [7/16] 0.0, 128
          %6243 = vxpose.xlu0.b32.cont [8/16] 0.0, 128
          %6244 = vxpose.xlu0.b32.cont [9/16] 0.0, 128
          %6245 = vxpose.xlu0.b32.cont [10/16] 0.0, 128
          %6246 = vxpose.xlu0.b32.cont [11/16] 0.0, 128
          %6247 = vxpose.xlu0.b32.cont [12/16] 0.0, 128
          %6248 = vxpose.xlu0.b32.cont [13/16] 0.0, 128
          %6249 = vxpose.xlu0.b32.cont [14/16] 0.0, 128
          %6250 = vxpose.xlu0.b32.cont [15/16] 0.0, 128
          %6251 = vxpose.xlu0.b32.end [16/16] 0.0, 128
          %v6252 = vpop.trf.xlu0
          %v6253 = vpop.trf.xlu0
          %v6254 = vpop.trf.xlu0
          %v6255 = vpop.trf.xlu0
          %v6256 = vpop.trf.xlu0
          %v6257 = vpop.trf.xlu0
          %v6258 = vpop.trf.xlu0
          %v6259 = vpop.trf.xlu0
          %v6260 = vpop.trf.xlu0
          %v6261 = vpop.trf.xlu0
          %v6262 = vpop.trf.xlu0
          %v6263 = vpop.trf.xlu0
          %v6264 = vpop.trf.xlu0
          %v6265 = vpop.trf.xlu0
          %v6266 = vpop.trf.xlu0
          %v6267 = vpop.trf.xlu0
          %6268 = vxpose.xlu0.b32.start [1/16] %v5877, 128
          %6269 = vxpose.xlu0.b32.cont [2/16] %v5880, 128
          %6270 = vxpose.xlu0.b32.cont [3/16] %v5883, 128
          %6271 = vxpose.xlu0.b32.cont [4/16] %v5886, 128
          %6272 = vxpose.xlu0.b32.cont [5/16] 0.0, 128
          %6273 = vxpose.xlu0.b32.cont [6/16] 0.0, 128
          %6274 = vxpose.xlu0.b32.cont [7/16] 0.0, 128
          %6275 = vxpose.xlu0.b32.cont [8/16] 0.0, 128
          %6276 = vxpose.xlu0.b32.cont [9/16] 0.0, 128
          %6277 = vxpose.xlu0.b32.cont [10/16] 0.0, 128
          %6278 = vxpose.xlu0.b32.cont [11/16] 0.0, 128
          %6279 = vxpose.xlu0.b32.cont [12/16] 0.0, 128
          %6280 = vxpose.xlu0.b32.cont [13/16] 0.0, 128
          %6281 = vxpose.xlu0.b32.cont [14/16] 0.0, 128
          %6282 = vxpose.xlu0.b32.cont [15/16] 0.0, 128
          %6283 = vxpose.xlu0.b32.end [16/16] 0.0, 128
          %v6284 = vpop.trf.xlu0
          %v6285 = vpop.trf.xlu0
          %v6286 = vpop.trf.xlu0
          %v6287 = vpop.trf.xlu0
          %v6288 = vpop.trf.xlu0
          %v6289 = vpop.trf.xlu0
          %v6290 = vpop.trf.xlu0
          %v6291 = vpop.trf.xlu0
          %v6292 = vpop.trf.xlu0
          %v6293 = vpop.trf.xlu0
          %v6294 = vpop.trf.xlu0
          %v6295 = vpop.trf.xlu0
          %v6296 = vpop.trf.xlu0
          %v6297 = vpop.trf.xlu0
          %v6298 = vpop.trf.xlu0
          %v6299 = vpop.trf.xlu0
          %6300 = vxpose.xlu0.b32.start [1/16] %v5889, 128
          %6301 = vxpose.xlu0.b32.cont [2/16] %v5892, 128
          %6302 = vxpose.xlu0.b32.cont [3/16] %v5895, 128
          %6303 = vxpose.xlu0.b32.cont [4/16] %v5898, 128
          %6304 = vxpose.xlu0.b32.cont [5/16] 0.0, 128
          %6305 = vxpose.xlu0.b32.cont [6/16] 0.0, 128
          %6306 = vxpose.xlu0.b32.cont [7/16] 0.0, 128
          %6307 = vxpose.xlu0.b32.cont [8/16] 0.0, 128
          %6308 = vxpose.xlu0.b32.cont [9/16] 0.0, 128
          %6309 = vxpose.xlu0.b32.cont [10/16] 0.0, 128
          %6310 = vxpose.xlu0.b32.cont [11/16] 0.0, 128
          %6311 = vxpose.xlu0.b32.cont [12/16] 0.0, 128
          %6312 = vxpose.xlu0.b32.cont [13/16] 0.0, 128
          %6313 = vxpose.xlu0.b32.cont [14/16] 0.0, 128
          %6314 = vxpose.xlu0.b32.cont [15/16] 0.0, 128
          %6315 = vxpose.xlu0.b32.end [16/16] 0.0, 128
          %v6316 = vpop.trf.xlu0
          %v6317 = vpop.trf.xlu0
          %v6318 = vpop.trf.xlu0
          %v6319 = vpop.trf.xlu0
          %v6320 = vpop.trf.xlu0
          %v6321 = vpop.trf.xlu0
          %v6322 = vpop.trf.xlu0
          %v6323 = vpop.trf.xlu0
          %v6324 = vpop.trf.xlu0
          %v6325 = vpop.trf.xlu0
          %v6326 = vpop.trf.xlu0
          %v6327 = vpop.trf.xlu0
          %v6328 = vpop.trf.xlu0
          %v6329 = vpop.trf.xlu0
          %v6330 = vpop.trf.xlu0
          %v6331 = vpop.trf.xlu0
          %6332 = vxpose.xlu0.b32.start [1/16] %v5901, 128
          %6333 = vxpose.xlu0.b32.cont [2/16] %v5904, 128
          %6334 = vxpose.xlu0.b32.cont [3/16] %v5907, 128
          %6335 = vxpose.xlu0.b32.cont [4/16] %v5910, 128
          %6336 = vxpose.xlu0.b32.cont [5/16] 0.0, 128
          %6337 = vxpose.xlu0.b32.cont [6/16] 0.0, 128
          %6338 = vxpose.xlu0.b32.cont [7/16] 0.0, 128
          %6339 = vxpose.xlu0.b32.cont [8/16] 0.0, 128
          %6340 = vxpose.xlu0.b32.cont [9/16] 0.0, 128
          %6341 = vxpose.xlu0.b32.cont [10/16] 0.0, 128
          %6342 = vxpose.xlu0.b32.cont [11/16] 0.0, 128
          %6343 = vxpose.xlu0.b32.cont [12/16] 0.0, 128
          %6344 = vxpose.xlu0.b32.cont [13/16] 0.0, 128
          %6345 = vxpose.xlu0.b32.cont [14/16] 0.0, 128
          %6346 = vxpose.xlu0.b32.cont [15/16] 0.0, 128
          %6347 = vxpose.xlu0.b32.end [16/16] 0.0, 128
          %v6348 = vpop.trf.xlu0
          %v6349 = vpop.trf.xlu0
          %v6350 = vpop.trf.xlu0
          %v6351 = vpop.trf.xlu0
          %v6352 = vpop.trf.xlu0
          %v6353 = vpop.trf.xlu0
          %v6354 = vpop.trf.xlu0
          %v6355 = vpop.trf.xlu0
          %v6356 = vpop.trf.xlu0
          %v6357 = vpop.trf.xlu0
          %v6358 = vpop.trf.xlu0
          %v6359 = vpop.trf.xlu0
          %v6360 = vpop.trf.xlu0
          %v6361 = vpop.trf.xlu0
          %v6362 = vpop.trf.xlu0
          %v6363 = vpop.trf.xlu0
          %6364 = vxpose.xlu0.b32.start [1/16] %v5913, 128
          %6365 = vxpose.xlu0.b32.cont [2/16] %v5916, 128
          %6366 = vxpose.xlu0.b32.cont [3/16] %v5919, 128
          %6367 = vxpose.xlu0.b32.cont [4/16] %v5922, 128
          %6368 = vxpose.xlu0.b32.cont [5/16] 0.0, 128
          %6369 = vxpose.xlu0.b32.cont [6/16] 0.0, 128
          %6370 = vxpose.xlu0.b32.cont [7/16] 0.0, 128
          %6371 = vxpose.xlu0.b32.cont [8/16] 0.0, 128
          %6372 = vxpose.xlu0.b32.cont [9/16] 0.0, 128
          %6373 = vxpose.xlu0.b32.cont [10/16] 0.0, 128
          %6374 = vxpose.xlu0.b32.cont [11/16] 0.0, 128
          %6375 = vxpose.xlu0.b32.cont [12/16] 0.0, 128
          %6376 = vxpose.xlu0.b32.cont [13/16] 0.0, 128
          %6377 = vxpose.xlu0.b32.cont [14/16] 0.0, 128
          %6378 = vxpose.xlu0.b32.cont [15/16] 0.0, 128
          %6379 = vxpose.xlu0.b32.end [16/16] 0.0, 128
          %v6380 = vpop.trf.xlu0
          %v6381 = vpop.trf.xlu0
          %v6382 = vpop.trf.xlu0
          %v6383 = vpop.trf.xlu0
          %v6384 = vpop.trf.xlu0
          %v6385 = vpop.trf.xlu0
          %v6386 = vpop.trf.xlu0
          %v6387 = vpop.trf.xlu0
          %v6388 = vpop.trf.xlu0
          %v6389 = vpop.trf.xlu0
          %v6390 = vpop.trf.xlu0
          %v6391 = vpop.trf.xlu0
          %v6392 = vpop.trf.xlu0
          %v6393 = vpop.trf.xlu0
          %v6394 = vpop.trf.xlu0
          %v6395 = vpop.trf.xlu0
          %6396 = vxpose.xlu0.b32.start [1/16] %v5925, 128
          %6397 = vxpose.xlu0.b32.cont [2/16] %v5928, 128
          %6398 = vxpose.xlu0.b32.cont [3/16] %v5931, 128
          %6399 = vxpose.xlu0.b32.cont [4/16] %v5934, 128
          %6400 = vxpose.xlu0.b32.cont [5/16] 0.0, 128
          %6401 = vxpose.xlu0.b32.cont [6/16] 0.0, 128
          %6402 = vxpose.xlu0.b32.cont [7/16] 0.0, 128
          %6403 = vxpose.xlu0.b32.cont [8/16] 0.0, 128
          %6404 = vxpose.xlu0.b32.cont [9/16] 0.0, 128
          %6405 = vxpose.xlu0.b32.cont [10/16] 0.0, 128
          %6406 = vxpose.xlu0.b32.cont [11/16] 0.0, 128
          %6407 = vxpose.xlu0.b32.cont [12/16] 0.0, 128
          %6408 = vxpose.xlu0.b32.cont [13/16] 0.0, 128
          %6409 = vxpose.xlu0.b32.cont [14/16] 0.0, 128
          %6410 = vxpose.xlu0.b32.cont [15/16] 0.0, 128
          %6411 = vxpose.xlu0.b32.end [16/16] 0.0, 128
          %v6412 = vpop.trf.xlu0
          %v6413 = vpop.trf.xlu0
          %v6414 = vpop.trf.xlu0
          %v6415 = vpop.trf.xlu0
          %v6416 = vpop.trf.xlu0
          %v6417 = vpop.trf.xlu0
          %v6418 = vpop.trf.xlu0
          %v6419 = vpop.trf.xlu0
          %v6420 = vpop.trf.xlu0
          %v6421 = vpop.trf.xlu0
          %v6422 = vpop.trf.xlu0
          %v6423 = vpop.trf.xlu0
          %v6424 = vpop.trf.xlu0
          %v6425 = vpop.trf.xlu0
          %v6426 = vpop.trf.xlu0
          %v6427 = vpop.trf.xlu0
          %6428 = vxpose.xlu0.b32.start [1/16] %v5937, 128
          %6429 = vxpose.xlu0.b32.cont [2/16] %v5940, 128
          %6430 = vxpose.xlu0.b32.cont [3/16] %v5943, 128
          %6431 = vxpose.xlu0.b32.cont [4/16] %v5946, 128
          %6432 = vxpose.xlu0.b32.cont [5/16] 0.0, 128
          %6433 = vxpose.xlu0.b32.cont [6/16] 0.0, 128
          %6434 = vxpose.xlu0.b32.cont [7/16] 0.0, 128
          %6435 = vxpose.xlu0.b32.cont [8/16] 0.0, 128
          %6436 = vxpose.xlu0.b32.cont [9/16] 0.0, 128
          %6437 = vxpose.xlu0.b32.cont [10/16] 0.0, 128
          %6438 = vxpose.xlu0.b32.cont [11/16] 0.0, 128
          %6439 = vxpose.xlu0.b32.cont [12/16] 0.0, 128
          %6440 = vxpose.xlu0.b32.cont [13/16] 0.0, 128
          %6441 = vxpose.xlu0.b32.cont [14/16] 0.0, 128
          %6442 = vxpose.xlu0.b32.cont [15/16] 0.0, 128
          %6443 = vxpose.xlu0.b32.end [16/16] 0.0, 128
          %v6444 = vpop.trf.xlu0
          %v6445 = vpop.trf.xlu0
          %v6446 = vpop.trf.xlu0
          %v6447 = vpop.trf.xlu0
          %v6448 = vpop.trf.xlu0
          %v6449 = vpop.trf.xlu0
          %v6450 = vpop.trf.xlu0
          %v6451 = vpop.trf.xlu0
          %v6452 = vpop.trf.xlu0
          %v6453 = vpop.trf.xlu0
          %v6454 = vpop.trf.xlu0
          %v6455 = vpop.trf.xlu0
          %v6456 = vpop.trf.xlu0
          %v6457 = vpop.trf.xlu0
          %v6458 = vpop.trf.xlu0
          %v6459 = vpop.trf.xlu0
          %v6460 = vpack.c.bf16 %v5964, %v5964
          %v6461 = vpack.c.bf16 %v5965, %v5965
          %v6462 = vpack.c.bf16 %v5966, %v5966
          %v6463 = vpack.c.bf16 %v5967, %v5967
          %v6464 = vpack.c.bf16 %v5996, %v5996
          %v6465 = vpack.c.bf16 %v5997, %v5997
          %v6466 = vpack.c.bf16 %v5998, %v5998
          %v6467 = vpack.c.bf16 %v5999, %v5999
          %v6468 = vpack.c.bf16 %v6028, %v6028
          %v6469 = vpack.c.bf16 %v6029, %v6029
          %v6470 = vpack.c.bf16 %v6030, %v6030
          %v6471 = vpack.c.bf16 %v6031, %v6031
          %v6472 = vpack.c.bf16 %v6060, %v6060
          %v6473 = vpack.c.bf16 %v6061, %v6061
          %v6474 = vpack.c.bf16 %v6062, %v6062
          %v6475 = vpack.c.bf16 %v6063, %v6063
          %v6476 = vpack.c.bf16 %v6092, %v6092
          %v6477 = vpack.c.bf16 %v6093, %v6093
          %v6478 = vpack.c.bf16 %v6094, %v6094
          %v6479 = vpack.c.bf16 %v6095, %v6095
          %v6480 = vpack.c.bf16 %v6124, %v6124
          %v6481 = vpack.c.bf16 %v6125, %v6125
          %v6482 = vpack.c.bf16 %v6126, %v6126
          %v6483 = vpack.c.bf16 %v6127, %v6127
          %v6484 = vpack.c.bf16 %v6156, %v6156
          %v6485 = vpack.c.bf16 %v6157, %v6157
          %v6486 = vpack.c.bf16 %v6158, %v6158
          %v6487 = vpack.c.bf16 %v6159, %v6159
          %v6488 = vpack.c.bf16 %v6188, %v6188
          %v6489 = vpack.c.bf16 %v6189, %v6189
          %v6490 = vpack.c.bf16 %v6190, %v6190
          %v6491 = vpack.c.bf16 %v6191, %v6191
          %v6492 = vpack.c.bf16 %v6220, %v6220
          %v6493 = vpack.c.bf16 %v6221, %v6221
          %v6494 = vpack.c.bf16 %v6222, %v6222
          %v6495 = vpack.c.bf16 %v6223, %v6223
          %v6496 = vpack.c.bf16 %v6252, %v6252
          %v6497 = vpack.c.bf16 %v6253, %v6253
          %v6498 = vpack.c.bf16 %v6254, %v6254
          %v6499 = vpack.c.bf16 %v6255, %v6255
          %v6500 = vpack.c.bf16 %v6284, %v6284
          %v6501 = vpack.c.bf16 %v6285, %v6285
          %v6502 = vpack.c.bf16 %v6286, %v6286
          %v6503 = vpack.c.bf16 %v6287, %v6287
          %v6504 = vpack.c.bf16 %v6316, %v6316
          %v6505 = vpack.c.bf16 %v6317, %v6317
          %v6506 = vpack.c.bf16 %v6318, %v6318
          %v6507 = vpack.c.bf16 %v6319, %v6319
          %v6508 = vpack.c.bf16 %v6348, %v6348
          %v6509 = vpack.c.bf16 %v6349, %v6349
          %v6510 = vpack.c.bf16 %v6350, %v6350
          %v6511 = vpack.c.bf16 %v6351, %v6351
          %v6512 = vpack.c.bf16 %v6380, %v6380
          %v6513 = vpack.c.bf16 %v6381, %v6381
          %v6514 = vpack.c.bf16 %v6382, %v6382
          %v6515 = vpack.c.bf16 %v6383, %v6383
          %v6516 = vpack.c.bf16 %v6412, %v6412
          %v6517 = vpack.c.bf16 %v6413, %v6413
          %v6518 = vpack.c.bf16 %v6414, %v6414
          %v6519 = vpack.c.bf16 %v6415, %v6415
          %v6520 = vpack.c.bf16 %v6444, %v6444
          %v6521 = vpack.c.bf16 %v6445, %v6445
          %v6522 = vpack.c.bf16 %v6446, %v6446
          %v6523 = vpack.c.bf16 %v6447, %v6447
          %vm6524 = vcmask 257024
          %6525 = vst.msk [vmem:[%s315] sm:$0xf] %vm6524, %v6460
          %6526 = vst.msk [vmem:[%s315 + $0x4] sm:$0xf] %vm6524, %v6461
          %6527 = vst.msk [vmem:[%s315 + $0x8] sm:$0xf] %vm6524, %v6462
          %6528 = vst.msk [vmem:[%s315 + $0xc] sm:$0xf] %vm6524, %v6463
          %6529 = vst.msk [vmem:[%s315 + $0x10] sm:$0xf] %vm6524, %v6464
          %6530 = vst.msk [vmem:[%s315 + $0x14] sm:$0xf] %vm6524, %v6465
          %6531 = vst.msk [vmem:[%s315 + $0x18] sm:$0xf] %vm6524, %v6466
          %6532 = vst.msk [vmem:[%s315 + $0x1c] sm:$0xf] %vm6524, %v6467
          %6533 = vst.msk [vmem:[%s315 + $0x20] sm:$0xf] %vm6524, %v6468
          %6534 = vst.msk [vmem:[%s315 + $0x24] sm:$0xf] %vm6524, %v6469
          %6535 = vst.msk [vmem:[%s315 + $0x28] sm:$0xf] %vm6524, %v6470
          %6536 = vst.msk [vmem:[%s315 + $0x2c] sm:$0xf] %vm6524, %v6471
          %6537 = vst.msk [vmem:[%s315 + $0x30] sm:$0xf] %vm6524, %v6472
          %6538 = vst.msk [vmem:[%s315 + $0x34] sm:$0xf] %vm6524, %v6473
          %6539 = vst.msk [vmem:[%s315 + $0x38] sm:$0xf] %vm6524, %v6474
          %6540 = vst.msk [vmem:[%s315 + $0x3c] sm:$0xf] %vm6524, %v6475
          %6541 = vst.msk [vmem:[%s315 + $0x40] sm:$0xf] %vm6524, %v6476
          %6542 = vst.msk [vmem:[%s315 + $0x44] sm:$0xf] %vm6524, %v6477
          %6543 = vst.msk [vmem:[%s315 + $0x48] sm:$0xf] %vm6524, %v6478
          %6544 = vst.msk [vmem:[%s315 + $0x4c] sm:$0xf] %vm6524, %v6479
          %6545 = vst.msk [vmem:[%s315 + $0x50] sm:$0xf] %vm6524, %v6480
          %6546 = vst.msk [vmem:[%s315 + $0x54] sm:$0xf] %vm6524, %v6481
          %6547 = vst.msk [vmem:[%s315 + $0x58] sm:$0xf] %vm6524, %v6482
          %6548 = vst.msk [vmem:[%s315 + $0x5c] sm:$0xf] %vm6524, %v6483
          %6549 = vst.msk [vmem:[%s315 + $0x60] sm:$0xf] %vm6524, %v6484
          %6550 = vst.msk [vmem:[%s315 + $0x64] sm:$0xf] %vm6524, %v6485
          %6551 = vst.msk [vmem:[%s315 + $0x68] sm:$0xf] %vm6524, %v6486
          %6552 = vst.msk [vmem:[%s315 + $0x6c] sm:$0xf] %vm6524, %v6487
          %6553 = vst.msk [vmem:[%s315 + $0x70] sm:$0xf] %vm6524, %v6488
          %6554 = vst.msk [vmem:[%s315 + $0x74] sm:$0xf] %vm6524, %v6489
          %6555 = vst.msk [vmem:[%s315 + $0x78] sm:$0xf] %vm6524, %v6490
          %6556 = vst.msk [vmem:[%s315 + $0x7c] sm:$0xf] %vm6524, %v6491
          %6557 = vst.msk [vmem:[%s315 + $0x80] sm:$0xf] %vm6524, %v6492
          %6558 = vst.msk [vmem:[%s315 + $0x84] sm:$0xf] %vm6524, %v6493
          %6559 = vst.msk [vmem:[%s315 + $0x88] sm:$0xf] %vm6524, %v6494
          %6560 = vst.msk [vmem:[%s315 + $0x8c] sm:$0xf] %vm6524, %v6495
          %6561 = vst.msk [vmem:[%s315 + $0x90] sm:$0xf] %vm6524, %v6496
          %6562 = vst.msk [vmem:[%s315 + $0x94] sm:$0xf] %vm6524, %v6497
          %6563 = vst.msk [vmem:[%s315 + $0x98] sm:$0xf] %vm6524, %v6498
          %6564 = vst.msk [vmem:[%s315 + $0x9c] sm:$0xf] %vm6524, %v6499
          %6565 = vst.msk [vmem:[%s315 + $0xa0] sm:$0xf] %vm6524, %v6500
          %6566 = vst.msk [vmem:[%s315 + $0xa4] sm:$0xf] %vm6524, %v6501
          %6567 = vst.msk [vmem:[%s315 + $0xa8] sm:$0xf] %vm6524, %v6502
          %6568 = vst.msk [vmem:[%s315 + $0xac] sm:$0xf] %vm6524, %v6503
          %6569 = vst.msk [vmem:[%s315 + $0xb0] sm:$0xf] %vm6524, %v6504
          %6570 = vst.msk [vmem:[%s315 + $0xb4] sm:$0xf] %vm6524, %v6505
          %6571 = vst.msk [vmem:[%s315 + $0xb8] sm:$0xf] %vm6524, %v6506
          %6572 = vst.msk [vmem:[%s315 + $0xbc] sm:$0xf] %vm6524, %v6507
          %6573 = vst.msk [vmem:[%s315 + $0xc0] sm:$0xf] %vm6524, %v6508
          %6574 = vst.msk [vmem:[%s315 + $0xc4] sm:$0xf] %vm6524, %v6509
          %6575 = vst.msk [vmem:[%s315 + $0xc8] sm:$0xf] %vm6524, %v6510
          %6576 = vst.msk [vmem:[%s315 + $0xcc] sm:$0xf] %vm6524, %v6511
          %6577 = vst.msk [vmem:[%s315 + $0xd0] sm:$0xf] %vm6524, %v6512
          %6578 = vst.msk [vmem:[%s315 + $0xd4] sm:$0xf] %vm6524, %v6513
          %6579 = vst.msk [vmem:[%s315 + $0xd8] sm:$0xf] %vm6524, %v6514
          %6580 = vst.msk [vmem:[%s315 + $0xdc] sm:$0xf] %vm6524, %v6515
          %6581 = vst.msk [vmem:[%s315 + $0xe0] sm:$0xf] %vm6524, %v6516
          %6582 = vst.msk [vmem:[%s315 + $0xe4] sm:$0xf] %vm6524, %v6517
          %6583 = vst.msk [vmem:[%s315 + $0xe8] sm:$0xf] %vm6524, %v6518
          %6584 = vst.msk [vmem:[%s315 + $0xec] sm:$0xf] %vm6524, %v6519
          %6585 = vst.msk [vmem:[%s315 + $0xf0] sm:$0xf] %vm6524, %v6520
          %6586 = vst.msk [vmem:[%s315 + $0xf4] sm:$0xf] %vm6524, %v6521
          %6587 = vst.msk [vmem:[%s315 + $0xf8] sm:$0xf] %vm6524, %v6522
          %6588 = vst.msk [vmem:[%s315 + $0xfc] sm:$0xf] %vm6524, %v6523
        $region92: #{tpu_custom_call.1} parent=43 // pred_fallthru
          _
        %s6589 = sand.u32 %s193, 1
        %s6590 = scalar_lea.sflag [#allocation8], %s6589
        %s6591 = sand.u32 %s193, 1
        %s6592 = smul.addr %s6591, 256
        %s6593 = scalar_lea.vmem [#allocation9], %s6592
        // Predicated region
        $region93: #{tpu_custom_call.1} parent=43 // pred_check
          %p6594 = pneg %p203
        $region94: #{tpu_custom_call.1} parent=43 // pred_check_branch
          %6596 = sbr.rel (%p6594) target = $region96
        $region95: #{tpu_custom_call.1} parent=43 // pred_region
          %s6597 = smul.u32 %s30, %s31
          %s6598 = smul.u32 16, %s6597
          %6600 = vsyncadd %s6590, 0
          %s6601 = smul.addr %s6598, 4
          %s6602 = smul.addr %s29, 128
          %s6603 = sadd.s32 %s6601, %s6602
          %s6604 = smul.addr %s6603, 4
          %s6605 = scalar_lea.hbm %s7, %s6604
          %s6606 = sshll.u32 %s6593, 4
          %s6607 = int_to_ptr.vmem [resolvable:$true] %s6606
          %s6608 = sshll.u32 %s6605, 4
          %s6609 = int_to_ptr.hbm [resolvable:$true] %s6608
          %6614 = dma.vmem_to_hbm [thread:$0]  %s6607, 4096, %s6609, %s6590, 64, 64, 4
        $region96: #{tpu_custom_call.1} parent=43 // pred_fallthru
          _
      $region44: #{tpu_custom_call.1} parent=5 // pred_fallthru
        _
      %p6615 = scmp.le.s32.totalorder 2, %s19
      // Predicated region
      $region97: #{tpu_custom_call.1} parent=5 // pred_check
        %p6616 = pneg %p6615
      $region98: #{tpu_custom_call.1} parent=5 // pred_check_branch
        %6618 = sbr.rel (%p6616) target = $region100
      $region99: #{tpu_custom_call.1} parent=5 // pred_region
        %s6619 = ssub.s32 %s19, 2
        // Predicated region
        $region101: #{tpu_custom_call.1} parent=99 // pred_check
          %p6620 = pneg %p209
        $region102: #{tpu_custom_call.1} parent=99 // pred_check_branch
          %6622 = sbr.rel (%p6620) target = $region104
        $region103: #{tpu_custom_call.1} parent=99 // pred_region
          %s6623 = sand.u32 %s194, 1
          %s6624 = scalar_lea.sflag [#allocation8], %s6623
          %s6625 = sand.u32 %s194, 1
          %s6626 = smul.addr %s6625, 256
          %s6627 = scalar_lea.vmem [#allocation9], %s6626
          %6629 = dma.done %s6624, 4096
        $region104: #{tpu_custom_call.1} parent=99 // pred_fallthru
          _
      $region100: #{tpu_custom_call.1} parent=5 // pred_fallthru
        _
    $region6: #{tpu_custom_call.1} parent=1 // loop_footer
      %s23 = sadd.s32 1, %s19
    $region7: #{tpu_custom_call.1} parent=1 // loop_footer_branch
      %18 = sbr.rel target = $region3
    $region8: #{tpu_custom_call.1} parent=1 // loop_exit
      _
    %6630 = vsyncpa [#allocation7], 1
    %s6631 = scalar_lea.sflag [#allocation7], 1
    %6632 = vsyncpa %s6631, 1
    %6633 = vsyncpa [#allocation8], 1
    %s6634 = scalar_lea.sflag [#allocation8], 1
    %6635 = vsyncpa %s6634, 1
  %6636 = vsyncmov [#allocation3]
  %s6637 = vpop.sfrf %6636
  %p6638 = scmp.eq.s32.totalorder %s6637, 0
  %p6639 = pneg %p6638
  %6641 = shalt.err (%p6639)
  %s6642 = scalar_lea.sflag [#allocation3], 1
  %6643 = vsyncmov %s6642
  %s6644 = vpop.sfrf %6643
  %p6645 = scmp.eq.s32.totalorder %s6644, 0
  %p6646 = pneg %p6645
  %6648 = shalt.err (%p6646)

</llo_original>
